<compile_context>
chip_gen: v7x
topology: tpu7x:2x2x1
jax: 0.10.0
libtpu: 0.0.40
codegen_flags: <defaults>
</compile_context>

<pallas_src>
import numpy as np
import jax
import jax.numpy as jnp
from jax.experimental import pallas as pl
from jax.experimental.pallas import tpu as pltpu


# ----------------------------------------------------------------------------
# Structure tensors (same construction as the PyTorch buffers)
# ----------------------------------------------------------------------------
def build_join_convolve_tensor(signal_dim, kernel_dim, kernel_loc):
    M = np.zeros((signal_dim, signal_dim, kernel_dim), np.float32)
    for i in range(signal_dim):
        for j in range(i, signal_dim):
            for k in range(kernel_dim):
                if i == max(j, k + kernel_loc):
                    M[i, j, k] = 1.0
    return jnp.asarray(M)


def build_meet_convolve_tensor(signal_dim, kernel_dim, kernel_loc):
    M = np.zeros((signal_dim, signal_dim, kernel_dim), np.float32)
    for i in range(signal_dim):
        for j in range(i, signal_dim):
            for k in range(kernel_dim):
                if i == min(j, k + kernel_loc):
                    M[i, j, k] = 1.0
    return jnp.asarray(M)


# ----------------------------------------------------------------------------
# Fused Pallas kernel: all layers in one call.
# refs = (x_ref, [Kw_ref, bias_ref] * n_layers, out_ref)
# ----------------------------------------------------------------------------
def _make_fused_kernel(layer_meta):
    # layer_meta: list of dicts with static ints 'P', 'Nout'
    def kernel(*refs):
        x_ref = refs[0]
        o_ref = refs[-1]
        h = x_ref[...]                                     # (Mp, Kdim0) f32
        for li, meta in enumerate(layer_meta):
            k_ref = refs[1 + 2 * li]                       # (Kdim, P*Nout) bf16
            b_ref = refs[2 + 2 * li]                       # (1, Nout) f32
            P, Nout = meta['P'], meta['Nout']
            # One wide MXU matmul covering every pool-window offset at once.
            y = jnp.dot(h.astype(jnp.bfloat16), k_ref[...],
                        preferred_element_type=jnp.float32)    # (Mp, P*Nout)
            # max_pool2d == elementwise max over the P lane-aligned groups (VPU).
            m = y[:, 0:Nout]
            for p in range(1, P):
                m = jnp.maximum(m, y[:, p * Nout:(p + 1) * Nout])
            # Bias is constant across pool offsets and leaky_relu is monotone,
            # so applying them after the max matches bias -> leaky_relu -> pool.
            m = m + b_ref[...]
            h = jnp.maximum(m, 0.01 * m)                   # leaky_relu, slope 0.01
        o_ref[...] = h
    return kernel


def lattice_cnn_pool_pallas(layers, x):
    metas = [layer['folded'] for layer in layers]
    M = x.shape[0]
    Kdim0 = metas[0]['Kdim']
    N_last = metas[-1]['Nout']

    # Pad batch to the f32 sublane multiple (8) so output stores are unmasked.
    Mp = max(8, ((M + 7) // 8) * 8)
    x_flat = x.reshape(M, Kdim0).astype(jnp.float32)
    if Mp != M:
        x_flat = jnp.pad(x_flat, ((0, Mp - M), (0, 0)))

    in_arrays = [x_flat]
    in_specs = [pl.BlockSpec((Mp, Kdim0), lambda i: (0, 0))]
    for meta in metas:
        Kw, brow = meta['Kw'], meta['brow']
        in_arrays += [Kw, brow]
        in_specs += [pl.BlockSpec(Kw.shape, lambda i: (0, 0)),
                     pl.BlockSpec(brow.shape, lambda i: (0, 0))]

    out = pl.pallas_call(
        _make_fused_kernel(metas),
        out_shape=jax.ShapeDtypeStruct((Mp, N_last), jnp.float32),
        grid=(1,),
        in_specs=in_specs,
        out_specs=pl.BlockSpec((Mp, N_last), lambda i: (0, 0)),
        compiler_params=pltpu.CompilerParams(
            dimension_semantics=("arbitrary",),
            # ~10 MiB actually needed (bf16 weight slabs + activations);
            # 32 MiB is safe on v5e/v6e (128 MiB) and v7x (64 MiB physical).
            vmem_limit_bytes=32 * 1024 * 1024,
        ),
    )(*in_arrays)

    Gout, Xo, Yo = metas[-1]['shape_out']
    return out[:M].reshape(M, Gout, Xo, Yo)   # back to NCHW


# ----------------------------------------------------------------------------
# Parameter construction / folding (input-independent glue)
# ----------------------------------------------------------------------------
def _kaiming_normal(key, shape):
    # PyTorch kaiming_normal_ fan_in convention for a 4-D tensor of this layout.
    _, ky, fin, fout = shape
    fan_in = ky * fin * fout
    std = (2.0 / fan_in) ** 0.5
    return std * jax.random.normal(key, shape, dtype=jnp.float32)


def _fold_layer(layer):
    # K[g,x,y,f,i,j] = sum_{a,b} conv_x[i,x,a] conv_y[j,y,b] W[a,b,f,g]
    Km = jnp.einsum('ixa,jyb,abfg->gxyfij', layer['cxm'], layer['cym'], layer['Wm'])
    Kj = jnp.einsum('ixa,jyb,abfg->gxyfij', layer['cxj'], layer['cyj'], layer['Wj'])
    K = jnp.concatenate([Km, Kj], axis=0)                    # (Gout, Sx, Sy, F, Sx, Sy)
    b = jnp.concatenate([layer['bm'], layer['bj']], axis=0)  # (Gout,)
    Gout, Sx, Sy, F, _, _ = K.shape
    px, py = layer['pool']
    Xo, Yo = Sx // px, Sy // py
    P, Nout, Kdim = px * py, Gout * Xo * Yo, F * Sx * Sy
    K = K.reshape(Gout, Xo, px, Yo, py, F, Sx, Sy)
    K = K.transpose(2, 4, 0, 1, 3, 5, 6, 7)                  # (px, py, Gout, Xo, Yo, F, Sx, Sy)
    # (Kdim, P*Nout) with column index = p*Nout + n; cast weights to bf16.
    Kw = (K.reshape(P, Nout, Kdim)
           .transpose(2, 0, 1)
           .reshape(Kdim, P * Nout)
           .astype(jnp.bfloat16))
    brow = jnp.broadcast_to(b[:, None, None], (Gout, Xo, Yo)).reshape(1, Nout)
    return dict(Kw=Kw, brow=brow.astype(jnp.float32),
                P=P, Nout=Nout, Kdim=Kdim, shape_out=(Gout, Xo, Yo))


def init_lattice_cnn_pool(key, signal_dim, kernel_dim, n_features, pool_sizes):
    layers = []
    dims = signal_dim
    kx, ky = kernel_dim
    for i in range(len(n_features) - 1):
        fin = n_features[i]
        fhalf = n_features[i + 1] // 2
        key, km, kj = jax.random.split(key, 3)
        layer = dict(
            # MeetConv2d: kernel_loc = (dims - kernel)
            cxm=build_meet_convolve_tensor(dims[0], kx, dims[0] - kx),
            cym=build_meet_convolve_tensor(dims[1], ky, dims[1] - ky),
            Wm=_kaiming_normal(km, (kx, ky, fin, fhalf)),
            bm=jnp.zeros((fhalf,), jnp.float32),
            # JoinConv2d: kernel_loc = (0, 0)
            cxj=build_join_convolve_tensor(dims[0], kx, 0),
            cyj=build_join_convolve_tensor(dims[1], ky, 0),
            Wj=_kaiming_normal(kj, (kx, ky, fin, fhalf)),
            bj=jnp.zeros((fhalf,), jnp.float32),
            pool=pool_sizes[i],
        )
        layer['folded'] = _fold_layer(layer)
        layers.append(layer)
        dims = (dims[0] // pool_sizes[i][0], dims[1] // pool_sizes[i][1])
    return layers


# ----------------------------------------------------------------------------
# Pure-JAX f32 reference (mirrors the PyTorch forward exactly)
# ----------------------------------------------------------------------------
def reference_forward(layers, x):
    hi = jax.lax.Precision.HIGHEST
    for layer in layers:
        ym = jnp.einsum('ixa,jyb,mfij,abfg->mgxy',
                        layer['cxm'], layer['cym'], x, layer['Wm'], precision=hi)
        ym = ym + layer['bm'][None, :, None, None]
        yj = jnp.einsum('ixa,jyb,mfij,abfg->mgxy',
                        layer['cxj'], layer['cyj'], x, layer['Wj'], precision=hi)
        yj = yj + layer['bj'][None, :, None, None]
        y = jnp.concatenate([ym, yj], axis=1)
        y = jnp.where(y >= 0.0, y, 0.01 * y)
        M_, G, Sx, Sy = y.shape
        px, py = layer['pool']
        x = y.reshape(M_, G, Sx // px, px, Sy // py, py).max(axis=(3, 5))
    return x


if __name__ == "__main__":
    signal_dim = (16, 16)
    kernel_dim = (3, 3)
    n_features = [4, 8, 8]
    pool_sizes = [(2, 2), (2, 2)]

    key = jax.random.PRNGKey(0)
    k_in, k_params = jax.random.split(key)
    x = jax.random.normal(k_in, (2, 4, 16, 16), dtype=jnp.float32)

    layers = init_lattice_cnn_pool(k_params, signal_dim, kernel_dim,
                                   n_features, pool_sizes)

    out = lattice_cnn_pool_forward = lattice_cnn_pool_pallas(layers, x)
    out = jax.block_until_ready(out)

    ref = jax.block_until_ready(reference_forward(layers, x))
    # bf16 weights/activations in the kernel vs f32 reference: expected
    # precision loss, hence the loosened tolerance (per review guidance).
    np.testing.assert_allclose(np.asarray(out), np.asarray(ref),
                               rtol=5e-2, atol=5e-2)
    assert out.shape == (2, 8, 4, 4), out.shape
    print("KERNEL_OK")
</pallas_src>

<mosaic_0001>
module attributes {stable_mosaic.version = 11 : i64} {
  func.func @kernel(%arg0: i32, %arg1: memref<8x1024xf32, #tpu.memory_space<vmem>>, %arg2: memref<1024x2048xbf16, #tpu.memory_space<vmem>>, %arg3: memref<1x512xf32, #tpu.memory_space<vmem>>, %arg4: memref<512x512xbf16, #tpu.memory_space<vmem>>, %arg5: memref<1x128xf32, #tpu.memory_space<vmem>>, %arg6: memref<8x128xf32, #tpu.memory_space<vmem>>) attributes {dimension_semantics = [#tpu.dimension_semantics<arbitrary>], iteration_bounds = array<i64: 1>, scalar_prefetch = 0 : i64, scratch_operands = 0 : i64, tpu.core_type = #tpu.core_type<tc>, window_params = [{pipeline_mode = #tpu.pipeline_mode<synchronous>, transform_indices = @transform_0, window_bounds = array<i64: 8, 1024>}, {pipeline_mode = #tpu.pipeline_mode<synchronous>, transform_indices = @transform_1, window_bounds = array<i64: 1024, 2048>}, {pipeline_mode = #tpu.pipeline_mode<synchronous>, transform_indices = @transform_2, window_bounds = array<i64: 1, 512>}, {pipeline_mode = #tpu.pipeline_mode<synchronous>, transform_indices = @transform_3, window_bounds = array<i64: 512, 512>}, {pipeline_mode = #tpu.pipeline_mode<synchronous>, transform_indices = @transform_4, window_bounds = array<i64: 1, 128>}, {pipeline_mode = #tpu.pipeline_mode<synchronous>, transform_indices = @transform_5, window_bounds = array<i64: 8, 128>}]} {
    %c0 = arith.constant 0 : index
    %c0_0 = arith.constant 0 : index
    %0 = vector.load %arg1[%c0, %c0_0] : memref<8x1024xf32, #tpu.memory_space<vmem>>, vector<8x1024xf32>
    %1 = arith.truncf %0 : vector<8x1024xf32> to vector<8x1024xbf16>
    %c0_1 = arith.constant 0 : index
    %c0_2 = arith.constant 0 : index
    %2 = vector.load %arg2[%c0_1, %c0_2] : memref<1024x2048xbf16, #tpu.memory_space<vmem>>, vector<1024x2048xbf16>
    %cst = arith.constant dense<0.000000e+00> : vector<8x2048xf32>
    %3 = tpu.matmul %1, %2, %cst {dimension_numbers = #tpu.dot_dimension_numbers<[1], [0], [0], [1], [0, 0, 1, 1], [], []>} : vector<8x1024xbf16>, vector<1024x2048xbf16>, vector<8x2048xf32> -> vector<8x2048xf32>
    %4 = vector.extract_strided_slice %3 {offsets = [0, 0], sizes = [8, 512], strides = [1, 1]} : vector<8x2048xf32> to vector<8x512xf32>
    %5 = vector.extract_strided_slice %3 {offsets = [0, 512], sizes = [8, 512], strides = [1, 1]} : vector<8x2048xf32> to vector<8x512xf32>
    %6 = arith.maximumf %4, %5 : vector<8x512xf32>
    %7 = vector.extract_strided_slice %3 {offsets = [0, 1024], sizes = [8, 512], strides = [1, 1]} : vector<8x2048xf32> to vector<8x512xf32>
    %8 = arith.maximumf %6, %7 : vector<8x512xf32>
    %9 = vector.extract_strided_slice %3 {offsets = [0, 1536], sizes = [8, 512], strides = [1, 1]} : vector<8x2048xf32> to vector<8x512xf32>
    %10 = arith.maximumf %8, %9 : vector<8x512xf32>
    %c0_3 = arith.constant 0 : index
    %c0_4 = arith.constant 0 : index
    %11 = vector.load %arg3[%c0_3, %c0_4] : memref<1x512xf32, #tpu.memory_space<vmem>>, vector<1x512xf32>
    %12 = vector.broadcast %11 : vector<1x512xf32> to vector<8x512xf32>
    %13 = arith.addf %10, %12 : vector<8x512xf32>
    %cst_5 = arith.constant 0.00999999977 : f32
    %14 = vector.broadcast %cst_5 : f32 to vector<8x512xf32>
    %15 = arith.mulf %14, %13 : vector<8x512xf32>
    %16 = arith.maximumf %13, %15 : vector<8x512xf32>
    %17 = arith.truncf %16 : vector<8x512xf32> to vector<8x512xbf16>
    %c0_6 = arith.constant 0 : index
    %c0_7 = arith.constant 0 : index
    %18 = vector.load %arg4[%c0_6, %c0_7] : memref<512x512xbf16, #tpu.memory_space<vmem>>, vector<512x512xbf16>
    %cst_8 = arith.constant dense<0.000000e+00> : vector<8x512xf32>
    %19 = tpu.matmul %17, %18, %cst_8 {dimension_numbers = #tpu.dot_dimension_numbers<[1], [0], [0], [1], [0, 0, 1, 1], [], []>} : vector<8x512xbf16>, vector<512x512xbf16>, vector<8x512xf32> -> vector<8x512xf32>
    %20 = vector.extract_strided_slice %19 {offsets = [0, 0], sizes = [8, 128], strides = [1, 1]} : vector<8x512xf32> to vector<8x128xf32>
    %21 = vector.extract_strided_slice %19 {offsets = [0, 128], sizes = [8, 128], strides = [1, 1]} : vector<8x512xf32> to vector<8x128xf32>
    %22 = arith.maximumf %20, %21 : vector<8x128xf32>
    %23 = vector.extract_strided_slice %19 {offsets = [0, 256], sizes = [8, 128], strides = [1, 1]} : vector<8x512xf32> to vector<8x128xf32>
    %24 = arith.maximumf %22, %23 : vector<8x128xf32>
    %25 = vector.extract_strided_slice %19 {offsets = [0, 384], sizes = [8, 128], strides = [1, 1]} : vector<8x512xf32> to vector<8x128xf32>
    %26 = arith.maximumf %24, %25 : vector<8x128xf32>
    %c0_9 = arith.constant 0 : index
    %c0_10 = arith.constant 0 : index
    %27 = vector.load %arg5[%c0_9, %c0_10] : memref<1x128xf32, #tpu.memory_space<vmem>>, vector<1x128xf32>
    %28 = vector.broadcast %27 : vector<1x128xf32> to vector<8x128xf32>
    %29 = arith.addf %26, %28 : vector<8x128xf32>
    %cst_11 = arith.constant 0.00999999977 : f32
    %30 = vector.broadcast %cst_11 : f32 to vector<8x128xf32>
    %31 = arith.mulf %30, %29 : vector<8x128xf32>
    %32 = arith.maximumf %29, %31 : vector<8x128xf32>
    %c0_12 = arith.constant 0 : index
    %c0_13 = arith.constant 0 : index
    %33 = vector.load %arg6[%c0_12, %c0_13] : memref<8x128xf32, #tpu.memory_space<vmem>>, vector<8x128xf32>
    tpu.vector_store %arg6[%c0_12, %c0_13], %32 {strides = array<i32>} : memref<8x128xf32, #tpu.memory_space<vmem>>, vector<8x128xf32>,
    return
  }
  func.func @transform_0(%arg0: i32) -> (i32, i32) {
    %c0_i32 = arith.constant 0 : i32
    %c0_i32_0 = arith.constant 0 : i32
    %c0_i32_1 = arith.constant 0 : i32
    return %c0_i32, %c0_i32_0 : i32, i32
  }
  func.func @transform_1(%arg0: i32) -> (i32, i32) {
    %c0_i32 = arith.constant 0 : i32
    %c0_i32_0 = arith.constant 0 : i32
    %c0_i32_1 = arith.constant 0 : i32
    return %c0_i32, %c0_i32_0 : i32, i32
  }
  func.func @transform_2(%arg0: i32) -> (i32, i32) {
    %c0_i32 = arith.constant 0 : i32
    %c0_i32_0 = arith.constant 0 : i32
    %c0_i32_1 = arith.constant 0 : i32
    return %c0_i32, %c0_i32_0 : i32, i32
  }
  func.func @transform_3(%arg0: i32) -> (i32, i32) {
    %c0_i32 = arith.constant 0 : i32
    %c0_i32_0 = arith.constant 0 : i32
    %c0_i32_1 = arith.constant 0 : i32
    return %c0_i32, %c0_i32_0 : i32, i32
  }
  func.func @transform_4(%arg0: i32) -> (i32, i32) {
    %c0_i32 = arith.constant 0 : i32
    %c0_i32_0 = arith.constant 0 : i32
    %c0_i32_1 = arith.constant 0 : i32
    return %c0_i32, %c0_i32_0 : i32, i32
  }
  func.func @transform_5(%arg0: i32) -> (i32, i32) {
    %c0_i32 = arith.constant 0 : i32
    %c0_i32_0 = arith.constant 0 : i32
    %c0_i32_1 = arith.constant 0 : i32
    return %c0_i32, %c0_i32_0 : i32, i32
  }
}

</mosaic_0001>

<llo_original>
// kernel: tpu_custom_call.1
$region0: #{tpu_custom_call.1}
  #allocation0 [shape = 'u32[]', space=smem, size = 0x4, offset = 0x4, fixed_abs, tag = 'smem constant byte address 0x4 - core index']
  #allocation1 [shape = 'u32[144,128]{1,0:T(1,128)}', space=vmem, size = 0x12000, scoped, tag = 'internal scratch']
  %s0 = inlined_call_operand.hbm [shape: f32[8,1024], index: 0, kind: input, shape index: {}]
  %s1 = inlined_call_operand.hbm [shape: bf16[1024,2048], index: 1, kind: input, shape index: {}]
  %s2 = inlined_call_operand.hbm [shape: f32[1,512], index: 2, kind: input, shape index: {}]
  %s3 = inlined_call_operand.hbm [shape: bf16[512,512], index: 3, kind: input, shape index: {}]
  %s4 = inlined_call_operand.hbm [shape: f32[1,128], index: 4, kind: input, shape index: {}]
  %s5 = inlined_call_operand.hbm [shape: f32[8,128], index: 5, kind: output, shape index: {}]
  %s6 = sld [smem:[#allocation0]]
  $region50: #{tpu_custom_call.1} parent=0
    _
  %s8 = ssub.s32 1, %s6
  %s9 = scalar_select 0, %s8, %s6
  $region1: #{tpu_custom_call.1} parent=0
    #allocation2 [shape = 'u8[32768]{0}', space=vmem, size = 0x8000, scoped, tag = 'input window, operand 0, single buffered']
    #allocation3 [shape = 's32[1]{0}', space=sflag, size = 0x4, scoped, tag = 'scoped memory for tpu_custom_call.1']
    #allocation4 [shape = 's32[1]{0}', space=sflag, size = 0x4, scoped, tag = 'scoped memory for tpu_custom_call.1']
    #allocation5 [shape = 'u8[4194304]{0}', space=vmem, size = 0x400000, scoped, tag = 'input window, operand 1, single buffered']
    #allocation6 [shape = 's32[1]{0}', space=sflag, size = 0x4, scoped, tag = 'scoped memory for tpu_custom_call.1']
    #allocation7 [shape = 'u8[2048]{0}', space=vmem, size = 0x800, scoped, tag = 'input window, operand 2, single buffered']
    #allocation8 [shape = 'u8[524288]{0}', space=vmem, size = 0x80000, scoped, tag = 'input window, operand 3, single buffered']
    #allocation9 [shape = 's32[1]{0}', space=sflag, size = 0x4, scoped, tag = 'scoped memory for tpu_custom_call.1']
    #allocation10 [shape = 'u8[512]{0}', space=vmem, size = 0x400, scoped, tag = 'input window, operand 4, single buffered']
    #allocation11 [shape = 'u8[4096]{0}', space=vmem, size = 0x1000, scoped, tag = 'output window, operand 0, single buffered']
    %10 = vsyncpa [#allocation3], 0
    %11 = vsyncpa [#allocation6], 0
    %12 = vsyncpa [#allocation9], 0
    %13 = vsyncpa [#allocation4], 0
    // Predicated region
    $region2: #{tpu_custom_call.1} parent=1 // pred_check
      _
    $region3: #{tpu_custom_call.1} parent=1 // pred_check_branch
      %15 = sbr.rel (0) target = $region5
    $region4: #{tpu_custom_call.1} parent=1 // pred_region
      %s17 = ssub.s32 1024, 1024
      %18 = vsyncadd [#allocation3], %s17
      %s20 = sshll.u32 [#allocation2], 4
      %s21 = int_to_ptr.vmem [resolvable:$true] %s20
      %23 = dma.hbm_to_vmem [thread:$0]  %s0, 1024, %s21, [#allocation3]
    $region5: #{tpu_custom_call.1} parent=1 // pred_fallthru
      _
    // Predicated region
    $region6: #{tpu_custom_call.1} parent=1 // pred_check
      _
    $region7: #{tpu_custom_call.1} parent=1 // pred_check_branch
      %25 = sbr.rel (0) target = $region9
    $region8: #{tpu_custom_call.1} parent=1 // pred_region
      %s27 = ssub.s32 131072, 131072
      %28 = vsyncadd [#allocation6], %s27
      %s29 = sshll.u32 [#allocation5], 4
      %s30 = int_to_ptr.vmem [resolvable:$true] %s29
      %35 = dma.hbm_to_vmem [thread:$0]  %s1, 131072, %s30, [#allocation6], 1024, 1024, 64
    $region9: #{tpu_custom_call.1} parent=1 // pred_fallthru
      _
    // Predicated region
    $region10: #{tpu_custom_call.1} parent=1 // pred_check
      _
    $region11: #{tpu_custom_call.1} parent=1 // pred_check_branch
      %37 = sbr.rel (0) target = $region13
    $region12: #{tpu_custom_call.1} parent=1 // pred_region
      %s39 = ssub.s32 64, 64
      %40 = vsyncadd [#allocation6], %s39
      %s42 = sshll.u32 [#allocation7], 4
      %s43 = int_to_ptr.vmem [resolvable:$true] %s42
      %45 = dma.hbm_to_vmem [thread:$0]  %s2, 64, %s43, [#allocation6]
    $region13: #{tpu_custom_call.1} parent=1 // pred_fallthru
      _
    // Predicated region
    $region14: #{tpu_custom_call.1} parent=1 // pred_check
      _
    $region15: #{tpu_custom_call.1} parent=1 // pred_check_branch
      %47 = sbr.rel (0) target = $region17
    $region16: #{tpu_custom_call.1} parent=1 // pred_region
      %s49 = ssub.s32 16384, 16384
      %50 = vsyncadd [#allocation9], %s49
      %s51 = sshll.u32 [#allocation8], 4
      %s52 = int_to_ptr.vmem [resolvable:$true] %s51
      %57 = dma.hbm_to_vmem [thread:$0]  %s3, 16384, %s52, [#allocation9], 256, 256, 16
    $region17: #{tpu_custom_call.1} parent=1 // pred_fallthru
      _
    // Predicated region
    $region18: #{tpu_custom_call.1} parent=1 // pred_check
      _
    $region19: #{tpu_custom_call.1} parent=1 // pred_check_branch
      %59 = sbr.rel (0) target = $region21
    $region20: #{tpu_custom_call.1} parent=1 // pred_region
      %s61 = ssub.s32 16, 16
      %62 = vsyncadd [#allocation9], %s61
      %s64 = sshll.u32 [#allocation10], 4
      %s65 = int_to_ptr.vmem [resolvable:$true] %s64
      %67 = dma.hbm_to_vmem [thread:$0]  %s4, 16, %s65, [#allocation9]
    $region21: #{tpu_custom_call.1} parent=1 // pred_fallthru
      _
    // Predicated region
    $region22: #{tpu_custom_call.1} parent=1 // pred_check
      _
    $region23: #{tpu_custom_call.1} parent=1 // pred_check_branch
      %69 = sbr.rel (0) target = $region25
    $region24: #{tpu_custom_call.1} parent=1 // pred_region
      %70 = dma.done [#allocation3], 1024
    $region25: #{tpu_custom_call.1} parent=1 // pred_fallthru
      _
    // Predicated region
    $region26: #{tpu_custom_call.1} parent=1 // pred_check
      _
    $region27: #{tpu_custom_call.1} parent=1 // pred_check_branch
      %72 = sbr.rel (0) target = $region29
    $region28: #{tpu_custom_call.1} parent=1 // pred_region
      %73 = dma.done [#allocation6], 131072
    $region29: #{tpu_custom_call.1} parent=1 // pred_fallthru
      _
    // Predicated region
    $region30: #{tpu_custom_call.1} parent=1 // pred_check
      _
    $region31: #{tpu_custom_call.1} parent=1 // pred_check_branch
      %75 = sbr.rel (0) target = $region33
    $region32: #{tpu_custom_call.1} parent=1 // pred_region
      %76 = dma.done [#allocation6], 64
    $region33: #{tpu_custom_call.1} parent=1 // pred_fallthru
      _
    // Predicated region
    $region34: #{tpu_custom_call.1} parent=1 // pred_check
      _
    $region35: #{tpu_custom_call.1} parent=1 // pred_check_branch
      %78 = sbr.rel (0) target = $region37
    $region36: #{tpu_custom_call.1} parent=1 // pred_region
      %79 = dma.done [#allocation9], 16384
    $region37: #{tpu_custom_call.1} parent=1 // pred_fallthru
      _
    // Predicated region
    $region38: #{tpu_custom_call.1} parent=1 // pred_check
      _
    $region39: #{tpu_custom_call.1} parent=1 // pred_check_branch
      %81 = sbr.rel (0) target = $region41
    $region40: #{tpu_custom_call.1} parent=1 // pred_region
      %82 = dma.done [#allocation9], 16
    $region41: #{tpu_custom_call.1} parent=1 // pred_fallthru
      _
    %v83 = vld [vmem:[#allocation2] sm:$0xff]
    %v84 = vld [vmem:[#allocation2 + $0x8] sm:$0xff]
    %v85 = vld [vmem:[#allocation2 + $0x10] sm:$0xff]
    %v86 = vld [vmem:[#allocation2 + $0x18] sm:$0xff]
    %v87 = vld [vmem:[#allocation2 + $0x20] sm:$0xff]
    %v88 = vld [vmem:[#allocation2 + $0x28] sm:$0xff]
    %v89 = vld [vmem:[#allocation2 + $0x30] sm:$0xff]
    %v90 = vld [vmem:[#allocation2 + $0x38] sm:$0xff]
    %v91 = vpack.c.bf16 %v83, %v83
    %v92 = vpack.c.bf16 %v84, %v84
    %v93 = vpack.c.bf16 %v85, %v85
    %v94 = vpack.c.bf16 %v86, %v86
    %v95 = vpack.c.bf16 %v87, %v87
    %v96 = vpack.c.bf16 %v88, %v88
    %v97 = vpack.c.bf16 %v89, %v89
    %v98 = vpack.c.bf16 %v90, %v90
    %v99 = vld [vmem:[#allocation5] sm:$0xff]
    %v100 = vld [vmem:[#allocation5 + $0x8] sm:$0xff]
    %v101 = vld [vmem:[#allocation5 + $0x10] sm:$0xff]
    %v102 = vld [vmem:[#allocation5 + $0x18] sm:$0xff]
    %v103 = vld [vmem:[#allocation5 + $0x20] sm:$0xff]
    %v104 = vld [vmem:[#allocation5 + $0x28] sm:$0xff]
    %v105 = vld [vmem:[#allocation5 + $0x30] sm:$0xff]
    %v106 = vld [vmem:[#allocation5 + $0x38] sm:$0xff]
    %v107 = vld [vmem:[#allocation5 + $0x40] sm:$0xff]
    %v108 = vld [vmem:[#allocation5 + $0x48] sm:$0xff]
    %v109 = vld [vmem:[#allocation5 + $0x50] sm:$0xff]
    %v110 = vld [vmem:[#allocation5 + $0x58] sm:$0xff]
    %v111 = vld [vmem:[#allocation5 + $0x60] sm:$0xff]
    %v112 = vld [vmem:[#allocation5 + $0x68] sm:$0xff]
    %v113 = vld [vmem:[#allocation5 + $0x70] sm:$0xff]
    %v114 = vld [vmem:[#allocation5 + $0x78] sm:$0xff]
    %v115 = vld [vmem:[#allocation5 + $0x80] sm:$0xff]
    %v116 = vld [vmem:[#allocation5 + $0x88] sm:$0xff]
    %v117 = vld [vmem:[#allocation5 + $0x90] sm:$0xff]
    %v118 = vld [vmem:[#allocation5 + $0x98] sm:$0xff]
    %v119 = vld [vmem:[#allocation5 + $0xa0] sm:$0xff]
    %v120 = vld [vmem:[#allocation5 + $0xa8] sm:$0xff]
    %v121 = vld [vmem:[#allocation5 + $0xb0] sm:$0xff]
    %v122 = vld [vmem:[#allocation5 + $0xb8] sm:$0xff]
    %v123 = vld [vmem:[#allocation5 + $0xc0] sm:$0xff]
    %v124 = vld [vmem:[#allocation5 + $0xc8] sm:$0xff]
    %v125 = vld [vmem:[#allocation5 + $0xd0] sm:$0xff]
    %v126 = vld [vmem:[#allocation5 + $0xd8] sm:$0xff]
    %v127 = vld [vmem:[#allocation5 + $0xe0] sm:$0xff]
    %v128 = vld [vmem:[#allocation5 + $0xe8] sm:$0xff]
    %v129 = vld [vmem:[#allocation5 + $0xf0] sm:$0xff]
    %v130 = vld [vmem:[#allocation5 + $0xf8] sm:$0xff]
    %v131 = vld [vmem:[#allocation5 + $0x100] sm:$0xff]
    %v132 = vld [vmem:[#allocation5 + $0x108] sm:$0xff]
    %v133 = vld [vmem:[#allocation5 + $0x110] sm:$0xff]
    %v134 = vld [vmem:[#allocation5 + $0x118] sm:$0xff]
    %v135 = vld [vmem:[#allocation5 + $0x120] sm:$0xff]
    %v136 = vld [vmem:[#allocation5 + $0x128] sm:$0xff]
    %v137 = vld [vmem:[#allocation5 + $0x130] sm:$0xff]
    %v138 = vld [vmem:[#allocation5 + $0x138] sm:$0xff]
    %v139 = vld [vmem:[#allocation5 + $0x140] sm:$0xff]
    %v140 = vld [vmem:[#allocation5 + $0x148] sm:$0xff]
    %v141 = vld [vmem:[#allocation5 + $0x150] sm:$0xff]
    %v142 = vld [vmem:[#allocation5 + $0x158] sm:$0xff]
    %v143 = vld [vmem:[#allocation5 + $0x160] sm:$0xff]
    %v144 = vld [vmem:[#allocation5 + $0x168] sm:$0xff]
    %v145 = vld [vmem:[#allocation5 + $0x170] sm:$0xff]
    %v146 = vld [vmem:[#allocation5 + $0x178] sm:$0xff]
    %v147 = vld [vmem:[#allocation5 + $0x180] sm:$0xff]
    %v148 = vld [vmem:[#allocation5 + $0x188] sm:$0xff]
    %v149 = vld [vmem:[#allocation5 + $0x190] sm:$0xff]
    %v150 = vld [vmem:[#allocation5 + $0x198] sm:$0xff]
    %v151 = vld [vmem:[#allocation5 + $0x1a0] sm:$0xff]
    %v152 = vld [vmem:[#allocation5 + $0x1a8] sm:$0xff]
    %v153 = vld [vmem:[#allocation5 + $0x1b0] sm:$0xff]
    %v154 = vld [vmem:[#allocation5 + $0x1b8] sm:$0xff]
    %v155 = vld [vmem:[#allocation5 + $0x1c0] sm:$0xff]
    %v156 = vld [vmem:[#allocation5 + $0x1c8] sm:$0xff]
    %v157 = vld [vmem:[#allocation5 + $0x1d0] sm:$0xff]
    %v158 = vld [vmem:[#allocation5 + $0x1d8] sm:$0xff]
    %v159 = vld [vmem:[#allocation5 + $0x1e0] sm:$0xff]
    %v160 = vld [vmem:[#allocation5 + $0x1e8] sm:$0xff]
    %v161 = vld [vmem:[#allocation5 + $0x1f0] sm:$0xff]
    %v162 = vld [vmem:[#allocation5 + $0x1f8] sm:$0xff]
    %v163 = vld [vmem:[#allocation5 + $0x200] sm:$0xff]
    %v164 = vld [vmem:[#allocation5 + $0x208] sm:$0xff]
    %v165 = vld [vmem:[#allocation5 + $0x210] sm:$0xff]
    %v166 = vld [vmem:[#allocation5 + $0x218] sm:$0xff]
    %v167 = vld [vmem:[#allocation5 + $0x220] sm:$0xff]
    %v168 = vld [vmem:[#allocation5 + $0x228] sm:$0xff]
    %v169 = vld [vmem:[#allocation5 + $0x230] sm:$0xff]
    %v170 = vld [vmem:[#allocation5 + $0x238] sm:$0xff]
    %v171 = vld [vmem:[#allocation5 + $0x240] sm:$0xff]
    %v172 = vld [vmem:[#allocation5 + $0x248] sm:$0xff]
    %v173 = vld [vmem:[#allocation5 + $0x250] sm:$0xff]
    %v174 = vld [vmem:[#allocation5 + $0x258] sm:$0xff]
    %v175 = vld [vmem:[#allocation5 + $0x260] sm:$0xff]
    %v176 = vld [vmem:[#allocation5 + $0x268] sm:$0xff]
    %v177 = vld [vmem:[#allocation5 + $0x270] sm:$0xff]
    %v178 = vld [vmem:[#allocation5 + $0x278] sm:$0xff]
    %v179 = vld [vmem:[#allocation5 + $0x280] sm:$0xff]
    %v180 = vld [vmem:[#allocation5 + $0x288] sm:$0xff]
    %v181 = vld [vmem:[#allocation5 + $0x290] sm:$0xff]
    %v182 = vld [vmem:[#allocation5 + $0x298] sm:$0xff]
    %v183 = vld [vmem:[#allocation5 + $0x2a0] sm:$0xff]
    %v184 = vld [vmem:[#allocation5 + $0x2a8] sm:$0xff]
    %v185 = vld [vmem:[#allocation5 + $0x2b0] sm:$0xff]
    %v186 = vld [vmem:[#allocation5 + $0x2b8] sm:$0xff]
    %v187 = vld [vmem:[#allocation5 + $0x2c0] sm:$0xff]
    %v188 = vld [vmem:[#allocation5 + $0x2c8] sm:$0xff]
    %v189 = vld [vmem:[#allocation5 + $0x2d0] sm:$0xff]
    %v190 = vld [vmem:[#allocation5 + $0x2d8] sm:$0xff]
    %v191 = vld [vmem:[#allocation5 + $0x2e0] sm:$0xff]
    %v192 = vld [vmem:[#allocation5 + $0x2e8] sm:$0xff]
    %v193 = vld [vmem:[#allocation5 + $0x2f0] sm:$0xff]
    %v194 = vld [vmem:[#allocation5 + $0x2f8] sm:$0xff]
    %v195 = vld [vmem:[#allocation5 + $0x300] sm:$0xff]
    %v196 = vld [vmem:[#allocation5 + $0x308] sm:$0xff]
    %v197 = vld [vmem:[#allocation5 + $0x310] sm:$0xff]
    %v198 = vld [vmem:[#allocation5 + $0x318] sm:$0xff]
    %v199 = vld [vmem:[#allocation5 + $0x320] sm:$0xff]
    %v200 = vld [vmem:[#allocation5 + $0x328] sm:$0xff]
    %v201 = vld [vmem:[#allocation5 + $0x330] sm:$0xff]
    %v202 = vld [vmem:[#allocation5 + $0x338] sm:$0xff]
    %v203 = vld [vmem:[#allocation5 + $0x340] sm:$0xff]
    %v204 = vld [vmem:[#allocation5 + $0x348] sm:$0xff]
    %v205 = vld [vmem:[#allocation5 + $0x350] sm:$0xff]
    %v206 = vld [vmem:[#allocation5 + $0x358] sm:$0xff]
    %v207 = vld [vmem:[#allocation5 + $0x360] sm:$0xff]
    %v208 = vld [vmem:[#allocation5 + $0x368] sm:$0xff]
    %v209 = vld [vmem:[#allocation5 + $0x370] sm:$0xff]
    %v210 = vld [vmem:[#allocation5 + $0x378] sm:$0xff]
    %v211 = vld [vmem:[#allocation5 + $0x380] sm:$0xff]
    %v212 = vld [vmem:[#allocation5 + $0x388] sm:$0xff]
    %v213 = vld [vmem:[#allocation5 + $0x390] sm:$0xff]
    %v214 = vld [vmem:[#allocation5 + $0x398] sm:$0xff]
    %v215 = vld [vmem:[#allocation5 + $0x3a0] sm:$0xff]
    %v216 = vld [vmem:[#allocation5 + $0x3a8] sm:$0xff]
    %v217 = vld [vmem:[#allocation5 + $0x3b0] sm:$0xff]
    %v218 = vld [vmem:[#allocation5 + $0x3b8] sm:$0xff]
    %v219 = vld [vmem:[#allocation5 + $0x3c0] sm:$0xff]
    %v220 = vld [vmem:[#allocation5 + $0x3c8] sm:$0xff]
    %v221 = vld [vmem:[#allocation5 + $0x3d0] sm:$0xff]
    %v222 = vld [vmem:[#allocation5 + $0x3d8] sm:$0xff]
    %v223 = vld [vmem:[#allocation5 + $0x3e0] sm:$0xff]
    %v224 = vld [vmem:[#allocation5 + $0x3e8] sm:$0xff]
    %v225 = vld [vmem:[#allocation5 + $0x3f0] sm:$0xff]
    %v226 = vld [vmem:[#allocation5 + $0x3f8] sm:$0xff]
    %v227 = vld [vmem:[#allocation5 + $0x400] sm:$0xff]
    %v228 = vld [vmem:[#allocation5 + $0x408] sm:$0xff]
    %v229 = vld [vmem:[#allocation5 + $0x410] sm:$0xff]
    %v230 = vld [vmem:[#allocation5 + $0x418] sm:$0xff]
    %v231 = vld [vmem:[#allocation5 + $0x420] sm:$0xff]
    %v232 = vld [vmem:[#allocation5 + $0x428] sm:$0xff]
    %v233 = vld [vmem:[#allocation5 + $0x430] sm:$0xff]
    %v234 = vld [vmem:[#allocation5 + $0x438] sm:$0xff]
    %v235 = vld [vmem:[#allocation5 + $0x440] sm:$0xff]
    %v236 = vld [vmem:[#allocation5 + $0x448] sm:$0xff]
    %v237 = vld [vmem:[#allocation5 + $0x450] sm:$0xff]
    %v238 = vld [vmem:[#allocation5 + $0x458] sm:$0xff]
    %v239 = vld [vmem:[#allocation5 + $0x460] sm:$0xff]
    %v240 = vld [vmem:[#allocation5 + $0x468] sm:$0xff]
    %v241 = vld [vmem:[#allocation5 + $0x470] sm:$0xff]
    %v242 = vld [vmem:[#allocation5 + $0x478] sm:$0xff]
    %v243 = vld [vmem:[#allocation5 + $0x480] sm:$0xff]
    %v244 = vld [vmem:[#allocation5 + $0x488] sm:$0xff]
    %v245 = vld [vmem:[#allocation5 + $0x490] sm:$0xff]
    %v246 = vld [vmem:[#allocation5 + $0x498] sm:$0xff]
    %v247 = vld [vmem:[#allocation5 + $0x4a0] sm:$0xff]
    %v248 = vld [vmem:[#allocation5 + $0x4a8] sm:$0xff]
    %v249 = vld [vmem:[#allocation5 + $0x4b0] sm:$0xff]
    %v250 = vld [vmem:[#allocation5 + $0x4b8] sm:$0xff]
    %v251 = vld [vmem:[#allocation5 + $0x4c0] sm:$0xff]
    %v252 = vld [vmem:[#allocation5 + $0x4c8] sm:$0xff]
    %v253 = vld [vmem:[#allocation5 + $0x4d0] sm:$0xff]
    %v254 = vld [vmem:[#allocation5 + $0x4d8] sm:$0xff]
    %v255 = vld [vmem:[#allocation5 + $0x4e0] sm:$0xff]
    %v256 = vld [vmem:[#allocation5 + $0x4e8] sm:$0xff]
    %v257 = vld [vmem:[#allocation5 + $0x4f0] sm:$0xff]
    %v258 = vld [vmem:[#allocation5 + $0x4f8] sm:$0xff]
    %v259 = vld [vmem:[#allocation5 + $0x500] sm:$0xff]
    %v260 = vld [vmem:[#allocation5 + $0x508] sm:$0xff]
    %v261 = vld [vmem:[#allocation5 + $0x510] sm:$0xff]
    %v262 = vld [vmem:[#allocation5 + $0x518] sm:$0xff]
    %v263 = vld [vmem:[#allocation5 + $0x520] sm:$0xff]
    %v264 = vld [vmem:[#allocation5 + $0x528] sm:$0xff]
    %v265 = vld [vmem:[#allocation5 + $0x530] sm:$0xff]
    %v266 = vld [vmem:[#allocation5 + $0x538] sm:$0xff]
    %v267 = vld [vmem:[#allocation5 + $0x540] sm:$0xff]
    %v268 = vld [vmem:[#allocation5 + $0x548] sm:$0xff]
    %v269 = vld [vmem:[#allocation5 + $0x550] sm:$0xff]
    %v270 = vld [vmem:[#allocation5 + $0x558] sm:$0xff]
    %v271 = vld [vmem:[#allocation5 + $0x560] sm:$0xff]
    %v272 = vld [vmem:[#allocation5 + $0x568] sm:$0xff]
    %v273 = vld [vmem:[#allocation5 + $0x570] sm:$0xff]
    %v274 = vld [vmem:[#allocation5 + $0x578] sm:$0xff]
    %v275 = vld [vmem:[#allocation5 + $0x580] sm:$0xff]
    %v276 = vld [vmem:[#allocation5 + $0x588] sm:$0xff]
    %v277 = vld [vmem:[#allocation5 + $0x590] sm:$0xff]
    %v278 = vld [vmem:[#allocation5 + $0x598] sm:$0xff]
    %v279 = vld [vmem:[#allocation5 + $0x5a0] sm:$0xff]
    %v280 = vld [vmem:[#allocation5 + $0x5a8] sm:$0xff]
    %v281 = vld [vmem:[#allocation5 + $0x5b0] sm:$0xff]
    %v282 = vld [vmem:[#allocation5 + $0x5b8] sm:$0xff]
    %v283 = vld [vmem:[#allocation5 + $0x5c0] sm:$0xff]
    %v284 = vld [vmem:[#allocation5 + $0x5c8] sm:$0xff]
    %v285 = vld [vmem:[#allocation5 + $0x5d0] sm:$0xff]
    %v286 = vld [vmem:[#allocation5 + $0x5d8] sm:$0xff]
    %v287 = vld [vmem:[#allocation5 + $0x5e0] sm:$0xff]
    %v288 = vld [vmem:[#allocation5 + $0x5e8] sm:$0xff]
    %v289 = vld [vmem:[#allocation5 + $0x5f0] sm:$0xff]
    %v290 = vld [vmem:[#allocation5 + $0x5f8] sm:$0xff]
    %v291 = vld [vmem:[#allocation5 + $0x600] sm:$0xff]
    %v292 = vld [vmem:[#allocation5 + $0x608] sm:$0xff]
    %v293 = vld [vmem:[#allocation5 + $0x610] sm:$0xff]
    %v294 = vld [vmem:[#allocation5 + $0x618] sm:$0xff]
    %v295 = vld [vmem:[#allocation5 + $0x620] sm:$0xff]
    %v296 = vld [vmem:[#allocation5 + $0x628] sm:$0xff]
    %v297 = vld [vmem:[#allocation5 + $0x630] sm:$0xff]
    %v298 = vld [vmem:[#allocation5 + $0x638] sm:$0xff]
    %v299 = vld [vmem:[#allocation5 + $0x640] sm:$0xff]
    %v300 = vld [vmem:[#allocation5 + $0x648] sm:$0xff]
    %v301 = vld [vmem:[#allocation5 + $0x650] sm:$0xff]
    %v302 = vld [vmem:[#allocation5 + $0x658] sm:$0xff]
    %v303 = vld [vmem:[#allocation5 + $0x660] sm:$0xff]
    %v304 = vld [vmem:[#allocation5 + $0x668] sm:$0xff]
    %v305 = vld [vmem:[#allocation5 + $0x670] sm:$0xff]
    %v306 = vld [vmem:[#allocation5 + $0x678] sm:$0xff]
    %v307 = vld [vmem:[#allocation5 + $0x680] sm:$0xff]
    %v308 = vld [vmem:[#allocation5 + $0x688] sm:$0xff]
    %v309 = vld [vmem:[#allocation5 + $0x690] sm:$0xff]
    %v310 = vld [vmem:[#allocation5 + $0x698] sm:$0xff]
    %v311 = vld [vmem:[#allocation5 + $0x6a0] sm:$0xff]
    %v312 = vld [vmem:[#allocation5 + $0x6a8] sm:$0xff]
    %v313 = vld [vmem:[#allocation5 + $0x6b0] sm:$0xff]
    %v314 = vld [vmem:[#allocation5 + $0x6b8] sm:$0xff]
    %v315 = vld [vmem:[#allocation5 + $0x6c0] sm:$0xff]
    %v316 = vld [vmem:[#allocation5 + $0x6c8] sm:$0xff]
    %v317 = vld [vmem:[#allocation5 + $0x6d0] sm:$0xff]
    %v318 = vld [vmem:[#allocation5 + $0x6d8] sm:$0xff]
    %v319 = vld [vmem:[#allocation5 + $0x6e0] sm:$0xff]
    %v320 = vld [vmem:[#allocation5 + $0x6e8] sm:$0xff]
    %v321 = vld [vmem:[#allocation5 + $0x6f0] sm:$0xff]
    %v322 = vld [vmem:[#allocation5 + $0x6f8] sm:$0xff]
    %v323 = vld [vmem:[#allocation5 + $0x700] sm:$0xff]
    %v324 = vld [vmem:[#allocation5 + $0x708] sm:$0xff]
    %v325 = vld [vmem:[#allocation5 + $0x710] sm:$0xff]
    %v326 = vld [vmem:[#allocation5 + $0x718] sm:$0xff]
    %v327 = vld [vmem:[#allocation5 + $0x720] sm:$0xff]
    %v328 = vld [vmem:[#allocation5 + $0x728] sm:$0xff]
    %v329 = vld [vmem:[#allocation5 + $0x730] sm:$0xff]
    %v330 = vld [vmem:[#allocation5 + $0x738] sm:$0xff]
    %v331 = vld [vmem:[#allocation5 + $0x740] sm:$0xff]
    %v332 = vld [vmem:[#allocation5 + $0x748] sm:$0xff]
    %v333 = vld [vmem:[#allocation5 + $0x750] sm:$0xff]
    %v334 = vld [vmem:[#allocation5 + $0x758] sm:$0xff]
    %v335 = vld [vmem:[#allocation5 + $0x760] sm:$0xff]
    %v336 = vld [vmem:[#allocation5 + $0x768] sm:$0xff]
    %v337 = vld [vmem:[#allocation5 + $0x770] sm:$0xff]
    %v338 = vld [vmem:[#allocation5 + $0x778] sm:$0xff]
    %v339 = vld [vmem:[#allocation5 + $0x780] sm:$0xff]
    %v340 = vld [vmem:[#allocation5 + $0x788] sm:$0xff]
    %v341 = vld [vmem:[#allocation5 + $0x790] sm:$0xff]
    %v342 = vld [vmem:[#allocation5 + $0x798] sm:$0xff]
    %v343 = vld [vmem:[#allocation5 + $0x7a0] sm:$0xff]
    %v344 = vld [vmem:[#allocation5 + $0x7a8] sm:$0xff]
    %v345 = vld [vmem:[#allocation5 + $0x7b0] sm:$0xff]
    %v346 = vld [vmem:[#allocation5 + $0x7b8] sm:$0xff]
    %v347 = vld [vmem:[#allocation5 + $0x7c0] sm:$0xff]
    %v348 = vld [vmem:[#allocation5 + $0x7c8] sm:$0xff]
    %v349 = vld [vmem:[#allocation5 + $0x7d0] sm:$0xff]
    %v350 = vld [vmem:[#allocation5 + $0x7d8] sm:$0xff]
    %v351 = vld [vmem:[#allocation5 + $0x7e0] sm:$0xff]
    %v352 = vld [vmem:[#allocation5 + $0x7e8] sm:$0xff]
    %v353 = vld [vmem:[#allocation5 + $0x7f0] sm:$0xff]
    %v354 = vld [vmem:[#allocation5 + $0x7f8] sm:$0xff]
    %v355 = vld [vmem:[#allocation5 + $0x800] sm:$0xff]
    %v356 = vld [vmem:[#allocation5 + $0x808] sm:$0xff]
    %v357 = vld [vmem:[#allocation5 + $0x810] sm:$0xff]
    %v358 = vld [vmem:[#allocation5 + $0x818] sm:$0xff]
    %v359 = vld [vmem:[#allocation5 + $0x820] sm:$0xff]
    %v360 = vld [vmem:[#allocation5 + $0x828] sm:$0xff]
    %v361 = vld [vmem:[#allocation5 + $0x830] sm:$0xff]
    %v362 = vld [vmem:[#allocation5 + $0x838] sm:$0xff]
    %v363 = vld [vmem:[#allocation5 + $0x840] sm:$0xff]
    %v364 = vld [vmem:[#allocation5 + $0x848] sm:$0xff]
    %v365 = vld [vmem:[#allocation5 + $0x850] sm:$0xff]
    %v366 = vld [vmem:[#allocation5 + $0x858] sm:$0xff]
    %v367 = vld [vmem:[#allocation5 + $0x860] sm:$0xff]
    %v368 = vld [vmem:[#allocation5 + $0x868] sm:$0xff]
    %v369 = vld [vmem:[#allocation5 + $0x870] sm:$0xff]
    %v370 = vld [vmem:[#allocation5 + $0x878] sm:$0xff]
    %v371 = vld [vmem:[#allocation5 + $0x880] sm:$0xff]
    %v372 = vld [vmem:[#allocation5 + $0x888] sm:$0xff]
    %v373 = vld [vmem:[#allocation5 + $0x890] sm:$0xff]
    %v374 = vld [vmem:[#allocation5 + $0x898] sm:$0xff]
    %v375 = vld [vmem:[#allocation5 + $0x8a0] sm:$0xff]
    %v376 = vld [vmem:[#allocation5 + $0x8a8] sm:$0xff]
    %v377 = vld [vmem:[#allocation5 + $0x8b0] sm:$0xff]
    %v378 = vld [vmem:[#allocation5 + $0x8b8] sm:$0xff]
    %v379 = vld [vmem:[#allocation5 + $0x8c0] sm:$0xff]
    %v380 = vld [vmem:[#allocation5 + $0x8c8] sm:$0xff]
    %v381 = vld [vmem:[#allocation5 + $0x8d0] sm:$0xff]
    %v382 = vld [vmem:[#allocation5 + $0x8d8] sm:$0xff]
    %v383 = vld [vmem:[#allocation5 + $0x8e0] sm:$0xff]
    %v384 = vld [vmem:[#allocation5 + $0x8e8] sm:$0xff]
    %v385 = vld [vmem:[#allocation5 + $0x8f0] sm:$0xff]
    %v386 = vld [vmem:[#allocation5 + $0x8f8] sm:$0xff]
    %v387 = vld [vmem:[#allocation5 + $0x900] sm:$0xff]
    %v388 = vld [vmem:[#allocation5 + $0x908] sm:$0xff]
    %v389 = vld [vmem:[#allocation5 + $0x910] sm:$0xff]
    %v390 = vld [vmem:[#allocation5 + $0x918] sm:$0xff]
    %v391 = vld [vmem:[#allocation5 + $0x920] sm:$0xff]
    %v392 = vld [vmem:[#allocation5 + $0x928] sm:$0xff]
    %v393 = vld [vmem:[#allocation5 + $0x930] sm:$0xff]
    %v394 = vld [vmem:[#allocation5 + $0x938] sm:$0xff]
    %v395 = vld [vmem:[#allocation5 + $0x940] sm:$0xff]
    %v396 = vld [vmem:[#allocation5 + $0x948] sm:$0xff]
    %v397 = vld [vmem:[#allocation5 + $0x950] sm:$0xff]
    %v398 = vld [vmem:[#allocation5 + $0x958] sm:$0xff]
    %v399 = vld [vmem:[#allocation5 + $0x960] sm:$0xff]
    %v400 = vld [vmem:[#allocation5 + $0x968] sm:$0xff]
    %v401 = vld [vmem:[#allocation5 + $0x970] sm:$0xff]
    %v402 = vld [vmem:[#allocation5 + $0x978] sm:$0xff]
    %v403 = vld [vmem:[#allocation5 + $0x980] sm:$0xff]
    %v404 = vld [vmem:[#allocation5 + $0x988] sm:$0xff]
    %v405 = vld [vmem:[#allocation5 + $0x990] sm:$0xff]
    %v406 = vld [vmem:[#allocation5 + $0x998] sm:$0xff]
    %v407 = vld [vmem:[#allocation5 + $0x9a0] sm:$0xff]
    %v408 = vld [vmem:[#allocation5 + $0x9a8] sm:$0xff]
    %v409 = vld [vmem:[#allocation5 + $0x9b0] sm:$0xff]
    %v410 = vld [vmem:[#allocation5 + $0x9b8] sm:$0xff]
    %v411 = vld [vmem:[#allocation5 + $0x9c0] sm:$0xff]
    %v412 = vld [vmem:[#allocation5 + $0x9c8] sm:$0xff]
    %v413 = vld [vmem:[#allocation5 + $0x9d0] sm:$0xff]
    %v414 = vld [vmem:[#allocation5 + $0x9d8] sm:$0xff]
    %v415 = vld [vmem:[#allocation5 + $0x9e0] sm:$0xff]
    %v416 = vld [vmem:[#allocation5 + $0x9e8] sm:$0xff]
    %v417 = vld [vmem:[#allocation5 + $0x9f0] sm:$0xff]
    %v418 = vld [vmem:[#allocation5 + $0x9f8] sm:$0xff]
    %v419 = vld [vmem:[#allocation5 + $0xa00] sm:$0xff]
    %v420 = vld [vmem:[#allocation5 + $0xa08] sm:$0xff]
    %v421 = vld [vmem:[#allocation5 + $0xa10] sm:$0xff]
    %v422 = vld [vmem:[#allocation5 + $0xa18] sm:$0xff]
    %v423 = vld [vmem:[#allocation5 + $0xa20] sm:$0xff]
    %v424 = vld [vmem:[#allocation5 + $0xa28] sm:$0xff]
    %v425 = vld [vmem:[#allocation5 + $0xa30] sm:$0xff]
    %v426 = vld [vmem:[#allocation5 + $0xa38] sm:$0xff]
    %v427 = vld [vmem:[#allocation5 + $0xa40] sm:$0xff]
    %v428 = vld [vmem:[#allocation5 + $0xa48] sm:$0xff]
    %v429 = vld [vmem:[#allocation5 + $0xa50] sm:$0xff]
    %v430 = vld [vmem:[#allocation5 + $0xa58] sm:$0xff]
    %v431 = vld [vmem:[#allocation5 + $0xa60] sm:$0xff]
    %v432 = vld [vmem:[#allocation5 + $0xa68] sm:$0xff]
    %v433 = vld [vmem:[#allocation5 + $0xa70] sm:$0xff]
    %v434 = vld [vmem:[#allocation5 + $0xa78] sm:$0xff]
    %v435 = vld [vmem:[#allocation5 + $0xa80] sm:$0xff]
    %v436 = vld [vmem:[#allocation5 + $0xa88] sm:$0xff]
    %v437 = vld [vmem:[#allocation5 + $0xa90] sm:$0xff]
    %v438 = vld [vmem:[#allocation5 + $0xa98] sm:$0xff]
    %v439 = vld [vmem:[#allocation5 + $0xaa0] sm:$0xff]
    %v440 = vld [vmem:[#allocation5 + $0xaa8] sm:$0xff]
    %v441 = vld [vmem:[#allocation5 + $0xab0] sm:$0xff]
    %v442 = vld [vmem:[#allocation5 + $0xab8] sm:$0xff]
    %v443 = vld [vmem:[#allocation5 + $0xac0] sm:$0xff]
    %v444 = vld [vmem:[#allocation5 + $0xac8] sm:$0xff]
    %v445 = vld [vmem:[#allocation5 + $0xad0] sm:$0xff]
    %v446 = vld [vmem:[#allocation5 + $0xad8] sm:$0xff]
    %v447 = vld [vmem:[#allocation5 + $0xae0] sm:$0xff]
    %v448 = vld [vmem:[#allocation5 + $0xae8] sm:$0xff]
    %v449 = vld [vmem:[#allocation5 + $0xaf0] sm:$0xff]
    %v450 = vld [vmem:[#allocation5 + $0xaf8] sm:$0xff]
    %v451 = vld [vmem:[#allocation5 + $0xb00] sm:$0xff]
    %v452 = vld [vmem:[#allocation5 + $0xb08] sm:$0xff]
    %v453 = vld [vmem:[#allocation5 + $0xb10] sm:$0xff]
    %v454 = vld [vmem:[#allocation5 + $0xb18] sm:$0xff]
    %v455 = vld [vmem:[#allocation5 + $0xb20] sm:$0xff]
    %v456 = vld [vmem:[#allocation5 + $0xb28] sm:$0xff]
    %v457 = vld [vmem:[#allocation5 + $0xb30] sm:$0xff]
    %v458 = vld [vmem:[#allocation5 + $0xb38] sm:$0xff]
    %v459 = vld [vmem:[#allocation5 + $0xb40] sm:$0xff]
    %v460 = vld [vmem:[#allocation5 + $0xb48] sm:$0xff]
    %v461 = vld [vmem:[#allocation5 + $0xb50] sm:$0xff]
    %v462 = vld [vmem:[#allocation5 + $0xb58] sm:$0xff]
    %v463 = vld [vmem:[#allocation5 + $0xb60] sm:$0xff]
    %v464 = vld [vmem:[#allocation5 + $0xb68] sm:$0xff]
    %v465 = vld [vmem:[#allocation5 + $0xb70] sm:$0xff]
    %v466 = vld [vmem:[#allocation5 + $0xb78] sm:$0xff]
    %v467 = vld [vmem:[#allocation5 + $0xb80] sm:$0xff]
    %v468 = vld [vmem:[#allocation5 + $0xb88] sm:$0xff]
    %v469 = vld [vmem:[#allocation5 + $0xb90] sm:$0xff]
    %v470 = vld [vmem:[#allocation5 + $0xb98] sm:$0xff]
    %v471 = vld [vmem:[#allocation5 + $0xba0] sm:$0xff]
    %v472 = vld [vmem:[#allocation5 + $0xba8] sm:$0xff]
    %v473 = vld [vmem:[#allocation5 + $0xbb0] sm:$0xff]
    %v474 = vld [vmem:[#allocation5 + $0xbb8] sm:$0xff]
    %v475 = vld [vmem:[#allocation5 + $0xbc0] sm:$0xff]
    %v476 = vld [vmem:[#allocation5 + $0xbc8] sm:$0xff]
    %v477 = vld [vmem:[#allocation5 + $0xbd0] sm:$0xff]
    %v478 = vld [vmem:[#allocation5 + $0xbd8] sm:$0xff]
    %v479 = vld [vmem:[#allocation5 + $0xbe0] sm:$0xff]
    %v480 = vld [vmem:[#allocation5 + $0xbe8] sm:$0xff]
    %v481 = vld [vmem:[#allocation5 + $0xbf0] sm:$0xff]
    %v482 = vld [vmem:[#allocation5 + $0xbf8] sm:$0xff]
    %v483 = vld [vmem:[#allocation5 + $0xc00] sm:$0xff]
    %v484 = vld [vmem:[#allocation5 + $0xc08] sm:$0xff]
    %v485 = vld [vmem:[#allocation5 + $0xc10] sm:$0xff]
    %v486 = vld [vmem:[#allocation5 + $0xc18] sm:$0xff]
    %v487 = vld [vmem:[#allocation5 + $0xc20] sm:$0xff]
    %v488 = vld [vmem:[#allocation5 + $0xc28] sm:$0xff]
    %v489 = vld [vmem:[#allocation5 + $0xc30] sm:$0xff]
    %v490 = vld [vmem:[#allocation5 + $0xc38] sm:$0xff]
    %v491 = vld [vmem:[#allocation5 + $0xc40] sm:$0xff]
    %v492 = vld [vmem:[#allocation5 + $0xc48] sm:$0xff]
    %v493 = vld [vmem:[#allocation5 + $0xc50] sm:$0xff]
    %v494 = vld [vmem:[#allocation5 + $0xc58] sm:$0xff]
    %v495 = vld [vmem:[#allocation5 + $0xc60] sm:$0xff]
    %v496 = vld [vmem:[#allocation5 + $0xc68] sm:$0xff]
    %v497 = vld [vmem:[#allocation5 + $0xc70] sm:$0xff]
    %v498 = vld [vmem:[#allocation5 + $0xc78] sm:$0xff]
    %v499 = vld [vmem:[#allocation5 + $0xc80] sm:$0xff]
    %v500 = vld [vmem:[#allocation5 + $0xc88] sm:$0xff]
    %v501 = vld [vmem:[#allocation5 + $0xc90] sm:$0xff]
    %v502 = vld [vmem:[#allocation5 + $0xc98] sm:$0xff]
    %v503 = vld [vmem:[#allocation5 + $0xca0] sm:$0xff]
    %v504 = vld [vmem:[#allocation5 + $0xca8] sm:$0xff]
    %v505 = vld [vmem:[#allocation5 + $0xcb0] sm:$0xff]
    %v506 = vld [vmem:[#allocation5 + $0xcb8] sm:$0xff]
    %v507 = vld [vmem:[#allocation5 + $0xcc0] sm:$0xff]
    %v508 = vld [vmem:[#allocation5 + $0xcc8] sm:$0xff]
    %v509 = vld [vmem:[#allocation5 + $0xcd0] sm:$0xff]
    %v510 = vld [vmem:[#allocation5 + $0xcd8] sm:$0xff]
    %v511 = vld [vmem:[#allocation5 + $0xce0] sm:$0xff]
    %v512 = vld [vmem:[#allocation5 + $0xce8] sm:$0xff]
    %v513 = vld [vmem:[#allocation5 + $0xcf0] sm:$0xff]
    %v514 = vld [vmem:[#allocation5 + $0xcf8] sm:$0xff]
    %v515 = vld [vmem:[#allocation5 + $0xd00] sm:$0xff]
    %v516 = vld [vmem:[#allocation5 + $0xd08] sm:$0xff]
    %v517 = vld [vmem:[#allocation5 + $0xd10] sm:$0xff]
    %v518 = vld [vmem:[#allocation5 + $0xd18] sm:$0xff]
    %v519 = vld [vmem:[#allocation5 + $0xd20] sm:$0xff]
    %v520 = vld [vmem:[#allocation5 + $0xd28] sm:$0xff]
    %v521 = vld [vmem:[#allocation5 + $0xd30] sm:$0xff]
    %v522 = vld [vmem:[#allocation5 + $0xd38] sm:$0xff]
    %v523 = vld [vmem:[#allocation5 + $0xd40] sm:$0xff]
    %v524 = vld [vmem:[#allocation5 + $0xd48] sm:$0xff]
    %v525 = vld [vmem:[#allocation5 + $0xd50] sm:$0xff]
    %v526 = vld [vmem:[#allocation5 + $0xd58] sm:$0xff]
    %v527 = vld [vmem:[#allocation5 + $0xd60] sm:$0xff]
    %v528 = vld [vmem:[#allocation5 + $0xd68] sm:$0xff]
    %v529 = vld [vmem:[#allocation5 + $0xd70] sm:$0xff]
    %v530 = vld [vmem:[#allocation5 + $0xd78] sm:$0xff]
    %v531 = vld [vmem:[#allocation5 + $0xd80] sm:$0xff]
    %v532 = vld [vmem:[#allocation5 + $0xd88] sm:$0xff]
    %v533 = vld [vmem:[#allocation5 + $0xd90] sm:$0xff]
    %v534 = vld [vmem:[#allocation5 + $0xd98] sm:$0xff]
    %v535 = vld [vmem:[#allocation5 + $0xda0] sm:$0xff]
    %v536 = vld [vmem:[#allocation5 + $0xda8] sm:$0xff]
    %v537 = vld [vmem:[#allocation5 + $0xdb0] sm:$0xff]
    %v538 = vld [vmem:[#allocation5 + $0xdb8] sm:$0xff]
    %v539 = vld [vmem:[#allocation5 + $0xdc0] sm:$0xff]
    %v540 = vld [vmem:[#allocation5 + $0xdc8] sm:$0xff]
    %v541 = vld [vmem:[#allocation5 + $0xdd0] sm:$0xff]
    %v542 = vld [vmem:[#allocation5 + $0xdd8] sm:$0xff]
    %v543 = vld [vmem:[#allocation5 + $0xde0] sm:$0xff]
    %v544 = vld [vmem:[#allocation5 + $0xde8] sm:$0xff]
    %v545 = vld [vmem:[#allocation5 + $0xdf0] sm:$0xff]
    %v546 = vld [vmem:[#allocation5 + $0xdf8] sm:$0xff]
    %v547 = vld [vmem:[#allocation5 + $0xe00] sm:$0xff]
    %v548 = vld [vmem:[#allocation5 + $0xe08] sm:$0xff]
    %v549 = vld [vmem:[#allocation5 + $0xe10] sm:$0xff]
    %v550 = vld [vmem:[#allocation5 + $0xe18] sm:$0xff]
    %v551 = vld [vmem:[#allocation5 + $0xe20] sm:$0xff]
    %v552 = vld [vmem:[#allocation5 + $0xe28] sm:$0xff]
    %v553 = vld [vmem:[#allocation5 + $0xe30] sm:$0xff]
    %v554 = vld [vmem:[#allocation5 + $0xe38] sm:$0xff]
    %v555 = vld [vmem:[#allocation5 + $0xe40] sm:$0xff]
    %v556 = vld [vmem:[#allocation5 + $0xe48] sm:$0xff]
    %v557 = vld [vmem:[#allocation5 + $0xe50] sm:$0xff]
    %v558 = vld [vmem:[#allocation5 + $0xe58] sm:$0xff]
    %v559 = vld [vmem:[#allocation5 + $0xe60] sm:$0xff]
    %v560 = vld [vmem:[#allocation5 + $0xe68] sm:$0xff]
    %v561 = vld [vmem:[#allocation5 + $0xe70] sm:$0xff]
    %v562 = vld [vmem:[#allocation5 + $0xe78] sm:$0xff]
    %v563 = vld [vmem:[#allocation5 + $0xe80] sm:$0xff]
    %v564 = vld [vmem:[#allocation5 + $0xe88] sm:$0xff]
    %v565 = vld [vmem:[#allocation5 + $0xe90] sm:$0xff]
    %v566 = vld [vmem:[#allocation5 + $0xe98] sm:$0xff]
    %v567 = vld [vmem:[#allocation5 + $0xea0] sm:$0xff]
    %v568 = vld [vmem:[#allocation5 + $0xea8] sm:$0xff]
    %v569 = vld [vmem:[#allocation5 + $0xeb0] sm:$0xff]
    %v570 = vld [vmem:[#allocation5 + $0xeb8] sm:$0xff]
    %v571 = vld [vmem:[#allocation5 + $0xec0] sm:$0xff]
    %v572 = vld [vmem:[#allocation5 + $0xec8] sm:$0xff]
    %v573 = vld [vmem:[#allocation5 + $0xed0] sm:$0xff]
    %v574 = vld [vmem:[#allocation5 + $0xed8] sm:$0xff]
    %v575 = vld [vmem:[#allocation5 + $0xee0] sm:$0xff]
    %v576 = vld [vmem:[#allocation5 + $0xee8] sm:$0xff]
    %v577 = vld [vmem:[#allocation5 + $0xef0] sm:$0xff]
    %v578 = vld [vmem:[#allocation5 + $0xef8] sm:$0xff]
    %v579 = vld [vmem:[#allocation5 + $0xf00] sm:$0xff]
    %v580 = vld [vmem:[#allocation5 + $0xf08] sm:$0xff]
    %v581 = vld [vmem:[#allocation5 + $0xf10] sm:$0xff]
    %v582 = vld [vmem:[#allocation5 + $0xf18] sm:$0xff]
    %v583 = vld [vmem:[#allocation5 + $0xf20] sm:$0xff]
    %v584 = vld [vmem:[#allocation5 + $0xf28] sm:$0xff]
    %v585 = vld [vmem:[#allocation5 + $0xf30] sm:$0xff]
    %v586 = vld [vmem:[#allocation5 + $0xf38] sm:$0xff]
    %v587 = vld [vmem:[#allocation5 + $0xf40] sm:$0xff]
    %v588 = vld [vmem:[#allocation5 + $0xf48] sm:$0xff]
    %v589 = vld [vmem:[#allocation5 + $0xf50] sm:$0xff]
    %v590 = vld [vmem:[#allocation5 + $0xf58] sm:$0xff]
    %v591 = vld [vmem:[#allocation5 + $0xf60] sm:$0xff]
    %v592 = vld [vmem:[#allocation5 + $0xf68] sm:$0xff]
    %v593 = vld [vmem:[#allocation5 + $0xf70] sm:$0xff]
    %v594 = vld [vmem:[#allocation5 + $0xf78] sm:$0xff]
    %v595 = vld [vmem:[#allocation5 + $0xf80] sm:$0xff]
    %v596 = vld [vmem:[#allocation5 + $0xf88] sm:$0xff]
    %v597 = vld [vmem:[#allocation5 + $0xf90] sm:$0xff]
    %v598 = vld [vmem:[#allocation5 + $0xf98] sm:$0xff]
    %v599 = vld [vmem:[#allocation5 + $0xfa0] sm:$0xff]
    %v600 = vld [vmem:[#allocation5 + $0xfa8] sm:$0xff]
    %v601 = vld [vmem:[#allocation5 + $0xfb0] sm:$0xff]
    %v602 = vld [vmem:[#allocation5 + $0xfb8] sm:$0xff]
    %v603 = vld [vmem:[#allocation5 + $0xfc0] sm:$0xff]
    %v604 = vld [vmem:[#allocation5 + $0xfc8] sm:$0xff]
    %v605 = vld [vmem:[#allocation5 + $0xfd0] sm:$0xff]
    %v606 = vld [vmem:[#allocation5 + $0xfd8] sm:$0xff]
    %v607 = vld [vmem:[#allocation5 + $0xfe0] sm:$0xff]
    %v608 = vld [vmem:[#allocation5 + $0xfe8] sm:$0xff]
    %v609 = vld [vmem:[#allocation5 + $0xff0] sm:$0xff]
    %v610 = vld [vmem:[#allocation5 + $0xff8] sm:$0xff]
    %v611 = vld [vmem:[#allocation5 + $0x1000] sm:$0xff]
    %v612 = vld [vmem:[#allocation5 + $0x1008] sm:$0xff]
    %v613 = vld [vmem:[#allocation5 + $0x1010] sm:$0xff]
    %v614 = vld [vmem:[#allocation5 + $0x1018] sm:$0xff]
    %v615 = vld [vmem:[#allocation5 + $0x1020] sm:$0xff]
    %v616 = vld [vmem:[#allocation5 + $0x1028] sm:$0xff]
    %v617 = vld [vmem:[#allocation5 + $0x1030] sm:$0xff]
    %v618 = vld [vmem:[#allocation5 + $0x1038] sm:$0xff]
    %v619 = vld [vmem:[#allocation5 + $0x1040] sm:$0xff]
    %v620 = vld [vmem:[#allocation5 + $0x1048] sm:$0xff]
    %v621 = vld [vmem:[#allocation5 + $0x1050] sm:$0xff]
    %v622 = vld [vmem:[#allocation5 + $0x1058] sm:$0xff]
    %v623 = vld [vmem:[#allocation5 + $0x1060] sm:$0xff]
    %v624 = vld [vmem:[#allocation5 + $0x1068] sm:$0xff]
    %v625 = vld [vmem:[#allocation5 + $0x1070] sm:$0xff]
    %v626 = vld [vmem:[#allocation5 + $0x1078] sm:$0xff]
    %v627 = vld [vmem:[#allocation5 + $0x1080] sm:$0xff]
    %v628 = vld [vmem:[#allocation5 + $0x1088] sm:$0xff]
    %v629 = vld [vmem:[#allocation5 + $0x1090] sm:$0xff]
    %v630 = vld [vmem:[#allocation5 + $0x1098] sm:$0xff]
    %v631 = vld [vmem:[#allocation5 + $0x10a0] sm:$0xff]
    %v632 = vld [vmem:[#allocation5 + $0x10a8] sm:$0xff]
    %v633 = vld [vmem:[#allocation5 + $0x10b0] sm:$0xff]
    %v634 = vld [vmem:[#allocation5 + $0x10b8] sm:$0xff]
    %v635 = vld [vmem:[#allocation5 + $0x10c0] sm:$0xff]
    %v636 = vld [vmem:[#allocation5 + $0x10c8] sm:$0xff]
    %v637 = vld [vmem:[#allocation5 + $0x10d0] sm:$0xff]
    %v638 = vld [vmem:[#allocation5 + $0x10d8] sm:$0xff]
    %v639 = vld [vmem:[#allocation5 + $0x10e0] sm:$0xff]
    %v640 = vld [vmem:[#allocation5 + $0x10e8] sm:$0xff]
    %v641 = vld [vmem:[#allocation5 + $0x10f0] sm:$0xff]
    %v642 = vld [vmem:[#allocation5 + $0x10f8] sm:$0xff]
    %v643 = vld [vmem:[#allocation5 + $0x1100] sm:$0xff]
    %v644 = vld [vmem:[#allocation5 + $0x1108] sm:$0xff]
    %v645 = vld [vmem:[#allocation5 + $0x1110] sm:$0xff]
    %v646 = vld [vmem:[#allocation5 + $0x1118] sm:$0xff]
    %v647 = vld [vmem:[#allocation5 + $0x1120] sm:$0xff]
    %v648 = vld [vmem:[#allocation5 + $0x1128] sm:$0xff]
    %v649 = vld [vmem:[#allocation5 + $0x1130] sm:$0xff]
    %v650 = vld [vmem:[#allocation5 + $0x1138] sm:$0xff]
    %v651 = vld [vmem:[#allocation5 + $0x1140] sm:$0xff]
    %v652 = vld [vmem:[#allocation5 + $0x1148] sm:$0xff]
    %v653 = vld [vmem:[#allocation5 + $0x1150] sm:$0xff]
    %v654 = vld [vmem:[#allocation5 + $0x1158] sm:$0xff]
    %v655 = vld [vmem:[#allocation5 + $0x1160] sm:$0xff]
    %v656 = vld [vmem:[#allocation5 + $0x1168] sm:$0xff]
    %v657 = vld [vmem:[#allocation5 + $0x1170] sm:$0xff]
    %v658 = vld [vmem:[#allocation5 + $0x1178] sm:$0xff]
    %v659 = vld [vmem:[#allocation5 + $0x1180] sm:$0xff]
    %v660 = vld [vmem:[#allocation5 + $0x1188] sm:$0xff]
    %v661 = vld [vmem:[#allocation5 + $0x1190] sm:$0xff]
    %v662 = vld [vmem:[#allocation5 + $0x1198] sm:$0xff]
    %v663 = vld [vmem:[#allocation5 + $0x11a0] sm:$0xff]
    %v664 = vld [vmem:[#allocation5 + $0x11a8] sm:$0xff]
    %v665 = vld [vmem:[#allocation5 + $0x11b0] sm:$0xff]
    %v666 = vld [vmem:[#allocation5 + $0x11b8] sm:$0xff]
    %v667 = vld [vmem:[#allocation5 + $0x11c0] sm:$0xff]
    %v668 = vld [vmem:[#allocation5 + $0x11c8] sm:$0xff]
    %v669 = vld [vmem:[#allocation5 + $0x11d0] sm:$0xff]
    %v670 = vld [vmem:[#allocation5 + $0x11d8] sm:$0xff]
    %v671 = vld [vmem:[#allocation5 + $0x11e0] sm:$0xff]
    %v672 = vld [vmem:[#allocation5 + $0x11e8] sm:$0xff]
    %v673 = vld [vmem:[#allocation5 + $0x11f0] sm:$0xff]
    %v674 = vld [vmem:[#allocation5 + $0x11f8] sm:$0xff]
    %v675 = vld [vmem:[#allocation5 + $0x1200] sm:$0xff]
    %v676 = vld [vmem:[#allocation5 + $0x1208] sm:$0xff]
    %v677 = vld [vmem:[#allocation5 + $0x1210] sm:$0xff]
    %v678 = vld [vmem:[#allocation5 + $0x1218] sm:$0xff]
    %v679 = vld [vmem:[#allocation5 + $0x1220] sm:$0xff]
    %v680 = vld [vmem:[#allocation5 + $0x1228] sm:$0xff]
    %v681 = vld [vmem:[#allocation5 + $0x1230] sm:$0xff]
    %v682 = vld [vmem:[#allocation5 + $0x1238] sm:$0xff]
    %v683 = vld [vmem:[#allocation5 + $0x1240] sm:$0xff]
    %v684 = vld [vmem:[#allocation5 + $0x1248] sm:$0xff]
    %v685 = vld [vmem:[#allocation5 + $0x1250] sm:$0xff]
    %v686 = vld [vmem:[#allocation5 + $0x1258] sm:$0xff]
    %v687 = vld [vmem:[#allocation5 + $0x1260] sm:$0xff]
    %v688 = vld [vmem:[#allocation5 + $0x1268] sm:$0xff]
    %v689 = vld [vmem:[#allocation5 + $0x1270] sm:$0xff]
    %v690 = vld [vmem:[#allocation5 + $0x1278] sm:$0xff]
    %v691 = vld [vmem:[#allocation5 + $0x1280] sm:$0xff]
    %v692 = vld [vmem:[#allocation5 + $0x1288] sm:$0xff]
    %v693 = vld [vmem:[#allocation5 + $0x1290] sm:$0xff]
    %v694 = vld [vmem:[#allocation5 + $0x1298] sm:$0xff]
    %v695 = vld [vmem:[#allocation5 + $0x12a0] sm:$0xff]
    %v696 = vld [vmem:[#allocation5 + $0x12a8] sm:$0xff]
    %v697 = vld [vmem:[#allocation5 + $0x12b0] sm:$0xff]
    %v698 = vld [vmem:[#allocation5 + $0x12b8] sm:$0xff]
    %v699 = vld [vmem:[#allocation5 + $0x12c0] sm:$0xff]
    %v700 = vld [vmem:[#allocation5 + $0x12c8] sm:$0xff]
    %v701 = vld [vmem:[#allocation5 + $0x12d0] sm:$0xff]
    %v702 = vld [vmem:[#allocation5 + $0x12d8] sm:$0xff]
    %v703 = vld [vmem:[#allocation5 + $0x12e0] sm:$0xff]
    %v704 = vld [vmem:[#allocation5 + $0x12e8] sm:$0xff]
    %v705 = vld [vmem:[#allocation5 + $0x12f0] sm:$0xff]
    %v706 = vld [vmem:[#allocation5 + $0x12f8] sm:$0xff]
    %v707 = vld [vmem:[#allocation5 + $0x1300] sm:$0xff]
    %v708 = vld [vmem:[#allocation5 + $0x1308] sm:$0xff]
    %v709 = vld [vmem:[#allocation5 + $0x1310] sm:$0xff]
    %v710 = vld [vmem:[#allocation5 + $0x1318] sm:$0xff]
    %v711 = vld [vmem:[#allocation5 + $0x1320] sm:$0xff]
    %v712 = vld [vmem:[#allocation5 + $0x1328] sm:$0xff]
    %v713 = vld [vmem:[#allocation5 + $0x1330] sm:$0xff]
    %v714 = vld [vmem:[#allocation5 + $0x1338] sm:$0xff]
    %v715 = vld [vmem:[#allocation5 + $0x1340] sm:$0xff]
    %v716 = vld [vmem:[#allocation5 + $0x1348] sm:$0xff]
    %v717 = vld [vmem:[#allocation5 + $0x1350] sm:$0xff]
    %v718 = vld [vmem:[#allocation5 + $0x1358] sm:$0xff]
    %v719 = vld [vmem:[#allocation5 + $0x1360] sm:$0xff]
    %v720 = vld [vmem:[#allocation5 + $0x1368] sm:$0xff]
    %v721 = vld [vmem:[#allocation5 + $0x1370] sm:$0xff]
    %v722 = vld [vmem:[#allocation5 + $0x1378] sm:$0xff]
    %v723 = vld [vmem:[#allocation5 + $0x1380] sm:$0xff]
    %v724 = vld [vmem:[#allocation5 + $0x1388] sm:$0xff]
    %v725 = vld [vmem:[#allocation5 + $0x1390] sm:$0xff]
    %v726 = vld [vmem:[#allocation5 + $0x1398] sm:$0xff]
    %v727 = vld [vmem:[#allocation5 + $0x13a0] sm:$0xff]
    %v728 = vld [vmem:[#allocation5 + $0x13a8] sm:$0xff]
    %v729 = vld [vmem:[#allocation5 + $0x13b0] sm:$0xff]
    %v730 = vld [vmem:[#allocation5 + $0x13b8] sm:$0xff]
    %v731 = vld [vmem:[#allocation5 + $0x13c0] sm:$0xff]
    %v732 = vld [vmem:[#allocation5 + $0x13c8] sm:$0xff]
    %v733 = vld [vmem:[#allocation5 + $0x13d0] sm:$0xff]
    %v734 = vld [vmem:[#allocation5 + $0x13d8] sm:$0xff]
    %v735 = vld [vmem:[#allocation5 + $0x13e0] sm:$0xff]
    %v736 = vld [vmem:[#allocation5 + $0x13e8] sm:$0xff]
    %v737 = vld [vmem:[#allocation5 + $0x13f0] sm:$0xff]
    %v738 = vld [vmem:[#allocation5 + $0x13f8] sm:$0xff]
    %v739 = vld [vmem:[#allocation5 + $0x1400] sm:$0xff]
    %v740 = vld [vmem:[#allocation5 + $0x1408] sm:$0xff]
    %v741 = vld [vmem:[#allocation5 + $0x1410] sm:$0xff]
    %v742 = vld [vmem:[#allocation5 + $0x1418] sm:$0xff]
    %v743 = vld [vmem:[#allocation5 + $0x1420] sm:$0xff]
    %v744 = vld [vmem:[#allocation5 + $0x1428] sm:$0xff]
    %v745 = vld [vmem:[#allocation5 + $0x1430] sm:$0xff]
    %v746 = vld [vmem:[#allocation5 + $0x1438] sm:$0xff]
    %v747 = vld [vmem:[#allocation5 + $0x1440] sm:$0xff]
    %v748 = vld [vmem:[#allocation5 + $0x1448] sm:$0xff]
    %v749 = vld [vmem:[#allocation5 + $0x1450] sm:$0xff]
    %v750 = vld [vmem:[#allocation5 + $0x1458] sm:$0xff]
    %v751 = vld [vmem:[#allocation5 + $0x1460] sm:$0xff]
    %v752 = vld [vmem:[#allocation5 + $0x1468] sm:$0xff]
    %v753 = vld [vmem:[#allocation5 + $0x1470] sm:$0xff]
    %v754 = vld [vmem:[#allocation5 + $0x1478] sm:$0xff]
    %v755 = vld [vmem:[#allocation5 + $0x1480] sm:$0xff]
    %v756 = vld [vmem:[#allocation5 + $0x1488] sm:$0xff]
    %v757 = vld [vmem:[#allocation5 + $0x1490] sm:$0xff]
    %v758 = vld [vmem:[#allocation5 + $0x1498] sm:$0xff]
    %v759 = vld [vmem:[#allocation5 + $0x14a0] sm:$0xff]
    %v760 = vld [vmem:[#allocation5 + $0x14a8] sm:$0xff]
    %v761 = vld [vmem:[#allocation5 + $0x14b0] sm:$0xff]
    %v762 = vld [vmem:[#allocation5 + $0x14b8] sm:$0xff]
    %v763 = vld [vmem:[#allocation5 + $0x14c0] sm:$0xff]
    %v764 = vld [vmem:[#allocation5 + $0x14c8] sm:$0xff]
    %v765 = vld [vmem:[#allocation5 + $0x14d0] sm:$0xff]
    %v766 = vld [vmem:[#allocation5 + $0x14d8] sm:$0xff]
    %v767 = vld [vmem:[#allocation5 + $0x14e0] sm:$0xff]
    %v768 = vld [vmem:[#allocation5 + $0x14e8] sm:$0xff]
    %v769 = vld [vmem:[#allocation5 + $0x14f0] sm:$0xff]
    %v770 = vld [vmem:[#allocation5 + $0x14f8] sm:$0xff]
    %v771 = vld [vmem:[#allocation5 + $0x1500] sm:$0xff]
    %v772 = vld [vmem:[#allocation5 + $0x1508] sm:$0xff]
    %v773 = vld [vmem:[#allocation5 + $0x1510] sm:$0xff]
    %v774 = vld [vmem:[#allocation5 + $0x1518] sm:$0xff]
    %v775 = vld [vmem:[#allocation5 + $0x1520] sm:$0xff]
    %v776 = vld [vmem:[#allocation5 + $0x1528] sm:$0xff]
    %v777 = vld [vmem:[#allocation5 + $0x1530] sm:$0xff]
    %v778 = vld [vmem:[#allocation5 + $0x1538] sm:$0xff]
    %v779 = vld [vmem:[#allocation5 + $0x1540] sm:$0xff]
    %v780 = vld [vmem:[#allocation5 + $0x1548] sm:$0xff]
    %v781 = vld [vmem:[#allocation5 + $0x1550] sm:$0xff]
    %v782 = vld [vmem:[#allocation5 + $0x1558] sm:$0xff]
    %v783 = vld [vmem:[#allocation5 + $0x1560] sm:$0xff]
    %v784 = vld [vmem:[#allocation5 + $0x1568] sm:$0xff]
    %v785 = vld [vmem:[#allocation5 + $0x1570] sm:$0xff]
    %v786 = vld [vmem:[#allocation5 + $0x1578] sm:$0xff]
    %v787 = vld [vmem:[#allocation5 + $0x1580] sm:$0xff]
    %v788 = vld [vmem:[#allocation5 + $0x1588] sm:$0xff]
    %v789 = vld [vmem:[#allocation5 + $0x1590] sm:$0xff]
    %v790 = vld [vmem:[#allocation5 + $0x1598] sm:$0xff]
    %v791 = vld [vmem:[#allocation5 + $0x15a0] sm:$0xff]
    %v792 = vld [vmem:[#allocation5 + $0x15a8] sm:$0xff]
    %v793 = vld [vmem:[#allocation5 + $0x15b0] sm:$0xff]
    %v794 = vld [vmem:[#allocation5 + $0x15b8] sm:$0xff]
    %v795 = vld [vmem:[#allocation5 + $0x15c0] sm:$0xff]
    %v796 = vld [vmem:[#allocation5 + $0x15c8] sm:$0xff]
    %v797 = vld [vmem:[#allocation5 + $0x15d0] sm:$0xff]
    %v798 = vld [vmem:[#allocation5 + $0x15d8] sm:$0xff]
    %v799 = vld [vmem:[#allocation5 + $0x15e0] sm:$0xff]
    %v800 = vld [vmem:[#allocation5 + $0x15e8] sm:$0xff]
    %v801 = vld [vmem:[#allocation5 + $0x15f0] sm:$0xff]
    %v802 = vld [vmem:[#allocation5 + $0x15f8] sm:$0xff]
    %v803 = vld [vmem:[#allocation5 + $0x1600] sm:$0xff]
    %v804 = vld [vmem:[#allocation5 + $0x1608] sm:$0xff]
    %v805 = vld [vmem:[#allocation5 + $0x1610] sm:$0xff]
    %v806 = vld [vmem:[#allocation5 + $0x1618] sm:$0xff]
    %v807 = vld [vmem:[#allocation5 + $0x1620] sm:$0xff]
    %v808 = vld [vmem:[#allocation5 + $0x1628] sm:$0xff]
    %v809 = vld [vmem:[#allocation5 + $0x1630] sm:$0xff]
    %v810 = vld [vmem:[#allocation5 + $0x1638] sm:$0xff]
    %v811 = vld [vmem:[#allocation5 + $0x1640] sm:$0xff]
    %v812 = vld [vmem:[#allocation5 + $0x1648] sm:$0xff]
    %v813 = vld [vmem:[#allocation5 + $0x1650] sm:$0xff]
    %v814 = vld [vmem:[#allocation5 + $0x1658] sm:$0xff]
    %v815 = vld [vmem:[#allocation5 + $0x1660] sm:$0xff]
    %v816 = vld [vmem:[#allocation5 + $0x1668] sm:$0xff]
    %v817 = vld [vmem:[#allocation5 + $0x1670] sm:$0xff]
    %v818 = vld [vmem:[#allocation5 + $0x1678] sm:$0xff]
    %v819 = vld [vmem:[#allocation5 + $0x1680] sm:$0xff]
    %v820 = vld [vmem:[#allocation5 + $0x1688] sm:$0xff]
    %v821 = vld [vmem:[#allocation5 + $0x1690] sm:$0xff]
    %v822 = vld [vmem:[#allocation5 + $0x1698] sm:$0xff]
    %v823 = vld [vmem:[#allocation5 + $0x16a0] sm:$0xff]
    %v824 = vld [vmem:[#allocation5 + $0x16a8] sm:$0xff]
    %v825 = vld [vmem:[#allocation5 + $0x16b0] sm:$0xff]
    %v826 = vld [vmem:[#allocation5 + $0x16b8] sm:$0xff]
    %v827 = vld [vmem:[#allocation5 + $0x16c0] sm:$0xff]
    %v828 = vld [vmem:[#allocation5 + $0x16c8] sm:$0xff]
    %v829 = vld [vmem:[#allocation5 + $0x16d0] sm:$0xff]
    %v830 = vld [vmem:[#allocation5 + $0x16d8] sm:$0xff]
    %v831 = vld [vmem:[#allocation5 + $0x16e0] sm:$0xff]
    %v832 = vld [vmem:[#allocation5 + $0x16e8] sm:$0xff]
    %v833 = vld [vmem:[#allocation5 + $0x16f0] sm:$0xff]
    %v834 = vld [vmem:[#allocation5 + $0x16f8] sm:$0xff]
    %v835 = vld [vmem:[#allocation5 + $0x1700] sm:$0xff]
    %v836 = vld [vmem:[#allocation5 + $0x1708] sm:$0xff]
    %v837 = vld [vmem:[#allocation5 + $0x1710] sm:$0xff]
    %v838 = vld [vmem:[#allocation5 + $0x1718] sm:$0xff]
    %v839 = vld [vmem:[#allocation5 + $0x1720] sm:$0xff]
    %v840 = vld [vmem:[#allocation5 + $0x1728] sm:$0xff]
    %v841 = vld [vmem:[#allocation5 + $0x1730] sm:$0xff]
    %v842 = vld [vmem:[#allocation5 + $0x1738] sm:$0xff]
    %v843 = vld [vmem:[#allocation5 + $0x1740] sm:$0xff]
    %v844 = vld [vmem:[#allocation5 + $0x1748] sm:$0xff]
    %v845 = vld [vmem:[#allocation5 + $0x1750] sm:$0xff]
    %v846 = vld [vmem:[#allocation5 + $0x1758] sm:$0xff]
    %v847 = vld [vmem:[#allocation5 + $0x1760] sm:$0xff]
    %v848 = vld [vmem:[#allocation5 + $0x1768] sm:$0xff]
    %v849 = vld [vmem:[#allocation5 + $0x1770] sm:$0xff]
    %v850 = vld [vmem:[#allocation5 + $0x1778] sm:$0xff]
    %v851 = vld [vmem:[#allocation5 + $0x1780] sm:$0xff]
    %v852 = vld [vmem:[#allocation5 + $0x1788] sm:$0xff]
    %v853 = vld [vmem:[#allocation5 + $0x1790] sm:$0xff]
    %v854 = vld [vmem:[#allocation5 + $0x1798] sm:$0xff]
    %v855 = vld [vmem:[#allocation5 + $0x17a0] sm:$0xff]
    %v856 = vld [vmem:[#allocation5 + $0x17a8] sm:$0xff]
    %v857 = vld [vmem:[#allocation5 + $0x17b0] sm:$0xff]
    %v858 = vld [vmem:[#allocation5 + $0x17b8] sm:$0xff]
    %v859 = vld [vmem:[#allocation5 + $0x17c0] sm:$0xff]
    %v860 = vld [vmem:[#allocation5 + $0x17c8] sm:$0xff]
    %v861 = vld [vmem:[#allocation5 + $0x17d0] sm:$0xff]
    %v862 = vld [vmem:[#allocation5 + $0x17d8] sm:$0xff]
    %v863 = vld [vmem:[#allocation5 + $0x17e0] sm:$0xff]
    %v864 = vld [vmem:[#allocation5 + $0x17e8] sm:$0xff]
    %v865 = vld [vmem:[#allocation5 + $0x17f0] sm:$0xff]
    %v866 = vld [vmem:[#allocation5 + $0x17f8] sm:$0xff]
    %v867 = vld [vmem:[#allocation5 + $0x1800] sm:$0xff]
    %v868 = vld [vmem:[#allocation5 + $0x1808] sm:$0xff]
    %v869 = vld [vmem:[#allocation5 + $0x1810] sm:$0xff]
    %v870 = vld [vmem:[#allocation5 + $0x1818] sm:$0xff]
    %v871 = vld [vmem:[#allocation5 + $0x1820] sm:$0xff]
    %v872 = vld [vmem:[#allocation5 + $0x1828] sm:$0xff]
    %v873 = vld [vmem:[#allocation5 + $0x1830] sm:$0xff]
    %v874 = vld [vmem:[#allocation5 + $0x1838] sm:$0xff]
    %v875 = vld [vmem:[#allocation5 + $0x1840] sm:$0xff]
    %v876 = vld [vmem:[#allocation5 + $0x1848] sm:$0xff]
    %v877 = vld [vmem:[#allocation5 + $0x1850] sm:$0xff]
    %v878 = vld [vmem:[#allocation5 + $0x1858] sm:$0xff]
    %v879 = vld [vmem:[#allocation5 + $0x1860] sm:$0xff]
    %v880 = vld [vmem:[#allocation5 + $0x1868] sm:$0xff]
    %v881 = vld [vmem:[#allocation5 + $0x1870] sm:$0xff]
    %v882 = vld [vmem:[#allocation5 + $0x1878] sm:$0xff]
    %v883 = vld [vmem:[#allocation5 + $0x1880] sm:$0xff]
    %v884 = vld [vmem:[#allocation5 + $0x1888] sm:$0xff]
    %v885 = vld [vmem:[#allocation5 + $0x1890] sm:$0xff]
    %v886 = vld [vmem:[#allocation5 + $0x1898] sm:$0xff]
    %v887 = vld [vmem:[#allocation5 + $0x18a0] sm:$0xff]
    %v888 = vld [vmem:[#allocation5 + $0x18a8] sm:$0xff]
    %v889 = vld [vmem:[#allocation5 + $0x18b0] sm:$0xff]
    %v890 = vld [vmem:[#allocation5 + $0x18b8] sm:$0xff]
    %v891 = vld [vmem:[#allocation5 + $0x18c0] sm:$0xff]
    %v892 = vld [vmem:[#allocation5 + $0x18c8] sm:$0xff]
    %v893 = vld [vmem:[#allocation5 + $0x18d0] sm:$0xff]
    %v894 = vld [vmem:[#allocation5 + $0x18d8] sm:$0xff]
    %v895 = vld [vmem:[#allocation5 + $0x18e0] sm:$0xff]
    %v896 = vld [vmem:[#allocation5 + $0x18e8] sm:$0xff]
    %v897 = vld [vmem:[#allocation5 + $0x18f0] sm:$0xff]
    %v898 = vld [vmem:[#allocation5 + $0x18f8] sm:$0xff]
    %v899 = vld [vmem:[#allocation5 + $0x1900] sm:$0xff]
    %v900 = vld [vmem:[#allocation5 + $0x1908] sm:$0xff]
    %v901 = vld [vmem:[#allocation5 + $0x1910] sm:$0xff]
    %v902 = vld [vmem:[#allocation5 + $0x1918] sm:$0xff]
    %v903 = vld [vmem:[#allocation5 + $0x1920] sm:$0xff]
    %v904 = vld [vmem:[#allocation5 + $0x1928] sm:$0xff]
    %v905 = vld [vmem:[#allocation5 + $0x1930] sm:$0xff]
    %v906 = vld [vmem:[#allocation5 + $0x1938] sm:$0xff]
    %v907 = vld [vmem:[#allocation5 + $0x1940] sm:$0xff]
    %v908 = vld [vmem:[#allocation5 + $0x1948] sm:$0xff]
    %v909 = vld [vmem:[#allocation5 + $0x1950] sm:$0xff]
    %v910 = vld [vmem:[#allocation5 + $0x1958] sm:$0xff]
    %v911 = vld [vmem:[#allocation5 + $0x1960] sm:$0xff]
    %v912 = vld [vmem:[#allocation5 + $0x1968] sm:$0xff]
    %v913 = vld [vmem:[#allocation5 + $0x1970] sm:$0xff]
    %v914 = vld [vmem:[#allocation5 + $0x1978] sm:$0xff]
    %v915 = vld [vmem:[#allocation5 + $0x1980] sm:$0xff]
    %v916 = vld [vmem:[#allocation5 + $0x1988] sm:$0xff]
    %v917 = vld [vmem:[#allocation5 + $0x1990] sm:$0xff]
    %v918 = vld [vmem:[#allocation5 + $0x1998] sm:$0xff]
    %v919 = vld [vmem:[#allocation5 + $0x19a0] sm:$0xff]
    %v920 = vld [vmem:[#allocation5 + $0x19a8] sm:$0xff]
    %v921 = vld [vmem:[#allocation5 + $0x19b0] sm:$0xff]
    %v922 = vld [vmem:[#allocation5 + $0x19b8] sm:$0xff]
    %v923 = vld [vmem:[#allocation5 + $0x19c0] sm:$0xff]
    %v924 = vld [vmem:[#allocation5 + $0x19c8] sm:$0xff]
    %v925 = vld [vmem:[#allocation5 + $0x19d0] sm:$0xff]
    %v926 = vld [vmem:[#allocation5 + $0x19d8] sm:$0xff]
    %v927 = vld [vmem:[#allocation5 + $0x19e0] sm:$0xff]
    %v928 = vld [vmem:[#allocation5 + $0x19e8] sm:$0xff]
    %v929 = vld [vmem:[#allocation5 + $0x19f0] sm:$0xff]
    %v930 = vld [vmem:[#allocation5 + $0x19f8] sm:$0xff]
    %v931 = vld [vmem:[#allocation5 + $0x1a00] sm:$0xff]
    %v932 = vld [vmem:[#allocation5 + $0x1a08] sm:$0xff]
    %v933 = vld [vmem:[#allocation5 + $0x1a10] sm:$0xff]
    %v934 = vld [vmem:[#allocation5 + $0x1a18] sm:$0xff]
    %v935 = vld [vmem:[#allocation5 + $0x1a20] sm:$0xff]
    %v936 = vld [vmem:[#allocation5 + $0x1a28] sm:$0xff]
    %v937 = vld [vmem:[#allocation5 + $0x1a30] sm:$0xff]
    %v938 = vld [vmem:[#allocation5 + $0x1a38] sm:$0xff]
    %v939 = vld [vmem:[#allocation5 + $0x1a40] sm:$0xff]
    %v940 = vld [vmem:[#allocation5 + $0x1a48] sm:$0xff]
    %v941 = vld [vmem:[#allocation5 + $0x1a50] sm:$0xff]
    %v942 = vld [vmem:[#allocation5 + $0x1a58] sm:$0xff]
    %v943 = vld [vmem:[#allocation5 + $0x1a60] sm:$0xff]
    %v944 = vld [vmem:[#allocation5 + $0x1a68] sm:$0xff]
    %v945 = vld [vmem:[#allocation5 + $0x1a70] sm:$0xff]
    %v946 = vld [vmem:[#allocation5 + $0x1a78] sm:$0xff]
    %v947 = vld [vmem:[#allocation5 + $0x1a80] sm:$0xff]
    %v948 = vld [vmem:[#allocation5 + $0x1a88] sm:$0xff]
    %v949 = vld [vmem:[#allocation5 + $0x1a90] sm:$0xff]
    %v950 = vld [vmem:[#allocation5 + $0x1a98] sm:$0xff]
    %v951 = vld [vmem:[#allocation5 + $0x1aa0] sm:$0xff]
    %v952 = vld [vmem:[#allocation5 + $0x1aa8] sm:$0xff]
    %v953 = vld [vmem:[#allocation5 + $0x1ab0] sm:$0xff]
    %v954 = vld [vmem:[#allocation5 + $0x1ab8] sm:$0xff]
    %v955 = vld [vmem:[#allocation5 + $0x1ac0] sm:$0xff]
    %v956 = vld [vmem:[#allocation5 + $0x1ac8] sm:$0xff]
    %v957 = vld [vmem:[#allocation5 + $0x1ad0] sm:$0xff]
    %v958 = vld [vmem:[#allocation5 + $0x1ad8] sm:$0xff]
    %v959 = vld [vmem:[#allocation5 + $0x1ae0] sm:$0xff]
    %v960 = vld [vmem:[#allocation5 + $0x1ae8] sm:$0xff]
    %v961 = vld [vmem:[#allocation5 + $0x1af0] sm:$0xff]
    %v962 = vld [vmem:[#allocation5 + $0x1af8] sm:$0xff]
    %v963 = vld [vmem:[#allocation5 + $0x1b00] sm:$0xff]
    %v964 = vld [vmem:[#allocation5 + $0x1b08] sm:$0xff]
    %v965 = vld [vmem:[#allocation5 + $0x1b10] sm:$0xff]
    %v966 = vld [vmem:[#allocation5 + $0x1b18] sm:$0xff]
    %v967 = vld [vmem:[#allocation5 + $0x1b20] sm:$0xff]
    %v968 = vld [vmem:[#allocation5 + $0x1b28] sm:$0xff]
    %v969 = vld [vmem:[#allocation5 + $0x1b30] sm:$0xff]
    %v970 = vld [vmem:[#allocation5 + $0x1b38] sm:$0xff]
    %v971 = vld [vmem:[#allocation5 + $0x1b40] sm:$0xff]
    %v972 = vld [vmem:[#allocation5 + $0x1b48] sm:$0xff]
    %v973 = vld [vmem:[#allocation5 + $0x1b50] sm:$0xff]
    %v974 = vld [vmem:[#allocation5 + $0x1b58] sm:$0xff]
    %v975 = vld [vmem:[#allocation5 + $0x1b60] sm:$0xff]
    %v976 = vld [vmem:[#allocation5 + $0x1b68] sm:$0xff]
    %v977 = vld [vmem:[#allocation5 + $0x1b70] sm:$0xff]
    %v978 = vld [vmem:[#allocation5 + $0x1b78] sm:$0xff]
    %v979 = vld [vmem:[#allocation5 + $0x1b80] sm:$0xff]
    %v980 = vld [vmem:[#allocation5 + $0x1b88] sm:$0xff]
    %v981 = vld [vmem:[#allocation5 + $0x1b90] sm:$0xff]
    %v982 = vld [vmem:[#allocation5 + $0x1b98] sm:$0xff]
    %v983 = vld [vmem:[#allocation5 + $0x1ba0] sm:$0xff]
    %v984 = vld [vmem:[#allocation5 + $0x1ba8] sm:$0xff]
    %v985 = vld [vmem:[#allocation5 + $0x1bb0] sm:$0xff]
    %v986 = vld [vmem:[#allocation5 + $0x1bb8] sm:$0xff]
    %v987 = vld [vmem:[#allocation5 + $0x1bc0] sm:$0xff]
    %v988 = vld [vmem:[#allocation5 + $0x1bc8] sm:$0xff]
    %v989 = vld [vmem:[#allocation5 + $0x1bd0] sm:$0xff]
    %v990 = vld [vmem:[#allocation5 + $0x1bd8] sm:$0xff]
    %v991 = vld [vmem:[#allocation5 + $0x1be0] sm:$0xff]
    %v992 = vld [vmem:[#allocation5 + $0x1be8] sm:$0xff]
    %v993 = vld [vmem:[#allocation5 + $0x1bf0] sm:$0xff]
    %v994 = vld [vmem:[#allocation5 + $0x1bf8] sm:$0xff]
    %v995 = vld [vmem:[#allocation5 + $0x1c00] sm:$0xff]
    %v996 = vld [vmem:[#allocation5 + $0x1c08] sm:$0xff]
    %v997 = vld [vmem:[#allocation5 + $0x1c10] sm:$0xff]
    %v998 = vld [vmem:[#allocation5 + $0x1c18] sm:$0xff]
    %v999 = vld [vmem:[#allocation5 + $0x1c20] sm:$0xff]
    %v1000 = vld [vmem:[#allocation5 + $0x1c28] sm:$0xff]
    %v1001 = vld [vmem:[#allocation5 + $0x1c30] sm:$0xff]
    %v1002 = vld [vmem:[#allocation5 + $0x1c38] sm:$0xff]
    %v1003 = vld [vmem:[#allocation5 + $0x1c40] sm:$0xff]
    %v1004 = vld [vmem:[#allocation5 + $0x1c48] sm:$0xff]
    %v1005 = vld [vmem:[#allocation5 + $0x1c50] sm:$0xff]
    %v1006 = vld [vmem:[#allocation5 + $0x1c58] sm:$0xff]
    %v1007 = vld [vmem:[#allocation5 + $0x1c60] sm:$0xff]
    %v1008 = vld [vmem:[#allocation5 + $0x1c68] sm:$0xff]
    %v1009 = vld [vmem:[#allocation5 + $0x1c70] sm:$0xff]
    %v1010 = vld [vmem:[#allocation5 + $0x1c78] sm:$0xff]
    %v1011 = vld [vmem:[#allocation5 + $0x1c80] sm:$0xff]
    %v1012 = vld [vmem:[#allocation5 + $0x1c88] sm:$0xff]
    %v1013 = vld [vmem:[#allocation5 + $0x1c90] sm:$0xff]
    %v1014 = vld [vmem:[#allocation5 + $0x1c98] sm:$0xff]
    %v1015 = vld [vmem:[#allocation5 + $0x1ca0] sm:$0xff]
    %v1016 = vld [vmem:[#allocation5 + $0x1ca8] sm:$0xff]
    %v1017 = vld [vmem:[#allocation5 + $0x1cb0] sm:$0xff]
    %v1018 = vld [vmem:[#allocation5 + $0x1cb8] sm:$0xff]
    %v1019 = vld [vmem:[#allocation5 + $0x1cc0] sm:$0xff]
    %v1020 = vld [vmem:[#allocation5 + $0x1cc8] sm:$0xff]
    %v1021 = vld [vmem:[#allocation5 + $0x1cd0] sm:$0xff]
    %v1022 = vld [vmem:[#allocation5 + $0x1cd8] sm:$0xff]
    %v1023 = vld [vmem:[#allocation5 + $0x1ce0] sm:$0xff]
    %v1024 = vld [vmem:[#allocation5 + $0x1ce8] sm:$0xff]
    %v1025 = vld [vmem:[#allocation5 + $0x1cf0] sm:$0xff]
    %v1026 = vld [vmem:[#allocation5 + $0x1cf8] sm:$0xff]
    %v1027 = vld [vmem:[#allocation5 + $0x1d00] sm:$0xff]
    %v1028 = vld [vmem:[#allocation5 + $0x1d08] sm:$0xff]
    %v1029 = vld [vmem:[#allocation5 + $0x1d10] sm:$0xff]
    %v1030 = vld [vmem:[#allocation5 + $0x1d18] sm:$0xff]
    %v1031 = vld [vmem:[#allocation5 + $0x1d20] sm:$0xff]
    %v1032 = vld [vmem:[#allocation5 + $0x1d28] sm:$0xff]
    %v1033 = vld [vmem:[#allocation5 + $0x1d30] sm:$0xff]
    %v1034 = vld [vmem:[#allocation5 + $0x1d38] sm:$0xff]
    %v1035 = vld [vmem:[#allocation5 + $0x1d40] sm:$0xff]
    %v1036 = vld [vmem:[#allocation5 + $0x1d48] sm:$0xff]
    %v1037 = vld [vmem:[#allocation5 + $0x1d50] sm:$0xff]
    %v1038 = vld [vmem:[#allocation5 + $0x1d58] sm:$0xff]
    %v1039 = vld [vmem:[#allocation5 + $0x1d60] sm:$0xff]
    %v1040 = vld [vmem:[#allocation5 + $0x1d68] sm:$0xff]
    %v1041 = vld [vmem:[#allocation5 + $0x1d70] sm:$0xff]
    %v1042 = vld [vmem:[#allocation5 + $0x1d78] sm:$0xff]
    %v1043 = vld [vmem:[#allocation5 + $0x1d80] sm:$0xff]
    %v1044 = vld [vmem:[#allocation5 + $0x1d88] sm:$0xff]
    %v1045 = vld [vmem:[#allocation5 + $0x1d90] sm:$0xff]
    %v1046 = vld [vmem:[#allocation5 + $0x1d98] sm:$0xff]
    %v1047 = vld [vmem:[#allocation5 + $0x1da0] sm:$0xff]
    %v1048 = vld [vmem:[#allocation5 + $0x1da8] sm:$0xff]
    %v1049 = vld [vmem:[#allocation5 + $0x1db0] sm:$0xff]
    %v1050 = vld [vmem:[#allocation5 + $0x1db8] sm:$0xff]
    %v1051 = vld [vmem:[#allocation5 + $0x1dc0] sm:$0xff]
    %v1052 = vld [vmem:[#allocation5 + $0x1dc8] sm:$0xff]
    %v1053 = vld [vmem:[#allocation5 + $0x1dd0] sm:$0xff]
    %v1054 = vld [vmem:[#allocation5 + $0x1dd8] sm:$0xff]
    %v1055 = vld [vmem:[#allocation5 + $0x1de0] sm:$0xff]
    %v1056 = vld [vmem:[#allocation5 + $0x1de8] sm:$0xff]
    %v1057 = vld [vmem:[#allocation5 + $0x1df0] sm:$0xff]
    %v1058 = vld [vmem:[#allocation5 + $0x1df8] sm:$0xff]
    %v1059 = vld [vmem:[#allocation5 + $0x1e00] sm:$0xff]
    %v1060 = vld [vmem:[#allocation5 + $0x1e08] sm:$0xff]
    %v1061 = vld [vmem:[#allocation5 + $0x1e10] sm:$0xff]
    %v1062 = vld [vmem:[#allocation5 + $0x1e18] sm:$0xff]
    %v1063 = vld [vmem:[#allocation5 + $0x1e20] sm:$0xff]
    %v1064 = vld [vmem:[#allocation5 + $0x1e28] sm:$0xff]
    %v1065 = vld [vmem:[#allocation5 + $0x1e30] sm:$0xff]
    %v1066 = vld [vmem:[#allocation5 + $0x1e38] sm:$0xff]
    %v1067 = vld [vmem:[#allocation5 + $0x1e40] sm:$0xff]
    %v1068 = vld [vmem:[#allocation5 + $0x1e48] sm:$0xff]
    %v1069 = vld [vmem:[#allocation5 + $0x1e50] sm:$0xff]
    %v1070 = vld [vmem:[#allocation5 + $0x1e58] sm:$0xff]
    %v1071 = vld [vmem:[#allocation5 + $0x1e60] sm:$0xff]
    %v1072 = vld [vmem:[#allocation5 + $0x1e68] sm:$0xff]
    %v1073 = vld [vmem:[#allocation5 + $0x1e70] sm:$0xff]
    %v1074 = vld [vmem:[#allocation5 + $0x1e78] sm:$0xff]
    %v1075 = vld [vmem:[#allocation5 + $0x1e80] sm:$0xff]
    %v1076 = vld [vmem:[#allocation5 + $0x1e88] sm:$0xff]
    %v1077 = vld [vmem:[#allocation5 + $0x1e90] sm:$0xff]
    %v1078 = vld [vmem:[#allocation5 + $0x1e98] sm:$0xff]
    %v1079 = vld [vmem:[#allocation5 + $0x1ea0] sm:$0xff]
    %v1080 = vld [vmem:[#allocation5 + $0x1ea8] sm:$0xff]
    %v1081 = vld [vmem:[#allocation5 + $0x1eb0] sm:$0xff]
    %v1082 = vld [vmem:[#allocation5 + $0x1eb8] sm:$0xff]
    %v1083 = vld [vmem:[#allocation5 + $0x1ec0] sm:$0xff]
    %v1084 = vld [vmem:[#allocation5 + $0x1ec8] sm:$0xff]
    %v1085 = vld [vmem:[#allocation5 + $0x1ed0] sm:$0xff]
    %v1086 = vld [vmem:[#allocation5 + $0x1ed8] sm:$0xff]
    %v1087 = vld [vmem:[#allocation5 + $0x1ee0] sm:$0xff]
    %v1088 = vld [vmem:[#allocation5 + $0x1ee8] sm:$0xff]
    %v1089 = vld [vmem:[#allocation5 + $0x1ef0] sm:$0xff]
    %v1090 = vld [vmem:[#allocation5 + $0x1ef8] sm:$0xff]
    %v1091 = vld [vmem:[#allocation5 + $0x1f00] sm:$0xff]
    %v1092 = vld [vmem:[#allocation5 + $0x1f08] sm:$0xff]
    %v1093 = vld [vmem:[#allocation5 + $0x1f10] sm:$0xff]
    %v1094 = vld [vmem:[#allocation5 + $0x1f18] sm:$0xff]
    %v1095 = vld [vmem:[#allocation5 + $0x1f20] sm:$0xff]
    %v1096 = vld [vmem:[#allocation5 + $0x1f28] sm:$0xff]
    %v1097 = vld [vmem:[#allocation5 + $0x1f30] sm:$0xff]
    %v1098 = vld [vmem:[#allocation5 + $0x1f38] sm:$0xff]
    %v1099 = vld [vmem:[#allocation5 + $0x1f40] sm:$0xff]
    %v1100 = vld [vmem:[#allocation5 + $0x1f48] sm:$0xff]
    %v1101 = vld [vmem:[#allocation5 + $0x1f50] sm:$0xff]
    %v1102 = vld [vmem:[#allocation5 + $0x1f58] sm:$0xff]
    %v1103 = vld [vmem:[#allocation5 + $0x1f60] sm:$0xff]
    %v1104 = vld [vmem:[#allocation5 + $0x1f68] sm:$0xff]
    %v1105 = vld [vmem:[#allocation5 + $0x1f70] sm:$0xff]
    %v1106 = vld [vmem:[#allocation5 + $0x1f78] sm:$0xff]
    %v1107 = vld [vmem:[#allocation5 + $0x1f80] sm:$0xff]
    %v1108 = vld [vmem:[#allocation5 + $0x1f88] sm:$0xff]
    %v1109 = vld [vmem:[#allocation5 + $0x1f90] sm:$0xff]
    %v1110 = vld [vmem:[#allocation5 + $0x1f98] sm:$0xff]
    %v1111 = vld [vmem:[#allocation5 + $0x1fa0] sm:$0xff]
    %v1112 = vld [vmem:[#allocation5 + $0x1fa8] sm:$0xff]
    %v1113 = vld [vmem:[#allocation5 + $0x1fb0] sm:$0xff]
    %v1114 = vld [vmem:[#allocation5 + $0x1fb8] sm:$0xff]
    %v1115 = vld [vmem:[#allocation5 + $0x1fc0] sm:$0xff]
    %v1116 = vld [vmem:[#allocation5 + $0x1fc8] sm:$0xff]
    %v1117 = vld [vmem:[#allocation5 + $0x1fd0] sm:$0xff]
    %v1118 = vld [vmem:[#allocation5 + $0x1fd8] sm:$0xff]
    %v1119 = vld [vmem:[#allocation5 + $0x1fe0] sm:$0xff]
    %v1120 = vld [vmem:[#allocation5 + $0x1fe8] sm:$0xff]
    %v1121 = vld [vmem:[#allocation5 + $0x1ff0] sm:$0xff]
    %v1122 = vld [vmem:[#allocation5 + $0x1ff8] sm:$0xff]
    %v2147 = vunpack.c.l.b16 %v99
    %v2148 = vunpack.c.h.b16 %v99
    %v2149 = vunpack.c.l.b16 %v100
    %v2150 = vunpack.c.h.b16 %v100
    %v2151 = vunpack.c.l.b16 %v101
    %v2152 = vunpack.c.h.b16 %v101
    %v2153 = vunpack.c.l.b16 %v102
    %v2154 = vunpack.c.h.b16 %v102
    %v2155 = vunpack.c.l.b16 %v103
    %v2156 = vunpack.c.h.b16 %v103
    %v2157 = vunpack.c.l.b16 %v104
    %v2158 = vunpack.c.h.b16 %v104
    %v2159 = vunpack.c.l.b16 %v105
    %v2160 = vunpack.c.h.b16 %v105
    %v2161 = vunpack.c.l.b16 %v106
    %v2162 = vunpack.c.h.b16 %v106
    %v2163 = vunpack.c.l.b16 %v107
    %v2164 = vunpack.c.h.b16 %v107
    %v2165 = vunpack.c.l.b16 %v108
    %v2166 = vunpack.c.h.b16 %v108
    %v2167 = vunpack.c.l.b16 %v109
    %v2168 = vunpack.c.h.b16 %v109
    %v2169 = vunpack.c.l.b16 %v110
    %v2170 = vunpack.c.h.b16 %v110
    %v2171 = vunpack.c.l.b16 %v111
    %v2172 = vunpack.c.h.b16 %v111
    %v2173 = vunpack.c.l.b16 %v112
    %v2174 = vunpack.c.h.b16 %v112
    %v2175 = vunpack.c.l.b16 %v113
    %v2176 = vunpack.c.h.b16 %v113
    %v2177 = vunpack.c.l.b16 %v114
    %v2178 = vunpack.c.h.b16 %v114
    %v2179 = vunpack.c.l.b16 %v115
    %v2180 = vunpack.c.h.b16 %v115
    %v2181 = vunpack.c.l.b16 %v116
    %v2182 = vunpack.c.h.b16 %v116
    %v2183 = vunpack.c.l.b16 %v117
    %v2184 = vunpack.c.h.b16 %v117
    %v2185 = vunpack.c.l.b16 %v118
    %v2186 = vunpack.c.h.b16 %v118
    %v2187 = vunpack.c.l.b16 %v119
    %v2188 = vunpack.c.h.b16 %v119
    %v2189 = vunpack.c.l.b16 %v120
    %v2190 = vunpack.c.h.b16 %v120
    %v2191 = vunpack.c.l.b16 %v121
    %v2192 = vunpack.c.h.b16 %v121
    %v2193 = vunpack.c.l.b16 %v122
    %v2194 = vunpack.c.h.b16 %v122
    %v2195 = vunpack.c.l.b16 %v123
    %v2196 = vunpack.c.h.b16 %v123
    %v2197 = vunpack.c.l.b16 %v124
    %v2198 = vunpack.c.h.b16 %v124
    %v2199 = vunpack.c.l.b16 %v125
    %v2200 = vunpack.c.h.b16 %v125
    %v2201 = vunpack.c.l.b16 %v126
    %v2202 = vunpack.c.h.b16 %v126
    %v2203 = vunpack.c.l.b16 %v127
    %v2204 = vunpack.c.h.b16 %v127
    %v2205 = vunpack.c.l.b16 %v128
    %v2206 = vunpack.c.h.b16 %v128
    %v2207 = vunpack.c.l.b16 %v129
    %v2208 = vunpack.c.h.b16 %v129
    %v2209 = vunpack.c.l.b16 %v130
    %v2210 = vunpack.c.h.b16 %v130
    %v2211 = vunpack.c.l.b16 %v131
    %v2212 = vunpack.c.h.b16 %v131
    %v2213 = vunpack.c.l.b16 %v132
    %v2214 = vunpack.c.h.b16 %v132
    %v2215 = vunpack.c.l.b16 %v133
    %v2216 = vunpack.c.h.b16 %v133
    %v2217 = vunpack.c.l.b16 %v134
    %v2218 = vunpack.c.h.b16 %v134
    %v2219 = vunpack.c.l.b16 %v135
    %v2220 = vunpack.c.h.b16 %v135
    %v2221 = vunpack.c.l.b16 %v136
    %v2222 = vunpack.c.h.b16 %v136
    %v2223 = vunpack.c.l.b16 %v137
    %v2224 = vunpack.c.h.b16 %v137
    %v2225 = vunpack.c.l.b16 %v138
    %v2226 = vunpack.c.h.b16 %v138
    %v2227 = vunpack.c.l.b16 %v139
    %v2228 = vunpack.c.h.b16 %v139
    %v2229 = vunpack.c.l.b16 %v140
    %v2230 = vunpack.c.h.b16 %v140
    %v2231 = vunpack.c.l.b16 %v141
    %v2232 = vunpack.c.h.b16 %v141
    %v2233 = vunpack.c.l.b16 %v142
    %v2234 = vunpack.c.h.b16 %v142
    %v2235 = vunpack.c.l.b16 %v143
    %v2236 = vunpack.c.h.b16 %v143
    %v2237 = vunpack.c.l.b16 %v144
    %v2238 = vunpack.c.h.b16 %v144
    %v2239 = vunpack.c.l.b16 %v145
    %v2240 = vunpack.c.h.b16 %v145
    %v2241 = vunpack.c.l.b16 %v146
    %v2242 = vunpack.c.h.b16 %v146
    %v2243 = vunpack.c.l.b16 %v147
    %v2244 = vunpack.c.h.b16 %v147
    %v2245 = vunpack.c.l.b16 %v148
    %v2246 = vunpack.c.h.b16 %v148
    %v2247 = vunpack.c.l.b16 %v149
    %v2248 = vunpack.c.h.b16 %v149
    %v2249 = vunpack.c.l.b16 %v150
    %v2250 = vunpack.c.h.b16 %v150
    %v2251 = vunpack.c.l.b16 %v151
    %v2252 = vunpack.c.h.b16 %v151
    %v2253 = vunpack.c.l.b16 %v152
    %v2254 = vunpack.c.h.b16 %v152
    %v2255 = vunpack.c.l.b16 %v153
    %v2256 = vunpack.c.h.b16 %v153
    %v2257 = vunpack.c.l.b16 %v154
    %v2258 = vunpack.c.h.b16 %v154
    %v2259 = vunpack.c.l.b16 %v155
    %v2260 = vunpack.c.h.b16 %v155
    %v2261 = vunpack.c.l.b16 %v156
    %v2262 = vunpack.c.h.b16 %v156
    %v2263 = vunpack.c.l.b16 %v157
    %v2264 = vunpack.c.h.b16 %v157
    %v2265 = vunpack.c.l.b16 %v158
    %v2266 = vunpack.c.h.b16 %v158
    %v2267 = vunpack.c.l.b16 %v159
    %v2268 = vunpack.c.h.b16 %v159
    %v2269 = vunpack.c.l.b16 %v160
    %v2270 = vunpack.c.h.b16 %v160
    %v2271 = vunpack.c.l.b16 %v161
    %v2272 = vunpack.c.h.b16 %v161
    %v2273 = vunpack.c.l.b16 %v162
    %v2274 = vunpack.c.h.b16 %v162
    %v2275 = vunpack.c.l.b16 %v163
    %v2276 = vunpack.c.h.b16 %v163
    %v2277 = vunpack.c.l.b16 %v164
    %v2278 = vunpack.c.h.b16 %v164
    %v2279 = vunpack.c.l.b16 %v165
    %v2280 = vunpack.c.h.b16 %v165
    %v2281 = vunpack.c.l.b16 %v166
    %v2282 = vunpack.c.h.b16 %v166
    %v2283 = vunpack.c.l.b16 %v167
    %v2284 = vunpack.c.h.b16 %v167
    %v2285 = vunpack.c.l.b16 %v168
    %v2286 = vunpack.c.h.b16 %v168
    %v2287 = vunpack.c.l.b16 %v169
    %v2288 = vunpack.c.h.b16 %v169
    %v2289 = vunpack.c.l.b16 %v170
    %v2290 = vunpack.c.h.b16 %v170
    %v2291 = vunpack.c.l.b16 %v171
    %v2292 = vunpack.c.h.b16 %v171
    %v2293 = vunpack.c.l.b16 %v172
    %v2294 = vunpack.c.h.b16 %v172
    %v2295 = vunpack.c.l.b16 %v173
    %v2296 = vunpack.c.h.b16 %v173
    %v2297 = vunpack.c.l.b16 %v174
    %v2298 = vunpack.c.h.b16 %v174
    %v2299 = vunpack.c.l.b16 %v175
    %v2300 = vunpack.c.h.b16 %v175
    %v2301 = vunpack.c.l.b16 %v176
    %v2302 = vunpack.c.h.b16 %v176
    %v2303 = vunpack.c.l.b16 %v177
    %v2304 = vunpack.c.h.b16 %v177
    %v2305 = vunpack.c.l.b16 %v178
    %v2306 = vunpack.c.h.b16 %v178
    %v2307 = vunpack.c.l.b16 %v179
    %v2308 = vunpack.c.h.b16 %v179
    %v2309 = vunpack.c.l.b16 %v180
    %v2310 = vunpack.c.h.b16 %v180
    %v2311 = vunpack.c.l.b16 %v181
    %v2312 = vunpack.c.h.b16 %v181
    %v2313 = vunpack.c.l.b16 %v182
    %v2314 = vunpack.c.h.b16 %v182
    %v2315 = vunpack.c.l.b16 %v183
    %v2316 = vunpack.c.h.b16 %v183
    %v2317 = vunpack.c.l.b16 %v184
    %v2318 = vunpack.c.h.b16 %v184
    %v2319 = vunpack.c.l.b16 %v185
    %v2320 = vunpack.c.h.b16 %v185
    %v2321 = vunpack.c.l.b16 %v186
    %v2322 = vunpack.c.h.b16 %v186
    %v2323 = vunpack.c.l.b16 %v187
    %v2324 = vunpack.c.h.b16 %v187
    %v2325 = vunpack.c.l.b16 %v188
    %v2326 = vunpack.c.h.b16 %v188
    %v2327 = vunpack.c.l.b16 %v189
    %v2328 = vunpack.c.h.b16 %v189
    %v2329 = vunpack.c.l.b16 %v190
    %v2330 = vunpack.c.h.b16 %v190
    %v2331 = vunpack.c.l.b16 %v191
    %v2332 = vunpack.c.h.b16 %v191
    %v2333 = vunpack.c.l.b16 %v192
    %v2334 = vunpack.c.h.b16 %v192
    %v2335 = vunpack.c.l.b16 %v193
    %v2336 = vunpack.c.h.b16 %v193
    %v2337 = vunpack.c.l.b16 %v194
    %v2338 = vunpack.c.h.b16 %v194
    %v2339 = vunpack.c.l.b16 %v195
    %v2340 = vunpack.c.h.b16 %v195
    %v2341 = vunpack.c.l.b16 %v196
    %v2342 = vunpack.c.h.b16 %v196
    %v2343 = vunpack.c.l.b16 %v197
    %v2344 = vunpack.c.h.b16 %v197
    %v2345 = vunpack.c.l.b16 %v198
    %v2346 = vunpack.c.h.b16 %v198
    %v2347 = vunpack.c.l.b16 %v199
    %v2348 = vunpack.c.h.b16 %v199
    %v2349 = vunpack.c.l.b16 %v200
    %v2350 = vunpack.c.h.b16 %v200
    %v2351 = vunpack.c.l.b16 %v201
    %v2352 = vunpack.c.h.b16 %v201
    %v2353 = vunpack.c.l.b16 %v202
    %v2354 = vunpack.c.h.b16 %v202
    %v2355 = vunpack.c.l.b16 %v203
    %v2356 = vunpack.c.h.b16 %v203
    %v2357 = vunpack.c.l.b16 %v204
    %v2358 = vunpack.c.h.b16 %v204
    %v2359 = vunpack.c.l.b16 %v205
    %v2360 = vunpack.c.h.b16 %v205
    %v2361 = vunpack.c.l.b16 %v206
    %v2362 = vunpack.c.h.b16 %v206
    %v2363 = vunpack.c.l.b16 %v207
    %v2364 = vunpack.c.h.b16 %v207
    %v2365 = vunpack.c.l.b16 %v208
    %v2366 = vunpack.c.h.b16 %v208
    %v2367 = vunpack.c.l.b16 %v209
    %v2368 = vunpack.c.h.b16 %v209
    %v2369 = vunpack.c.l.b16 %v210
    %v2370 = vunpack.c.h.b16 %v210
    %v2371 = vunpack.c.l.b16 %v211
    %v2372 = vunpack.c.h.b16 %v211
    %v2373 = vunpack.c.l.b16 %v212
    %v2374 = vunpack.c.h.b16 %v212
    %v2375 = vunpack.c.l.b16 %v213
    %v2376 = vunpack.c.h.b16 %v213
    %v2377 = vunpack.c.l.b16 %v214
    %v2378 = vunpack.c.h.b16 %v214
    %v2379 = vunpack.c.l.b16 %v215
    %v2380 = vunpack.c.h.b16 %v215
    %v2381 = vunpack.c.l.b16 %v216
    %v2382 = vunpack.c.h.b16 %v216
    %v2383 = vunpack.c.l.b16 %v217
    %v2384 = vunpack.c.h.b16 %v217
    %v2385 = vunpack.c.l.b16 %v218
    %v2386 = vunpack.c.h.b16 %v218
    %v2387 = vunpack.c.l.b16 %v219
    %v2388 = vunpack.c.h.b16 %v219
    %v2389 = vunpack.c.l.b16 %v220
    %v2390 = vunpack.c.h.b16 %v220
    %v2391 = vunpack.c.l.b16 %v221
    %v2392 = vunpack.c.h.b16 %v221
    %v2393 = vunpack.c.l.b16 %v222
    %v2394 = vunpack.c.h.b16 %v222
    %v2395 = vunpack.c.l.b16 %v223
    %v2396 = vunpack.c.h.b16 %v223
    %v2397 = vunpack.c.l.b16 %v224
    %v2398 = vunpack.c.h.b16 %v224
    %v2399 = vunpack.c.l.b16 %v225
    %v2400 = vunpack.c.h.b16 %v225
    %v2401 = vunpack.c.l.b16 %v226
    %v2402 = vunpack.c.h.b16 %v226
    %v2403 = vunpack.c.l.b16 %v227
    %v2404 = vunpack.c.h.b16 %v227
    %v2405 = vunpack.c.l.b16 %v228
    %v2406 = vunpack.c.h.b16 %v228
    %v2407 = vunpack.c.l.b16 %v229
    %v2408 = vunpack.c.h.b16 %v229
    %v2409 = vunpack.c.l.b16 %v230
    %v2410 = vunpack.c.h.b16 %v230
    %v2411 = vunpack.c.l.b16 %v231
    %v2412 = vunpack.c.h.b16 %v231
    %v2413 = vunpack.c.l.b16 %v232
    %v2414 = vunpack.c.h.b16 %v232
    %v2415 = vunpack.c.l.b16 %v233
    %v2416 = vunpack.c.h.b16 %v233
    %v2417 = vunpack.c.l.b16 %v234
    %v2418 = vunpack.c.h.b16 %v234
    %v2419 = vunpack.c.l.b16 %v235
    %v2420 = vunpack.c.h.b16 %v235
    %v2421 = vunpack.c.l.b16 %v236
    %v2422 = vunpack.c.h.b16 %v236
    %v2423 = vunpack.c.l.b16 %v237
    %v2424 = vunpack.c.h.b16 %v237
    %v2425 = vunpack.c.l.b16 %v238
    %v2426 = vunpack.c.h.b16 %v238
    %v2427 = vunpack.c.l.b16 %v239
    %v2428 = vunpack.c.h.b16 %v239
    %v2429 = vunpack.c.l.b16 %v240
    %v2430 = vunpack.c.h.b16 %v240
    %v2431 = vunpack.c.l.b16 %v241
    %v2432 = vunpack.c.h.b16 %v241
    %v2433 = vunpack.c.l.b16 %v242
    %v2434 = vunpack.c.h.b16 %v242
    %v2435 = vunpack.c.l.b16 %v243
    %v2436 = vunpack.c.h.b16 %v243
    %v2437 = vunpack.c.l.b16 %v244
    %v2438 = vunpack.c.h.b16 %v244
    %v2439 = vunpack.c.l.b16 %v245
    %v2440 = vunpack.c.h.b16 %v245
    %v2441 = vunpack.c.l.b16 %v246
    %v2442 = vunpack.c.h.b16 %v246
    %v2443 = vunpack.c.l.b16 %v247
    %v2444 = vunpack.c.h.b16 %v247
    %v2445 = vunpack.c.l.b16 %v248
    %v2446 = vunpack.c.h.b16 %v248
    %v2447 = vunpack.c.l.b16 %v249
    %v2448 = vunpack.c.h.b16 %v249
    %v2449 = vunpack.c.l.b16 %v250
    %v2450 = vunpack.c.h.b16 %v250
    %v2451 = vunpack.c.l.b16 %v251
    %v2452 = vunpack.c.h.b16 %v251
    %v2453 = vunpack.c.l.b16 %v252
    %v2454 = vunpack.c.h.b16 %v252
    %v2455 = vunpack.c.l.b16 %v253
    %v2456 = vunpack.c.h.b16 %v253
    %v2457 = vunpack.c.l.b16 %v254
    %v2458 = vunpack.c.h.b16 %v254
    %v2459 = vunpack.c.l.b16 %v255
    %v2460 = vunpack.c.h.b16 %v255
    %v2461 = vunpack.c.l.b16 %v256
    %v2462 = vunpack.c.h.b16 %v256
    %v2463 = vunpack.c.l.b16 %v257
    %v2464 = vunpack.c.h.b16 %v257
    %v2465 = vunpack.c.l.b16 %v258
    %v2466 = vunpack.c.h.b16 %v258
    %v2467 = vunpack.c.l.b16 %v259
    %v2468 = vunpack.c.h.b16 %v259
    %v2469 = vunpack.c.l.b16 %v260
    %v2470 = vunpack.c.h.b16 %v260
    %v2471 = vunpack.c.l.b16 %v261
    %v2472 = vunpack.c.h.b16 %v261
    %v2473 = vunpack.c.l.b16 %v262
    %v2474 = vunpack.c.h.b16 %v262
    %v2475 = vunpack.c.l.b16 %v263
    %v2476 = vunpack.c.h.b16 %v263
    %v2477 = vunpack.c.l.b16 %v264
    %v2478 = vunpack.c.h.b16 %v264
    %v2479 = vunpack.c.l.b16 %v265
    %v2480 = vunpack.c.h.b16 %v265
    %v2481 = vunpack.c.l.b16 %v266
    %v2482 = vunpack.c.h.b16 %v266
    %v2483 = vunpack.c.l.b16 %v267
    %v2484 = vunpack.c.h.b16 %v267
    %v2485 = vunpack.c.l.b16 %v268
    %v2486 = vunpack.c.h.b16 %v268
    %v2487 = vunpack.c.l.b16 %v269
    %v2488 = vunpack.c.h.b16 %v269
    %v2489 = vunpack.c.l.b16 %v270
    %v2490 = vunpack.c.h.b16 %v270
    %v2491 = vunpack.c.l.b16 %v271
    %v2492 = vunpack.c.h.b16 %v271
    %v2493 = vunpack.c.l.b16 %v272
    %v2494 = vunpack.c.h.b16 %v272
    %v2495 = vunpack.c.l.b16 %v273
    %v2496 = vunpack.c.h.b16 %v273
    %v2497 = vunpack.c.l.b16 %v274
    %v2498 = vunpack.c.h.b16 %v274
    %v2499 = vunpack.c.l.b16 %v275
    %v2500 = vunpack.c.h.b16 %v275
    %v2501 = vunpack.c.l.b16 %v276
    %v2502 = vunpack.c.h.b16 %v276
    %v2503 = vunpack.c.l.b16 %v277
    %v2504 = vunpack.c.h.b16 %v277
    %v2505 = vunpack.c.l.b16 %v278
    %v2506 = vunpack.c.h.b16 %v278
    %v2507 = vunpack.c.l.b16 %v279
    %v2508 = vunpack.c.h.b16 %v279
    %v2509 = vunpack.c.l.b16 %v280
    %v2510 = vunpack.c.h.b16 %v280
    %v2511 = vunpack.c.l.b16 %v281
    %v2512 = vunpack.c.h.b16 %v281
    %v2513 = vunpack.c.l.b16 %v282
    %v2514 = vunpack.c.h.b16 %v282
    %v2515 = vunpack.c.l.b16 %v283
    %v2516 = vunpack.c.h.b16 %v283
    %v2517 = vunpack.c.l.b16 %v284
    %v2518 = vunpack.c.h.b16 %v284
    %v2519 = vunpack.c.l.b16 %v285
    %v2520 = vunpack.c.h.b16 %v285
    %v2521 = vunpack.c.l.b16 %v286
    %v2522 = vunpack.c.h.b16 %v286
    %v2523 = vunpack.c.l.b16 %v287
    %v2524 = vunpack.c.h.b16 %v287
    %v2525 = vunpack.c.l.b16 %v288
    %v2526 = vunpack.c.h.b16 %v288
    %v2527 = vunpack.c.l.b16 %v289
    %v2528 = vunpack.c.h.b16 %v289
    %v2529 = vunpack.c.l.b16 %v290
    %v2530 = vunpack.c.h.b16 %v290
    %v2531 = vunpack.c.l.b16 %v291
    %v2532 = vunpack.c.h.b16 %v291
    %v2533 = vunpack.c.l.b16 %v292
    %v2534 = vunpack.c.h.b16 %v292
    %v2535 = vunpack.c.l.b16 %v293
    %v2536 = vunpack.c.h.b16 %v293
    %v2537 = vunpack.c.l.b16 %v294
    %v2538 = vunpack.c.h.b16 %v294
    %v2539 = vunpack.c.l.b16 %v295
    %v2540 = vunpack.c.h.b16 %v295
    %v2541 = vunpack.c.l.b16 %v296
    %v2542 = vunpack.c.h.b16 %v296
    %v2543 = vunpack.c.l.b16 %v297
    %v2544 = vunpack.c.h.b16 %v297
    %v2545 = vunpack.c.l.b16 %v298
    %v2546 = vunpack.c.h.b16 %v298
    %v2547 = vunpack.c.l.b16 %v299
    %v2548 = vunpack.c.h.b16 %v299
    %v2549 = vunpack.c.l.b16 %v300
    %v2550 = vunpack.c.h.b16 %v300
    %v2551 = vunpack.c.l.b16 %v301
    %v2552 = vunpack.c.h.b16 %v301
    %v2553 = vunpack.c.l.b16 %v302
    %v2554 = vunpack.c.h.b16 %v302
    %v2555 = vunpack.c.l.b16 %v303
    %v2556 = vunpack.c.h.b16 %v303
    %v2557 = vunpack.c.l.b16 %v304
    %v2558 = vunpack.c.h.b16 %v304
    %v2559 = vunpack.c.l.b16 %v305
    %v2560 = vunpack.c.h.b16 %v305
    %v2561 = vunpack.c.l.b16 %v306
    %v2562 = vunpack.c.h.b16 %v306
    %v2563 = vunpack.c.l.b16 %v307
    %v2564 = vunpack.c.h.b16 %v307
    %v2565 = vunpack.c.l.b16 %v308
    %v2566 = vunpack.c.h.b16 %v308
    %v2567 = vunpack.c.l.b16 %v309
    %v2568 = vunpack.c.h.b16 %v309
    %v2569 = vunpack.c.l.b16 %v310
    %v2570 = vunpack.c.h.b16 %v310
    %v2571 = vunpack.c.l.b16 %v311
    %v2572 = vunpack.c.h.b16 %v311
    %v2573 = vunpack.c.l.b16 %v312
    %v2574 = vunpack.c.h.b16 %v312
    %v2575 = vunpack.c.l.b16 %v313
    %v2576 = vunpack.c.h.b16 %v313
    %v2577 = vunpack.c.l.b16 %v314
    %v2578 = vunpack.c.h.b16 %v314
    %v2579 = vunpack.c.l.b16 %v315
    %v2580 = vunpack.c.h.b16 %v315
    %v2581 = vunpack.c.l.b16 %v316
    %v2582 = vunpack.c.h.b16 %v316
    %v2583 = vunpack.c.l.b16 %v317
    %v2584 = vunpack.c.h.b16 %v317
    %v2585 = vunpack.c.l.b16 %v318
    %v2586 = vunpack.c.h.b16 %v318
    %v2587 = vunpack.c.l.b16 %v319
    %v2588 = vunpack.c.h.b16 %v319
    %v2589 = vunpack.c.l.b16 %v320
    %v2590 = vunpack.c.h.b16 %v320
    %v2591 = vunpack.c.l.b16 %v321
    %v2592 = vunpack.c.h.b16 %v321
    %v2593 = vunpack.c.l.b16 %v322
    %v2594 = vunpack.c.h.b16 %v322
    %v2595 = vunpack.c.l.b16 %v323
    %v2596 = vunpack.c.h.b16 %v323
    %v2597 = vunpack.c.l.b16 %v324
    %v2598 = vunpack.c.h.b16 %v324
    %v2599 = vunpack.c.l.b16 %v325
    %v2600 = vunpack.c.h.b16 %v325
    %v2601 = vunpack.c.l.b16 %v326
    %v2602 = vunpack.c.h.b16 %v326
    %v2603 = vunpack.c.l.b16 %v327
    %v2604 = vunpack.c.h.b16 %v327
    %v2605 = vunpack.c.l.b16 %v328
    %v2606 = vunpack.c.h.b16 %v328
    %v2607 = vunpack.c.l.b16 %v329
    %v2608 = vunpack.c.h.b16 %v329
    %v2609 = vunpack.c.l.b16 %v330
    %v2610 = vunpack.c.h.b16 %v330
    %v2611 = vunpack.c.l.b16 %v331
    %v2612 = vunpack.c.h.b16 %v331
    %v2613 = vunpack.c.l.b16 %v332
    %v2614 = vunpack.c.h.b16 %v332
    %v2615 = vunpack.c.l.b16 %v333
    %v2616 = vunpack.c.h.b16 %v333
    %v2617 = vunpack.c.l.b16 %v334
    %v2618 = vunpack.c.h.b16 %v334
    %v2619 = vunpack.c.l.b16 %v335
    %v2620 = vunpack.c.h.b16 %v335
    %v2621 = vunpack.c.l.b16 %v336
    %v2622 = vunpack.c.h.b16 %v336
    %v2623 = vunpack.c.l.b16 %v337
    %v2624 = vunpack.c.h.b16 %v337
    %v2625 = vunpack.c.l.b16 %v338
    %v2626 = vunpack.c.h.b16 %v338
    %v2627 = vunpack.c.l.b16 %v339
    %v2628 = vunpack.c.h.b16 %v339
    %v2629 = vunpack.c.l.b16 %v340
    %v2630 = vunpack.c.h.b16 %v340
    %v2631 = vunpack.c.l.b16 %v341
    %v2632 = vunpack.c.h.b16 %v341
    %v2633 = vunpack.c.l.b16 %v342
    %v2634 = vunpack.c.h.b16 %v342
    %v2635 = vunpack.c.l.b16 %v343
    %v2636 = vunpack.c.h.b16 %v343
    %v2637 = vunpack.c.l.b16 %v344
    %v2638 = vunpack.c.h.b16 %v344
    %v2639 = vunpack.c.l.b16 %v345
    %v2640 = vunpack.c.h.b16 %v345
    %v2641 = vunpack.c.l.b16 %v346
    %v2642 = vunpack.c.h.b16 %v346
    %v2643 = vunpack.c.l.b16 %v347
    %v2644 = vunpack.c.h.b16 %v347
    %v2645 = vunpack.c.l.b16 %v348
    %v2646 = vunpack.c.h.b16 %v348
    %v2647 = vunpack.c.l.b16 %v349
    %v2648 = vunpack.c.h.b16 %v349
    %v2649 = vunpack.c.l.b16 %v350
    %v2650 = vunpack.c.h.b16 %v350
    %v2651 = vunpack.c.l.b16 %v351
    %v2652 = vunpack.c.h.b16 %v351
    %v2653 = vunpack.c.l.b16 %v352
    %v2654 = vunpack.c.h.b16 %v352
    %v2655 = vunpack.c.l.b16 %v353
    %v2656 = vunpack.c.h.b16 %v353
    %v2657 = vunpack.c.l.b16 %v354
    %v2658 = vunpack.c.h.b16 %v354
    %v2659 = vunpack.c.l.b16 %v355
    %v2660 = vunpack.c.h.b16 %v355
    %v2661 = vunpack.c.l.b16 %v356
    %v2662 = vunpack.c.h.b16 %v356
    %v2663 = vunpack.c.l.b16 %v357
    %v2664 = vunpack.c.h.b16 %v357
    %v2665 = vunpack.c.l.b16 %v358
    %v2666 = vunpack.c.h.b16 %v358
    %v2667 = vunpack.c.l.b16 %v359
    %v2668 = vunpack.c.h.b16 %v359
    %v2669 = vunpack.c.l.b16 %v360
    %v2670 = vunpack.c.h.b16 %v360
    %v2671 = vunpack.c.l.b16 %v361
    %v2672 = vunpack.c.h.b16 %v361
    %v2673 = vunpack.c.l.b16 %v362
    %v2674 = vunpack.c.h.b16 %v362
    %v2675 = vunpack.c.l.b16 %v363
    %v2676 = vunpack.c.h.b16 %v363
    %v2677 = vunpack.c.l.b16 %v364
    %v2678 = vunpack.c.h.b16 %v364
    %v2679 = vunpack.c.l.b16 %v365
    %v2680 = vunpack.c.h.b16 %v365
    %v2681 = vunpack.c.l.b16 %v366
    %v2682 = vunpack.c.h.b16 %v366
    %v2683 = vunpack.c.l.b16 %v367
    %v2684 = vunpack.c.h.b16 %v367
    %v2685 = vunpack.c.l.b16 %v368
    %v2686 = vunpack.c.h.b16 %v368
    %v2687 = vunpack.c.l.b16 %v369
    %v2688 = vunpack.c.h.b16 %v369
    %v2689 = vunpack.c.l.b16 %v370
    %v2690 = vunpack.c.h.b16 %v370
    %v2691 = vunpack.c.l.b16 %v371
    %v2692 = vunpack.c.h.b16 %v371
    %v2693 = vunpack.c.l.b16 %v372
    %v2694 = vunpack.c.h.b16 %v372
    %v2695 = vunpack.c.l.b16 %v373
    %v2696 = vunpack.c.h.b16 %v373
    %v2697 = vunpack.c.l.b16 %v374
    %v2698 = vunpack.c.h.b16 %v374
    %v2699 = vunpack.c.l.b16 %v375
    %v2700 = vunpack.c.h.b16 %v375
    %v2701 = vunpack.c.l.b16 %v376
    %v2702 = vunpack.c.h.b16 %v376
    %v2703 = vunpack.c.l.b16 %v377
    %v2704 = vunpack.c.h.b16 %v377
    %v2705 = vunpack.c.l.b16 %v378
    %v2706 = vunpack.c.h.b16 %v378
    %v2707 = vunpack.c.l.b16 %v379
    %v2708 = vunpack.c.h.b16 %v379
    %v2709 = vunpack.c.l.b16 %v380
    %v2710 = vunpack.c.h.b16 %v380
    %v2711 = vunpack.c.l.b16 %v381
    %v2712 = vunpack.c.h.b16 %v381
    %v2713 = vunpack.c.l.b16 %v382
    %v2714 = vunpack.c.h.b16 %v382
    %v2715 = vunpack.c.l.b16 %v383
    %v2716 = vunpack.c.h.b16 %v383
    %v2717 = vunpack.c.l.b16 %v384
    %v2718 = vunpack.c.h.b16 %v384
    %v2719 = vunpack.c.l.b16 %v385
    %v2720 = vunpack.c.h.b16 %v385
    %v2721 = vunpack.c.l.b16 %v386
    %v2722 = vunpack.c.h.b16 %v386
    %v2723 = vunpack.c.l.b16 %v387
    %v2724 = vunpack.c.h.b16 %v387
    %v2725 = vunpack.c.l.b16 %v388
    %v2726 = vunpack.c.h.b16 %v388
    %v2727 = vunpack.c.l.b16 %v389
    %v2728 = vunpack.c.h.b16 %v389
    %v2729 = vunpack.c.l.b16 %v390
    %v2730 = vunpack.c.h.b16 %v390
    %v2731 = vunpack.c.l.b16 %v391
    %v2732 = vunpack.c.h.b16 %v391
    %v2733 = vunpack.c.l.b16 %v392
    %v2734 = vunpack.c.h.b16 %v392
    %v2735 = vunpack.c.l.b16 %v393
    %v2736 = vunpack.c.h.b16 %v393
    %v2737 = vunpack.c.l.b16 %v394
    %v2738 = vunpack.c.h.b16 %v394
    %v2739 = vunpack.c.l.b16 %v395
    %v2740 = vunpack.c.h.b16 %v395
    %v2741 = vunpack.c.l.b16 %v396
    %v2742 = vunpack.c.h.b16 %v396
    %v2743 = vunpack.c.l.b16 %v397
    %v2744 = vunpack.c.h.b16 %v397
    %v2745 = vunpack.c.l.b16 %v398
    %v2746 = vunpack.c.h.b16 %v398
    %v2747 = vunpack.c.l.b16 %v399
    %v2748 = vunpack.c.h.b16 %v399
    %v2749 = vunpack.c.l.b16 %v400
    %v2750 = vunpack.c.h.b16 %v400
    %v2751 = vunpack.c.l.b16 %v401
    %v2752 = vunpack.c.h.b16 %v401
    %v2753 = vunpack.c.l.b16 %v402
    %v2754 = vunpack.c.h.b16 %v402
    %v2755 = vunpack.c.l.b16 %v403
    %v2756 = vunpack.c.h.b16 %v403
    %v2757 = vunpack.c.l.b16 %v404
    %v2758 = vunpack.c.h.b16 %v404
    %v2759 = vunpack.c.l.b16 %v405
    %v2760 = vunpack.c.h.b16 %v405
    %v2761 = vunpack.c.l.b16 %v406
    %v2762 = vunpack.c.h.b16 %v406
    %v2763 = vunpack.c.l.b16 %v407
    %v2764 = vunpack.c.h.b16 %v407
    %v2765 = vunpack.c.l.b16 %v408
    %v2766 = vunpack.c.h.b16 %v408
    %v2767 = vunpack.c.l.b16 %v409
    %v2768 = vunpack.c.h.b16 %v409
    %v2769 = vunpack.c.l.b16 %v410
    %v2770 = vunpack.c.h.b16 %v410
    %v2771 = vunpack.c.l.b16 %v411
    %v2772 = vunpack.c.h.b16 %v411
    %v2773 = vunpack.c.l.b16 %v412
    %v2774 = vunpack.c.h.b16 %v412
    %v2775 = vunpack.c.l.b16 %v413
    %v2776 = vunpack.c.h.b16 %v413
    %v2777 = vunpack.c.l.b16 %v414
    %v2778 = vunpack.c.h.b16 %v414
    %v2779 = vunpack.c.l.b16 %v415
    %v2780 = vunpack.c.h.b16 %v415
    %v2781 = vunpack.c.l.b16 %v416
    %v2782 = vunpack.c.h.b16 %v416
    %v2783 = vunpack.c.l.b16 %v417
    %v2784 = vunpack.c.h.b16 %v417
    %v2785 = vunpack.c.l.b16 %v418
    %v2786 = vunpack.c.h.b16 %v418
    %v2787 = vunpack.c.l.b16 %v419
    %v2788 = vunpack.c.h.b16 %v419
    %v2789 = vunpack.c.l.b16 %v420
    %v2790 = vunpack.c.h.b16 %v420
    %v2791 = vunpack.c.l.b16 %v421
    %v2792 = vunpack.c.h.b16 %v421
    %v2793 = vunpack.c.l.b16 %v422
    %v2794 = vunpack.c.h.b16 %v422
    %v2795 = vunpack.c.l.b16 %v423
    %v2796 = vunpack.c.h.b16 %v423
    %v2797 = vunpack.c.l.b16 %v424
    %v2798 = vunpack.c.h.b16 %v424
    %v2799 = vunpack.c.l.b16 %v425
    %v2800 = vunpack.c.h.b16 %v425
    %v2801 = vunpack.c.l.b16 %v426
    %v2802 = vunpack.c.h.b16 %v426
    %v2803 = vunpack.c.l.b16 %v427
    %v2804 = vunpack.c.h.b16 %v427
    %v2805 = vunpack.c.l.b16 %v428
    %v2806 = vunpack.c.h.b16 %v428
    %v2807 = vunpack.c.l.b16 %v429
    %v2808 = vunpack.c.h.b16 %v429
    %v2809 = vunpack.c.l.b16 %v430
    %v2810 = vunpack.c.h.b16 %v430
    %v2811 = vunpack.c.l.b16 %v431
    %v2812 = vunpack.c.h.b16 %v431
    %v2813 = vunpack.c.l.b16 %v432
    %v2814 = vunpack.c.h.b16 %v432
    %v2815 = vunpack.c.l.b16 %v433
    %v2816 = vunpack.c.h.b16 %v433
    %v2817 = vunpack.c.l.b16 %v434
    %v2818 = vunpack.c.h.b16 %v434
    %v2819 = vunpack.c.l.b16 %v435
    %v2820 = vunpack.c.h.b16 %v435
    %v2821 = vunpack.c.l.b16 %v436
    %v2822 = vunpack.c.h.b16 %v436
    %v2823 = vunpack.c.l.b16 %v437
    %v2824 = vunpack.c.h.b16 %v437
    %v2825 = vunpack.c.l.b16 %v438
    %v2826 = vunpack.c.h.b16 %v438
    %v2827 = vunpack.c.l.b16 %v439
    %v2828 = vunpack.c.h.b16 %v439
    %v2829 = vunpack.c.l.b16 %v440
    %v2830 = vunpack.c.h.b16 %v440
    %v2831 = vunpack.c.l.b16 %v441
    %v2832 = vunpack.c.h.b16 %v441
    %v2833 = vunpack.c.l.b16 %v442
    %v2834 = vunpack.c.h.b16 %v442
    %v2835 = vunpack.c.l.b16 %v443
    %v2836 = vunpack.c.h.b16 %v443
    %v2837 = vunpack.c.l.b16 %v444
    %v2838 = vunpack.c.h.b16 %v444
    %v2839 = vunpack.c.l.b16 %v445
    %v2840 = vunpack.c.h.b16 %v445
    %v2841 = vunpack.c.l.b16 %v446
    %v2842 = vunpack.c.h.b16 %v446
    %v2843 = vunpack.c.l.b16 %v447
    %v2844 = vunpack.c.h.b16 %v447
    %v2845 = vunpack.c.l.b16 %v448
    %v2846 = vunpack.c.h.b16 %v448
    %v2847 = vunpack.c.l.b16 %v449
    %v2848 = vunpack.c.h.b16 %v449
    %v2849 = vunpack.c.l.b16 %v450
    %v2850 = vunpack.c.h.b16 %v450
    %v2851 = vunpack.c.l.b16 %v451
    %v2852 = vunpack.c.h.b16 %v451
    %v2853 = vunpack.c.l.b16 %v452
    %v2854 = vunpack.c.h.b16 %v452
    %v2855 = vunpack.c.l.b16 %v453
    %v2856 = vunpack.c.h.b16 %v453
    %v2857 = vunpack.c.l.b16 %v454
    %v2858 = vunpack.c.h.b16 %v454
    %v2859 = vunpack.c.l.b16 %v455
    %v2860 = vunpack.c.h.b16 %v455
    %v2861 = vunpack.c.l.b16 %v456
    %v2862 = vunpack.c.h.b16 %v456
    %v2863 = vunpack.c.l.b16 %v457
    %v2864 = vunpack.c.h.b16 %v457
    %v2865 = vunpack.c.l.b16 %v458
    %v2866 = vunpack.c.h.b16 %v458
    %v2867 = vunpack.c.l.b16 %v459
    %v2868 = vunpack.c.h.b16 %v459
    %v2869 = vunpack.c.l.b16 %v460
    %v2870 = vunpack.c.h.b16 %v460
    %v2871 = vunpack.c.l.b16 %v461
    %v2872 = vunpack.c.h.b16 %v461
    %v2873 = vunpack.c.l.b16 %v462
    %v2874 = vunpack.c.h.b16 %v462
    %v2875 = vunpack.c.l.b16 %v463
    %v2876 = vunpack.c.h.b16 %v463
    %v2877 = vunpack.c.l.b16 %v464
    %v2878 = vunpack.c.h.b16 %v464
    %v2879 = vunpack.c.l.b16 %v465
    %v2880 = vunpack.c.h.b16 %v465
    %v2881 = vunpack.c.l.b16 %v466
    %v2882 = vunpack.c.h.b16 %v466
    %v2883 = vunpack.c.l.b16 %v467
    %v2884 = vunpack.c.h.b16 %v467
    %v2885 = vunpack.c.l.b16 %v468
    %v2886 = vunpack.c.h.b16 %v468
    %v2887 = vunpack.c.l.b16 %v469
    %v2888 = vunpack.c.h.b16 %v469
    %v2889 = vunpack.c.l.b16 %v470
    %v2890 = vunpack.c.h.b16 %v470
    %v2891 = vunpack.c.l.b16 %v471
    %v2892 = vunpack.c.h.b16 %v471
    %v2893 = vunpack.c.l.b16 %v472
    %v2894 = vunpack.c.h.b16 %v472
    %v2895 = vunpack.c.l.b16 %v473
    %v2896 = vunpack.c.h.b16 %v473
    %v2897 = vunpack.c.l.b16 %v474
    %v2898 = vunpack.c.h.b16 %v474
    %v2899 = vunpack.c.l.b16 %v475
    %v2900 = vunpack.c.h.b16 %v475
    %v2901 = vunpack.c.l.b16 %v476
    %v2902 = vunpack.c.h.b16 %v476
    %v2903 = vunpack.c.l.b16 %v477
    %v2904 = vunpack.c.h.b16 %v477
    %v2905 = vunpack.c.l.b16 %v478
    %v2906 = vunpack.c.h.b16 %v478
    %v2907 = vunpack.c.l.b16 %v479
    %v2908 = vunpack.c.h.b16 %v479
    %v2909 = vunpack.c.l.b16 %v480
    %v2910 = vunpack.c.h.b16 %v480
    %v2911 = vunpack.c.l.b16 %v481
    %v2912 = vunpack.c.h.b16 %v481
    %v2913 = vunpack.c.l.b16 %v482
    %v2914 = vunpack.c.h.b16 %v482
    %v2915 = vunpack.c.l.b16 %v483
    %v2916 = vunpack.c.h.b16 %v483
    %v2917 = vunpack.c.l.b16 %v484
    %v2918 = vunpack.c.h.b16 %v484
    %v2919 = vunpack.c.l.b16 %v485
    %v2920 = vunpack.c.h.b16 %v485
    %v2921 = vunpack.c.l.b16 %v486
    %v2922 = vunpack.c.h.b16 %v486
    %v2923 = vunpack.c.l.b16 %v487
    %v2924 = vunpack.c.h.b16 %v487
    %v2925 = vunpack.c.l.b16 %v488
    %v2926 = vunpack.c.h.b16 %v488
    %v2927 = vunpack.c.l.b16 %v489
    %v2928 = vunpack.c.h.b16 %v489
    %v2929 = vunpack.c.l.b16 %v490
    %v2930 = vunpack.c.h.b16 %v490
    %v2931 = vunpack.c.l.b16 %v491
    %v2932 = vunpack.c.h.b16 %v491
    %v2933 = vunpack.c.l.b16 %v492
    %v2934 = vunpack.c.h.b16 %v492
    %v2935 = vunpack.c.l.b16 %v493
    %v2936 = vunpack.c.h.b16 %v493
    %v2937 = vunpack.c.l.b16 %v494
    %v2938 = vunpack.c.h.b16 %v494
    %v2939 = vunpack.c.l.b16 %v495
    %v2940 = vunpack.c.h.b16 %v495
    %v2941 = vunpack.c.l.b16 %v496
    %v2942 = vunpack.c.h.b16 %v496
    %v2943 = vunpack.c.l.b16 %v497
    %v2944 = vunpack.c.h.b16 %v497
    %v2945 = vunpack.c.l.b16 %v498
    %v2946 = vunpack.c.h.b16 %v498
    %v2947 = vunpack.c.l.b16 %v499
    %v2948 = vunpack.c.h.b16 %v499
    %v2949 = vunpack.c.l.b16 %v500
    %v2950 = vunpack.c.h.b16 %v500
    %v2951 = vunpack.c.l.b16 %v501
    %v2952 = vunpack.c.h.b16 %v501
    %v2953 = vunpack.c.l.b16 %v502
    %v2954 = vunpack.c.h.b16 %v502
    %v2955 = vunpack.c.l.b16 %v503
    %v2956 = vunpack.c.h.b16 %v503
    %v2957 = vunpack.c.l.b16 %v504
    %v2958 = vunpack.c.h.b16 %v504
    %v2959 = vunpack.c.l.b16 %v505
    %v2960 = vunpack.c.h.b16 %v505
    %v2961 = vunpack.c.l.b16 %v506
    %v2962 = vunpack.c.h.b16 %v506
    %v2963 = vunpack.c.l.b16 %v507
    %v2964 = vunpack.c.h.b16 %v507
    %v2965 = vunpack.c.l.b16 %v508
    %v2966 = vunpack.c.h.b16 %v508
    %v2967 = vunpack.c.l.b16 %v509
    %v2968 = vunpack.c.h.b16 %v509
    %v2969 = vunpack.c.l.b16 %v510
    %v2970 = vunpack.c.h.b16 %v510
    %v2971 = vunpack.c.l.b16 %v511
    %v2972 = vunpack.c.h.b16 %v511
    %v2973 = vunpack.c.l.b16 %v512
    %v2974 = vunpack.c.h.b16 %v512
    %v2975 = vunpack.c.l.b16 %v513
    %v2976 = vunpack.c.h.b16 %v513
    %v2977 = vunpack.c.l.b16 %v514
    %v2978 = vunpack.c.h.b16 %v514
    %v2979 = vunpack.c.l.b16 %v515
    %v2980 = vunpack.c.h.b16 %v515
    %v2981 = vunpack.c.l.b16 %v516
    %v2982 = vunpack.c.h.b16 %v516
    %v2983 = vunpack.c.l.b16 %v517
    %v2984 = vunpack.c.h.b16 %v517
    %v2985 = vunpack.c.l.b16 %v518
    %v2986 = vunpack.c.h.b16 %v518
    %v2987 = vunpack.c.l.b16 %v519
    %v2988 = vunpack.c.h.b16 %v519
    %v2989 = vunpack.c.l.b16 %v520
    %v2990 = vunpack.c.h.b16 %v520
    %v2991 = vunpack.c.l.b16 %v521
    %v2992 = vunpack.c.h.b16 %v521
    %v2993 = vunpack.c.l.b16 %v522
    %v2994 = vunpack.c.h.b16 %v522
    %v2995 = vunpack.c.l.b16 %v523
    %v2996 = vunpack.c.h.b16 %v523
    %v2997 = vunpack.c.l.b16 %v524
    %v2998 = vunpack.c.h.b16 %v524
    %v2999 = vunpack.c.l.b16 %v525
    %v3000 = vunpack.c.h.b16 %v525
    %v3001 = vunpack.c.l.b16 %v526
    %v3002 = vunpack.c.h.b16 %v526
    %v3003 = vunpack.c.l.b16 %v527
    %v3004 = vunpack.c.h.b16 %v527
    %v3005 = vunpack.c.l.b16 %v528
    %v3006 = vunpack.c.h.b16 %v528
    %v3007 = vunpack.c.l.b16 %v529
    %v3008 = vunpack.c.h.b16 %v529
    %v3009 = vunpack.c.l.b16 %v530
    %v3010 = vunpack.c.h.b16 %v530
    %v3011 = vunpack.c.l.b16 %v531
    %v3012 = vunpack.c.h.b16 %v531
    %v3013 = vunpack.c.l.b16 %v532
    %v3014 = vunpack.c.h.b16 %v532
    %v3015 = vunpack.c.l.b16 %v533
    %v3016 = vunpack.c.h.b16 %v533
    %v3017 = vunpack.c.l.b16 %v534
    %v3018 = vunpack.c.h.b16 %v534
    %v3019 = vunpack.c.l.b16 %v535
    %v3020 = vunpack.c.h.b16 %v535
    %v3021 = vunpack.c.l.b16 %v536
    %v3022 = vunpack.c.h.b16 %v536
    %v3023 = vunpack.c.l.b16 %v537
    %v3024 = vunpack.c.h.b16 %v537
    %v3025 = vunpack.c.l.b16 %v538
    %v3026 = vunpack.c.h.b16 %v538
    %v3027 = vunpack.c.l.b16 %v539
    %v3028 = vunpack.c.h.b16 %v539
    %v3029 = vunpack.c.l.b16 %v540
    %v3030 = vunpack.c.h.b16 %v540
    %v3031 = vunpack.c.l.b16 %v541
    %v3032 = vunpack.c.h.b16 %v541
    %v3033 = vunpack.c.l.b16 %v542
    %v3034 = vunpack.c.h.b16 %v542
    %v3035 = vunpack.c.l.b16 %v543
    %v3036 = vunpack.c.h.b16 %v543
    %v3037 = vunpack.c.l.b16 %v544
    %v3038 = vunpack.c.h.b16 %v544
    %v3039 = vunpack.c.l.b16 %v545
    %v3040 = vunpack.c.h.b16 %v545
    %v3041 = vunpack.c.l.b16 %v546
    %v3042 = vunpack.c.h.b16 %v546
    %v3043 = vunpack.c.l.b16 %v547
    %v3044 = vunpack.c.h.b16 %v547
    %v3045 = vunpack.c.l.b16 %v548
    %v3046 = vunpack.c.h.b16 %v548
    %v3047 = vunpack.c.l.b16 %v549
    %v3048 = vunpack.c.h.b16 %v549
    %v3049 = vunpack.c.l.b16 %v550
    %v3050 = vunpack.c.h.b16 %v550
    %v3051 = vunpack.c.l.b16 %v551
    %v3052 = vunpack.c.h.b16 %v551
    %v3053 = vunpack.c.l.b16 %v552
    %v3054 = vunpack.c.h.b16 %v552
    %v3055 = vunpack.c.l.b16 %v553
    %v3056 = vunpack.c.h.b16 %v553
    %v3057 = vunpack.c.l.b16 %v554
    %v3058 = vunpack.c.h.b16 %v554
    %v3059 = vunpack.c.l.b16 %v555
    %v3060 = vunpack.c.h.b16 %v555
    %v3061 = vunpack.c.l.b16 %v556
    %v3062 = vunpack.c.h.b16 %v556
    %v3063 = vunpack.c.l.b16 %v557
    %v3064 = vunpack.c.h.b16 %v557
    %v3065 = vunpack.c.l.b16 %v558
    %v3066 = vunpack.c.h.b16 %v558
    %v3067 = vunpack.c.l.b16 %v559
    %v3068 = vunpack.c.h.b16 %v559
    %v3069 = vunpack.c.l.b16 %v560
    %v3070 = vunpack.c.h.b16 %v560
    %v3071 = vunpack.c.l.b16 %v561
    %v3072 = vunpack.c.h.b16 %v561
    %v3073 = vunpack.c.l.b16 %v562
    %v3074 = vunpack.c.h.b16 %v562
    %v3075 = vunpack.c.l.b16 %v563
    %v3076 = vunpack.c.h.b16 %v563
    %v3077 = vunpack.c.l.b16 %v564
    %v3078 = vunpack.c.h.b16 %v564
    %v3079 = vunpack.c.l.b16 %v565
    %v3080 = vunpack.c.h.b16 %v565
    %v3081 = vunpack.c.l.b16 %v566
    %v3082 = vunpack.c.h.b16 %v566
    %v3083 = vunpack.c.l.b16 %v567
    %v3084 = vunpack.c.h.b16 %v567
    %v3085 = vunpack.c.l.b16 %v568
    %v3086 = vunpack.c.h.b16 %v568
    %v3087 = vunpack.c.l.b16 %v569
    %v3088 = vunpack.c.h.b16 %v569
    %v3089 = vunpack.c.l.b16 %v570
    %v3090 = vunpack.c.h.b16 %v570
    %v3091 = vunpack.c.l.b16 %v571
    %v3092 = vunpack.c.h.b16 %v571
    %v3093 = vunpack.c.l.b16 %v572
    %v3094 = vunpack.c.h.b16 %v572
    %v3095 = vunpack.c.l.b16 %v573
    %v3096 = vunpack.c.h.b16 %v573
    %v3097 = vunpack.c.l.b16 %v574
    %v3098 = vunpack.c.h.b16 %v574
    %v3099 = vunpack.c.l.b16 %v575
    %v3100 = vunpack.c.h.b16 %v575
    %v3101 = vunpack.c.l.b16 %v576
    %v3102 = vunpack.c.h.b16 %v576
    %v3103 = vunpack.c.l.b16 %v577
    %v3104 = vunpack.c.h.b16 %v577
    %v3105 = vunpack.c.l.b16 %v578
    %v3106 = vunpack.c.h.b16 %v578
    %v3107 = vunpack.c.l.b16 %v579
    %v3108 = vunpack.c.h.b16 %v579
    %v3109 = vunpack.c.l.b16 %v580
    %v3110 = vunpack.c.h.b16 %v580
    %v3111 = vunpack.c.l.b16 %v581
    %v3112 = vunpack.c.h.b16 %v581
    %v3113 = vunpack.c.l.b16 %v582
    %v3114 = vunpack.c.h.b16 %v582
    %v3115 = vunpack.c.l.b16 %v583
    %v3116 = vunpack.c.h.b16 %v583
    %v3117 = vunpack.c.l.b16 %v584
    %v3118 = vunpack.c.h.b16 %v584
    %v3119 = vunpack.c.l.b16 %v585
    %v3120 = vunpack.c.h.b16 %v585
    %v3121 = vunpack.c.l.b16 %v586
    %v3122 = vunpack.c.h.b16 %v586
    %v3123 = vunpack.c.l.b16 %v587
    %v3124 = vunpack.c.h.b16 %v587
    %v3125 = vunpack.c.l.b16 %v588
    %v3126 = vunpack.c.h.b16 %v588
    %v3127 = vunpack.c.l.b16 %v589
    %v3128 = vunpack.c.h.b16 %v589
    %v3129 = vunpack.c.l.b16 %v590
    %v3130 = vunpack.c.h.b16 %v590
    %v3131 = vunpack.c.l.b16 %v591
    %v3132 = vunpack.c.h.b16 %v591
    %v3133 = vunpack.c.l.b16 %v592
    %v3134 = vunpack.c.h.b16 %v592
    %v3135 = vunpack.c.l.b16 %v593
    %v3136 = vunpack.c.h.b16 %v593
    %v3137 = vunpack.c.l.b16 %v594
    %v3138 = vunpack.c.h.b16 %v594
    %v3139 = vunpack.c.l.b16 %v595
    %v3140 = vunpack.c.h.b16 %v595
    %v3141 = vunpack.c.l.b16 %v596
    %v3142 = vunpack.c.h.b16 %v596
    %v3143 = vunpack.c.l.b16 %v597
    %v3144 = vunpack.c.h.b16 %v597
    %v3145 = vunpack.c.l.b16 %v598
    %v3146 = vunpack.c.h.b16 %v598
    %v3147 = vunpack.c.l.b16 %v599
    %v3148 = vunpack.c.h.b16 %v599
    %v3149 = vunpack.c.l.b16 %v600
    %v3150 = vunpack.c.h.b16 %v600
    %v3151 = vunpack.c.l.b16 %v601
    %v3152 = vunpack.c.h.b16 %v601
    %v3153 = vunpack.c.l.b16 %v602
    %v3154 = vunpack.c.h.b16 %v602
    %v3155 = vunpack.c.l.b16 %v603
    %v3156 = vunpack.c.h.b16 %v603
    %v3157 = vunpack.c.l.b16 %v604
    %v3158 = vunpack.c.h.b16 %v604
    %v3159 = vunpack.c.l.b16 %v605
    %v3160 = vunpack.c.h.b16 %v605
    %v3161 = vunpack.c.l.b16 %v606
    %v3162 = vunpack.c.h.b16 %v606
    %v3163 = vunpack.c.l.b16 %v607
    %v3164 = vunpack.c.h.b16 %v607
    %v3165 = vunpack.c.l.b16 %v608
    %v3166 = vunpack.c.h.b16 %v608
    %v3167 = vunpack.c.l.b16 %v609
    %v3168 = vunpack.c.h.b16 %v609
    %v3169 = vunpack.c.l.b16 %v610
    %v3170 = vunpack.c.h.b16 %v610
    %v3171 = vunpack.c.l.b16 %v611
    %v3172 = vunpack.c.h.b16 %v611
    %v3173 = vunpack.c.l.b16 %v612
    %v3174 = vunpack.c.h.b16 %v612
    %v3175 = vunpack.c.l.b16 %v613
    %v3176 = vunpack.c.h.b16 %v613
    %v3177 = vunpack.c.l.b16 %v614
    %v3178 = vunpack.c.h.b16 %v614
    %v3179 = vunpack.c.l.b16 %v615
    %v3180 = vunpack.c.h.b16 %v615
    %v3181 = vunpack.c.l.b16 %v616
    %v3182 = vunpack.c.h.b16 %v616
    %v3183 = vunpack.c.l.b16 %v617
    %v3184 = vunpack.c.h.b16 %v617
    %v3185 = vunpack.c.l.b16 %v618
    %v3186 = vunpack.c.h.b16 %v618
    %v3187 = vunpack.c.l.b16 %v619
    %v3188 = vunpack.c.h.b16 %v619
    %v3189 = vunpack.c.l.b16 %v620
    %v3190 = vunpack.c.h.b16 %v620
    %v3191 = vunpack.c.l.b16 %v621
    %v3192 = vunpack.c.h.b16 %v621
    %v3193 = vunpack.c.l.b16 %v622
    %v3194 = vunpack.c.h.b16 %v622
    %v3195 = vunpack.c.l.b16 %v623
    %v3196 = vunpack.c.h.b16 %v623
    %v3197 = vunpack.c.l.b16 %v624
    %v3198 = vunpack.c.h.b16 %v624
    %v3199 = vunpack.c.l.b16 %v625
    %v3200 = vunpack.c.h.b16 %v625
    %v3201 = vunpack.c.l.b16 %v626
    %v3202 = vunpack.c.h.b16 %v626
    %v3203 = vunpack.c.l.b16 %v627
    %v3204 = vunpack.c.h.b16 %v627
    %v3205 = vunpack.c.l.b16 %v628
    %v3206 = vunpack.c.h.b16 %v628
    %v3207 = vunpack.c.l.b16 %v629
    %v3208 = vunpack.c.h.b16 %v629
    %v3209 = vunpack.c.l.b16 %v630
    %v3210 = vunpack.c.h.b16 %v630
    %v3211 = vunpack.c.l.b16 %v631
    %v3212 = vunpack.c.h.b16 %v631
    %v3213 = vunpack.c.l.b16 %v632
    %v3214 = vunpack.c.h.b16 %v632
    %v3215 = vunpack.c.l.b16 %v633
    %v3216 = vunpack.c.h.b16 %v633
    %v3217 = vunpack.c.l.b16 %v634
    %v3218 = vunpack.c.h.b16 %v634
    %v3219 = vunpack.c.l.b16 %v635
    %v3220 = vunpack.c.h.b16 %v635
    %v3221 = vunpack.c.l.b16 %v636
    %v3222 = vunpack.c.h.b16 %v636
    %v3223 = vunpack.c.l.b16 %v637
    %v3224 = vunpack.c.h.b16 %v637
    %v3225 = vunpack.c.l.b16 %v638
    %v3226 = vunpack.c.h.b16 %v638
    %v3227 = vunpack.c.l.b16 %v639
    %v3228 = vunpack.c.h.b16 %v639
    %v3229 = vunpack.c.l.b16 %v640
    %v3230 = vunpack.c.h.b16 %v640
    %v3231 = vunpack.c.l.b16 %v641
    %v3232 = vunpack.c.h.b16 %v641
    %v3233 = vunpack.c.l.b16 %v642
    %v3234 = vunpack.c.h.b16 %v642
    %v3235 = vunpack.c.l.b16 %v643
    %v3236 = vunpack.c.h.b16 %v643
    %v3237 = vunpack.c.l.b16 %v644
    %v3238 = vunpack.c.h.b16 %v644
    %v3239 = vunpack.c.l.b16 %v645
    %v3240 = vunpack.c.h.b16 %v645
    %v3241 = vunpack.c.l.b16 %v646
    %v3242 = vunpack.c.h.b16 %v646
    %v3243 = vunpack.c.l.b16 %v647
    %v3244 = vunpack.c.h.b16 %v647
    %v3245 = vunpack.c.l.b16 %v648
    %v3246 = vunpack.c.h.b16 %v648
    %v3247 = vunpack.c.l.b16 %v649
    %v3248 = vunpack.c.h.b16 %v649
    %v3249 = vunpack.c.l.b16 %v650
    %v3250 = vunpack.c.h.b16 %v650
    %v3251 = vunpack.c.l.b16 %v651
    %v3252 = vunpack.c.h.b16 %v651
    %v3253 = vunpack.c.l.b16 %v652
    %v3254 = vunpack.c.h.b16 %v652
    %v3255 = vunpack.c.l.b16 %v653
    %v3256 = vunpack.c.h.b16 %v653
    %v3257 = vunpack.c.l.b16 %v654
    %v3258 = vunpack.c.h.b16 %v654
    %v3259 = vunpack.c.l.b16 %v655
    %v3260 = vunpack.c.h.b16 %v655
    %v3261 = vunpack.c.l.b16 %v656
    %v3262 = vunpack.c.h.b16 %v656
    %v3263 = vunpack.c.l.b16 %v657
    %v3264 = vunpack.c.h.b16 %v657
    %v3265 = vunpack.c.l.b16 %v658
    %v3266 = vunpack.c.h.b16 %v658
    %v3267 = vunpack.c.l.b16 %v659
    %v3268 = vunpack.c.h.b16 %v659
    %v3269 = vunpack.c.l.b16 %v660
    %v3270 = vunpack.c.h.b16 %v660
    %v3271 = vunpack.c.l.b16 %v661
    %v3272 = vunpack.c.h.b16 %v661
    %v3273 = vunpack.c.l.b16 %v662
    %v3274 = vunpack.c.h.b16 %v662
    %v3275 = vunpack.c.l.b16 %v663
    %v3276 = vunpack.c.h.b16 %v663
    %v3277 = vunpack.c.l.b16 %v664
    %v3278 = vunpack.c.h.b16 %v664
    %v3279 = vunpack.c.l.b16 %v665
    %v3280 = vunpack.c.h.b16 %v665
    %v3281 = vunpack.c.l.b16 %v666
    %v3282 = vunpack.c.h.b16 %v666
    %v3283 = vunpack.c.l.b16 %v667
    %v3284 = vunpack.c.h.b16 %v667
    %v3285 = vunpack.c.l.b16 %v668
    %v3286 = vunpack.c.h.b16 %v668
    %v3287 = vunpack.c.l.b16 %v669
    %v3288 = vunpack.c.h.b16 %v669
    %v3289 = vunpack.c.l.b16 %v670
    %v3290 = vunpack.c.h.b16 %v670
    %v3291 = vunpack.c.l.b16 %v671
    %v3292 = vunpack.c.h.b16 %v671
    %v3293 = vunpack.c.l.b16 %v672
    %v3294 = vunpack.c.h.b16 %v672
    %v3295 = vunpack.c.l.b16 %v673
    %v3296 = vunpack.c.h.b16 %v673
    %v3297 = vunpack.c.l.b16 %v674
    %v3298 = vunpack.c.h.b16 %v674
    %v3299 = vunpack.c.l.b16 %v675
    %v3300 = vunpack.c.h.b16 %v675
    %v3301 = vunpack.c.l.b16 %v676
    %v3302 = vunpack.c.h.b16 %v676
    %v3303 = vunpack.c.l.b16 %v677
    %v3304 = vunpack.c.h.b16 %v677
    %v3305 = vunpack.c.l.b16 %v678
    %v3306 = vunpack.c.h.b16 %v678
    %v3307 = vunpack.c.l.b16 %v679
    %v3308 = vunpack.c.h.b16 %v679
    %v3309 = vunpack.c.l.b16 %v680
    %v3310 = vunpack.c.h.b16 %v680
    %v3311 = vunpack.c.l.b16 %v681
    %v3312 = vunpack.c.h.b16 %v681
    %v3313 = vunpack.c.l.b16 %v682
    %v3314 = vunpack.c.h.b16 %v682
    %v3315 = vunpack.c.l.b16 %v683
    %v3316 = vunpack.c.h.b16 %v683
    %v3317 = vunpack.c.l.b16 %v684
    %v3318 = vunpack.c.h.b16 %v684
    %v3319 = vunpack.c.l.b16 %v685
    %v3320 = vunpack.c.h.b16 %v685
    %v3321 = vunpack.c.l.b16 %v686
    %v3322 = vunpack.c.h.b16 %v686
    %v3323 = vunpack.c.l.b16 %v687
    %v3324 = vunpack.c.h.b16 %v687
    %v3325 = vunpack.c.l.b16 %v688
    %v3326 = vunpack.c.h.b16 %v688
    %v3327 = vunpack.c.l.b16 %v689
    %v3328 = vunpack.c.h.b16 %v689
    %v3329 = vunpack.c.l.b16 %v690
    %v3330 = vunpack.c.h.b16 %v690
    %v3331 = vunpack.c.l.b16 %v691
    %v3332 = vunpack.c.h.b16 %v691
    %v3333 = vunpack.c.l.b16 %v692
    %v3334 = vunpack.c.h.b16 %v692
    %v3335 = vunpack.c.l.b16 %v693
    %v3336 = vunpack.c.h.b16 %v693
    %v3337 = vunpack.c.l.b16 %v694
    %v3338 = vunpack.c.h.b16 %v694
    %v3339 = vunpack.c.l.b16 %v695
    %v3340 = vunpack.c.h.b16 %v695
    %v3341 = vunpack.c.l.b16 %v696
    %v3342 = vunpack.c.h.b16 %v696
    %v3343 = vunpack.c.l.b16 %v697
    %v3344 = vunpack.c.h.b16 %v697
    %v3345 = vunpack.c.l.b16 %v698
    %v3346 = vunpack.c.h.b16 %v698
    %v3347 = vunpack.c.l.b16 %v699
    %v3348 = vunpack.c.h.b16 %v699
    %v3349 = vunpack.c.l.b16 %v700
    %v3350 = vunpack.c.h.b16 %v700
    %v3351 = vunpack.c.l.b16 %v701
    %v3352 = vunpack.c.h.b16 %v701
    %v3353 = vunpack.c.l.b16 %v702
    %v3354 = vunpack.c.h.b16 %v702
    %v3355 = vunpack.c.l.b16 %v703
    %v3356 = vunpack.c.h.b16 %v703
    %v3357 = vunpack.c.l.b16 %v704
    %v3358 = vunpack.c.h.b16 %v704
    %v3359 = vunpack.c.l.b16 %v705
    %v3360 = vunpack.c.h.b16 %v705
    %v3361 = vunpack.c.l.b16 %v706
    %v3362 = vunpack.c.h.b16 %v706
    %v3363 = vunpack.c.l.b16 %v707
    %v3364 = vunpack.c.h.b16 %v707
    %v3365 = vunpack.c.l.b16 %v708
    %v3366 = vunpack.c.h.b16 %v708
    %v3367 = vunpack.c.l.b16 %v709
    %v3368 = vunpack.c.h.b16 %v709
    %v3369 = vunpack.c.l.b16 %v710
    %v3370 = vunpack.c.h.b16 %v710
    %v3371 = vunpack.c.l.b16 %v711
    %v3372 = vunpack.c.h.b16 %v711
    %v3373 = vunpack.c.l.b16 %v712
    %v3374 = vunpack.c.h.b16 %v712
    %v3375 = vunpack.c.l.b16 %v713
    %v3376 = vunpack.c.h.b16 %v713
    %v3377 = vunpack.c.l.b16 %v714
    %v3378 = vunpack.c.h.b16 %v714
    %v3379 = vunpack.c.l.b16 %v715
    %v3380 = vunpack.c.h.b16 %v715
    %v3381 = vunpack.c.l.b16 %v716
    %v3382 = vunpack.c.h.b16 %v716
    %v3383 = vunpack.c.l.b16 %v717
    %v3384 = vunpack.c.h.b16 %v717
    %v3385 = vunpack.c.l.b16 %v718
    %v3386 = vunpack.c.h.b16 %v718
    %v3387 = vunpack.c.l.b16 %v719
    %v3388 = vunpack.c.h.b16 %v719
    %v3389 = vunpack.c.l.b16 %v720
    %v3390 = vunpack.c.h.b16 %v720
    %v3391 = vunpack.c.l.b16 %v721
    %v3392 = vunpack.c.h.b16 %v721
    %v3393 = vunpack.c.l.b16 %v722
    %v3394 = vunpack.c.h.b16 %v722
    %v3395 = vunpack.c.l.b16 %v723
    %v3396 = vunpack.c.h.b16 %v723
    %v3397 = vunpack.c.l.b16 %v724
    %v3398 = vunpack.c.h.b16 %v724
    %v3399 = vunpack.c.l.b16 %v725
    %v3400 = vunpack.c.h.b16 %v725
    %v3401 = vunpack.c.l.b16 %v726
    %v3402 = vunpack.c.h.b16 %v726
    %v3403 = vunpack.c.l.b16 %v727
    %v3404 = vunpack.c.h.b16 %v727
    %v3405 = vunpack.c.l.b16 %v728
    %v3406 = vunpack.c.h.b16 %v728
    %v3407 = vunpack.c.l.b16 %v729
    %v3408 = vunpack.c.h.b16 %v729
    %v3409 = vunpack.c.l.b16 %v730
    %v3410 = vunpack.c.h.b16 %v730
    %v3411 = vunpack.c.l.b16 %v731
    %v3412 = vunpack.c.h.b16 %v731
    %v3413 = vunpack.c.l.b16 %v732
    %v3414 = vunpack.c.h.b16 %v732
    %v3415 = vunpack.c.l.b16 %v733
    %v3416 = vunpack.c.h.b16 %v733
    %v3417 = vunpack.c.l.b16 %v734
    %v3418 = vunpack.c.h.b16 %v734
    %v3419 = vunpack.c.l.b16 %v735
    %v3420 = vunpack.c.h.b16 %v735
    %v3421 = vunpack.c.l.b16 %v736
    %v3422 = vunpack.c.h.b16 %v736
    %v3423 = vunpack.c.l.b16 %v737
    %v3424 = vunpack.c.h.b16 %v737
    %v3425 = vunpack.c.l.b16 %v738
    %v3426 = vunpack.c.h.b16 %v738
    %v3427 = vunpack.c.l.b16 %v739
    %v3428 = vunpack.c.h.b16 %v739
    %v3429 = vunpack.c.l.b16 %v740
    %v3430 = vunpack.c.h.b16 %v740
    %v3431 = vunpack.c.l.b16 %v741
    %v3432 = vunpack.c.h.b16 %v741
    %v3433 = vunpack.c.l.b16 %v742
    %v3434 = vunpack.c.h.b16 %v742
    %v3435 = vunpack.c.l.b16 %v743
    %v3436 = vunpack.c.h.b16 %v743
    %v3437 = vunpack.c.l.b16 %v744
    %v3438 = vunpack.c.h.b16 %v744
    %v3439 = vunpack.c.l.b16 %v745
    %v3440 = vunpack.c.h.b16 %v745
    %v3441 = vunpack.c.l.b16 %v746
    %v3442 = vunpack.c.h.b16 %v746
    %v3443 = vunpack.c.l.b16 %v747
    %v3444 = vunpack.c.h.b16 %v747
    %v3445 = vunpack.c.l.b16 %v748
    %v3446 = vunpack.c.h.b16 %v748
    %v3447 = vunpack.c.l.b16 %v749
    %v3448 = vunpack.c.h.b16 %v749
    %v3449 = vunpack.c.l.b16 %v750
    %v3450 = vunpack.c.h.b16 %v750
    %v3451 = vunpack.c.l.b16 %v751
    %v3452 = vunpack.c.h.b16 %v751
    %v3453 = vunpack.c.l.b16 %v752
    %v3454 = vunpack.c.h.b16 %v752
    %v3455 = vunpack.c.l.b16 %v753
    %v3456 = vunpack.c.h.b16 %v753
    %v3457 = vunpack.c.l.b16 %v754
    %v3458 = vunpack.c.h.b16 %v754
    %v3459 = vunpack.c.l.b16 %v755
    %v3460 = vunpack.c.h.b16 %v755
    %v3461 = vunpack.c.l.b16 %v756
    %v3462 = vunpack.c.h.b16 %v756
    %v3463 = vunpack.c.l.b16 %v757
    %v3464 = vunpack.c.h.b16 %v757
    %v3465 = vunpack.c.l.b16 %v758
    %v3466 = vunpack.c.h.b16 %v758
    %v3467 = vunpack.c.l.b16 %v759
    %v3468 = vunpack.c.h.b16 %v759
    %v3469 = vunpack.c.l.b16 %v760
    %v3470 = vunpack.c.h.b16 %v760
    %v3471 = vunpack.c.l.b16 %v761
    %v3472 = vunpack.c.h.b16 %v761
    %v3473 = vunpack.c.l.b16 %v762
    %v3474 = vunpack.c.h.b16 %v762
    %v3475 = vunpack.c.l.b16 %v763
    %v3476 = vunpack.c.h.b16 %v763
    %v3477 = vunpack.c.l.b16 %v764
    %v3478 = vunpack.c.h.b16 %v764
    %v3479 = vunpack.c.l.b16 %v765
    %v3480 = vunpack.c.h.b16 %v765
    %v3481 = vunpack.c.l.b16 %v766
    %v3482 = vunpack.c.h.b16 %v766
    %v3483 = vunpack.c.l.b16 %v767
    %v3484 = vunpack.c.h.b16 %v767
    %v3485 = vunpack.c.l.b16 %v768
    %v3486 = vunpack.c.h.b16 %v768
    %v3487 = vunpack.c.l.b16 %v769
    %v3488 = vunpack.c.h.b16 %v769
    %v3489 = vunpack.c.l.b16 %v770
    %v3490 = vunpack.c.h.b16 %v770
    %v3491 = vunpack.c.l.b16 %v771
    %v3492 = vunpack.c.h.b16 %v771
    %v3493 = vunpack.c.l.b16 %v772
    %v3494 = vunpack.c.h.b16 %v772
    %v3495 = vunpack.c.l.b16 %v773
    %v3496 = vunpack.c.h.b16 %v773
    %v3497 = vunpack.c.l.b16 %v774
    %v3498 = vunpack.c.h.b16 %v774
    %v3499 = vunpack.c.l.b16 %v775
    %v3500 = vunpack.c.h.b16 %v775
    %v3501 = vunpack.c.l.b16 %v776
    %v3502 = vunpack.c.h.b16 %v776
    %v3503 = vunpack.c.l.b16 %v777
    %v3504 = vunpack.c.h.b16 %v777
    %v3505 = vunpack.c.l.b16 %v778
    %v3506 = vunpack.c.h.b16 %v778
    %v3507 = vunpack.c.l.b16 %v779
    %v3508 = vunpack.c.h.b16 %v779
    %v3509 = vunpack.c.l.b16 %v780
    %v3510 = vunpack.c.h.b16 %v780
    %v3511 = vunpack.c.l.b16 %v781
    %v3512 = vunpack.c.h.b16 %v781
    %v3513 = vunpack.c.l.b16 %v782
    %v3514 = vunpack.c.h.b16 %v782
    %v3515 = vunpack.c.l.b16 %v783
    %v3516 = vunpack.c.h.b16 %v783
    %v3517 = vunpack.c.l.b16 %v784
    %v3518 = vunpack.c.h.b16 %v784
    %v3519 = vunpack.c.l.b16 %v785
    %v3520 = vunpack.c.h.b16 %v785
    %v3521 = vunpack.c.l.b16 %v786
    %v3522 = vunpack.c.h.b16 %v786
    %v3523 = vunpack.c.l.b16 %v787
    %v3524 = vunpack.c.h.b16 %v787
    %v3525 = vunpack.c.l.b16 %v788
    %v3526 = vunpack.c.h.b16 %v788
    %v3527 = vunpack.c.l.b16 %v789
    %v3528 = vunpack.c.h.b16 %v789
    %v3529 = vunpack.c.l.b16 %v790
    %v3530 = vunpack.c.h.b16 %v790
    %v3531 = vunpack.c.l.b16 %v791
    %v3532 = vunpack.c.h.b16 %v791
    %v3533 = vunpack.c.l.b16 %v792
    %v3534 = vunpack.c.h.b16 %v792
    %v3535 = vunpack.c.l.b16 %v793
    %v3536 = vunpack.c.h.b16 %v793
    %v3537 = vunpack.c.l.b16 %v794
    %v3538 = vunpack.c.h.b16 %v794
    %v3539 = vunpack.c.l.b16 %v795
    %v3540 = vunpack.c.h.b16 %v795
    %v3541 = vunpack.c.l.b16 %v796
    %v3542 = vunpack.c.h.b16 %v796
    %v3543 = vunpack.c.l.b16 %v797
    %v3544 = vunpack.c.h.b16 %v797
    %v3545 = vunpack.c.l.b16 %v798
    %v3546 = vunpack.c.h.b16 %v798
    %v3547 = vunpack.c.l.b16 %v799
    %v3548 = vunpack.c.h.b16 %v799
    %v3549 = vunpack.c.l.b16 %v800
    %v3550 = vunpack.c.h.b16 %v800
    %v3551 = vunpack.c.l.b16 %v801
    %v3552 = vunpack.c.h.b16 %v801
    %v3553 = vunpack.c.l.b16 %v802
    %v3554 = vunpack.c.h.b16 %v802
    %v3555 = vunpack.c.l.b16 %v803
    %v3556 = vunpack.c.h.b16 %v803
    %v3557 = vunpack.c.l.b16 %v804
    %v3558 = vunpack.c.h.b16 %v804
    %v3559 = vunpack.c.l.b16 %v805
    %v3560 = vunpack.c.h.b16 %v805
    %v3561 = vunpack.c.l.b16 %v806
    %v3562 = vunpack.c.h.b16 %v806
    %v3563 = vunpack.c.l.b16 %v807
    %v3564 = vunpack.c.h.b16 %v807
    %v3565 = vunpack.c.l.b16 %v808
    %v3566 = vunpack.c.h.b16 %v808
    %v3567 = vunpack.c.l.b16 %v809
    %v3568 = vunpack.c.h.b16 %v809
    %v3569 = vunpack.c.l.b16 %v810
    %v3570 = vunpack.c.h.b16 %v810
    %v3571 = vunpack.c.l.b16 %v811
    %v3572 = vunpack.c.h.b16 %v811
    %v3573 = vunpack.c.l.b16 %v812
    %v3574 = vunpack.c.h.b16 %v812
    %v3575 = vunpack.c.l.b16 %v813
    %v3576 = vunpack.c.h.b16 %v813
    %v3577 = vunpack.c.l.b16 %v814
    %v3578 = vunpack.c.h.b16 %v814
    %v3579 = vunpack.c.l.b16 %v815
    %v3580 = vunpack.c.h.b16 %v815
    %v3581 = vunpack.c.l.b16 %v816
    %v3582 = vunpack.c.h.b16 %v816
    %v3583 = vunpack.c.l.b16 %v817
    %v3584 = vunpack.c.h.b16 %v817
    %v3585 = vunpack.c.l.b16 %v818
    %v3586 = vunpack.c.h.b16 %v818
    %v3587 = vunpack.c.l.b16 %v819
    %v3588 = vunpack.c.h.b16 %v819
    %v3589 = vunpack.c.l.b16 %v820
    %v3590 = vunpack.c.h.b16 %v820
    %v3591 = vunpack.c.l.b16 %v821
    %v3592 = vunpack.c.h.b16 %v821
    %v3593 = vunpack.c.l.b16 %v822
    %v3594 = vunpack.c.h.b16 %v822
    %v3595 = vunpack.c.l.b16 %v823
    %v3596 = vunpack.c.h.b16 %v823
    %v3597 = vunpack.c.l.b16 %v824
    %v3598 = vunpack.c.h.b16 %v824
    %v3599 = vunpack.c.l.b16 %v825
    %v3600 = vunpack.c.h.b16 %v825
    %v3601 = vunpack.c.l.b16 %v826
    %v3602 = vunpack.c.h.b16 %v826
    %v3603 = vunpack.c.l.b16 %v827
    %v3604 = vunpack.c.h.b16 %v827
    %v3605 = vunpack.c.l.b16 %v828
    %v3606 = vunpack.c.h.b16 %v828
    %v3607 = vunpack.c.l.b16 %v829
    %v3608 = vunpack.c.h.b16 %v829
    %v3609 = vunpack.c.l.b16 %v830
    %v3610 = vunpack.c.h.b16 %v830
    %v3611 = vunpack.c.l.b16 %v831
    %v3612 = vunpack.c.h.b16 %v831
    %v3613 = vunpack.c.l.b16 %v832
    %v3614 = vunpack.c.h.b16 %v832
    %v3615 = vunpack.c.l.b16 %v833
    %v3616 = vunpack.c.h.b16 %v833
    %v3617 = vunpack.c.l.b16 %v834
    %v3618 = vunpack.c.h.b16 %v834
    %v3619 = vunpack.c.l.b16 %v835
    %v3620 = vunpack.c.h.b16 %v835
    %v3621 = vunpack.c.l.b16 %v836
    %v3622 = vunpack.c.h.b16 %v836
    %v3623 = vunpack.c.l.b16 %v837
    %v3624 = vunpack.c.h.b16 %v837
    %v3625 = vunpack.c.l.b16 %v838
    %v3626 = vunpack.c.h.b16 %v838
    %v3627 = vunpack.c.l.b16 %v839
    %v3628 = vunpack.c.h.b16 %v839
    %v3629 = vunpack.c.l.b16 %v840
    %v3630 = vunpack.c.h.b16 %v840
    %v3631 = vunpack.c.l.b16 %v841
    %v3632 = vunpack.c.h.b16 %v841
    %v3633 = vunpack.c.l.b16 %v842
    %v3634 = vunpack.c.h.b16 %v842
    %v3635 = vunpack.c.l.b16 %v843
    %v3636 = vunpack.c.h.b16 %v843
    %v3637 = vunpack.c.l.b16 %v844
    %v3638 = vunpack.c.h.b16 %v844
    %v3639 = vunpack.c.l.b16 %v845
    %v3640 = vunpack.c.h.b16 %v845
    %v3641 = vunpack.c.l.b16 %v846
    %v3642 = vunpack.c.h.b16 %v846
    %v3643 = vunpack.c.l.b16 %v847
    %v3644 = vunpack.c.h.b16 %v847
    %v3645 = vunpack.c.l.b16 %v848
    %v3646 = vunpack.c.h.b16 %v848
    %v3647 = vunpack.c.l.b16 %v849
    %v3648 = vunpack.c.h.b16 %v849
    %v3649 = vunpack.c.l.b16 %v850
    %v3650 = vunpack.c.h.b16 %v850
    %v3651 = vunpack.c.l.b16 %v851
    %v3652 = vunpack.c.h.b16 %v851
    %v3653 = vunpack.c.l.b16 %v852
    %v3654 = vunpack.c.h.b16 %v852
    %v3655 = vunpack.c.l.b16 %v853
    %v3656 = vunpack.c.h.b16 %v853
    %v3657 = vunpack.c.l.b16 %v854
    %v3658 = vunpack.c.h.b16 %v854
    %v3659 = vunpack.c.l.b16 %v855
    %v3660 = vunpack.c.h.b16 %v855
    %v3661 = vunpack.c.l.b16 %v856
    %v3662 = vunpack.c.h.b16 %v856
    %v3663 = vunpack.c.l.b16 %v857
    %v3664 = vunpack.c.h.b16 %v857
    %v3665 = vunpack.c.l.b16 %v858
    %v3666 = vunpack.c.h.b16 %v858
    %v3667 = vunpack.c.l.b16 %v859
    %v3668 = vunpack.c.h.b16 %v859
    %v3669 = vunpack.c.l.b16 %v860
    %v3670 = vunpack.c.h.b16 %v860
    %v3671 = vunpack.c.l.b16 %v861
    %v3672 = vunpack.c.h.b16 %v861
    %v3673 = vunpack.c.l.b16 %v862
    %v3674 = vunpack.c.h.b16 %v862
    %v3675 = vunpack.c.l.b16 %v863
    %v3676 = vunpack.c.h.b16 %v863
    %v3677 = vunpack.c.l.b16 %v864
    %v3678 = vunpack.c.h.b16 %v864
    %v3679 = vunpack.c.l.b16 %v865
    %v3680 = vunpack.c.h.b16 %v865
    %v3681 = vunpack.c.l.b16 %v866
    %v3682 = vunpack.c.h.b16 %v866
    %v3683 = vunpack.c.l.b16 %v867
    %v3684 = vunpack.c.h.b16 %v867
    %v3685 = vunpack.c.l.b16 %v868
    %v3686 = vunpack.c.h.b16 %v868
    %v3687 = vunpack.c.l.b16 %v869
    %v3688 = vunpack.c.h.b16 %v869
    %v3689 = vunpack.c.l.b16 %v870
    %v3690 = vunpack.c.h.b16 %v870
    %v3691 = vunpack.c.l.b16 %v871
    %v3692 = vunpack.c.h.b16 %v871
    %v3693 = vunpack.c.l.b16 %v872
    %v3694 = vunpack.c.h.b16 %v872
    %v3695 = vunpack.c.l.b16 %v873
    %v3696 = vunpack.c.h.b16 %v873
    %v3697 = vunpack.c.l.b16 %v874
    %v3698 = vunpack.c.h.b16 %v874
    %v3699 = vunpack.c.l.b16 %v875
    %v3700 = vunpack.c.h.b16 %v875
    %v3701 = vunpack.c.l.b16 %v876
    %v3702 = vunpack.c.h.b16 %v876
    %v3703 = vunpack.c.l.b16 %v877
    %v3704 = vunpack.c.h.b16 %v877
    %v3705 = vunpack.c.l.b16 %v878
    %v3706 = vunpack.c.h.b16 %v878
    %v3707 = vunpack.c.l.b16 %v879
    %v3708 = vunpack.c.h.b16 %v879
    %v3709 = vunpack.c.l.b16 %v880
    %v3710 = vunpack.c.h.b16 %v880
    %v3711 = vunpack.c.l.b16 %v881
    %v3712 = vunpack.c.h.b16 %v881
    %v3713 = vunpack.c.l.b16 %v882
    %v3714 = vunpack.c.h.b16 %v882
    %v3715 = vunpack.c.l.b16 %v883
    %v3716 = vunpack.c.h.b16 %v883
    %v3717 = vunpack.c.l.b16 %v884
    %v3718 = vunpack.c.h.b16 %v884
    %v3719 = vunpack.c.l.b16 %v885
    %v3720 = vunpack.c.h.b16 %v885
    %v3721 = vunpack.c.l.b16 %v886
    %v3722 = vunpack.c.h.b16 %v886
    %v3723 = vunpack.c.l.b16 %v887
    %v3724 = vunpack.c.h.b16 %v887
    %v3725 = vunpack.c.l.b16 %v888
    %v3726 = vunpack.c.h.b16 %v888
    %v3727 = vunpack.c.l.b16 %v889
    %v3728 = vunpack.c.h.b16 %v889
    %v3729 = vunpack.c.l.b16 %v890
    %v3730 = vunpack.c.h.b16 %v890
    %v3731 = vunpack.c.l.b16 %v891
    %v3732 = vunpack.c.h.b16 %v891
    %v3733 = vunpack.c.l.b16 %v892
    %v3734 = vunpack.c.h.b16 %v892
    %v3735 = vunpack.c.l.b16 %v893
    %v3736 = vunpack.c.h.b16 %v893
    %v3737 = vunpack.c.l.b16 %v894
    %v3738 = vunpack.c.h.b16 %v894
    %v3739 = vunpack.c.l.b16 %v895
    %v3740 = vunpack.c.h.b16 %v895
    %v3741 = vunpack.c.l.b16 %v896
    %v3742 = vunpack.c.h.b16 %v896
    %v3743 = vunpack.c.l.b16 %v897
    %v3744 = vunpack.c.h.b16 %v897
    %v3745 = vunpack.c.l.b16 %v898
    %v3746 = vunpack.c.h.b16 %v898
    %v3747 = vunpack.c.l.b16 %v899
    %v3748 = vunpack.c.h.b16 %v899
    %v3749 = vunpack.c.l.b16 %v900
    %v3750 = vunpack.c.h.b16 %v900
    %v3751 = vunpack.c.l.b16 %v901
    %v3752 = vunpack.c.h.b16 %v901
    %v3753 = vunpack.c.l.b16 %v902
    %v3754 = vunpack.c.h.b16 %v902
    %v3755 = vunpack.c.l.b16 %v903
    %v3756 = vunpack.c.h.b16 %v903
    %v3757 = vunpack.c.l.b16 %v904
    %v3758 = vunpack.c.h.b16 %v904
    %v3759 = vunpack.c.l.b16 %v905
    %v3760 = vunpack.c.h.b16 %v905
    %v3761 = vunpack.c.l.b16 %v906
    %v3762 = vunpack.c.h.b16 %v906
    %v3763 = vunpack.c.l.b16 %v907
    %v3764 = vunpack.c.h.b16 %v907
    %v3765 = vunpack.c.l.b16 %v908
    %v3766 = vunpack.c.h.b16 %v908
    %v3767 = vunpack.c.l.b16 %v909
    %v3768 = vunpack.c.h.b16 %v909
    %v3769 = vunpack.c.l.b16 %v910
    %v3770 = vunpack.c.h.b16 %v910
    %v3771 = vunpack.c.l.b16 %v911
    %v3772 = vunpack.c.h.b16 %v911
    %v3773 = vunpack.c.l.b16 %v912
    %v3774 = vunpack.c.h.b16 %v912
    %v3775 = vunpack.c.l.b16 %v913
    %v3776 = vunpack.c.h.b16 %v913
    %v3777 = vunpack.c.l.b16 %v914
    %v3778 = vunpack.c.h.b16 %v914
    %v3779 = vunpack.c.l.b16 %v915
    %v3780 = vunpack.c.h.b16 %v915
    %v3781 = vunpack.c.l.b16 %v916
    %v3782 = vunpack.c.h.b16 %v916
    %v3783 = vunpack.c.l.b16 %v917
    %v3784 = vunpack.c.h.b16 %v917
    %v3785 = vunpack.c.l.b16 %v918
    %v3786 = vunpack.c.h.b16 %v918
    %v3787 = vunpack.c.l.b16 %v919
    %v3788 = vunpack.c.h.b16 %v919
    %v3789 = vunpack.c.l.b16 %v920
    %v3790 = vunpack.c.h.b16 %v920
    %v3791 = vunpack.c.l.b16 %v921
    %v3792 = vunpack.c.h.b16 %v921
    %v3793 = vunpack.c.l.b16 %v922
    %v3794 = vunpack.c.h.b16 %v922
    %v3795 = vunpack.c.l.b16 %v923
    %v3796 = vunpack.c.h.b16 %v923
    %v3797 = vunpack.c.l.b16 %v924
    %v3798 = vunpack.c.h.b16 %v924
    %v3799 = vunpack.c.l.b16 %v925
    %v3800 = vunpack.c.h.b16 %v925
    %v3801 = vunpack.c.l.b16 %v926
    %v3802 = vunpack.c.h.b16 %v926
    %v3803 = vunpack.c.l.b16 %v927
    %v3804 = vunpack.c.h.b16 %v927
    %v3805 = vunpack.c.l.b16 %v928
    %v3806 = vunpack.c.h.b16 %v928
    %v3807 = vunpack.c.l.b16 %v929
    %v3808 = vunpack.c.h.b16 %v929
    %v3809 = vunpack.c.l.b16 %v930
    %v3810 = vunpack.c.h.b16 %v930
    %v3811 = vunpack.c.l.b16 %v931
    %v3812 = vunpack.c.h.b16 %v931
    %v3813 = vunpack.c.l.b16 %v932
    %v3814 = vunpack.c.h.b16 %v932
    %v3815 = vunpack.c.l.b16 %v933
    %v3816 = vunpack.c.h.b16 %v933
    %v3817 = vunpack.c.l.b16 %v934
    %v3818 = vunpack.c.h.b16 %v934
    %v3819 = vunpack.c.l.b16 %v935
    %v3820 = vunpack.c.h.b16 %v935
    %v3821 = vunpack.c.l.b16 %v936
    %v3822 = vunpack.c.h.b16 %v936
    %v3823 = vunpack.c.l.b16 %v937
    %v3824 = vunpack.c.h.b16 %v937
    %v3825 = vunpack.c.l.b16 %v938
    %v3826 = vunpack.c.h.b16 %v938
    %v3827 = vunpack.c.l.b16 %v939
    %v3828 = vunpack.c.h.b16 %v939
    %v3829 = vunpack.c.l.b16 %v940
    %v3830 = vunpack.c.h.b16 %v940
    %v3831 = vunpack.c.l.b16 %v941
    %v3832 = vunpack.c.h.b16 %v941
    %v3833 = vunpack.c.l.b16 %v942
    %v3834 = vunpack.c.h.b16 %v942
    %v3835 = vunpack.c.l.b16 %v943
    %v3836 = vunpack.c.h.b16 %v943
    %v3837 = vunpack.c.l.b16 %v944
    %v3838 = vunpack.c.h.b16 %v944
    %v3839 = vunpack.c.l.b16 %v945
    %v3840 = vunpack.c.h.b16 %v945
    %v3841 = vunpack.c.l.b16 %v946
    %v3842 = vunpack.c.h.b16 %v946
    %v3843 = vunpack.c.l.b16 %v947
    %v3844 = vunpack.c.h.b16 %v947
    %v3845 = vunpack.c.l.b16 %v948
    %v3846 = vunpack.c.h.b16 %v948
    %v3847 = vunpack.c.l.b16 %v949
    %v3848 = vunpack.c.h.b16 %v949
    %v3849 = vunpack.c.l.b16 %v950
    %v3850 = vunpack.c.h.b16 %v950
    %v3851 = vunpack.c.l.b16 %v951
    %v3852 = vunpack.c.h.b16 %v951
    %v3853 = vunpack.c.l.b16 %v952
    %v3854 = vunpack.c.h.b16 %v952
    %v3855 = vunpack.c.l.b16 %v953
    %v3856 = vunpack.c.h.b16 %v953
    %v3857 = vunpack.c.l.b16 %v954
    %v3858 = vunpack.c.h.b16 %v954
    %v3859 = vunpack.c.l.b16 %v955
    %v3860 = vunpack.c.h.b16 %v955
    %v3861 = vunpack.c.l.b16 %v956
    %v3862 = vunpack.c.h.b16 %v956
    %v3863 = vunpack.c.l.b16 %v957
    %v3864 = vunpack.c.h.b16 %v957
    %v3865 = vunpack.c.l.b16 %v958
    %v3866 = vunpack.c.h.b16 %v958
    %v3867 = vunpack.c.l.b16 %v959
    %v3868 = vunpack.c.h.b16 %v959
    %v3869 = vunpack.c.l.b16 %v960
    %v3870 = vunpack.c.h.b16 %v960
    %v3871 = vunpack.c.l.b16 %v961
    %v3872 = vunpack.c.h.b16 %v961
    %v3873 = vunpack.c.l.b16 %v962
    %v3874 = vunpack.c.h.b16 %v962
    %v3875 = vunpack.c.l.b16 %v963
    %v3876 = vunpack.c.h.b16 %v963
    %v3877 = vunpack.c.l.b16 %v964
    %v3878 = vunpack.c.h.b16 %v964
    %v3879 = vunpack.c.l.b16 %v965
    %v3880 = vunpack.c.h.b16 %v965
    %v3881 = vunpack.c.l.b16 %v966
    %v3882 = vunpack.c.h.b16 %v966
    %v3883 = vunpack.c.l.b16 %v967
    %v3884 = vunpack.c.h.b16 %v967
    %v3885 = vunpack.c.l.b16 %v968
    %v3886 = vunpack.c.h.b16 %v968
    %v3887 = vunpack.c.l.b16 %v969
    %v3888 = vunpack.c.h.b16 %v969
    %v3889 = vunpack.c.l.b16 %v970
    %v3890 = vunpack.c.h.b16 %v970
    %v3891 = vunpack.c.l.b16 %v971
    %v3892 = vunpack.c.h.b16 %v971
    %v3893 = vunpack.c.l.b16 %v972
    %v3894 = vunpack.c.h.b16 %v972
    %v3895 = vunpack.c.l.b16 %v973
    %v3896 = vunpack.c.h.b16 %v973
    %v3897 = vunpack.c.l.b16 %v974
    %v3898 = vunpack.c.h.b16 %v974
    %v3899 = vunpack.c.l.b16 %v975
    %v3900 = vunpack.c.h.b16 %v975
    %v3901 = vunpack.c.l.b16 %v976
    %v3902 = vunpack.c.h.b16 %v976
    %v3903 = vunpack.c.l.b16 %v977
    %v3904 = vunpack.c.h.b16 %v977
    %v3905 = vunpack.c.l.b16 %v978
    %v3906 = vunpack.c.h.b16 %v978
    %v3907 = vunpack.c.l.b16 %v979
    %v3908 = vunpack.c.h.b16 %v979
    %v3909 = vunpack.c.l.b16 %v980
    %v3910 = vunpack.c.h.b16 %v980
    %v3911 = vunpack.c.l.b16 %v981
    %v3912 = vunpack.c.h.b16 %v981
    %v3913 = vunpack.c.l.b16 %v982
    %v3914 = vunpack.c.h.b16 %v982
    %v3915 = vunpack.c.l.b16 %v983
    %v3916 = vunpack.c.h.b16 %v983
    %v3917 = vunpack.c.l.b16 %v984
    %v3918 = vunpack.c.h.b16 %v984
    %v3919 = vunpack.c.l.b16 %v985
    %v3920 = vunpack.c.h.b16 %v985
    %v3921 = vunpack.c.l.b16 %v986
    %v3922 = vunpack.c.h.b16 %v986
    %v3923 = vunpack.c.l.b16 %v987
    %v3924 = vunpack.c.h.b16 %v987
    %v3925 = vunpack.c.l.b16 %v988
    %v3926 = vunpack.c.h.b16 %v988
    %v3927 = vunpack.c.l.b16 %v989
    %v3928 = vunpack.c.h.b16 %v989
    %v3929 = vunpack.c.l.b16 %v990
    %v3930 = vunpack.c.h.b16 %v990
    %v3931 = vunpack.c.l.b16 %v991
    %v3932 = vunpack.c.h.b16 %v991
    %v3933 = vunpack.c.l.b16 %v992
    %v3934 = vunpack.c.h.b16 %v992
    %v3935 = vunpack.c.l.b16 %v993
    %v3936 = vunpack.c.h.b16 %v993
    %v3937 = vunpack.c.l.b16 %v994
    %v3938 = vunpack.c.h.b16 %v994
    %v3939 = vunpack.c.l.b16 %v995
    %v3940 = vunpack.c.h.b16 %v995
    %v3941 = vunpack.c.l.b16 %v996
    %v3942 = vunpack.c.h.b16 %v996
    %v3943 = vunpack.c.l.b16 %v997
    %v3944 = vunpack.c.h.b16 %v997
    %v3945 = vunpack.c.l.b16 %v998
    %v3946 = vunpack.c.h.b16 %v998
    %v3947 = vunpack.c.l.b16 %v999
    %v3948 = vunpack.c.h.b16 %v999
    %v3949 = vunpack.c.l.b16 %v1000
    %v3950 = vunpack.c.h.b16 %v1000
    %v3951 = vunpack.c.l.b16 %v1001
    %v3952 = vunpack.c.h.b16 %v1001
    %v3953 = vunpack.c.l.b16 %v1002
    %v3954 = vunpack.c.h.b16 %v1002
    %v3955 = vunpack.c.l.b16 %v1003
    %v3956 = vunpack.c.h.b16 %v1003
    %v3957 = vunpack.c.l.b16 %v1004
    %v3958 = vunpack.c.h.b16 %v1004
    %v3959 = vunpack.c.l.b16 %v1005
    %v3960 = vunpack.c.h.b16 %v1005
    %v3961 = vunpack.c.l.b16 %v1006
    %v3962 = vunpack.c.h.b16 %v1006
    %v3963 = vunpack.c.l.b16 %v1007
    %v3964 = vunpack.c.h.b16 %v1007
    %v3965 = vunpack.c.l.b16 %v1008
    %v3966 = vunpack.c.h.b16 %v1008
    %v3967 = vunpack.c.l.b16 %v1009
    %v3968 = vunpack.c.h.b16 %v1009
    %v3969 = vunpack.c.l.b16 %v1010
    %v3970 = vunpack.c.h.b16 %v1010
    %v3971 = vunpack.c.l.b16 %v1011
    %v3972 = vunpack.c.h.b16 %v1011
    %v3973 = vunpack.c.l.b16 %v1012
    %v3974 = vunpack.c.h.b16 %v1012
    %v3975 = vunpack.c.l.b16 %v1013
    %v3976 = vunpack.c.h.b16 %v1013
    %v3977 = vunpack.c.l.b16 %v1014
    %v3978 = vunpack.c.h.b16 %v1014
    %v3979 = vunpack.c.l.b16 %v1015
    %v3980 = vunpack.c.h.b16 %v1015
    %v3981 = vunpack.c.l.b16 %v1016
    %v3982 = vunpack.c.h.b16 %v1016
    %v3983 = vunpack.c.l.b16 %v1017
    %v3984 = vunpack.c.h.b16 %v1017
    %v3985 = vunpack.c.l.b16 %v1018
    %v3986 = vunpack.c.h.b16 %v1018
    %v3987 = vunpack.c.l.b16 %v1019
    %v3988 = vunpack.c.h.b16 %v1019
    %v3989 = vunpack.c.l.b16 %v1020
    %v3990 = vunpack.c.h.b16 %v1020
    %v3991 = vunpack.c.l.b16 %v1021
    %v3992 = vunpack.c.h.b16 %v1021
    %v3993 = vunpack.c.l.b16 %v1022
    %v3994 = vunpack.c.h.b16 %v1022
    %v3995 = vunpack.c.l.b16 %v1023
    %v3996 = vunpack.c.h.b16 %v1023
    %v3997 = vunpack.c.l.b16 %v1024
    %v3998 = vunpack.c.h.b16 %v1024
    %v3999 = vunpack.c.l.b16 %v1025
    %v4000 = vunpack.c.h.b16 %v1025
    %v4001 = vunpack.c.l.b16 %v1026
    %v4002 = vunpack.c.h.b16 %v1026
    %v4003 = vunpack.c.l.b16 %v1027
    %v4004 = vunpack.c.h.b16 %v1027
    %v4005 = vunpack.c.l.b16 %v1028
    %v4006 = vunpack.c.h.b16 %v1028
    %v4007 = vunpack.c.l.b16 %v1029
    %v4008 = vunpack.c.h.b16 %v1029
    %v4009 = vunpack.c.l.b16 %v1030
    %v4010 = vunpack.c.h.b16 %v1030
    %v4011 = vunpack.c.l.b16 %v1031
    %v4012 = vunpack.c.h.b16 %v1031
    %v4013 = vunpack.c.l.b16 %v1032
    %v4014 = vunpack.c.h.b16 %v1032
    %v4015 = vunpack.c.l.b16 %v1033
    %v4016 = vunpack.c.h.b16 %v1033
    %v4017 = vunpack.c.l.b16 %v1034
    %v4018 = vunpack.c.h.b16 %v1034
    %v4019 = vunpack.c.l.b16 %v1035
    %v4020 = vunpack.c.h.b16 %v1035
    %v4021 = vunpack.c.l.b16 %v1036
    %v4022 = vunpack.c.h.b16 %v1036
    %v4023 = vunpack.c.l.b16 %v1037
    %v4024 = vunpack.c.h.b16 %v1037
    %v4025 = vunpack.c.l.b16 %v1038
    %v4026 = vunpack.c.h.b16 %v1038
    %v4027 = vunpack.c.l.b16 %v1039
    %v4028 = vunpack.c.h.b16 %v1039
    %v4029 = vunpack.c.l.b16 %v1040
    %v4030 = vunpack.c.h.b16 %v1040
    %v4031 = vunpack.c.l.b16 %v1041
    %v4032 = vunpack.c.h.b16 %v1041
    %v4033 = vunpack.c.l.b16 %v1042
    %v4034 = vunpack.c.h.b16 %v1042
    %v4035 = vunpack.c.l.b16 %v1043
    %v4036 = vunpack.c.h.b16 %v1043
    %v4037 = vunpack.c.l.b16 %v1044
    %v4038 = vunpack.c.h.b16 %v1044
    %v4039 = vunpack.c.l.b16 %v1045
    %v4040 = vunpack.c.h.b16 %v1045
    %v4041 = vunpack.c.l.b16 %v1046
    %v4042 = vunpack.c.h.b16 %v1046
    %v4043 = vunpack.c.l.b16 %v1047
    %v4044 = vunpack.c.h.b16 %v1047
    %v4045 = vunpack.c.l.b16 %v1048
    %v4046 = vunpack.c.h.b16 %v1048
    %v4047 = vunpack.c.l.b16 %v1049
    %v4048 = vunpack.c.h.b16 %v1049
    %v4049 = vunpack.c.l.b16 %v1050
    %v4050 = vunpack.c.h.b16 %v1050
    %v4051 = vunpack.c.l.b16 %v1051
    %v4052 = vunpack.c.h.b16 %v1051
    %v4053 = vunpack.c.l.b16 %v1052
    %v4054 = vunpack.c.h.b16 %v1052
    %v4055 = vunpack.c.l.b16 %v1053
    %v4056 = vunpack.c.h.b16 %v1053
    %v4057 = vunpack.c.l.b16 %v1054
    %v4058 = vunpack.c.h.b16 %v1054
    %v4059 = vunpack.c.l.b16 %v1055
    %v4060 = vunpack.c.h.b16 %v1055
    %v4061 = vunpack.c.l.b16 %v1056
    %v4062 = vunpack.c.h.b16 %v1056
    %v4063 = vunpack.c.l.b16 %v1057
    %v4064 = vunpack.c.h.b16 %v1057
    %v4065 = vunpack.c.l.b16 %v1058
    %v4066 = vunpack.c.h.b16 %v1058
    %v4067 = vunpack.c.l.b16 %v1059
    %v4068 = vunpack.c.h.b16 %v1059
    %v4069 = vunpack.c.l.b16 %v1060
    %v4070 = vunpack.c.h.b16 %v1060
    %v4071 = vunpack.c.l.b16 %v1061
    %v4072 = vunpack.c.h.b16 %v1061
    %v4073 = vunpack.c.l.b16 %v1062
    %v4074 = vunpack.c.h.b16 %v1062
    %v4075 = vunpack.c.l.b16 %v1063
    %v4076 = vunpack.c.h.b16 %v1063
    %v4077 = vunpack.c.l.b16 %v1064
    %v4078 = vunpack.c.h.b16 %v1064
    %v4079 = vunpack.c.l.b16 %v1065
    %v4080 = vunpack.c.h.b16 %v1065
    %v4081 = vunpack.c.l.b16 %v1066
    %v4082 = vunpack.c.h.b16 %v1066
    %v4083 = vunpack.c.l.b16 %v1067
    %v4084 = vunpack.c.h.b16 %v1067
    %v4085 = vunpack.c.l.b16 %v1068
    %v4086 = vunpack.c.h.b16 %v1068
    %v4087 = vunpack.c.l.b16 %v1069
    %v4088 = vunpack.c.h.b16 %v1069
    %v4089 = vunpack.c.l.b16 %v1070
    %v4090 = vunpack.c.h.b16 %v1070
    %v4091 = vunpack.c.l.b16 %v1071
    %v4092 = vunpack.c.h.b16 %v1071
    %v4093 = vunpack.c.l.b16 %v1072
    %v4094 = vunpack.c.h.b16 %v1072
    %v4095 = vunpack.c.l.b16 %v1073
    %v4096 = vunpack.c.h.b16 %v1073
    %v4097 = vunpack.c.l.b16 %v1074
    %v4098 = vunpack.c.h.b16 %v1074
    %v4099 = vunpack.c.l.b16 %v1075
    %v4100 = vunpack.c.h.b16 %v1075
    %v4101 = vunpack.c.l.b16 %v1076
    %v4102 = vunpack.c.h.b16 %v1076
    %v4103 = vunpack.c.l.b16 %v1077
    %v4104 = vunpack.c.h.b16 %v1077
    %v4105 = vunpack.c.l.b16 %v1078
    %v4106 = vunpack.c.h.b16 %v1078
    %v4107 = vunpack.c.l.b16 %v1079
    %v4108 = vunpack.c.h.b16 %v1079
    %v4109 = vunpack.c.l.b16 %v1080
    %v4110 = vunpack.c.h.b16 %v1080
    %v4111 = vunpack.c.l.b16 %v1081
    %v4112 = vunpack.c.h.b16 %v1081
    %v4113 = vunpack.c.l.b16 %v1082
    %v4114 = vunpack.c.h.b16 %v1082
    %v4115 = vunpack.c.l.b16 %v1083
    %v4116 = vunpack.c.h.b16 %v1083
    %v4117 = vunpack.c.l.b16 %v1084
    %v4118 = vunpack.c.h.b16 %v1084
    %v4119 = vunpack.c.l.b16 %v1085
    %v4120 = vunpack.c.h.b16 %v1085
    %v4121 = vunpack.c.l.b16 %v1086
    %v4122 = vunpack.c.h.b16 %v1086
    %v4123 = vunpack.c.l.b16 %v1087
    %v4124 = vunpack.c.h.b16 %v1087
    %v4125 = vunpack.c.l.b16 %v1088
    %v4126 = vunpack.c.h.b16 %v1088
    %v4127 = vunpack.c.l.b16 %v1089
    %v4128 = vunpack.c.h.b16 %v1089
    %v4129 = vunpack.c.l.b16 %v1090
    %v4130 = vunpack.c.h.b16 %v1090
    %v4131 = vunpack.c.l.b16 %v1091
    %v4132 = vunpack.c.h.b16 %v1091
    %v4133 = vunpack.c.l.b16 %v1092
    %v4134 = vunpack.c.h.b16 %v1092
    %v4135 = vunpack.c.l.b16 %v1093
    %v4136 = vunpack.c.h.b16 %v1093
    %v4137 = vunpack.c.l.b16 %v1094
    %v4138 = vunpack.c.h.b16 %v1094
    %v4139 = vunpack.c.l.b16 %v1095
    %v4140 = vunpack.c.h.b16 %v1095
    %v4141 = vunpack.c.l.b16 %v1096
    %v4142 = vunpack.c.h.b16 %v1096
    %v4143 = vunpack.c.l.b16 %v1097
    %v4144 = vunpack.c.h.b16 %v1097
    %v4145 = vunpack.c.l.b16 %v1098
    %v4146 = vunpack.c.h.b16 %v1098
    %v4147 = vunpack.c.l.b16 %v1099
    %v4148 = vunpack.c.h.b16 %v1099
    %v4149 = vunpack.c.l.b16 %v1100
    %v4150 = vunpack.c.h.b16 %v1100
    %v4151 = vunpack.c.l.b16 %v1101
    %v4152 = vunpack.c.h.b16 %v1101
    %v4153 = vunpack.c.l.b16 %v1102
    %v4154 = vunpack.c.h.b16 %v1102
    %v4155 = vunpack.c.l.b16 %v1103
    %v4156 = vunpack.c.h.b16 %v1103
    %v4157 = vunpack.c.l.b16 %v1104
    %v4158 = vunpack.c.h.b16 %v1104
    %v4159 = vunpack.c.l.b16 %v1105
    %v4160 = vunpack.c.h.b16 %v1105
    %v4161 = vunpack.c.l.b16 %v1106
    %v4162 = vunpack.c.h.b16 %v1106
    %v4163 = vunpack.c.l.b16 %v1107
    %v4164 = vunpack.c.h.b16 %v1107
    %v4165 = vunpack.c.l.b16 %v1108
    %v4166 = vunpack.c.h.b16 %v1108
    %v4167 = vunpack.c.l.b16 %v1109
    %v4168 = vunpack.c.h.b16 %v1109
    %v4169 = vunpack.c.l.b16 %v1110
    %v4170 = vunpack.c.h.b16 %v1110
    %v4171 = vunpack.c.l.b16 %v1111
    %v4172 = vunpack.c.h.b16 %v1111
    %v4173 = vunpack.c.l.b16 %v1112
    %v4174 = vunpack.c.h.b16 %v1112
    %v4175 = vunpack.c.l.b16 %v1113
    %v4176 = vunpack.c.h.b16 %v1113
    %v4177 = vunpack.c.l.b16 %v1114
    %v4178 = vunpack.c.h.b16 %v1114
    %v4179 = vunpack.c.l.b16 %v1115
    %v4180 = vunpack.c.h.b16 %v1115
    %v4181 = vunpack.c.l.b16 %v1116
    %v4182 = vunpack.c.h.b16 %v1116
    %v4183 = vunpack.c.l.b16 %v1117
    %v4184 = vunpack.c.h.b16 %v1117
    %v4185 = vunpack.c.l.b16 %v1118
    %v4186 = vunpack.c.h.b16 %v1118
    %v4187 = vunpack.c.l.b16 %v1119
    %v4188 = vunpack.c.h.b16 %v1119
    %v4189 = vunpack.c.l.b16 %v1120
    %v4190 = vunpack.c.h.b16 %v1120
    %v4191 = vunpack.c.l.b16 %v1121
    %v4192 = vunpack.c.h.b16 %v1121
    %v4193 = vunpack.c.l.b16 %v1122
    %v4194 = vunpack.c.h.b16 %v1122
    %v4195 = vpack.c.b16 %v2163, %v2147
    %v4196 = vpack.c.b16 %v2164, %v2148
    %v4197 = vpack.c.b16 %v2165, %v2149
    %v4198 = vpack.c.b16 %v2166, %v2150
    %v4199 = vpack.c.b16 %v2167, %v2151
    %v4200 = vpack.c.b16 %v2168, %v2152
    %v4201 = vpack.c.b16 %v2169, %v2153
    %v4202 = vpack.c.b16 %v2170, %v2154
    %v4203 = vpack.c.b16 %v2171, %v2155
    %v4204 = vpack.c.b16 %v2172, %v2156
    %v4205 = vpack.c.b16 %v2173, %v2157
    %v4206 = vpack.c.b16 %v2174, %v2158
    %v4207 = vpack.c.b16 %v2175, %v2159
    %v4208 = vpack.c.b16 %v2176, %v2160
    %v4209 = vpack.c.b16 %v2177, %v2161
    %v4210 = vpack.c.b16 %v2178, %v2162
    %v4211 = vpack.c.b16 %v2195, %v2179
    %v4212 = vpack.c.b16 %v2196, %v2180
    %v4213 = vpack.c.b16 %v2197, %v2181
    %v4214 = vpack.c.b16 %v2198, %v2182
    %v4215 = vpack.c.b16 %v2199, %v2183
    %v4216 = vpack.c.b16 %v2200, %v2184
    %v4217 = vpack.c.b16 %v2201, %v2185
    %v4218 = vpack.c.b16 %v2202, %v2186
    %v4219 = vpack.c.b16 %v2203, %v2187
    %v4220 = vpack.c.b16 %v2204, %v2188
    %v4221 = vpack.c.b16 %v2205, %v2189
    %v4222 = vpack.c.b16 %v2206, %v2190
    %v4223 = vpack.c.b16 %v2207, %v2191
    %v4224 = vpack.c.b16 %v2208, %v2192
    %v4225 = vpack.c.b16 %v2209, %v2193
    %v4226 = vpack.c.b16 %v2210, %v2194
    %v4227 = vpack.c.b16 %v2227, %v2211
    %v4228 = vpack.c.b16 %v2228, %v2212
    %v4229 = vpack.c.b16 %v2229, %v2213
    %v4230 = vpack.c.b16 %v2230, %v2214
    %v4231 = vpack.c.b16 %v2231, %v2215
    %v4232 = vpack.c.b16 %v2232, %v2216
    %v4233 = vpack.c.b16 %v2233, %v2217
    %v4234 = vpack.c.b16 %v2234, %v2218
    %v4235 = vpack.c.b16 %v2235, %v2219
    %v4236 = vpack.c.b16 %v2236, %v2220
    %v4237 = vpack.c.b16 %v2237, %v2221
    %v4238 = vpack.c.b16 %v2238, %v2222
    %v4239 = vpack.c.b16 %v2239, %v2223
    %v4240 = vpack.c.b16 %v2240, %v2224
    %v4241 = vpack.c.b16 %v2241, %v2225
    %v4242 = vpack.c.b16 %v2242, %v2226
    %v4243 = vpack.c.b16 %v2259, %v2243
    %v4244 = vpack.c.b16 %v2260, %v2244
    %v4245 = vpack.c.b16 %v2261, %v2245
    %v4246 = vpack.c.b16 %v2262, %v2246
    %v4247 = vpack.c.b16 %v2263, %v2247
    %v4248 = vpack.c.b16 %v2264, %v2248
    %v4249 = vpack.c.b16 %v2265, %v2249
    %v4250 = vpack.c.b16 %v2266, %v2250
    %v4251 = vpack.c.b16 %v2267, %v2251
    %v4252 = vpack.c.b16 %v2268, %v2252
    %v4253 = vpack.c.b16 %v2269, %v2253
    %v4254 = vpack.c.b16 %v2270, %v2254
    %v4255 = vpack.c.b16 %v2271, %v2255
    %v4256 = vpack.c.b16 %v2272, %v2256
    %v4257 = vpack.c.b16 %v2273, %v2257
    %v4258 = vpack.c.b16 %v2274, %v2258
    %v4259 = vpack.c.b16 %v2291, %v2275
    %v4260 = vpack.c.b16 %v2292, %v2276
    %v4261 = vpack.c.b16 %v2293, %v2277
    %v4262 = vpack.c.b16 %v2294, %v2278
    %v4263 = vpack.c.b16 %v2295, %v2279
    %v4264 = vpack.c.b16 %v2296, %v2280
    %v4265 = vpack.c.b16 %v2297, %v2281
    %v4266 = vpack.c.b16 %v2298, %v2282
    %v4267 = vpack.c.b16 %v2299, %v2283
    %v4268 = vpack.c.b16 %v2300, %v2284
    %v4269 = vpack.c.b16 %v2301, %v2285
    %v4270 = vpack.c.b16 %v2302, %v2286
    %v4271 = vpack.c.b16 %v2303, %v2287
    %v4272 = vpack.c.b16 %v2304, %v2288
    %v4273 = vpack.c.b16 %v2305, %v2289
    %v4274 = vpack.c.b16 %v2306, %v2290
    %v4275 = vpack.c.b16 %v2323, %v2307
    %v4276 = vpack.c.b16 %v2324, %v2308
    %v4277 = vpack.c.b16 %v2325, %v2309
    %v4278 = vpack.c.b16 %v2326, %v2310
    %v4279 = vpack.c.b16 %v2327, %v2311
    %v4280 = vpack.c.b16 %v2328, %v2312
    %v4281 = vpack.c.b16 %v2329, %v2313
    %v4282 = vpack.c.b16 %v2330, %v2314
    %v4283 = vpack.c.b16 %v2331, %v2315
    %v4284 = vpack.c.b16 %v2332, %v2316
    %v4285 = vpack.c.b16 %v2333, %v2317
    %v4286 = vpack.c.b16 %v2334, %v2318
    %v4287 = vpack.c.b16 %v2335, %v2319
    %v4288 = vpack.c.b16 %v2336, %v2320
    %v4289 = vpack.c.b16 %v2337, %v2321
    %v4290 = vpack.c.b16 %v2338, %v2322
    %v4291 = vpack.c.b16 %v2355, %v2339
    %v4292 = vpack.c.b16 %v2356, %v2340
    %v4293 = vpack.c.b16 %v2357, %v2341
    %v4294 = vpack.c.b16 %v2358, %v2342
    %v4295 = vpack.c.b16 %v2359, %v2343
    %v4296 = vpack.c.b16 %v2360, %v2344
    %v4297 = vpack.c.b16 %v2361, %v2345
    %v4298 = vpack.c.b16 %v2362, %v2346
    %v4299 = vpack.c.b16 %v2363, %v2347
    %v4300 = vpack.c.b16 %v2364, %v2348
    %v4301 = vpack.c.b16 %v2365, %v2349
    %v4302 = vpack.c.b16 %v2366, %v2350
    %v4303 = vpack.c.b16 %v2367, %v2351
    %v4304 = vpack.c.b16 %v2368, %v2352
    %v4305 = vpack.c.b16 %v2369, %v2353
    %v4306 = vpack.c.b16 %v2370, %v2354
    %v4307 = vpack.c.b16 %v2387, %v2371
    %v4308 = vpack.c.b16 %v2388, %v2372
    %v4309 = vpack.c.b16 %v2389, %v2373
    %v4310 = vpack.c.b16 %v2390, %v2374
    %v4311 = vpack.c.b16 %v2391, %v2375
    %v4312 = vpack.c.b16 %v2392, %v2376
    %v4313 = vpack.c.b16 %v2393, %v2377
    %v4314 = vpack.c.b16 %v2394, %v2378
    %v4315 = vpack.c.b16 %v2395, %v2379
    %v4316 = vpack.c.b16 %v2396, %v2380
    %v4317 = vpack.c.b16 %v2397, %v2381
    %v4318 = vpack.c.b16 %v2398, %v2382
    %v4319 = vpack.c.b16 %v2399, %v2383
    %v4320 = vpack.c.b16 %v2400, %v2384
    %v4321 = vpack.c.b16 %v2401, %v2385
    %v4322 = vpack.c.b16 %v2402, %v2386
    %v4323 = vpack.c.b16 %v2419, %v2403
    %v4324 = vpack.c.b16 %v2420, %v2404
    %v4325 = vpack.c.b16 %v2421, %v2405
    %v4326 = vpack.c.b16 %v2422, %v2406
    %v4327 = vpack.c.b16 %v2423, %v2407
    %v4328 = vpack.c.b16 %v2424, %v2408
    %v4329 = vpack.c.b16 %v2425, %v2409
    %v4330 = vpack.c.b16 %v2426, %v2410
    %v4331 = vpack.c.b16 %v2427, %v2411
    %v4332 = vpack.c.b16 %v2428, %v2412
    %v4333 = vpack.c.b16 %v2429, %v2413
    %v4334 = vpack.c.b16 %v2430, %v2414
    %v4335 = vpack.c.b16 %v2431, %v2415
    %v4336 = vpack.c.b16 %v2432, %v2416
    %v4337 = vpack.c.b16 %v2433, %v2417
    %v4338 = vpack.c.b16 %v2434, %v2418
    %v4339 = vpack.c.b16 %v2451, %v2435
    %v4340 = vpack.c.b16 %v2452, %v2436
    %v4341 = vpack.c.b16 %v2453, %v2437
    %v4342 = vpack.c.b16 %v2454, %v2438
    %v4343 = vpack.c.b16 %v2455, %v2439
    %v4344 = vpack.c.b16 %v2456, %v2440
    %v4345 = vpack.c.b16 %v2457, %v2441
    %v4346 = vpack.c.b16 %v2458, %v2442
    %v4347 = vpack.c.b16 %v2459, %v2443
    %v4348 = vpack.c.b16 %v2460, %v2444
    %v4349 = vpack.c.b16 %v2461, %v2445
    %v4350 = vpack.c.b16 %v2462, %v2446
    %v4351 = vpack.c.b16 %v2463, %v2447
    %v4352 = vpack.c.b16 %v2464, %v2448
    %v4353 = vpack.c.b16 %v2465, %v2449
    %v4354 = vpack.c.b16 %v2466, %v2450
    %v4355 = vpack.c.b16 %v2483, %v2467
    %v4356 = vpack.c.b16 %v2484, %v2468
    %v4357 = vpack.c.b16 %v2485, %v2469
    %v4358 = vpack.c.b16 %v2486, %v2470
    %v4359 = vpack.c.b16 %v2487, %v2471
    %v4360 = vpack.c.b16 %v2488, %v2472
    %v4361 = vpack.c.b16 %v2489, %v2473
    %v4362 = vpack.c.b16 %v2490, %v2474
    %v4363 = vpack.c.b16 %v2491, %v2475
    %v4364 = vpack.c.b16 %v2492, %v2476
    %v4365 = vpack.c.b16 %v2493, %v2477
    %v4366 = vpack.c.b16 %v2494, %v2478
    %v4367 = vpack.c.b16 %v2495, %v2479
    %v4368 = vpack.c.b16 %v2496, %v2480
    %v4369 = vpack.c.b16 %v2497, %v2481
    %v4370 = vpack.c.b16 %v2498, %v2482
    %v4371 = vpack.c.b16 %v2515, %v2499
    %v4372 = vpack.c.b16 %v2516, %v2500
    %v4373 = vpack.c.b16 %v2517, %v2501
    %v4374 = vpack.c.b16 %v2518, %v2502
    %v4375 = vpack.c.b16 %v2519, %v2503
    %v4376 = vpack.c.b16 %v2520, %v2504
    %v4377 = vpack.c.b16 %v2521, %v2505
    %v4378 = vpack.c.b16 %v2522, %v2506
    %v4379 = vpack.c.b16 %v2523, %v2507
    %v4380 = vpack.c.b16 %v2524, %v2508
    %v4381 = vpack.c.b16 %v2525, %v2509
    %v4382 = vpack.c.b16 %v2526, %v2510
    %v4383 = vpack.c.b16 %v2527, %v2511
    %v4384 = vpack.c.b16 %v2528, %v2512
    %v4385 = vpack.c.b16 %v2529, %v2513
    %v4386 = vpack.c.b16 %v2530, %v2514
    %v4387 = vpack.c.b16 %v2547, %v2531
    %v4388 = vpack.c.b16 %v2548, %v2532
    %v4389 = vpack.c.b16 %v2549, %v2533
    %v4390 = vpack.c.b16 %v2550, %v2534
    %v4391 = vpack.c.b16 %v2551, %v2535
    %v4392 = vpack.c.b16 %v2552, %v2536
    %v4393 = vpack.c.b16 %v2553, %v2537
    %v4394 = vpack.c.b16 %v2554, %v2538
    %v4395 = vpack.c.b16 %v2555, %v2539
    %v4396 = vpack.c.b16 %v2556, %v2540
    %v4397 = vpack.c.b16 %v2557, %v2541
    %v4398 = vpack.c.b16 %v2558, %v2542
    %v4399 = vpack.c.b16 %v2559, %v2543
    %v4400 = vpack.c.b16 %v2560, %v2544
    %v4401 = vpack.c.b16 %v2561, %v2545
    %v4402 = vpack.c.b16 %v2562, %v2546
    %v4403 = vpack.c.b16 %v2579, %v2563
    %v4404 = vpack.c.b16 %v2580, %v2564
    %v4405 = vpack.c.b16 %v2581, %v2565
    %v4406 = vpack.c.b16 %v2582, %v2566
    %v4407 = vpack.c.b16 %v2583, %v2567
    %v4408 = vpack.c.b16 %v2584, %v2568
    %v4409 = vpack.c.b16 %v2585, %v2569
    %v4410 = vpack.c.b16 %v2586, %v2570
    %v4411 = vpack.c.b16 %v2587, %v2571
    %v4412 = vpack.c.b16 %v2588, %v2572
    %v4413 = vpack.c.b16 %v2589, %v2573
    %v4414 = vpack.c.b16 %v2590, %v2574
    %v4415 = vpack.c.b16 %v2591, %v2575
    %v4416 = vpack.c.b16 %v2592, %v2576
    %v4417 = vpack.c.b16 %v2593, %v2577
    %v4418 = vpack.c.b16 %v2594, %v2578
    %v4419 = vpack.c.b16 %v2611, %v2595
    %v4420 = vpack.c.b16 %v2612, %v2596
    %v4421 = vpack.c.b16 %v2613, %v2597
    %v4422 = vpack.c.b16 %v2614, %v2598
    %v4423 = vpack.c.b16 %v2615, %v2599
    %v4424 = vpack.c.b16 %v2616, %v2600
    %v4425 = vpack.c.b16 %v2617, %v2601
    %v4426 = vpack.c.b16 %v2618, %v2602
    %v4427 = vpack.c.b16 %v2619, %v2603
    %v4428 = vpack.c.b16 %v2620, %v2604
    %v4429 = vpack.c.b16 %v2621, %v2605
    %v4430 = vpack.c.b16 %v2622, %v2606
    %v4431 = vpack.c.b16 %v2623, %v2607
    %v4432 = vpack.c.b16 %v2624, %v2608
    %v4433 = vpack.c.b16 %v2625, %v2609
    %v4434 = vpack.c.b16 %v2626, %v2610
    %v4435 = vpack.c.b16 %v2643, %v2627
    %v4436 = vpack.c.b16 %v2644, %v2628
    %v4437 = vpack.c.b16 %v2645, %v2629
    %v4438 = vpack.c.b16 %v2646, %v2630
    %v4439 = vpack.c.b16 %v2647, %v2631
    %v4440 = vpack.c.b16 %v2648, %v2632
    %v4441 = vpack.c.b16 %v2649, %v2633
    %v4442 = vpack.c.b16 %v2650, %v2634
    %v4443 = vpack.c.b16 %v2651, %v2635
    %v4444 = vpack.c.b16 %v2652, %v2636
    %v4445 = vpack.c.b16 %v2653, %v2637
    %v4446 = vpack.c.b16 %v2654, %v2638
    %v4447 = vpack.c.b16 %v2655, %v2639
    %v4448 = vpack.c.b16 %v2656, %v2640
    %v4449 = vpack.c.b16 %v2657, %v2641
    %v4450 = vpack.c.b16 %v2658, %v2642
    %v4451 = vpack.c.b16 %v2675, %v2659
    %v4452 = vpack.c.b16 %v2676, %v2660
    %v4453 = vpack.c.b16 %v2677, %v2661
    %v4454 = vpack.c.b16 %v2678, %v2662
    %v4455 = vpack.c.b16 %v2679, %v2663
    %v4456 = vpack.c.b16 %v2680, %v2664
    %v4457 = vpack.c.b16 %v2681, %v2665
    %v4458 = vpack.c.b16 %v2682, %v2666
    %v4459 = vpack.c.b16 %v2683, %v2667
    %v4460 = vpack.c.b16 %v2684, %v2668
    %v4461 = vpack.c.b16 %v2685, %v2669
    %v4462 = vpack.c.b16 %v2686, %v2670
    %v4463 = vpack.c.b16 %v2687, %v2671
    %v4464 = vpack.c.b16 %v2688, %v2672
    %v4465 = vpack.c.b16 %v2689, %v2673
    %v4466 = vpack.c.b16 %v2690, %v2674
    %v4467 = vpack.c.b16 %v2707, %v2691
    %v4468 = vpack.c.b16 %v2708, %v2692
    %v4469 = vpack.c.b16 %v2709, %v2693
    %v4470 = vpack.c.b16 %v2710, %v2694
    %v4471 = vpack.c.b16 %v2711, %v2695
    %v4472 = vpack.c.b16 %v2712, %v2696
    %v4473 = vpack.c.b16 %v2713, %v2697
    %v4474 = vpack.c.b16 %v2714, %v2698
    %v4475 = vpack.c.b16 %v2715, %v2699
    %v4476 = vpack.c.b16 %v2716, %v2700
    %v4477 = vpack.c.b16 %v2717, %v2701
    %v4478 = vpack.c.b16 %v2718, %v2702
    %v4479 = vpack.c.b16 %v2719, %v2703
    %v4480 = vpack.c.b16 %v2720, %v2704
    %v4481 = vpack.c.b16 %v2721, %v2705
    %v4482 = vpack.c.b16 %v2722, %v2706
    %v4483 = vpack.c.b16 %v2739, %v2723
    %v4484 = vpack.c.b16 %v2740, %v2724
    %v4485 = vpack.c.b16 %v2741, %v2725
    %v4486 = vpack.c.b16 %v2742, %v2726
    %v4487 = vpack.c.b16 %v2743, %v2727
    %v4488 = vpack.c.b16 %v2744, %v2728
    %v4489 = vpack.c.b16 %v2745, %v2729
    %v4490 = vpack.c.b16 %v2746, %v2730
    %v4491 = vpack.c.b16 %v2747, %v2731
    %v4492 = vpack.c.b16 %v2748, %v2732
    %v4493 = vpack.c.b16 %v2749, %v2733
    %v4494 = vpack.c.b16 %v2750, %v2734
    %v4495 = vpack.c.b16 %v2751, %v2735
    %v4496 = vpack.c.b16 %v2752, %v2736
    %v4497 = vpack.c.b16 %v2753, %v2737
    %v4498 = vpack.c.b16 %v2754, %v2738
    %v4499 = vpack.c.b16 %v2771, %v2755
    %v4500 = vpack.c.b16 %v2772, %v2756
    %v4501 = vpack.c.b16 %v2773, %v2757
    %v4502 = vpack.c.b16 %v2774, %v2758
    %v4503 = vpack.c.b16 %v2775, %v2759
    %v4504 = vpack.c.b16 %v2776, %v2760
    %v4505 = vpack.c.b16 %v2777, %v2761
    %v4506 = vpack.c.b16 %v2778, %v2762
    %v4507 = vpack.c.b16 %v2779, %v2763
    %v4508 = vpack.c.b16 %v2780, %v2764
    %v4509 = vpack.c.b16 %v2781, %v2765
    %v4510 = vpack.c.b16 %v2782, %v2766
    %v4511 = vpack.c.b16 %v2783, %v2767
    %v4512 = vpack.c.b16 %v2784, %v2768
    %v4513 = vpack.c.b16 %v2785, %v2769
    %v4514 = vpack.c.b16 %v2786, %v2770
    %v4515 = vpack.c.b16 %v2803, %v2787
    %v4516 = vpack.c.b16 %v2804, %v2788
    %v4517 = vpack.c.b16 %v2805, %v2789
    %v4518 = vpack.c.b16 %v2806, %v2790
    %v4519 = vpack.c.b16 %v2807, %v2791
    %v4520 = vpack.c.b16 %v2808, %v2792
    %v4521 = vpack.c.b16 %v2809, %v2793
    %v4522 = vpack.c.b16 %v2810, %v2794
    %v4523 = vpack.c.b16 %v2811, %v2795
    %v4524 = vpack.c.b16 %v2812, %v2796
    %v4525 = vpack.c.b16 %v2813, %v2797
    %v4526 = vpack.c.b16 %v2814, %v2798
    %v4527 = vpack.c.b16 %v2815, %v2799
    %v4528 = vpack.c.b16 %v2816, %v2800
    %v4529 = vpack.c.b16 %v2817, %v2801
    %v4530 = vpack.c.b16 %v2818, %v2802
    %v4531 = vpack.c.b16 %v2835, %v2819
    %v4532 = vpack.c.b16 %v2836, %v2820
    %v4533 = vpack.c.b16 %v2837, %v2821
    %v4534 = vpack.c.b16 %v2838, %v2822
    %v4535 = vpack.c.b16 %v2839, %v2823
    %v4536 = vpack.c.b16 %v2840, %v2824
    %v4537 = vpack.c.b16 %v2841, %v2825
    %v4538 = vpack.c.b16 %v2842, %v2826
    %v4539 = vpack.c.b16 %v2843, %v2827
    %v4540 = vpack.c.b16 %v2844, %v2828
    %v4541 = vpack.c.b16 %v2845, %v2829
    %v4542 = vpack.c.b16 %v2846, %v2830
    %v4543 = vpack.c.b16 %v2847, %v2831
    %v4544 = vpack.c.b16 %v2848, %v2832
    %v4545 = vpack.c.b16 %v2849, %v2833
    %v4546 = vpack.c.b16 %v2850, %v2834
    %v4547 = vpack.c.b16 %v2867, %v2851
    %v4548 = vpack.c.b16 %v2868, %v2852
    %v4549 = vpack.c.b16 %v2869, %v2853
    %v4550 = vpack.c.b16 %v2870, %v2854
    %v4551 = vpack.c.b16 %v2871, %v2855
    %v4552 = vpack.c.b16 %v2872, %v2856
    %v4553 = vpack.c.b16 %v2873, %v2857
    %v4554 = vpack.c.b16 %v2874, %v2858
    %v4555 = vpack.c.b16 %v2875, %v2859
    %v4556 = vpack.c.b16 %v2876, %v2860
    %v4557 = vpack.c.b16 %v2877, %v2861
    %v4558 = vpack.c.b16 %v2878, %v2862
    %v4559 = vpack.c.b16 %v2879, %v2863
    %v4560 = vpack.c.b16 %v2880, %v2864
    %v4561 = vpack.c.b16 %v2881, %v2865
    %v4562 = vpack.c.b16 %v2882, %v2866
    %v4563 = vpack.c.b16 %v2899, %v2883
    %v4564 = vpack.c.b16 %v2900, %v2884
    %v4565 = vpack.c.b16 %v2901, %v2885
    %v4566 = vpack.c.b16 %v2902, %v2886
    %v4567 = vpack.c.b16 %v2903, %v2887
    %v4568 = vpack.c.b16 %v2904, %v2888
    %v4569 = vpack.c.b16 %v2905, %v2889
    %v4570 = vpack.c.b16 %v2906, %v2890
    %v4571 = vpack.c.b16 %v2907, %v2891
    %v4572 = vpack.c.b16 %v2908, %v2892
    %v4573 = vpack.c.b16 %v2909, %v2893
    %v4574 = vpack.c.b16 %v2910, %v2894
    %v4575 = vpack.c.b16 %v2911, %v2895
    %v4576 = vpack.c.b16 %v2912, %v2896
    %v4577 = vpack.c.b16 %v2913, %v2897
    %v4578 = vpack.c.b16 %v2914, %v2898
    %v4579 = vpack.c.b16 %v2931, %v2915
    %v4580 = vpack.c.b16 %v2932, %v2916
    %v4581 = vpack.c.b16 %v2933, %v2917
    %v4582 = vpack.c.b16 %v2934, %v2918
    %v4583 = vpack.c.b16 %v2935, %v2919
    %v4584 = vpack.c.b16 %v2936, %v2920
    %v4585 = vpack.c.b16 %v2937, %v2921
    %v4586 = vpack.c.b16 %v2938, %v2922
    %v4587 = vpack.c.b16 %v2939, %v2923
    %v4588 = vpack.c.b16 %v2940, %v2924
    %v4589 = vpack.c.b16 %v2941, %v2925
    %v4590 = vpack.c.b16 %v2942, %v2926
    %v4591 = vpack.c.b16 %v2943, %v2927
    %v4592 = vpack.c.b16 %v2944, %v2928
    %v4593 = vpack.c.b16 %v2945, %v2929
    %v4594 = vpack.c.b16 %v2946, %v2930
    %v4595 = vpack.c.b16 %v2963, %v2947
    %v4596 = vpack.c.b16 %v2964, %v2948
    %v4597 = vpack.c.b16 %v2965, %v2949
    %v4598 = vpack.c.b16 %v2966, %v2950
    %v4599 = vpack.c.b16 %v2967, %v2951
    %v4600 = vpack.c.b16 %v2968, %v2952
    %v4601 = vpack.c.b16 %v2969, %v2953
    %v4602 = vpack.c.b16 %v2970, %v2954
    %v4603 = vpack.c.b16 %v2971, %v2955
    %v4604 = vpack.c.b16 %v2972, %v2956
    %v4605 = vpack.c.b16 %v2973, %v2957
    %v4606 = vpack.c.b16 %v2974, %v2958
    %v4607 = vpack.c.b16 %v2975, %v2959
    %v4608 = vpack.c.b16 %v2976, %v2960
    %v4609 = vpack.c.b16 %v2977, %v2961
    %v4610 = vpack.c.b16 %v2978, %v2962
    %v4611 = vpack.c.b16 %v2995, %v2979
    %v4612 = vpack.c.b16 %v2996, %v2980
    %v4613 = vpack.c.b16 %v2997, %v2981
    %v4614 = vpack.c.b16 %v2998, %v2982
    %v4615 = vpack.c.b16 %v2999, %v2983
    %v4616 = vpack.c.b16 %v3000, %v2984
    %v4617 = vpack.c.b16 %v3001, %v2985
    %v4618 = vpack.c.b16 %v3002, %v2986
    %v4619 = vpack.c.b16 %v3003, %v2987
    %v4620 = vpack.c.b16 %v3004, %v2988
    %v4621 = vpack.c.b16 %v3005, %v2989
    %v4622 = vpack.c.b16 %v3006, %v2990
    %v4623 = vpack.c.b16 %v3007, %v2991
    %v4624 = vpack.c.b16 %v3008, %v2992
    %v4625 = vpack.c.b16 %v3009, %v2993
    %v4626 = vpack.c.b16 %v3010, %v2994
    %v4627 = vpack.c.b16 %v3027, %v3011
    %v4628 = vpack.c.b16 %v3028, %v3012
    %v4629 = vpack.c.b16 %v3029, %v3013
    %v4630 = vpack.c.b16 %v3030, %v3014
    %v4631 = vpack.c.b16 %v3031, %v3015
    %v4632 = vpack.c.b16 %v3032, %v3016
    %v4633 = vpack.c.b16 %v3033, %v3017
    %v4634 = vpack.c.b16 %v3034, %v3018
    %v4635 = vpack.c.b16 %v3035, %v3019
    %v4636 = vpack.c.b16 %v3036, %v3020
    %v4637 = vpack.c.b16 %v3037, %v3021
    %v4638 = vpack.c.b16 %v3038, %v3022
    %v4639 = vpack.c.b16 %v3039, %v3023
    %v4640 = vpack.c.b16 %v3040, %v3024
    %v4641 = vpack.c.b16 %v3041, %v3025
    %v4642 = vpack.c.b16 %v3042, %v3026
    %v4643 = vpack.c.b16 %v3059, %v3043
    %v4644 = vpack.c.b16 %v3060, %v3044
    %v4645 = vpack.c.b16 %v3061, %v3045
    %v4646 = vpack.c.b16 %v3062, %v3046
    %v4647 = vpack.c.b16 %v3063, %v3047
    %v4648 = vpack.c.b16 %v3064, %v3048
    %v4649 = vpack.c.b16 %v3065, %v3049
    %v4650 = vpack.c.b16 %v3066, %v3050
    %v4651 = vpack.c.b16 %v3067, %v3051
    %v4652 = vpack.c.b16 %v3068, %v3052
    %v4653 = vpack.c.b16 %v3069, %v3053
    %v4654 = vpack.c.b16 %v3070, %v3054
    %v4655 = vpack.c.b16 %v3071, %v3055
    %v4656 = vpack.c.b16 %v3072, %v3056
    %v4657 = vpack.c.b16 %v3073, %v3057
    %v4658 = vpack.c.b16 %v3074, %v3058
    %v4659 = vpack.c.b16 %v3091, %v3075
    %v4660 = vpack.c.b16 %v3092, %v3076
    %v4661 = vpack.c.b16 %v3093, %v3077
    %v4662 = vpack.c.b16 %v3094, %v3078
    %v4663 = vpack.c.b16 %v3095, %v3079
    %v4664 = vpack.c.b16 %v3096, %v3080
    %v4665 = vpack.c.b16 %v3097, %v3081
    %v4666 = vpack.c.b16 %v3098, %v3082
    %v4667 = vpack.c.b16 %v3099, %v3083
    %v4668 = vpack.c.b16 %v3100, %v3084
    %v4669 = vpack.c.b16 %v3101, %v3085
    %v4670 = vpack.c.b16 %v3102, %v3086
    %v4671 = vpack.c.b16 %v3103, %v3087
    %v4672 = vpack.c.b16 %v3104, %v3088
    %v4673 = vpack.c.b16 %v3105, %v3089
    %v4674 = vpack.c.b16 %v3106, %v3090
    %v4675 = vpack.c.b16 %v3123, %v3107
    %v4676 = vpack.c.b16 %v3124, %v3108
    %v4677 = vpack.c.b16 %v3125, %v3109
    %v4678 = vpack.c.b16 %v3126, %v3110
    %v4679 = vpack.c.b16 %v3127, %v3111
    %v4680 = vpack.c.b16 %v3128, %v3112
    %v4681 = vpack.c.b16 %v3129, %v3113
    %v4682 = vpack.c.b16 %v3130, %v3114
    %v4683 = vpack.c.b16 %v3131, %v3115
    %v4684 = vpack.c.b16 %v3132, %v3116
    %v4685 = vpack.c.b16 %v3133, %v3117
    %v4686 = vpack.c.b16 %v3134, %v3118
    %v4687 = vpack.c.b16 %v3135, %v3119
    %v4688 = vpack.c.b16 %v3136, %v3120
    %v4689 = vpack.c.b16 %v3137, %v3121
    %v4690 = vpack.c.b16 %v3138, %v3122
    %v4691 = vpack.c.b16 %v3155, %v3139
    %v4692 = vpack.c.b16 %v3156, %v3140
    %v4693 = vpack.c.b16 %v3157, %v3141
    %v4694 = vpack.c.b16 %v3158, %v3142
    %v4695 = vpack.c.b16 %v3159, %v3143
    %v4696 = vpack.c.b16 %v3160, %v3144
    %v4697 = vpack.c.b16 %v3161, %v3145
    %v4698 = vpack.c.b16 %v3162, %v3146
    %v4699 = vpack.c.b16 %v3163, %v3147
    %v4700 = vpack.c.b16 %v3164, %v3148
    %v4701 = vpack.c.b16 %v3165, %v3149
    %v4702 = vpack.c.b16 %v3166, %v3150
    %v4703 = vpack.c.b16 %v3167, %v3151
    %v4704 = vpack.c.b16 %v3168, %v3152
    %v4705 = vpack.c.b16 %v3169, %v3153
    %v4706 = vpack.c.b16 %v3170, %v3154
    %v4707 = vpack.c.b16 %v3187, %v3171
    %v4708 = vpack.c.b16 %v3188, %v3172
    %v4709 = vpack.c.b16 %v3189, %v3173
    %v4710 = vpack.c.b16 %v3190, %v3174
    %v4711 = vpack.c.b16 %v3191, %v3175
    %v4712 = vpack.c.b16 %v3192, %v3176
    %v4713 = vpack.c.b16 %v3193, %v3177
    %v4714 = vpack.c.b16 %v3194, %v3178
    %v4715 = vpack.c.b16 %v3195, %v3179
    %v4716 = vpack.c.b16 %v3196, %v3180
    %v4717 = vpack.c.b16 %v3197, %v3181
    %v4718 = vpack.c.b16 %v3198, %v3182
    %v4719 = vpack.c.b16 %v3199, %v3183
    %v4720 = vpack.c.b16 %v3200, %v3184
    %v4721 = vpack.c.b16 %v3201, %v3185
    %v4722 = vpack.c.b16 %v3202, %v3186
    %v4723 = vpack.c.b16 %v3219, %v3203
    %v4724 = vpack.c.b16 %v3220, %v3204
    %v4725 = vpack.c.b16 %v3221, %v3205
    %v4726 = vpack.c.b16 %v3222, %v3206
    %v4727 = vpack.c.b16 %v3223, %v3207
    %v4728 = vpack.c.b16 %v3224, %v3208
    %v4729 = vpack.c.b16 %v3225, %v3209
    %v4730 = vpack.c.b16 %v3226, %v3210
    %v4731 = vpack.c.b16 %v3227, %v3211
    %v4732 = vpack.c.b16 %v3228, %v3212
    %v4733 = vpack.c.b16 %v3229, %v3213
    %v4734 = vpack.c.b16 %v3230, %v3214
    %v4735 = vpack.c.b16 %v3231, %v3215
    %v4736 = vpack.c.b16 %v3232, %v3216
    %v4737 = vpack.c.b16 %v3233, %v3217
    %v4738 = vpack.c.b16 %v3234, %v3218
    %v4739 = vpack.c.b16 %v3251, %v3235
    %v4740 = vpack.c.b16 %v3252, %v3236
    %v4741 = vpack.c.b16 %v3253, %v3237
    %v4742 = vpack.c.b16 %v3254, %v3238
    %v4743 = vpack.c.b16 %v3255, %v3239
    %v4744 = vpack.c.b16 %v3256, %v3240
    %v4745 = vpack.c.b16 %v3257, %v3241
    %v4746 = vpack.c.b16 %v3258, %v3242
    %v4747 = vpack.c.b16 %v3259, %v3243
    %v4748 = vpack.c.b16 %v3260, %v3244
    %v4749 = vpack.c.b16 %v3261, %v3245
    %v4750 = vpack.c.b16 %v3262, %v3246
    %v4751 = vpack.c.b16 %v3263, %v3247
    %v4752 = vpack.c.b16 %v3264, %v3248
    %v4753 = vpack.c.b16 %v3265, %v3249
    %v4754 = vpack.c.b16 %v3266, %v3250
    %v4755 = vpack.c.b16 %v3283, %v3267
    %v4756 = vpack.c.b16 %v3284, %v3268
    %v4757 = vpack.c.b16 %v3285, %v3269
    %v4758 = vpack.c.b16 %v3286, %v3270
    %v4759 = vpack.c.b16 %v3287, %v3271
    %v4760 = vpack.c.b16 %v3288, %v3272
    %v4761 = vpack.c.b16 %v3289, %v3273
    %v4762 = vpack.c.b16 %v3290, %v3274
    %v4763 = vpack.c.b16 %v3291, %v3275
    %v4764 = vpack.c.b16 %v3292, %v3276
    %v4765 = vpack.c.b16 %v3293, %v3277
    %v4766 = vpack.c.b16 %v3294, %v3278
    %v4767 = vpack.c.b16 %v3295, %v3279
    %v4768 = vpack.c.b16 %v3296, %v3280
    %v4769 = vpack.c.b16 %v3297, %v3281
    %v4770 = vpack.c.b16 %v3298, %v3282
    %v4771 = vpack.c.b16 %v3315, %v3299
    %v4772 = vpack.c.b16 %v3316, %v3300
    %v4773 = vpack.c.b16 %v3317, %v3301
    %v4774 = vpack.c.b16 %v3318, %v3302
    %v4775 = vpack.c.b16 %v3319, %v3303
    %v4776 = vpack.c.b16 %v3320, %v3304
    %v4777 = vpack.c.b16 %v3321, %v3305
    %v4778 = vpack.c.b16 %v3322, %v3306
    %v4779 = vpack.c.b16 %v3323, %v3307
    %v4780 = vpack.c.b16 %v3324, %v3308
    %v4781 = vpack.c.b16 %v3325, %v3309
    %v4782 = vpack.c.b16 %v3326, %v3310
    %v4783 = vpack.c.b16 %v3327, %v3311
    %v4784 = vpack.c.b16 %v3328, %v3312
    %v4785 = vpack.c.b16 %v3329, %v3313
    %v4786 = vpack.c.b16 %v3330, %v3314
    %v4787 = vpack.c.b16 %v3347, %v3331
    %v4788 = vpack.c.b16 %v3348, %v3332
    %v4789 = vpack.c.b16 %v3349, %v3333
    %v4790 = vpack.c.b16 %v3350, %v3334
    %v4791 = vpack.c.b16 %v3351, %v3335
    %v4792 = vpack.c.b16 %v3352, %v3336
    %v4793 = vpack.c.b16 %v3353, %v3337
    %v4794 = vpack.c.b16 %v3354, %v3338
    %v4795 = vpack.c.b16 %v3355, %v3339
    %v4796 = vpack.c.b16 %v3356, %v3340
    %v4797 = vpack.c.b16 %v3357, %v3341
    %v4798 = vpack.c.b16 %v3358, %v3342
    %v4799 = vpack.c.b16 %v3359, %v3343
    %v4800 = vpack.c.b16 %v3360, %v3344
    %v4801 = vpack.c.b16 %v3361, %v3345
    %v4802 = vpack.c.b16 %v3362, %v3346
    %v4803 = vpack.c.b16 %v3379, %v3363
    %v4804 = vpack.c.b16 %v3380, %v3364
    %v4805 = vpack.c.b16 %v3381, %v3365
    %v4806 = vpack.c.b16 %v3382, %v3366
    %v4807 = vpack.c.b16 %v3383, %v3367
    %v4808 = vpack.c.b16 %v3384, %v3368
    %v4809 = vpack.c.b16 %v3385, %v3369
    %v4810 = vpack.c.b16 %v3386, %v3370
    %v4811 = vpack.c.b16 %v3387, %v3371
    %v4812 = vpack.c.b16 %v3388, %v3372
    %v4813 = vpack.c.b16 %v3389, %v3373
    %v4814 = vpack.c.b16 %v3390, %v3374
    %v4815 = vpack.c.b16 %v3391, %v3375
    %v4816 = vpack.c.b16 %v3392, %v3376
    %v4817 = vpack.c.b16 %v3393, %v3377
    %v4818 = vpack.c.b16 %v3394, %v3378
    %v4819 = vpack.c.b16 %v3411, %v3395
    %v4820 = vpack.c.b16 %v3412, %v3396
    %v4821 = vpack.c.b16 %v3413, %v3397
    %v4822 = vpack.c.b16 %v3414, %v3398
    %v4823 = vpack.c.b16 %v3415, %v3399
    %v4824 = vpack.c.b16 %v3416, %v3400
    %v4825 = vpack.c.b16 %v3417, %v3401
    %v4826 = vpack.c.b16 %v3418, %v3402
    %v4827 = vpack.c.b16 %v3419, %v3403
    %v4828 = vpack.c.b16 %v3420, %v3404
    %v4829 = vpack.c.b16 %v3421, %v3405
    %v4830 = vpack.c.b16 %v3422, %v3406
    %v4831 = vpack.c.b16 %v3423, %v3407
    %v4832 = vpack.c.b16 %v3424, %v3408
    %v4833 = vpack.c.b16 %v3425, %v3409
    %v4834 = vpack.c.b16 %v3426, %v3410
    %v4835 = vpack.c.b16 %v3443, %v3427
    %v4836 = vpack.c.b16 %v3444, %v3428
    %v4837 = vpack.c.b16 %v3445, %v3429
    %v4838 = vpack.c.b16 %v3446, %v3430
    %v4839 = vpack.c.b16 %v3447, %v3431
    %v4840 = vpack.c.b16 %v3448, %v3432
    %v4841 = vpack.c.b16 %v3449, %v3433
    %v4842 = vpack.c.b16 %v3450, %v3434
    %v4843 = vpack.c.b16 %v3451, %v3435
    %v4844 = vpack.c.b16 %v3452, %v3436
    %v4845 = vpack.c.b16 %v3453, %v3437
    %v4846 = vpack.c.b16 %v3454, %v3438
    %v4847 = vpack.c.b16 %v3455, %v3439
    %v4848 = vpack.c.b16 %v3456, %v3440
    %v4849 = vpack.c.b16 %v3457, %v3441
    %v4850 = vpack.c.b16 %v3458, %v3442
    %v4851 = vpack.c.b16 %v3475, %v3459
    %v4852 = vpack.c.b16 %v3476, %v3460
    %v4853 = vpack.c.b16 %v3477, %v3461
    %v4854 = vpack.c.b16 %v3478, %v3462
    %v4855 = vpack.c.b16 %v3479, %v3463
    %v4856 = vpack.c.b16 %v3480, %v3464
    %v4857 = vpack.c.b16 %v3481, %v3465
    %v4858 = vpack.c.b16 %v3482, %v3466
    %v4859 = vpack.c.b16 %v3483, %v3467
    %v4860 = vpack.c.b16 %v3484, %v3468
    %v4861 = vpack.c.b16 %v3485, %v3469
    %v4862 = vpack.c.b16 %v3486, %v3470
    %v4863 = vpack.c.b16 %v3487, %v3471
    %v4864 = vpack.c.b16 %v3488, %v3472
    %v4865 = vpack.c.b16 %v3489, %v3473
    %v4866 = vpack.c.b16 %v3490, %v3474
    %v4867 = vpack.c.b16 %v3507, %v3491
    %v4868 = vpack.c.b16 %v3508, %v3492
    %v4869 = vpack.c.b16 %v3509, %v3493
    %v4870 = vpack.c.b16 %v3510, %v3494
    %v4871 = vpack.c.b16 %v3511, %v3495
    %v4872 = vpack.c.b16 %v3512, %v3496
    %v4873 = vpack.c.b16 %v3513, %v3497
    %v4874 = vpack.c.b16 %v3514, %v3498
    %v4875 = vpack.c.b16 %v3515, %v3499
    %v4876 = vpack.c.b16 %v3516, %v3500
    %v4877 = vpack.c.b16 %v3517, %v3501
    %v4878 = vpack.c.b16 %v3518, %v3502
    %v4879 = vpack.c.b16 %v3519, %v3503
    %v4880 = vpack.c.b16 %v3520, %v3504
    %v4881 = vpack.c.b16 %v3521, %v3505
    %v4882 = vpack.c.b16 %v3522, %v3506
    %v4883 = vpack.c.b16 %v3539, %v3523
    %v4884 = vpack.c.b16 %v3540, %v3524
    %v4885 = vpack.c.b16 %v3541, %v3525
    %v4886 = vpack.c.b16 %v3542, %v3526
    %v4887 = vpack.c.b16 %v3543, %v3527
    %v4888 = vpack.c.b16 %v3544, %v3528
    %v4889 = vpack.c.b16 %v3545, %v3529
    %v4890 = vpack.c.b16 %v3546, %v3530
    %v4891 = vpack.c.b16 %v3547, %v3531
    %v4892 = vpack.c.b16 %v3548, %v3532
    %v4893 = vpack.c.b16 %v3549, %v3533
    %v4894 = vpack.c.b16 %v3550, %v3534
    %v4895 = vpack.c.b16 %v3551, %v3535
    %v4896 = vpack.c.b16 %v3552, %v3536
    %v4897 = vpack.c.b16 %v3553, %v3537
    %v4898 = vpack.c.b16 %v3554, %v3538
    %v4899 = vpack.c.b16 %v3571, %v3555
    %v4900 = vpack.c.b16 %v3572, %v3556
    %v4901 = vpack.c.b16 %v3573, %v3557
    %v4902 = vpack.c.b16 %v3574, %v3558
    %v4903 = vpack.c.b16 %v3575, %v3559
    %v4904 = vpack.c.b16 %v3576, %v3560
    %v4905 = vpack.c.b16 %v3577, %v3561
    %v4906 = vpack.c.b16 %v3578, %v3562
    %v4907 = vpack.c.b16 %v3579, %v3563
    %v4908 = vpack.c.b16 %v3580, %v3564
    %v4909 = vpack.c.b16 %v3581, %v3565
    %v4910 = vpack.c.b16 %v3582, %v3566
    %v4911 = vpack.c.b16 %v3583, %v3567
    %v4912 = vpack.c.b16 %v3584, %v3568
    %v4913 = vpack.c.b16 %v3585, %v3569
    %v4914 = vpack.c.b16 %v3586, %v3570
    %v4915 = vpack.c.b16 %v3603, %v3587
    %v4916 = vpack.c.b16 %v3604, %v3588
    %v4917 = vpack.c.b16 %v3605, %v3589
    %v4918 = vpack.c.b16 %v3606, %v3590
    %v4919 = vpack.c.b16 %v3607, %v3591
    %v4920 = vpack.c.b16 %v3608, %v3592
    %v4921 = vpack.c.b16 %v3609, %v3593
    %v4922 = vpack.c.b16 %v3610, %v3594
    %v4923 = vpack.c.b16 %v3611, %v3595
    %v4924 = vpack.c.b16 %v3612, %v3596
    %v4925 = vpack.c.b16 %v3613, %v3597
    %v4926 = vpack.c.b16 %v3614, %v3598
    %v4927 = vpack.c.b16 %v3615, %v3599
    %v4928 = vpack.c.b16 %v3616, %v3600
    %v4929 = vpack.c.b16 %v3617, %v3601
    %v4930 = vpack.c.b16 %v3618, %v3602
    %v4931 = vpack.c.b16 %v3635, %v3619
    %v4932 = vpack.c.b16 %v3636, %v3620
    %v4933 = vpack.c.b16 %v3637, %v3621
    %v4934 = vpack.c.b16 %v3638, %v3622
    %v4935 = vpack.c.b16 %v3639, %v3623
    %v4936 = vpack.c.b16 %v3640, %v3624
    %v4937 = vpack.c.b16 %v3641, %v3625
    %v4938 = vpack.c.b16 %v3642, %v3626
    %v4939 = vpack.c.b16 %v3643, %v3627
    %v4940 = vpack.c.b16 %v3644, %v3628
    %v4941 = vpack.c.b16 %v3645, %v3629
    %v4942 = vpack.c.b16 %v3646, %v3630
    %v4943 = vpack.c.b16 %v3647, %v3631
    %v4944 = vpack.c.b16 %v3648, %v3632
    %v4945 = vpack.c.b16 %v3649, %v3633
    %v4946 = vpack.c.b16 %v3650, %v3634
    %v4947 = vpack.c.b16 %v3667, %v3651
    %v4948 = vpack.c.b16 %v3668, %v3652
    %v4949 = vpack.c.b16 %v3669, %v3653
    %v4950 = vpack.c.b16 %v3670, %v3654
    %v4951 = vpack.c.b16 %v3671, %v3655
    %v4952 = vpack.c.b16 %v3672, %v3656
    %v4953 = vpack.c.b16 %v3673, %v3657
    %v4954 = vpack.c.b16 %v3674, %v3658
    %v4955 = vpack.c.b16 %v3675, %v3659
    %v4956 = vpack.c.b16 %v3676, %v3660
    %v4957 = vpack.c.b16 %v3677, %v3661
    %v4958 = vpack.c.b16 %v3678, %v3662
    %v4959 = vpack.c.b16 %v3679, %v3663
    %v4960 = vpack.c.b16 %v3680, %v3664
    %v4961 = vpack.c.b16 %v3681, %v3665
    %v4962 = vpack.c.b16 %v3682, %v3666
    %v4963 = vpack.c.b16 %v3699, %v3683
    %v4964 = vpack.c.b16 %v3700, %v3684
    %v4965 = vpack.c.b16 %v3701, %v3685
    %v4966 = vpack.c.b16 %v3702, %v3686
    %v4967 = vpack.c.b16 %v3703, %v3687
    %v4968 = vpack.c.b16 %v3704, %v3688
    %v4969 = vpack.c.b16 %v3705, %v3689
    %v4970 = vpack.c.b16 %v3706, %v3690
    %v4971 = vpack.c.b16 %v3707, %v3691
    %v4972 = vpack.c.b16 %v3708, %v3692
    %v4973 = vpack.c.b16 %v3709, %v3693
    %v4974 = vpack.c.b16 %v3710, %v3694
    %v4975 = vpack.c.b16 %v3711, %v3695
    %v4976 = vpack.c.b16 %v3712, %v3696
    %v4977 = vpack.c.b16 %v3713, %v3697
    %v4978 = vpack.c.b16 %v3714, %v3698
    %v4979 = vpack.c.b16 %v3731, %v3715
    %v4980 = vpack.c.b16 %v3732, %v3716
    %v4981 = vpack.c.b16 %v3733, %v3717
    %v4982 = vpack.c.b16 %v3734, %v3718
    %v4983 = vpack.c.b16 %v3735, %v3719
    %v4984 = vpack.c.b16 %v3736, %v3720
    %v4985 = vpack.c.b16 %v3737, %v3721
    %v4986 = vpack.c.b16 %v3738, %v3722
    %v4987 = vpack.c.b16 %v3739, %v3723
    %v4988 = vpack.c.b16 %v3740, %v3724
    %v4989 = vpack.c.b16 %v3741, %v3725
    %v4990 = vpack.c.b16 %v3742, %v3726
    %v4991 = vpack.c.b16 %v3743, %v3727
    %v4992 = vpack.c.b16 %v3744, %v3728
    %v4993 = vpack.c.b16 %v3745, %v3729
    %v4994 = vpack.c.b16 %v3746, %v3730
    %v4995 = vpack.c.b16 %v3763, %v3747
    %v4996 = vpack.c.b16 %v3764, %v3748
    %v4997 = vpack.c.b16 %v3765, %v3749
    %v4998 = vpack.c.b16 %v3766, %v3750
    %v4999 = vpack.c.b16 %v3767, %v3751
    %v5000 = vpack.c.b16 %v3768, %v3752
    %v5001 = vpack.c.b16 %v3769, %v3753
    %v5002 = vpack.c.b16 %v3770, %v3754
    %v5003 = vpack.c.b16 %v3771, %v3755
    %v5004 = vpack.c.b16 %v3772, %v3756
    %v5005 = vpack.c.b16 %v3773, %v3757
    %v5006 = vpack.c.b16 %v3774, %v3758
    %v5007 = vpack.c.b16 %v3775, %v3759
    %v5008 = vpack.c.b16 %v3776, %v3760
    %v5009 = vpack.c.b16 %v3777, %v3761
    %v5010 = vpack.c.b16 %v3778, %v3762
    %v5011 = vpack.c.b16 %v3795, %v3779
    %v5012 = vpack.c.b16 %v3796, %v3780
    %v5013 = vpack.c.b16 %v3797, %v3781
    %v5014 = vpack.c.b16 %v3798, %v3782
    %v5015 = vpack.c.b16 %v3799, %v3783
    %v5016 = vpack.c.b16 %v3800, %v3784
    %v5017 = vpack.c.b16 %v3801, %v3785
    %v5018 = vpack.c.b16 %v3802, %v3786
    %v5019 = vpack.c.b16 %v3803, %v3787
    %v5020 = vpack.c.b16 %v3804, %v3788
    %v5021 = vpack.c.b16 %v3805, %v3789
    %v5022 = vpack.c.b16 %v3806, %v3790
    %v5023 = vpack.c.b16 %v3807, %v3791
    %v5024 = vpack.c.b16 %v3808, %v3792
    %v5025 = vpack.c.b16 %v3809, %v3793
    %v5026 = vpack.c.b16 %v3810, %v3794
    %v5027 = vpack.c.b16 %v3827, %v3811
    %v5028 = vpack.c.b16 %v3828, %v3812
    %v5029 = vpack.c.b16 %v3829, %v3813
    %v5030 = vpack.c.b16 %v3830, %v3814
    %v5031 = vpack.c.b16 %v3831, %v3815
    %v5032 = vpack.c.b16 %v3832, %v3816
    %v5033 = vpack.c.b16 %v3833, %v3817
    %v5034 = vpack.c.b16 %v3834, %v3818
    %v5035 = vpack.c.b16 %v3835, %v3819
    %v5036 = vpack.c.b16 %v3836, %v3820
    %v5037 = vpack.c.b16 %v3837, %v3821
    %v5038 = vpack.c.b16 %v3838, %v3822
    %v5039 = vpack.c.b16 %v3839, %v3823
    %v5040 = vpack.c.b16 %v3840, %v3824
    %v5041 = vpack.c.b16 %v3841, %v3825
    %v5042 = vpack.c.b16 %v3842, %v3826
    %v5043 = vpack.c.b16 %v3859, %v3843
    %v5044 = vpack.c.b16 %v3860, %v3844
    %v5045 = vpack.c.b16 %v3861, %v3845
    %v5046 = vpack.c.b16 %v3862, %v3846
    %v5047 = vpack.c.b16 %v3863, %v3847
    %v5048 = vpack.c.b16 %v3864, %v3848
    %v5049 = vpack.c.b16 %v3865, %v3849
    %v5050 = vpack.c.b16 %v3866, %v3850
    %v5051 = vpack.c.b16 %v3867, %v3851
    %v5052 = vpack.c.b16 %v3868, %v3852
    %v5053 = vpack.c.b16 %v3869, %v3853
    %v5054 = vpack.c.b16 %v3870, %v3854
    %v5055 = vpack.c.b16 %v3871, %v3855
    %v5056 = vpack.c.b16 %v3872, %v3856
    %v5057 = vpack.c.b16 %v3873, %v3857
    %v5058 = vpack.c.b16 %v3874, %v3858
    %v5059 = vpack.c.b16 %v3891, %v3875
    %v5060 = vpack.c.b16 %v3892, %v3876
    %v5061 = vpack.c.b16 %v3893, %v3877
    %v5062 = vpack.c.b16 %v3894, %v3878
    %v5063 = vpack.c.b16 %v3895, %v3879
    %v5064 = vpack.c.b16 %v3896, %v3880
    %v5065 = vpack.c.b16 %v3897, %v3881
    %v5066 = vpack.c.b16 %v3898, %v3882
    %v5067 = vpack.c.b16 %v3899, %v3883
    %v5068 = vpack.c.b16 %v3900, %v3884
    %v5069 = vpack.c.b16 %v3901, %v3885
    %v5070 = vpack.c.b16 %v3902, %v3886
    %v5071 = vpack.c.b16 %v3903, %v3887
    %v5072 = vpack.c.b16 %v3904, %v3888
    %v5073 = vpack.c.b16 %v3905, %v3889
    %v5074 = vpack.c.b16 %v3906, %v3890
    %v5075 = vpack.c.b16 %v3923, %v3907
    %v5076 = vpack.c.b16 %v3924, %v3908
    %v5077 = vpack.c.b16 %v3925, %v3909
    %v5078 = vpack.c.b16 %v3926, %v3910
    %v5079 = vpack.c.b16 %v3927, %v3911
    %v5080 = vpack.c.b16 %v3928, %v3912
    %v5081 = vpack.c.b16 %v3929, %v3913
    %v5082 = vpack.c.b16 %v3930, %v3914
    %v5083 = vpack.c.b16 %v3931, %v3915
    %v5084 = vpack.c.b16 %v3932, %v3916
    %v5085 = vpack.c.b16 %v3933, %v3917
    %v5086 = vpack.c.b16 %v3934, %v3918
    %v5087 = vpack.c.b16 %v3935, %v3919
    %v5088 = vpack.c.b16 %v3936, %v3920
    %v5089 = vpack.c.b16 %v3937, %v3921
    %v5090 = vpack.c.b16 %v3938, %v3922
    %v5091 = vpack.c.b16 %v3955, %v3939
    %v5092 = vpack.c.b16 %v3956, %v3940
    %v5093 = vpack.c.b16 %v3957, %v3941
    %v5094 = vpack.c.b16 %v3958, %v3942
    %v5095 = vpack.c.b16 %v3959, %v3943
    %v5096 = vpack.c.b16 %v3960, %v3944
    %v5097 = vpack.c.b16 %v3961, %v3945
    %v5098 = vpack.c.b16 %v3962, %v3946
    %v5099 = vpack.c.b16 %v3963, %v3947
    %v5100 = vpack.c.b16 %v3964, %v3948
    %v5101 = vpack.c.b16 %v3965, %v3949
    %v5102 = vpack.c.b16 %v3966, %v3950
    %v5103 = vpack.c.b16 %v3967, %v3951
    %v5104 = vpack.c.b16 %v3968, %v3952
    %v5105 = vpack.c.b16 %v3969, %v3953
    %v5106 = vpack.c.b16 %v3970, %v3954
    %v5107 = vpack.c.b16 %v3987, %v3971
    %v5108 = vpack.c.b16 %v3988, %v3972
    %v5109 = vpack.c.b16 %v3989, %v3973
    %v5110 = vpack.c.b16 %v3990, %v3974
    %v5111 = vpack.c.b16 %v3991, %v3975
    %v5112 = vpack.c.b16 %v3992, %v3976
    %v5113 = vpack.c.b16 %v3993, %v3977
    %v5114 = vpack.c.b16 %v3994, %v3978
    %v5115 = vpack.c.b16 %v3995, %v3979
    %v5116 = vpack.c.b16 %v3996, %v3980
    %v5117 = vpack.c.b16 %v3997, %v3981
    %v5118 = vpack.c.b16 %v3998, %v3982
    %v5119 = vpack.c.b16 %v3999, %v3983
    %v5120 = vpack.c.b16 %v4000, %v3984
    %v5121 = vpack.c.b16 %v4001, %v3985
    %v5122 = vpack.c.b16 %v4002, %v3986
    %v5123 = vpack.c.b16 %v4019, %v4003
    %v5124 = vpack.c.b16 %v4020, %v4004
    %v5125 = vpack.c.b16 %v4021, %v4005
    %v5126 = vpack.c.b16 %v4022, %v4006
    %v5127 = vpack.c.b16 %v4023, %v4007
    %v5128 = vpack.c.b16 %v4024, %v4008
    %v5129 = vpack.c.b16 %v4025, %v4009
    %v5130 = vpack.c.b16 %v4026, %v4010
    %v5131 = vpack.c.b16 %v4027, %v4011
    %v5132 = vpack.c.b16 %v4028, %v4012
    %v5133 = vpack.c.b16 %v4029, %v4013
    %v5134 = vpack.c.b16 %v4030, %v4014
    %v5135 = vpack.c.b16 %v4031, %v4015
    %v5136 = vpack.c.b16 %v4032, %v4016
    %v5137 = vpack.c.b16 %v4033, %v4017
    %v5138 = vpack.c.b16 %v4034, %v4018
    %v5139 = vpack.c.b16 %v4051, %v4035
    %v5140 = vpack.c.b16 %v4052, %v4036
    %v5141 = vpack.c.b16 %v4053, %v4037
    %v5142 = vpack.c.b16 %v4054, %v4038
    %v5143 = vpack.c.b16 %v4055, %v4039
    %v5144 = vpack.c.b16 %v4056, %v4040
    %v5145 = vpack.c.b16 %v4057, %v4041
    %v5146 = vpack.c.b16 %v4058, %v4042
    %v5147 = vpack.c.b16 %v4059, %v4043
    %v5148 = vpack.c.b16 %v4060, %v4044
    %v5149 = vpack.c.b16 %v4061, %v4045
    %v5150 = vpack.c.b16 %v4062, %v4046
    %v5151 = vpack.c.b16 %v4063, %v4047
    %v5152 = vpack.c.b16 %v4064, %v4048
    %v5153 = vpack.c.b16 %v4065, %v4049
    %v5154 = vpack.c.b16 %v4066, %v4050
    %v5155 = vpack.c.b16 %v4083, %v4067
    %v5156 = vpack.c.b16 %v4084, %v4068
    %v5157 = vpack.c.b16 %v4085, %v4069
    %v5158 = vpack.c.b16 %v4086, %v4070
    %v5159 = vpack.c.b16 %v4087, %v4071
    %v5160 = vpack.c.b16 %v4088, %v4072
    %v5161 = vpack.c.b16 %v4089, %v4073
    %v5162 = vpack.c.b16 %v4090, %v4074
    %v5163 = vpack.c.b16 %v4091, %v4075
    %v5164 = vpack.c.b16 %v4092, %v4076
    %v5165 = vpack.c.b16 %v4093, %v4077
    %v5166 = vpack.c.b16 %v4094, %v4078
    %v5167 = vpack.c.b16 %v4095, %v4079
    %v5168 = vpack.c.b16 %v4096, %v4080
    %v5169 = vpack.c.b16 %v4097, %v4081
    %v5170 = vpack.c.b16 %v4098, %v4082
    %v5171 = vpack.c.b16 %v4115, %v4099
    %v5172 = vpack.c.b16 %v4116, %v4100
    %v5173 = vpack.c.b16 %v4117, %v4101
    %v5174 = vpack.c.b16 %v4118, %v4102
    %v5175 = vpack.c.b16 %v4119, %v4103
    %v5176 = vpack.c.b16 %v4120, %v4104
    %v5177 = vpack.c.b16 %v4121, %v4105
    %v5178 = vpack.c.b16 %v4122, %v4106
    %v5179 = vpack.c.b16 %v4123, %v4107
    %v5180 = vpack.c.b16 %v4124, %v4108
    %v5181 = vpack.c.b16 %v4125, %v4109
    %v5182 = vpack.c.b16 %v4126, %v4110
    %v5183 = vpack.c.b16 %v4127, %v4111
    %v5184 = vpack.c.b16 %v4128, %v4112
    %v5185 = vpack.c.b16 %v4129, %v4113
    %v5186 = vpack.c.b16 %v4130, %v4114
    %v5187 = vpack.c.b16 %v4147, %v4131
    %v5188 = vpack.c.b16 %v4148, %v4132
    %v5189 = vpack.c.b16 %v4149, %v4133
    %v5190 = vpack.c.b16 %v4150, %v4134
    %v5191 = vpack.c.b16 %v4151, %v4135
    %v5192 = vpack.c.b16 %v4152, %v4136
    %v5193 = vpack.c.b16 %v4153, %v4137
    %v5194 = vpack.c.b16 %v4154, %v4138
    %v5195 = vpack.c.b16 %v4155, %v4139
    %v5196 = vpack.c.b16 %v4156, %v4140
    %v5197 = vpack.c.b16 %v4157, %v4141
    %v5198 = vpack.c.b16 %v4158, %v4142
    %v5199 = vpack.c.b16 %v4159, %v4143
    %v5200 = vpack.c.b16 %v4160, %v4144
    %v5201 = vpack.c.b16 %v4161, %v4145
    %v5202 = vpack.c.b16 %v4162, %v4146
    %v5203 = vpack.c.b16 %v4179, %v4163
    %v5204 = vpack.c.b16 %v4180, %v4164
    %v5205 = vpack.c.b16 %v4181, %v4165
    %v5206 = vpack.c.b16 %v4182, %v4166
    %v5207 = vpack.c.b16 %v4183, %v4167
    %v5208 = vpack.c.b16 %v4184, %v4168
    %v5209 = vpack.c.b16 %v4185, %v4169
    %v5210 = vpack.c.b16 %v4186, %v4170
    %v5211 = vpack.c.b16 %v4187, %v4171
    %v5212 = vpack.c.b16 %v4188, %v4172
    %v5213 = vpack.c.b16 %v4189, %v4173
    %v5214 = vpack.c.b16 %v4190, %v4174
    %v5215 = vpack.c.b16 %v4191, %v4175
    %v5216 = vpack.c.b16 %v4192, %v4176
    %v5217 = vpack.c.b16 %v4193, %v4177
    %v5218 = vpack.c.b16 %v4194, %v4178
    %6243 = vmatprep.subr.bf16.mxu0 %v4196
    %6244 = vmatpush1.bf16.msra.mxu0 %v4195
    %6245 = vmatprep.subr.bf16.mxu0 %v4212
    %6246 = vmatpush1.bf16.msra.mxu0 %v4211
    %6247 = vmatprep.subr.bf16.mxu0 %v4228
    %6248 = vmatpush1.bf16.msra.mxu0 %v4227
    %6249 = vmatprep.subr.bf16.mxu0 %v4244
    %6250 = vmatpush1.bf16.msra.mxu0 %v4243
    %6251 = vmatprep.subr.bf16.mxu0 %v4260
    %6252 = vmatpush1.bf16.msra.mxu0 %v4259
    %6253 = vmatprep.subr.bf16.mxu0 %v4276
    %6254 = vmatpush1.bf16.msra.mxu0 %v4275
    %6255 = vmatprep.subr.bf16.mxu0 %v4292
    %6256 = vmatpush1.bf16.msra.mxu0 %v4291
    %6257 = vmatprep.subr.bf16.mxu0 %v4308
    %6258 = vmatpush1.bf16.msra.mxu0 %v4307
    %6259 = vmatprep.subr.bf16.mxu0 %v4324
    %6260 = vmatpush1.bf16.msra.mxu0 %v4323
    %6261 = vmatprep.subr.bf16.mxu0 %v4340
    %6262 = vmatpush1.bf16.msra.mxu0 %v4339
    %6263 = vmatprep.subr.bf16.mxu0 %v4356
    %6264 = vmatpush1.bf16.msra.mxu0 %v4355
    %6265 = vmatprep.subr.bf16.mxu0 %v4372
    %6266 = vmatpush1.bf16.msra.mxu0 %v4371
    %6267 = vmatprep.subr.bf16.mxu0 %v4388
    %6268 = vmatpush1.bf16.msra.mxu0 %v4387
    %6269 = vmatprep.subr.bf16.mxu0 %v4404
    %6270 = vmatpush1.bf16.msra.mxu0 %v4403
    %6271 = vmatprep.subr.bf16.mxu0 %v4420
    %6272 = vmatpush1.bf16.msra.mxu0 %v4419
    %6273 = vmatprep.subr.bf16.mxu0 %v4436
    %6274 = vmatpush1.bf16.msra.mxu0 %v4435
    %6275 = vmatprep.mubr.bf16.mxu0 %v92
    %6276 = vmatmul.mubr.bf16.gmra.mrb[0].mxu0 %v91
    %v6277 = vpop.f32.mrb[0].mxu0
    %v6278 = vadd.f32 0.0, %v6277
    %v6279 = vpop.f32.mrb[0].mxu0
    %v6280 = vadd.f32 0.0, %v6279
    %v6281 = vpop.f32.mrb[0].mxu0
    %v6282 = vpop.f32.mrb[0].mxu0
    %6283 = vdwg.mxu0
    %6284 = vmatprep.subr.bf16.mxu0 %v4452
    %6285 = vmatpush1.bf16.msra.mxu0 %v4451
    %6286 = vmatprep.subr.bf16.mxu0 %v4468
    %6287 = vmatpush1.bf16.msra.mxu0 %v4467
    %6288 = vmatprep.subr.bf16.mxu0 %v4484
    %6289 = vmatpush1.bf16.msra.mxu0 %v4483
    %6290 = vmatprep.subr.bf16.mxu0 %v4500
    %6291 = vmatpush1.bf16.msra.mxu0 %v4499
    %6292 = vmatprep.subr.bf16.mxu0 %v4516
    %6293 = vmatpush1.bf16.msra.mxu0 %v4515
    %6294 = vmatprep.subr.bf16.mxu0 %v4532
    %6295 = vmatpush1.bf16.msra.mxu0 %v4531
    %6296 = vmatprep.subr.bf16.mxu0 %v4548
    %6297 = vmatpush1.bf16.msra.mxu0 %v4547
    %6298 = vmatprep.subr.bf16.mxu0 %v4564
    %6299 = vmatpush1.bf16.msra.mxu0 %v4563
    %6300 = vmatprep.subr.bf16.mxu0 %v4580
    %6301 = vmatpush1.bf16.msra.mxu0 %v4579
    %6302 = vmatprep.subr.bf16.mxu0 %v4596
    %6303 = vmatpush1.bf16.msra.mxu0 %v4595
    %6304 = vmatprep.subr.bf16.mxu0 %v4612
    %6305 = vmatpush1.bf16.msra.mxu0 %v4611
    %6306 = vmatprep.subr.bf16.mxu0 %v4628
    %6307 = vmatpush1.bf16.msra.mxu0 %v4627
    %6308 = vmatprep.subr.bf16.mxu0 %v4644
    %6309 = vmatpush1.bf16.msra.mxu0 %v4643
    %6310 = vmatprep.subr.bf16.mxu0 %v4660
    %6311 = vmatpush1.bf16.msra.mxu0 %v4659
    %6312 = vmatprep.subr.bf16.mxu0 %v4676
    %6313 = vmatpush1.bf16.msra.mxu0 %v4675
    %6314 = vmatprep.subr.bf16.mxu0 %v4692
    %6315 = vmatpush1.bf16.msra.mxu0 %v4691
    %6316 = vmatprep.mubr.bf16.mxu0 %v94
    %6317 = vmatmul.mubr.bf16.gmra.mrb[0].mxu0 %v93
    %v6318 = vpop.f32.mrb[0].mxu0
    %v6319 = vadd.f32 %v6278, %v6318
    %v6320 = vpop.f32.mrb[0].mxu0
    %v6321 = vadd.f32 %v6280, %v6320
    %v6322 = vpop.f32.mrb[0].mxu0
    %v6323 = vpop.f32.mrb[0].mxu0
    %6324 = vdwg.mxu0
    %6325 = vmatprep.subr.bf16.mxu0 %v4708
    %6326 = vmatpush1.bf16.msra.mxu0 %v4707
    %6327 = vmatprep.subr.bf16.mxu0 %v4724
    %6328 = vmatpush1.bf16.msra.mxu0 %v4723
    %6329 = vmatprep.subr.bf16.mxu0 %v4740
    %6330 = vmatpush1.bf16.msra.mxu0 %v4739
    %6331 = vmatprep.subr.bf16.mxu0 %v4756
    %6332 = vmatpush1.bf16.msra.mxu0 %v4755
    %6333 = vmatprep.subr.bf16.mxu0 %v4772
    %6334 = vmatpush1.bf16.msra.mxu0 %v4771
    %6335 = vmatprep.subr.bf16.mxu0 %v4788
    %6336 = vmatpush1.bf16.msra.mxu0 %v4787
    %6337 = vmatprep.subr.bf16.mxu0 %v4804
    %6338 = vmatpush1.bf16.msra.mxu0 %v4803
    %6339 = vmatprep.subr.bf16.mxu0 %v4820
    %6340 = vmatpush1.bf16.msra.mxu0 %v4819
    %6341 = vmatprep.subr.bf16.mxu0 %v4836
    %6342 = vmatpush1.bf16.msra.mxu0 %v4835
    %6343 = vmatprep.subr.bf16.mxu0 %v4852
    %6344 = vmatpush1.bf16.msra.mxu0 %v4851
    %6345 = vmatprep.subr.bf16.mxu0 %v4868
    %6346 = vmatpush1.bf16.msra.mxu0 %v4867
    %6347 = vmatprep.subr.bf16.mxu0 %v4884
    %6348 = vmatpush1.bf16.msra.mxu0 %v4883
    %6349 = vmatprep.subr.bf16.mxu0 %v4900
    %6350 = vmatpush1.bf16.msra.mxu0 %v4899
    %6351 = vmatprep.subr.bf16.mxu0 %v4916
    %6352 = vmatpush1.bf16.msra.mxu0 %v4915
    %6353 = vmatprep.subr.bf16.mxu0 %v4932
    %6354 = vmatpush1.bf16.msra.mxu0 %v4931
    %6355 = vmatprep.subr.bf16.mxu0 %v4948
    %6356 = vmatpush1.bf16.msra.mxu0 %v4947
    %6357 = vmatprep.mubr.bf16.mxu0 %v96
    %6358 = vmatmul.mubr.bf16.gmra.mrb[0].mxu0 %v95
    %v6359 = vpop.f32.mrb[0].mxu0
    %v6360 = vadd.f32 %v6319, %v6359
    %v6361 = vpop.f32.mrb[0].mxu0
    %v6362 = vadd.f32 %v6321, %v6361
    %v6363 = vpop.f32.mrb[0].mxu0
    %v6364 = vpop.f32.mrb[0].mxu0
    %6365 = vdwg.mxu0
    %6366 = vmatprep.subr.bf16.mxu0 %v4964
    %6367 = vmatpush1.bf16.msra.mxu0 %v4963
    %6368 = vmatprep.subr.bf16.mxu0 %v4980
    %6369 = vmatpush1.bf16.msra.mxu0 %v4979
    %6370 = vmatprep.subr.bf16.mxu0 %v4996
    %6371 = vmatpush1.bf16.msra.mxu0 %v4995
    %6372 = vmatprep.subr.bf16.mxu0 %v5012
    %6373 = vmatpush1.bf16.msra.mxu0 %v5011
    %6374 = vmatprep.subr.bf16.mxu0 %v5028
    %6375 = vmatpush1.bf16.msra.mxu0 %v5027
    %6376 = vmatprep.subr.bf16.mxu0 %v5044
    %6377 = vmatpush1.bf16.msra.mxu0 %v5043
    %6378 = vmatprep.subr.bf16.mxu0 %v5060
    %6379 = vmatpush1.bf16.msra.mxu0 %v5059
    %6380 = vmatprep.subr.bf16.mxu0 %v5076
    %6381 = vmatpush1.bf16.msra.mxu0 %v5075
    %6382 = vmatprep.subr.bf16.mxu0 %v5092
    %6383 = vmatpush1.bf16.msra.mxu0 %v5091
    %6384 = vmatprep.subr.bf16.mxu0 %v5108
    %6385 = vmatpush1.bf16.msra.mxu0 %v5107
    %6386 = vmatprep.subr.bf16.mxu0 %v5124
    %6387 = vmatpush1.bf16.msra.mxu0 %v5123
    %6388 = vmatprep.subr.bf16.mxu0 %v5140
    %6389 = vmatpush1.bf16.msra.mxu0 %v5139
    %6390 = vmatprep.subr.bf16.mxu0 %v5156
    %6391 = vmatpush1.bf16.msra.mxu0 %v5155
    %6392 = vmatprep.subr.bf16.mxu0 %v5172
    %6393 = vmatpush1.bf16.msra.mxu0 %v5171
    %6394 = vmatprep.subr.bf16.mxu0 %v5188
    %6395 = vmatpush1.bf16.msra.mxu0 %v5187
    %6396 = vmatprep.subr.bf16.mxu0 %v5204
    %6397 = vmatpush1.bf16.msra.mxu0 %v5203
    %6398 = vmatprep.mubr.bf16.mxu0 %v98
    %6399 = vmatmul.mubr.bf16.gmra.mrb[0].mxu0 %v97
    %v6400 = vpop.f32.mrb[0].mxu0
    %v6401 = vadd.f32 %v6360, %v6400
    %v6402 = vpop.f32.mrb[0].mxu0
    %v6403 = vadd.f32 %v6362, %v6402
    %v6404 = vpop.f32.mrb[0].mxu0
    %v6405 = vpop.f32.mrb[0].mxu0
    %6406 = vdwg.mxu0
    %6407 = vmatprep.subr.bf16.mxu0 %v4198
    %6408 = vmatpush1.bf16.msra.mxu0 %v4197
    %6409 = vmatprep.subr.bf16.mxu0 %v4214
    %6410 = vmatpush1.bf16.msra.mxu0 %v4213
    %6411 = vmatprep.subr.bf16.mxu0 %v4230
    %6412 = vmatpush1.bf16.msra.mxu0 %v4229
    %6413 = vmatprep.subr.bf16.mxu0 %v4246
    %6414 = vmatpush1.bf16.msra.mxu0 %v4245
    %6415 = vmatprep.subr.bf16.mxu0 %v4262
    %6416 = vmatpush1.bf16.msra.mxu0 %v4261
    %6417 = vmatprep.subr.bf16.mxu0 %v4278
    %6418 = vmatpush1.bf16.msra.mxu0 %v4277
    %6419 = vmatprep.subr.bf16.mxu0 %v4294
    %6420 = vmatpush1.bf16.msra.mxu0 %v4293
    %6421 = vmatprep.subr.bf16.mxu0 %v4310
    %6422 = vmatpush1.bf16.msra.mxu0 %v4309
    %6423 = vmatprep.subr.bf16.mxu0 %v4326
    %6424 = vmatpush1.bf16.msra.mxu0 %v4325
    %6425 = vmatprep.subr.bf16.mxu0 %v4342
    %6426 = vmatpush1.bf16.msra.mxu0 %v4341
    %6427 = vmatprep.subr.bf16.mxu0 %v4358
    %6428 = vmatpush1.bf16.msra.mxu0 %v4357
    %6429 = vmatprep.subr.bf16.mxu0 %v4374
    %6430 = vmatpush1.bf16.msra.mxu0 %v4373
    %6431 = vmatprep.subr.bf16.mxu0 %v4390
    %6432 = vmatpush1.bf16.msra.mxu0 %v4389
    %6433 = vmatprep.subr.bf16.mxu0 %v4406
    %6434 = vmatpush1.bf16.msra.mxu0 %v4405
    %6435 = vmatprep.subr.bf16.mxu0 %v4422
    %6436 = vmatpush1.bf16.msra.mxu0 %v4421
    %6437 = vmatprep.subr.bf16.mxu0 %v4438
    %6438 = vmatpush1.bf16.msra.mxu0 %v4437
    %6439 = vmatprep.mubr.bf16.mxu0 %v92
    %6440 = vmatmul.mubr.bf16.gmra.mrb[0].mxu0 %v91
    %v6441 = vpop.f32.mrb[0].mxu0
    %v6442 = vadd.f32 0.0, %v6441
    %v6443 = vpop.f32.mrb[0].mxu0
    %v6444 = vadd.f32 0.0, %v6443
    %v6445 = vpop.f32.mrb[0].mxu0
    %v6446 = vpop.f32.mrb[0].mxu0
    %6447 = vdwg.mxu0
    %6448 = vmatprep.subr.bf16.mxu0 %v4454
    %6449 = vmatpush1.bf16.msra.mxu0 %v4453
    %6450 = vmatprep.subr.bf16.mxu0 %v4470
    %6451 = vmatpush1.bf16.msra.mxu0 %v4469
    %6452 = vmatprep.subr.bf16.mxu0 %v4486
    %6453 = vmatpush1.bf16.msra.mxu0 %v4485
    %6454 = vmatprep.subr.bf16.mxu0 %v4502
    %6455 = vmatpush1.bf16.msra.mxu0 %v4501
    %6456 = vmatprep.subr.bf16.mxu0 %v4518
    %6457 = vmatpush1.bf16.msra.mxu0 %v4517
    %6458 = vmatprep.subr.bf16.mxu0 %v4534
    %6459 = vmatpush1.bf16.msra.mxu0 %v4533
    %6460 = vmatprep.subr.bf16.mxu0 %v4550
    %6461 = vmatpush1.bf16.msra.mxu0 %v4549
    %6462 = vmatprep.subr.bf16.mxu0 %v4566
    %6463 = vmatpush1.bf16.msra.mxu0 %v4565
    %6464 = vmatprep.subr.bf16.mxu0 %v4582
    %6465 = vmatpush1.bf16.msra.mxu0 %v4581
    %6466 = vmatprep.subr.bf16.mxu0 %v4598
    %6467 = vmatpush1.bf16.msra.mxu0 %v4597
    %6468 = vmatprep.subr.bf16.mxu0 %v4614
    %6469 = vmatpush1.bf16.msra.mxu0 %v4613
    %6470 = vmatprep.subr.bf16.mxu0 %v4630
    %6471 = vmatpush1.bf16.msra.mxu0 %v4629
    %6472 = vmatprep.subr.bf16.mxu0 %v4646
    %6473 = vmatpush1.bf16.msra.mxu0 %v4645
    %6474 = vmatprep.subr.bf16.mxu0 %v4662
    %6475 = vmatpush1.bf16.msra.mxu0 %v4661
    %6476 = vmatprep.subr.bf16.mxu0 %v4678
    %6477 = vmatpush1.bf16.msra.mxu0 %v4677
    %6478 = vmatprep.subr.bf16.mxu0 %v4694
    %6479 = vmatpush1.bf16.msra.mxu0 %v4693
    %6480 = vmatprep.mubr.bf16.mxu0 %v94
    %6481 = vmatmul.mubr.bf16.gmra.mrb[0].mxu0 %v93
    %v6482 = vpop.f32.mrb[0].mxu0
    %v6483 = vadd.f32 %v6442, %v6482
    %v6484 = vpop.f32.mrb[0].mxu0
    %v6485 = vadd.f32 %v6444, %v6484
    %v6486 = vpop.f32.mrb[0].mxu0
    %v6487 = vpop.f32.mrb[0].mxu0
    %6488 = vdwg.mxu0
    %6489 = vmatprep.subr.bf16.mxu0 %v4710
    %6490 = vmatpush1.bf16.msra.mxu0 %v4709
    %6491 = vmatprep.subr.bf16.mxu0 %v4726
    %6492 = vmatpush1.bf16.msra.mxu0 %v4725
    %6493 = vmatprep.subr.bf16.mxu0 %v4742
    %6494 = vmatpush1.bf16.msra.mxu0 %v4741
    %6495 = vmatprep.subr.bf16.mxu0 %v4758
    %6496 = vmatpush1.bf16.msra.mxu0 %v4757
    %6497 = vmatprep.subr.bf16.mxu0 %v4774
    %6498 = vmatpush1.bf16.msra.mxu0 %v4773
    %6499 = vmatprep.subr.bf16.mxu0 %v4790
    %6500 = vmatpush1.bf16.msra.mxu0 %v4789
    %6501 = vmatprep.subr.bf16.mxu0 %v4806
    %6502 = vmatpush1.bf16.msra.mxu0 %v4805
    %6503 = vmatprep.subr.bf16.mxu0 %v4822
    %6504 = vmatpush1.bf16.msra.mxu0 %v4821
    %6505 = vmatprep.subr.bf16.mxu0 %v4838
    %6506 = vmatpush1.bf16.msra.mxu0 %v4837
    %6507 = vmatprep.subr.bf16.mxu0 %v4854
    %6508 = vmatpush1.bf16.msra.mxu0 %v4853
    %6509 = vmatprep.subr.bf16.mxu0 %v4870
    %6510 = vmatpush1.bf16.msra.mxu0 %v4869
    %6511 = vmatprep.subr.bf16.mxu0 %v4886
    %6512 = vmatpush1.bf16.msra.mxu0 %v4885
    %6513 = vmatprep.subr.bf16.mxu0 %v4902
    %6514 = vmatpush1.bf16.msra.mxu0 %v4901
    %6515 = vmatprep.subr.bf16.mxu0 %v4918
    %6516 = vmatpush1.bf16.msra.mxu0 %v4917
    %6517 = vmatprep.subr.bf16.mxu0 %v4934
    %6518 = vmatpush1.bf16.msra.mxu0 %v4933
    %6519 = vmatprep.subr.bf16.mxu0 %v4950
    %6520 = vmatpush1.bf16.msra.mxu0 %v4949
    %6521 = vmatprep.mubr.bf16.mxu0 %v96
    %6522 = vmatmul.mubr.bf16.gmra.mrb[0].mxu0 %v95
    %v6523 = vpop.f32.mrb[0].mxu0
    %v6524 = vadd.f32 %v6483, %v6523
    %v6525 = vpop.f32.mrb[0].mxu0
    %v6526 = vadd.f32 %v6485, %v6525
    %v6527 = vpop.f32.mrb[0].mxu0
    %v6528 = vpop.f32.mrb[0].mxu0
    %6529 = vdwg.mxu0
    %6530 = vmatprep.subr.bf16.mxu0 %v4966
    %6531 = vmatpush1.bf16.msra.mxu0 %v4965
    %6532 = vmatprep.subr.bf16.mxu0 %v4982
    %6533 = vmatpush1.bf16.msra.mxu0 %v4981
    %6534 = vmatprep.subr.bf16.mxu0 %v4998
    %6535 = vmatpush1.bf16.msra.mxu0 %v4997
    %6536 = vmatprep.subr.bf16.mxu0 %v5014
    %6537 = vmatpush1.bf16.msra.mxu0 %v5013
    %6538 = vmatprep.subr.bf16.mxu0 %v5030
    %6539 = vmatpush1.bf16.msra.mxu0 %v5029
    %6540 = vmatprep.subr.bf16.mxu0 %v5046
    %6541 = vmatpush1.bf16.msra.mxu0 %v5045
    %6542 = vmatprep.subr.bf16.mxu0 %v5062
    %6543 = vmatpush1.bf16.msra.mxu0 %v5061
    %6544 = vmatprep.subr.bf16.mxu0 %v5078
    %6545 = vmatpush1.bf16.msra.mxu0 %v5077
    %6546 = vmatprep.subr.bf16.mxu0 %v5094
    %6547 = vmatpush1.bf16.msra.mxu0 %v5093
    %6548 = vmatprep.subr.bf16.mxu0 %v5110
    %6549 = vmatpush1.bf16.msra.mxu0 %v5109
    %6550 = vmatprep.subr.bf16.mxu0 %v5126
    %6551 = vmatpush1.bf16.msra.mxu0 %v5125
    %6552 = vmatprep.subr.bf16.mxu0 %v5142
    %6553 = vmatpush1.bf16.msra.mxu0 %v5141
    %6554 = vmatprep.subr.bf16.mxu0 %v5158
    %6555 = vmatpush1.bf16.msra.mxu0 %v5157
    %6556 = vmatprep.subr.bf16.mxu0 %v5174
    %6557 = vmatpush1.bf16.msra.mxu0 %v5173
    %6558 = vmatprep.subr.bf16.mxu0 %v5190
    %6559 = vmatpush1.bf16.msra.mxu0 %v5189
    %6560 = vmatprep.subr.bf16.mxu0 %v5206
    %6561 = vmatpush1.bf16.msra.mxu0 %v5205
    %6562 = vmatprep.mubr.bf16.mxu0 %v98
    %6563 = vmatmul.mubr.bf16.gmra.mrb[0].mxu0 %v97
    %v6564 = vpop.f32.mrb[0].mxu0
    %v6565 = vadd.f32 %v6524, %v6564
    %v6566 = vpop.f32.mrb[0].mxu0
    %v6567 = vadd.f32 %v6526, %v6566
    %v6568 = vpop.f32.mrb[0].mxu0
    %v6569 = vpop.f32.mrb[0].mxu0
    %6570 = vdwg.mxu0
    %6571 = vmatprep.subr.bf16.mxu0 %v4200
    %6572 = vmatpush1.bf16.msra.mxu0 %v4199
    %6573 = vmatprep.subr.bf16.mxu0 %v4216
    %6574 = vmatpush1.bf16.msra.mxu0 %v4215
    %6575 = vmatprep.subr.bf16.mxu0 %v4232
    %6576 = vmatpush1.bf16.msra.mxu0 %v4231
    %6577 = vmatprep.subr.bf16.mxu0 %v4248
    %6578 = vmatpush1.bf16.msra.mxu0 %v4247
    %6579 = vmatprep.subr.bf16.mxu0 %v4264
    %6580 = vmatpush1.bf16.msra.mxu0 %v4263
    %6581 = vmatprep.subr.bf16.mxu0 %v4280
    %6582 = vmatpush1.bf16.msra.mxu0 %v4279
    %6583 = vmatprep.subr.bf16.mxu0 %v4296
    %6584 = vmatpush1.bf16.msra.mxu0 %v4295
    %6585 = vmatprep.subr.bf16.mxu0 %v4312
    %6586 = vmatpush1.bf16.msra.mxu0 %v4311
    %6587 = vmatprep.subr.bf16.mxu0 %v4328
    %6588 = vmatpush1.bf16.msra.mxu0 %v4327
    %6589 = vmatprep.subr.bf16.mxu0 %v4344
    %6590 = vmatpush1.bf16.msra.mxu0 %v4343
    %6591 = vmatprep.subr.bf16.mxu0 %v4360
    %6592 = vmatpush1.bf16.msra.mxu0 %v4359
    %6593 = vmatprep.subr.bf16.mxu0 %v4376
    %6594 = vmatpush1.bf16.msra.mxu0 %v4375
    %6595 = vmatprep.subr.bf16.mxu0 %v4392
    %6596 = vmatpush1.bf16.msra.mxu0 %v4391
    %6597 = vmatprep.subr.bf16.mxu0 %v4408
    %6598 = vmatpush1.bf16.msra.mxu0 %v4407
    %6599 = vmatprep.subr.bf16.mxu0 %v4424
    %6600 = vmatpush1.bf16.msra.mxu0 %v4423
    %6601 = vmatprep.subr.bf16.mxu0 %v4440
    %6602 = vmatpush1.bf16.msra.mxu0 %v4439
    %6603 = vmatprep.mubr.bf16.mxu0 %v92
    %6604 = vmatmul.mubr.bf16.gmra.mrb[0].mxu0 %v91
    %v6605 = vpop.f32.mrb[0].mxu0
    %v6606 = vadd.f32 0.0, %v6605
    %v6607 = vpop.f32.mrb[0].mxu0
    %v6608 = vadd.f32 0.0, %v6607
    %v6609 = vpop.f32.mrb[0].mxu0
    %v6610 = vpop.f32.mrb[0].mxu0
    %6611 = vdwg.mxu0
    %6612 = vmatprep.subr.bf16.mxu0 %v4456
    %6613 = vmatpush1.bf16.msra.mxu0 %v4455
    %6614 = vmatprep.subr.bf16.mxu0 %v4472
    %6615 = vmatpush1.bf16.msra.mxu0 %v4471
    %6616 = vmatprep.subr.bf16.mxu0 %v4488
    %6617 = vmatpush1.bf16.msra.mxu0 %v4487
    %6618 = vmatprep.subr.bf16.mxu0 %v4504
    %6619 = vmatpush1.bf16.msra.mxu0 %v4503
    %6620 = vmatprep.subr.bf16.mxu0 %v4520
    %6621 = vmatpush1.bf16.msra.mxu0 %v4519
    %6622 = vmatprep.subr.bf16.mxu0 %v4536
    %6623 = vmatpush1.bf16.msra.mxu0 %v4535
    %6624 = vmatprep.subr.bf16.mxu0 %v4552
    %6625 = vmatpush1.bf16.msra.mxu0 %v4551
    %6626 = vmatprep.subr.bf16.mxu0 %v4568
    %6627 = vmatpush1.bf16.msra.mxu0 %v4567
    %6628 = vmatprep.subr.bf16.mxu0 %v4584
    %6629 = vmatpush1.bf16.msra.mxu0 %v4583
    %6630 = vmatprep.subr.bf16.mxu0 %v4600
    %6631 = vmatpush1.bf16.msra.mxu0 %v4599
    %6632 = vmatprep.subr.bf16.mxu0 %v4616
    %6633 = vmatpush1.bf16.msra.mxu0 %v4615
    %6634 = vmatprep.subr.bf16.mxu0 %v4632
    %6635 = vmatpush1.bf16.msra.mxu0 %v4631
    %6636 = vmatprep.subr.bf16.mxu0 %v4648
    %6637 = vmatpush1.bf16.msra.mxu0 %v4647
    %6638 = vmatprep.subr.bf16.mxu0 %v4664
    %6639 = vmatpush1.bf16.msra.mxu0 %v4663
    %6640 = vmatprep.subr.bf16.mxu0 %v4680
    %6641 = vmatpush1.bf16.msra.mxu0 %v4679
    %6642 = vmatprep.subr.bf16.mxu0 %v4696
    %6643 = vmatpush1.bf16.msra.mxu0 %v4695
    %6644 = vmatprep.mubr.bf16.mxu0 %v94
    %6645 = vmatmul.mubr.bf16.gmra.mrb[0].mxu0 %v93
    %v6646 = vpop.f32.mrb[0].mxu0
    %v6647 = vadd.f32 %v6606, %v6646
    %v6648 = vpop.f32.mrb[0].mxu0
    %v6649 = vadd.f32 %v6608, %v6648
    %v6650 = vpop.f32.mrb[0].mxu0
    %v6651 = vpop.f32.mrb[0].mxu0
    %6652 = vdwg.mxu0
    %6653 = vmatprep.subr.bf16.mxu0 %v4712
    %6654 = vmatpush1.bf16.msra.mxu0 %v4711
    %6655 = vmatprep.subr.bf16.mxu0 %v4728
    %6656 = vmatpush1.bf16.msra.mxu0 %v4727
    %6657 = vmatprep.subr.bf16.mxu0 %v4744
    %6658 = vmatpush1.bf16.msra.mxu0 %v4743
    %6659 = vmatprep.subr.bf16.mxu0 %v4760
    %6660 = vmatpush1.bf16.msra.mxu0 %v4759
    %6661 = vmatprep.subr.bf16.mxu0 %v4776
    %6662 = vmatpush1.bf16.msra.mxu0 %v4775
    %6663 = vmatprep.subr.bf16.mxu0 %v4792
    %6664 = vmatpush1.bf16.msra.mxu0 %v4791
    %6665 = vmatprep.subr.bf16.mxu0 %v4808
    %6666 = vmatpush1.bf16.msra.mxu0 %v4807
    %6667 = vmatprep.subr.bf16.mxu0 %v4824
    %6668 = vmatpush1.bf16.msra.mxu0 %v4823
    %6669 = vmatprep.subr.bf16.mxu0 %v4840
    %6670 = vmatpush1.bf16.msra.mxu0 %v4839
    %6671 = vmatprep.subr.bf16.mxu0 %v4856
    %6672 = vmatpush1.bf16.msra.mxu0 %v4855
    %6673 = vmatprep.subr.bf16.mxu0 %v4872
    %6674 = vmatpush1.bf16.msra.mxu0 %v4871
    %6675 = vmatprep.subr.bf16.mxu0 %v4888
    %6676 = vmatpush1.bf16.msra.mxu0 %v4887
    %6677 = vmatprep.subr.bf16.mxu0 %v4904
    %6678 = vmatpush1.bf16.msra.mxu0 %v4903
    %6679 = vmatprep.subr.bf16.mxu0 %v4920
    %6680 = vmatpush1.bf16.msra.mxu0 %v4919
    %6681 = vmatprep.subr.bf16.mxu0 %v4936
    %6682 = vmatpush1.bf16.msra.mxu0 %v4935
    %6683 = vmatprep.subr.bf16.mxu0 %v4952
    %6684 = vmatpush1.bf16.msra.mxu0 %v4951
    %6685 = vmatprep.mubr.bf16.mxu0 %v96
    %6686 = vmatmul.mubr.bf16.gmra.mrb[0].mxu0 %v95
    %v6687 = vpop.f32.mrb[0].mxu0
    %v6688 = vadd.f32 %v6647, %v6687
    %v6689 = vpop.f32.mrb[0].mxu0
    %v6690 = vadd.f32 %v6649, %v6689
    %v6691 = vpop.f32.mrb[0].mxu0
    %v6692 = vpop.f32.mrb[0].mxu0
    %6693 = vdwg.mxu0
    %6694 = vmatprep.subr.bf16.mxu0 %v4968
    %6695 = vmatpush1.bf16.msra.mxu0 %v4967
    %6696 = vmatprep.subr.bf16.mxu0 %v4984
    %6697 = vmatpush1.bf16.msra.mxu0 %v4983
    %6698 = vmatprep.subr.bf16.mxu0 %v5000
    %6699 = vmatpush1.bf16.msra.mxu0 %v4999
    %6700 = vmatprep.subr.bf16.mxu0 %v5016
    %6701 = vmatpush1.bf16.msra.mxu0 %v5015
    %6702 = vmatprep.subr.bf16.mxu0 %v5032
    %6703 = vmatpush1.bf16.msra.mxu0 %v5031
    %6704 = vmatprep.subr.bf16.mxu0 %v5048
    %6705 = vmatpush1.bf16.msra.mxu0 %v5047
    %6706 = vmatprep.subr.bf16.mxu0 %v5064
    %6707 = vmatpush1.bf16.msra.mxu0 %v5063
    %6708 = vmatprep.subr.bf16.mxu0 %v5080
    %6709 = vmatpush1.bf16.msra.mxu0 %v5079
    %6710 = vmatprep.subr.bf16.mxu0 %v5096
    %6711 = vmatpush1.bf16.msra.mxu0 %v5095
    %6712 = vmatprep.subr.bf16.mxu0 %v5112
    %6713 = vmatpush1.bf16.msra.mxu0 %v5111
    %6714 = vmatprep.subr.bf16.mxu0 %v5128
    %6715 = vmatpush1.bf16.msra.mxu0 %v5127
    %6716 = vmatprep.subr.bf16.mxu0 %v5144
    %6717 = vmatpush1.bf16.msra.mxu0 %v5143
    %6718 = vmatprep.subr.bf16.mxu0 %v5160
    %6719 = vmatpush1.bf16.msra.mxu0 %v5159
    %6720 = vmatprep.subr.bf16.mxu0 %v5176
    %6721 = vmatpush1.bf16.msra.mxu0 %v5175
    %6722 = vmatprep.subr.bf16.mxu0 %v5192
    %6723 = vmatpush1.bf16.msra.mxu0 %v5191
    %6724 = vmatprep.subr.bf16.mxu0 %v5208
    %6725 = vmatpush1.bf16.msra.mxu0 %v5207
    %6726 = vmatprep.mubr.bf16.mxu0 %v98
    %6727 = vmatmul.mubr.bf16.gmra.mrb[0].mxu0 %v97
    %v6728 = vpop.f32.mrb[0].mxu0
    %v6729 = vadd.f32 %v6688, %v6728
    %v6730 = vpop.f32.mrb[0].mxu0
    %v6731 = vadd.f32 %v6690, %v6730
    %v6732 = vpop.f32.mrb[0].mxu0
    %v6733 = vpop.f32.mrb[0].mxu0
    %6734 = vdwg.mxu0
    %6735 = vmatprep.subr.bf16.mxu0 %v4202
    %6736 = vmatpush1.bf16.msra.mxu0 %v4201
    %6737 = vmatprep.subr.bf16.mxu0 %v4218
    %6738 = vmatpush1.bf16.msra.mxu0 %v4217
    %6739 = vmatprep.subr.bf16.mxu0 %v4234
    %6740 = vmatpush1.bf16.msra.mxu0 %v4233
    %6741 = vmatprep.subr.bf16.mxu0 %v4250
    %6742 = vmatpush1.bf16.msra.mxu0 %v4249
    %6743 = vmatprep.subr.bf16.mxu0 %v4266
    %6744 = vmatpush1.bf16.msra.mxu0 %v4265
    %6745 = vmatprep.subr.bf16.mxu0 %v4282
    %6746 = vmatpush1.bf16.msra.mxu0 %v4281
    %6747 = vmatprep.subr.bf16.mxu0 %v4298
    %6748 = vmatpush1.bf16.msra.mxu0 %v4297
    %6749 = vmatprep.subr.bf16.mxu0 %v4314
    %6750 = vmatpush1.bf16.msra.mxu0 %v4313
    %6751 = vmatprep.subr.bf16.mxu0 %v4330
    %6752 = vmatpush1.bf16.msra.mxu0 %v4329
    %6753 = vmatprep.subr.bf16.mxu0 %v4346
    %6754 = vmatpush1.bf16.msra.mxu0 %v4345
    %6755 = vmatprep.subr.bf16.mxu0 %v4362
    %6756 = vmatpush1.bf16.msra.mxu0 %v4361
    %6757 = vmatprep.subr.bf16.mxu0 %v4378
    %6758 = vmatpush1.bf16.msra.mxu0 %v4377
    %6759 = vmatprep.subr.bf16.mxu0 %v4394
    %6760 = vmatpush1.bf16.msra.mxu0 %v4393
    %6761 = vmatprep.subr.bf16.mxu0 %v4410
    %6762 = vmatpush1.bf16.msra.mxu0 %v4409
    %6763 = vmatprep.subr.bf16.mxu0 %v4426
    %6764 = vmatpush1.bf16.msra.mxu0 %v4425
    %6765 = vmatprep.subr.bf16.mxu0 %v4442
    %6766 = vmatpush1.bf16.msra.mxu0 %v4441
    %6767 = vmatprep.mubr.bf16.mxu0 %v92
    %6768 = vmatmul.mubr.bf16.gmra.mrb[0].mxu0 %v91
    %v6769 = vpop.f32.mrb[0].mxu0
    %v6770 = vadd.f32 0.0, %v6769
    %v6771 = vpop.f32.mrb[0].mxu0
    %v6772 = vadd.f32 0.0, %v6771
    %v6773 = vpop.f32.mrb[0].mxu0
    %v6774 = vpop.f32.mrb[0].mxu0
    %6775 = vdwg.mxu0
    %6776 = vmatprep.subr.bf16.mxu0 %v4458
    %6777 = vmatpush1.bf16.msra.mxu0 %v4457
    %6778 = vmatprep.subr.bf16.mxu0 %v4474
    %6779 = vmatpush1.bf16.msra.mxu0 %v4473
    %6780 = vmatprep.subr.bf16.mxu0 %v4490
    %6781 = vmatpush1.bf16.msra.mxu0 %v4489
    %6782 = vmatprep.subr.bf16.mxu0 %v4506
    %6783 = vmatpush1.bf16.msra.mxu0 %v4505
    %6784 = vmatprep.subr.bf16.mxu0 %v4522
    %6785 = vmatpush1.bf16.msra.mxu0 %v4521
    %6786 = vmatprep.subr.bf16.mxu0 %v4538
    %6787 = vmatpush1.bf16.msra.mxu0 %v4537
    %6788 = vmatprep.subr.bf16.mxu0 %v4554
    %6789 = vmatpush1.bf16.msra.mxu0 %v4553
    %6790 = vmatprep.subr.bf16.mxu0 %v4570
    %6791 = vmatpush1.bf16.msra.mxu0 %v4569
    %6792 = vmatprep.subr.bf16.mxu0 %v4586
    %6793 = vmatpush1.bf16.msra.mxu0 %v4585
    %6794 = vmatprep.subr.bf16.mxu0 %v4602
    %6795 = vmatpush1.bf16.msra.mxu0 %v4601
    %6796 = vmatprep.subr.bf16.mxu0 %v4618
    %6797 = vmatpush1.bf16.msra.mxu0 %v4617
    %6798 = vmatprep.subr.bf16.mxu0 %v4634
    %6799 = vmatpush1.bf16.msra.mxu0 %v4633
    %6800 = vmatprep.subr.bf16.mxu0 %v4650
    %6801 = vmatpush1.bf16.msra.mxu0 %v4649
    %6802 = vmatprep.subr.bf16.mxu0 %v4666
    %6803 = vmatpush1.bf16.msra.mxu0 %v4665
    %6804 = vmatprep.subr.bf16.mxu0 %v4682
    %6805 = vmatpush1.bf16.msra.mxu0 %v4681
    %6806 = vmatprep.subr.bf16.mxu0 %v4698
    %6807 = vmatpush1.bf16.msra.mxu0 %v4697
    %6808 = vmatprep.mubr.bf16.mxu0 %v94
    %6809 = vmatmul.mubr.bf16.gmra.mrb[0].mxu0 %v93
    %v6810 = vpop.f32.mrb[0].mxu0
    %v6811 = vadd.f32 %v6770, %v6810
    %v6812 = vpop.f32.mrb[0].mxu0
    %v6813 = vadd.f32 %v6772, %v6812
    %v6814 = vpop.f32.mrb[0].mxu0
    %v6815 = vpop.f32.mrb[0].mxu0
    %6816 = vdwg.mxu0
    %6817 = vmatprep.subr.bf16.mxu0 %v4714
    %6818 = vmatpush1.bf16.msra.mxu0 %v4713
    %6819 = vmatprep.subr.bf16.mxu0 %v4730
    %6820 = vmatpush1.bf16.msra.mxu0 %v4729
    %6821 = vmatprep.subr.bf16.mxu0 %v4746
    %6822 = vmatpush1.bf16.msra.mxu0 %v4745
    %6823 = vmatprep.subr.bf16.mxu0 %v4762
    %6824 = vmatpush1.bf16.msra.mxu0 %v4761
    %6825 = vmatprep.subr.bf16.mxu0 %v4778
    %6826 = vmatpush1.bf16.msra.mxu0 %v4777
    %6827 = vmatprep.subr.bf16.mxu0 %v4794
    %6828 = vmatpush1.bf16.msra.mxu0 %v4793
    %6829 = vmatprep.subr.bf16.mxu0 %v4810
    %6830 = vmatpush1.bf16.msra.mxu0 %v4809
    %6831 = vmatprep.subr.bf16.mxu0 %v4826
    %6832 = vmatpush1.bf16.msra.mxu0 %v4825
    %6833 = vmatprep.subr.bf16.mxu0 %v4842
    %6834 = vmatpush1.bf16.msra.mxu0 %v4841
    %6835 = vmatprep.subr.bf16.mxu0 %v4858
    %6836 = vmatpush1.bf16.msra.mxu0 %v4857
    %6837 = vmatprep.subr.bf16.mxu0 %v4874
    %6838 = vmatpush1.bf16.msra.mxu0 %v4873
    %6839 = vmatprep.subr.bf16.mxu0 %v4890
    %6840 = vmatpush1.bf16.msra.mxu0 %v4889
    %6841 = vmatprep.subr.bf16.mxu0 %v4906
    %6842 = vmatpush1.bf16.msra.mxu0 %v4905
    %6843 = vmatprep.subr.bf16.mxu0 %v4922
    %6844 = vmatpush1.bf16.msra.mxu0 %v4921
    %6845 = vmatprep.subr.bf16.mxu0 %v4938
    %6846 = vmatpush1.bf16.msra.mxu0 %v4937
    %6847 = vmatprep.subr.bf16.mxu0 %v4954
    %6848 = vmatpush1.bf16.msra.mxu0 %v4953
    %6849 = vmatprep.mubr.bf16.mxu0 %v96
    %6850 = vmatmul.mubr.bf16.gmra.mrb[0].mxu0 %v95
    %v6851 = vpop.f32.mrb[0].mxu0
    %v6852 = vadd.f32 %v6811, %v6851
    %v6853 = vpop.f32.mrb[0].mxu0
    %v6854 = vadd.f32 %v6813, %v6853
    %v6855 = vpop.f32.mrb[0].mxu0
    %v6856 = vpop.f32.mrb[0].mxu0
    %6857 = vdwg.mxu0
    %6858 = vmatprep.subr.bf16.mxu0 %v4970
    %6859 = vmatpush1.bf16.msra.mxu0 %v4969
    %6860 = vmatprep.subr.bf16.mxu0 %v4986
    %6861 = vmatpush1.bf16.msra.mxu0 %v4985
    %6862 = vmatprep.subr.bf16.mxu0 %v5002
    %6863 = vmatpush1.bf16.msra.mxu0 %v5001
    %6864 = vmatprep.subr.bf16.mxu0 %v5018
    %6865 = vmatpush1.bf16.msra.mxu0 %v5017
    %6866 = vmatprep.subr.bf16.mxu0 %v5034
    %6867 = vmatpush1.bf16.msra.mxu0 %v5033
    %6868 = vmatprep.subr.bf16.mxu0 %v5050
    %6869 = vmatpush1.bf16.msra.mxu0 %v5049
    %6870 = vmatprep.subr.bf16.mxu0 %v5066
    %6871 = vmatpush1.bf16.msra.mxu0 %v5065
    %6872 = vmatprep.subr.bf16.mxu0 %v5082
    %6873 = vmatpush1.bf16.msra.mxu0 %v5081
    %6874 = vmatprep.subr.bf16.mxu0 %v5098
    %6875 = vmatpush1.bf16.msra.mxu0 %v5097
    %6876 = vmatprep.subr.bf16.mxu0 %v5114
    %6877 = vmatpush1.bf16.msra.mxu0 %v5113
    %6878 = vmatprep.subr.bf16.mxu0 %v5130
    %6879 = vmatpush1.bf16.msra.mxu0 %v5129
    %6880 = vmatprep.subr.bf16.mxu0 %v5146
    %6881 = vmatpush1.bf16.msra.mxu0 %v5145
    %6882 = vmatprep.subr.bf16.mxu0 %v5162
    %6883 = vmatpush1.bf16.msra.mxu0 %v5161
    %6884 = vmatprep.subr.bf16.mxu0 %v5178
    %6885 = vmatpush1.bf16.msra.mxu0 %v5177
    %6886 = vmatprep.subr.bf16.mxu0 %v5194
    %6887 = vmatpush1.bf16.msra.mxu0 %v5193
    %6888 = vmatprep.subr.bf16.mxu0 %v5210
    %6889 = vmatpush1.bf16.msra.mxu0 %v5209
    %6890 = vmatprep.mubr.bf16.mxu0 %v98
    %6891 = vmatmul.mubr.bf16.gmra.mrb[0].mxu0 %v97
    %v6892 = vpop.f32.mrb[0].mxu0
    %v6893 = vadd.f32 %v6852, %v6892
    %v6894 = vpop.f32.mrb[0].mxu0
    %v6895 = vadd.f32 %v6854, %v6894
    %v6896 = vpop.f32.mrb[0].mxu0
    %v6897 = vpop.f32.mrb[0].mxu0
    %6898 = vdwg.mxu0
    %6899 = vmatprep.subr.bf16.mxu0 %v4204
    %6900 = vmatpush1.bf16.msra.mxu0 %v4203
    %6901 = vmatprep.subr.bf16.mxu0 %v4220
    %6902 = vmatpush1.bf16.msra.mxu0 %v4219
    %6903 = vmatprep.subr.bf16.mxu0 %v4236
    %6904 = vmatpush1.bf16.msra.mxu0 %v4235
    %6905 = vmatprep.subr.bf16.mxu0 %v4252
    %6906 = vmatpush1.bf16.msra.mxu0 %v4251
    %6907 = vmatprep.subr.bf16.mxu0 %v4268
    %6908 = vmatpush1.bf16.msra.mxu0 %v4267
    %6909 = vmatprep.subr.bf16.mxu0 %v4284
    %6910 = vmatpush1.bf16.msra.mxu0 %v4283
    %6911 = vmatprep.subr.bf16.mxu0 %v4300
    %6912 = vmatpush1.bf16.msra.mxu0 %v4299
    %6913 = vmatprep.subr.bf16.mxu0 %v4316
    %6914 = vmatpush1.bf16.msra.mxu0 %v4315
    %6915 = vmatprep.subr.bf16.mxu0 %v4332
    %6916 = vmatpush1.bf16.msra.mxu0 %v4331
    %6917 = vmatprep.subr.bf16.mxu0 %v4348
    %6918 = vmatpush1.bf16.msra.mxu0 %v4347
    %6919 = vmatprep.subr.bf16.mxu0 %v4364
    %6920 = vmatpush1.bf16.msra.mxu0 %v4363
    %6921 = vmatprep.subr.bf16.mxu0 %v4380
    %6922 = vmatpush1.bf16.msra.mxu0 %v4379
    %6923 = vmatprep.subr.bf16.mxu0 %v4396
    %6924 = vmatpush1.bf16.msra.mxu0 %v4395
    %6925 = vmatprep.subr.bf16.mxu0 %v4412
    %6926 = vmatpush1.bf16.msra.mxu0 %v4411
    %6927 = vmatprep.subr.bf16.mxu0 %v4428
    %6928 = vmatpush1.bf16.msra.mxu0 %v4427
    %6929 = vmatprep.subr.bf16.mxu0 %v4444
    %6930 = vmatpush1.bf16.msra.mxu0 %v4443
    %6931 = vmatprep.mubr.bf16.mxu0 %v92
    %6932 = vmatmul.mubr.bf16.gmra.mrb[0].mxu0 %v91
    %v6933 = vpop.f32.mrb[0].mxu0
    %v6934 = vadd.f32 0.0, %v6933
    %v6935 = vpop.f32.mrb[0].mxu0
    %v6936 = vadd.f32 0.0, %v6935
    %v6937 = vpop.f32.mrb[0].mxu0
    %v6938 = vpop.f32.mrb[0].mxu0
    %6939 = vdwg.mxu0
    %6940 = vmatprep.subr.bf16.mxu0 %v4460
    %6941 = vmatpush1.bf16.msra.mxu0 %v4459
    %6942 = vmatprep.subr.bf16.mxu0 %v4476
    %6943 = vmatpush1.bf16.msra.mxu0 %v4475
    %6944 = vmatprep.subr.bf16.mxu0 %v4492
    %6945 = vmatpush1.bf16.msra.mxu0 %v4491
    %6946 = vmatprep.subr.bf16.mxu0 %v4508
    %6947 = vmatpush1.bf16.msra.mxu0 %v4507
    %6948 = vmatprep.subr.bf16.mxu0 %v4524
    %6949 = vmatpush1.bf16.msra.mxu0 %v4523
    %6950 = vmatprep.subr.bf16.mxu0 %v4540
    %6951 = vmatpush1.bf16.msra.mxu0 %v4539
    %6952 = vmatprep.subr.bf16.mxu0 %v4556
    %6953 = vmatpush1.bf16.msra.mxu0 %v4555
    %6954 = vmatprep.subr.bf16.mxu0 %v4572
    %6955 = vmatpush1.bf16.msra.mxu0 %v4571
    %6956 = vmatprep.subr.bf16.mxu0 %v4588
    %6957 = vmatpush1.bf16.msra.mxu0 %v4587
    %6958 = vmatprep.subr.bf16.mxu0 %v4604
    %6959 = vmatpush1.bf16.msra.mxu0 %v4603
    %6960 = vmatprep.subr.bf16.mxu0 %v4620
    %6961 = vmatpush1.bf16.msra.mxu0 %v4619
    %6962 = vmatprep.subr.bf16.mxu0 %v4636
    %6963 = vmatpush1.bf16.msra.mxu0 %v4635
    %6964 = vmatprep.subr.bf16.mxu0 %v4652
    %6965 = vmatpush1.bf16.msra.mxu0 %v4651
    %6966 = vmatprep.subr.bf16.mxu0 %v4668
    %6967 = vmatpush1.bf16.msra.mxu0 %v4667
    %6968 = vmatprep.subr.bf16.mxu0 %v4684
    %6969 = vmatpush1.bf16.msra.mxu0 %v4683
    %6970 = vmatprep.subr.bf16.mxu0 %v4700
    %6971 = vmatpush1.bf16.msra.mxu0 %v4699
    %6972 = vmatprep.mubr.bf16.mxu0 %v94
    %6973 = vmatmul.mubr.bf16.gmra.mrb[0].mxu0 %v93
    %v6974 = vpop.f32.mrb[0].mxu0
    %v6975 = vadd.f32 %v6934, %v6974
    %v6976 = vpop.f32.mrb[0].mxu0
    %v6977 = vadd.f32 %v6936, %v6976
    %v6978 = vpop.f32.mrb[0].mxu0
    %v6979 = vpop.f32.mrb[0].mxu0
    %6980 = vdwg.mxu0
    %6981 = vmatprep.subr.bf16.mxu0 %v4716
    %6982 = vmatpush1.bf16.msra.mxu0 %v4715
    %6983 = vmatprep.subr.bf16.mxu0 %v4732
    %6984 = vmatpush1.bf16.msra.mxu0 %v4731
    %6985 = vmatprep.subr.bf16.mxu0 %v4748
    %6986 = vmatpush1.bf16.msra.mxu0 %v4747
    %6987 = vmatprep.subr.bf16.mxu0 %v4764
    %6988 = vmatpush1.bf16.msra.mxu0 %v4763
    %6989 = vmatprep.subr.bf16.mxu0 %v4780
    %6990 = vmatpush1.bf16.msra.mxu0 %v4779
    %6991 = vmatprep.subr.bf16.mxu0 %v4796
    %6992 = vmatpush1.bf16.msra.mxu0 %v4795
    %6993 = vmatprep.subr.bf16.mxu0 %v4812
    %6994 = vmatpush1.bf16.msra.mxu0 %v4811
    %6995 = vmatprep.subr.bf16.mxu0 %v4828
    %6996 = vmatpush1.bf16.msra.mxu0 %v4827
    %6997 = vmatprep.subr.bf16.mxu0 %v4844
    %6998 = vmatpush1.bf16.msra.mxu0 %v4843
    %6999 = vmatprep.subr.bf16.mxu0 %v4860
    %7000 = vmatpush1.bf16.msra.mxu0 %v4859
    %7001 = vmatprep.subr.bf16.mxu0 %v4876
    %7002 = vmatpush1.bf16.msra.mxu0 %v4875
    %7003 = vmatprep.subr.bf16.mxu0 %v4892
    %7004 = vmatpush1.bf16.msra.mxu0 %v4891
    %7005 = vmatprep.subr.bf16.mxu0 %v4908
    %7006 = vmatpush1.bf16.msra.mxu0 %v4907
    %7007 = vmatprep.subr.bf16.mxu0 %v4924
    %7008 = vmatpush1.bf16.msra.mxu0 %v4923
    %7009 = vmatprep.subr.bf16.mxu0 %v4940
    %7010 = vmatpush1.bf16.msra.mxu0 %v4939
    %7011 = vmatprep.subr.bf16.mxu0 %v4956
    %7012 = vmatpush1.bf16.msra.mxu0 %v4955
    %7013 = vmatprep.mubr.bf16.mxu0 %v96
    %7014 = vmatmul.mubr.bf16.gmra.mrb[0].mxu0 %v95
    %v7015 = vpop.f32.mrb[0].mxu0
    %v7016 = vadd.f32 %v6975, %v7015
    %v7017 = vpop.f32.mrb[0].mxu0
    %v7018 = vadd.f32 %v6977, %v7017
    %v7019 = vpop.f32.mrb[0].mxu0
    %v7020 = vpop.f32.mrb[0].mxu0
    %7021 = vdwg.mxu0
    %7022 = vmatprep.subr.bf16.mxu0 %v4972
    %7023 = vmatpush1.bf16.msra.mxu0 %v4971
    %7024 = vmatprep.subr.bf16.mxu0 %v4988
    %7025 = vmatpush1.bf16.msra.mxu0 %v4987
    %7026 = vmatprep.subr.bf16.mxu0 %v5004
    %7027 = vmatpush1.bf16.msra.mxu0 %v5003
    %7028 = vmatprep.subr.bf16.mxu0 %v5020
    %7029 = vmatpush1.bf16.msra.mxu0 %v5019
    %7030 = vmatprep.subr.bf16.mxu0 %v5036
    %7031 = vmatpush1.bf16.msra.mxu0 %v5035
    %7032 = vmatprep.subr.bf16.mxu0 %v5052
    %7033 = vmatpush1.bf16.msra.mxu0 %v5051
    %7034 = vmatprep.subr.bf16.mxu0 %v5068
    %7035 = vmatpush1.bf16.msra.mxu0 %v5067
    %7036 = vmatprep.subr.bf16.mxu0 %v5084
    %7037 = vmatpush1.bf16.msra.mxu0 %v5083
    %7038 = vmatprep.subr.bf16.mxu0 %v5100
    %7039 = vmatpush1.bf16.msra.mxu0 %v5099
    %7040 = vmatprep.subr.bf16.mxu0 %v5116
    %7041 = vmatpush1.bf16.msra.mxu0 %v5115
    %7042 = vmatprep.subr.bf16.mxu0 %v5132
    %7043 = vmatpush1.bf16.msra.mxu0 %v5131
    %7044 = vmatprep.subr.bf16.mxu0 %v5148
    %7045 = vmatpush1.bf16.msra.mxu0 %v5147
    %7046 = vmatprep.subr.bf16.mxu0 %v5164
    %7047 = vmatpush1.bf16.msra.mxu0 %v5163
    %7048 = vmatprep.subr.bf16.mxu0 %v5180
    %7049 = vmatpush1.bf16.msra.mxu0 %v5179
    %7050 = vmatprep.subr.bf16.mxu0 %v5196
    %7051 = vmatpush1.bf16.msra.mxu0 %v5195
    %7052 = vmatprep.subr.bf16.mxu0 %v5212
    %7053 = vmatpush1.bf16.msra.mxu0 %v5211
    %7054 = vmatprep.mubr.bf16.mxu0 %v98
    %7055 = vmatmul.mubr.bf16.gmra.mrb[0].mxu0 %v97
    %v7056 = vpop.f32.mrb[0].mxu0
    %v7057 = vadd.f32 %v7016, %v7056
    %v7058 = vpop.f32.mrb[0].mxu0
    %v7059 = vadd.f32 %v7018, %v7058
    %v7060 = vpop.f32.mrb[0].mxu0
    %v7061 = vpop.f32.mrb[0].mxu0
    %7062 = vdwg.mxu0
    %7063 = vmatprep.subr.bf16.mxu0 %v4206
    %7064 = vmatpush1.bf16.msra.mxu0 %v4205
    %7065 = vmatprep.subr.bf16.mxu0 %v4222
    %7066 = vmatpush1.bf16.msra.mxu0 %v4221
    %7067 = vmatprep.subr.bf16.mxu0 %v4238
    %7068 = vmatpush1.bf16.msra.mxu0 %v4237
    %7069 = vmatprep.subr.bf16.mxu0 %v4254
    %7070 = vmatpush1.bf16.msra.mxu0 %v4253
    %7071 = vmatprep.subr.bf16.mxu0 %v4270
    %7072 = vmatpush1.bf16.msra.mxu0 %v4269
    %7073 = vmatprep.subr.bf16.mxu0 %v4286
    %7074 = vmatpush1.bf16.msra.mxu0 %v4285
    %7075 = vmatprep.subr.bf16.mxu0 %v4302
    %7076 = vmatpush1.bf16.msra.mxu0 %v4301
    %7077 = vmatprep.subr.bf16.mxu0 %v4318
    %7078 = vmatpush1.bf16.msra.mxu0 %v4317
    %7079 = vmatprep.subr.bf16.mxu0 %v4334
    %7080 = vmatpush1.bf16.msra.mxu0 %v4333
    %7081 = vmatprep.subr.bf16.mxu0 %v4350
    %7082 = vmatpush1.bf16.msra.mxu0 %v4349
    %7083 = vmatprep.subr.bf16.mxu0 %v4366
    %7084 = vmatpush1.bf16.msra.mxu0 %v4365
    %7085 = vmatprep.subr.bf16.mxu0 %v4382
    %7086 = vmatpush1.bf16.msra.mxu0 %v4381
    %7087 = vmatprep.subr.bf16.mxu0 %v4398
    %7088 = vmatpush1.bf16.msra.mxu0 %v4397
    %7089 = vmatprep.subr.bf16.mxu0 %v4414
    %7090 = vmatpush1.bf16.msra.mxu0 %v4413
    %7091 = vmatprep.subr.bf16.mxu0 %v4430
    %7092 = vmatpush1.bf16.msra.mxu0 %v4429
    %7093 = vmatprep.subr.bf16.mxu0 %v4446
    %7094 = vmatpush1.bf16.msra.mxu0 %v4445
    %7095 = vmatprep.mubr.bf16.mxu0 %v92
    %7096 = vmatmul.mubr.bf16.gmra.mrb[0].mxu0 %v91
    %v7097 = vpop.f32.mrb[0].mxu0
    %v7098 = vadd.f32 0.0, %v7097
    %v7099 = vpop.f32.mrb[0].mxu0
    %v7100 = vadd.f32 0.0, %v7099
    %v7101 = vpop.f32.mrb[0].mxu0
    %v7102 = vpop.f32.mrb[0].mxu0
    %7103 = vdwg.mxu0
    %7104 = vmatprep.subr.bf16.mxu0 %v4462
    %7105 = vmatpush1.bf16.msra.mxu0 %v4461
    %7106 = vmatprep.subr.bf16.mxu0 %v4478
    %7107 = vmatpush1.bf16.msra.mxu0 %v4477
    %7108 = vmatprep.subr.bf16.mxu0 %v4494
    %7109 = vmatpush1.bf16.msra.mxu0 %v4493
    %7110 = vmatprep.subr.bf16.mxu0 %v4510
    %7111 = vmatpush1.bf16.msra.mxu0 %v4509
    %7112 = vmatprep.subr.bf16.mxu0 %v4526
    %7113 = vmatpush1.bf16.msra.mxu0 %v4525
    %7114 = vmatprep.subr.bf16.mxu0 %v4542
    %7115 = vmatpush1.bf16.msra.mxu0 %v4541
    %7116 = vmatprep.subr.bf16.mxu0 %v4558
    %7117 = vmatpush1.bf16.msra.mxu0 %v4557
    %7118 = vmatprep.subr.bf16.mxu0 %v4574
    %7119 = vmatpush1.bf16.msra.mxu0 %v4573
    %7120 = vmatprep.subr.bf16.mxu0 %v4590
    %7121 = vmatpush1.bf16.msra.mxu0 %v4589
    %7122 = vmatprep.subr.bf16.mxu0 %v4606
    %7123 = vmatpush1.bf16.msra.mxu0 %v4605
    %7124 = vmatprep.subr.bf16.mxu0 %v4622
    %7125 = vmatpush1.bf16.msra.mxu0 %v4621
    %7126 = vmatprep.subr.bf16.mxu0 %v4638
    %7127 = vmatpush1.bf16.msra.mxu0 %v4637
    %7128 = vmatprep.subr.bf16.mxu0 %v4654
    %7129 = vmatpush1.bf16.msra.mxu0 %v4653
    %7130 = vmatprep.subr.bf16.mxu0 %v4670
    %7131 = vmatpush1.bf16.msra.mxu0 %v4669
    %7132 = vmatprep.subr.bf16.mxu0 %v4686
    %7133 = vmatpush1.bf16.msra.mxu0 %v4685
    %7134 = vmatprep.subr.bf16.mxu0 %v4702
    %7135 = vmatpush1.bf16.msra.mxu0 %v4701
    %7136 = vmatprep.mubr.bf16.mxu0 %v94
    %7137 = vmatmul.mubr.bf16.gmra.mrb[0].mxu0 %v93
    %v7138 = vpop.f32.mrb[0].mxu0
    %v7139 = vadd.f32 %v7098, %v7138
    %v7140 = vpop.f32.mrb[0].mxu0
    %v7141 = vadd.f32 %v7100, %v7140
    %v7142 = vpop.f32.mrb[0].mxu0
    %v7143 = vpop.f32.mrb[0].mxu0
    %7144 = vdwg.mxu0
    %7145 = vmatprep.subr.bf16.mxu0 %v4718
    %7146 = vmatpush1.bf16.msra.mxu0 %v4717
    %7147 = vmatprep.subr.bf16.mxu0 %v4734
    %7148 = vmatpush1.bf16.msra.mxu0 %v4733
    %7149 = vmatprep.subr.bf16.mxu0 %v4750
    %7150 = vmatpush1.bf16.msra.mxu0 %v4749
    %7151 = vmatprep.subr.bf16.mxu0 %v4766
    %7152 = vmatpush1.bf16.msra.mxu0 %v4765
    %7153 = vmatprep.subr.bf16.mxu0 %v4782
    %7154 = vmatpush1.bf16.msra.mxu0 %v4781
    %7155 = vmatprep.subr.bf16.mxu0 %v4798
    %7156 = vmatpush1.bf16.msra.mxu0 %v4797
    %7157 = vmatprep.subr.bf16.mxu0 %v4814
    %7158 = vmatpush1.bf16.msra.mxu0 %v4813
    %7159 = vmatprep.subr.bf16.mxu0 %v4830
    %7160 = vmatpush1.bf16.msra.mxu0 %v4829
    %7161 = vmatprep.subr.bf16.mxu0 %v4846
    %7162 = vmatpush1.bf16.msra.mxu0 %v4845
    %7163 = vmatprep.subr.bf16.mxu0 %v4862
    %7164 = vmatpush1.bf16.msra.mxu0 %v4861
    %7165 = vmatprep.subr.bf16.mxu0 %v4878
    %7166 = vmatpush1.bf16.msra.mxu0 %v4877
    %7167 = vmatprep.subr.bf16.mxu0 %v4894
    %7168 = vmatpush1.bf16.msra.mxu0 %v4893
    %7169 = vmatprep.subr.bf16.mxu0 %v4910
    %7170 = vmatpush1.bf16.msra.mxu0 %v4909
    %7171 = vmatprep.subr.bf16.mxu0 %v4926
    %7172 = vmatpush1.bf16.msra.mxu0 %v4925
    %7173 = vmatprep.subr.bf16.mxu0 %v4942
    %7174 = vmatpush1.bf16.msra.mxu0 %v4941
    %7175 = vmatprep.subr.bf16.mxu0 %v4958
    %7176 = vmatpush1.bf16.msra.mxu0 %v4957
    %7177 = vmatprep.mubr.bf16.mxu0 %v96
    %7178 = vmatmul.mubr.bf16.gmra.mrb[0].mxu0 %v95
    %v7179 = vpop.f32.mrb[0].mxu0
    %v7180 = vadd.f32 %v7139, %v7179
    %v7181 = vpop.f32.mrb[0].mxu0
    %v7182 = vadd.f32 %v7141, %v7181
    %v7183 = vpop.f32.mrb[0].mxu0
    %v7184 = vpop.f32.mrb[0].mxu0
    %7185 = vdwg.mxu0
    %7186 = vmatprep.subr.bf16.mxu0 %v4974
    %7187 = vmatpush1.bf16.msra.mxu0 %v4973
    %7188 = vmatprep.subr.bf16.mxu0 %v4990
    %7189 = vmatpush1.bf16.msra.mxu0 %v4989
    %7190 = vmatprep.subr.bf16.mxu0 %v5006
    %7191 = vmatpush1.bf16.msra.mxu0 %v5005
    %7192 = vmatprep.subr.bf16.mxu0 %v5022
    %7193 = vmatpush1.bf16.msra.mxu0 %v5021
    %7194 = vmatprep.subr.bf16.mxu0 %v5038
    %7195 = vmatpush1.bf16.msra.mxu0 %v5037
    %7196 = vmatprep.subr.bf16.mxu0 %v5054
    %7197 = vmatpush1.bf16.msra.mxu0 %v5053
    %7198 = vmatprep.subr.bf16.mxu0 %v5070
    %7199 = vmatpush1.bf16.msra.mxu0 %v5069
    %7200 = vmatprep.subr.bf16.mxu0 %v5086
    %7201 = vmatpush1.bf16.msra.mxu0 %v5085
    %7202 = vmatprep.subr.bf16.mxu0 %v5102
    %7203 = vmatpush1.bf16.msra.mxu0 %v5101
    %7204 = vmatprep.subr.bf16.mxu0 %v5118
    %7205 = vmatpush1.bf16.msra.mxu0 %v5117
    %7206 = vmatprep.subr.bf16.mxu0 %v5134
    %7207 = vmatpush1.bf16.msra.mxu0 %v5133
    %7208 = vmatprep.subr.bf16.mxu0 %v5150
    %7209 = vmatpush1.bf16.msra.mxu0 %v5149
    %7210 = vmatprep.subr.bf16.mxu0 %v5166
    %7211 = vmatpush1.bf16.msra.mxu0 %v5165
    %7212 = vmatprep.subr.bf16.mxu0 %v5182
    %7213 = vmatpush1.bf16.msra.mxu0 %v5181
    %7214 = vmatprep.subr.bf16.mxu0 %v5198
    %7215 = vmatpush1.bf16.msra.mxu0 %v5197
    %7216 = vmatprep.subr.bf16.mxu0 %v5214
    %7217 = vmatpush1.bf16.msra.mxu0 %v5213
    %7218 = vmatprep.mubr.bf16.mxu0 %v98
    %7219 = vmatmul.mubr.bf16.gmra.mrb[0].mxu0 %v97
    %v7220 = vpop.f32.mrb[0].mxu0
    %v7221 = vadd.f32 %v7180, %v7220
    %v7222 = vpop.f32.mrb[0].mxu0
    %v7223 = vadd.f32 %v7182, %v7222
    %v7224 = vpop.f32.mrb[0].mxu0
    %v7225 = vpop.f32.mrb[0].mxu0
    %7226 = vdwg.mxu0
    %7227 = vmatprep.subr.bf16.mxu0 %v4208
    %7228 = vmatpush1.bf16.msra.mxu0 %v4207
    %7229 = vmatprep.subr.bf16.mxu0 %v4224
    %7230 = vmatpush1.bf16.msra.mxu0 %v4223
    %7231 = vmatprep.subr.bf16.mxu0 %v4240
    %7232 = vmatpush1.bf16.msra.mxu0 %v4239
    %7233 = vmatprep.subr.bf16.mxu0 %v4256
    %7234 = vmatpush1.bf16.msra.mxu0 %v4255
    %7235 = vmatprep.subr.bf16.mxu0 %v4272
    %7236 = vmatpush1.bf16.msra.mxu0 %v4271
    %7237 = vmatprep.subr.bf16.mxu0 %v4288
    %7238 = vmatpush1.bf16.msra.mxu0 %v4287
    %7239 = vmatprep.subr.bf16.mxu0 %v4304
    %7240 = vmatpush1.bf16.msra.mxu0 %v4303
    %7241 = vmatprep.subr.bf16.mxu0 %v4320
    %7242 = vmatpush1.bf16.msra.mxu0 %v4319
    %7243 = vmatprep.subr.bf16.mxu0 %v4336
    %7244 = vmatpush1.bf16.msra.mxu0 %v4335
    %7245 = vmatprep.subr.bf16.mxu0 %v4352
    %7246 = vmatpush1.bf16.msra.mxu0 %v4351
    %7247 = vmatprep.subr.bf16.mxu0 %v4368
    %7248 = vmatpush1.bf16.msra.mxu0 %v4367
    %7249 = vmatprep.subr.bf16.mxu0 %v4384
    %7250 = vmatpush1.bf16.msra.mxu0 %v4383
    %7251 = vmatprep.subr.bf16.mxu0 %v4400
    %7252 = vmatpush1.bf16.msra.mxu0 %v4399
    %7253 = vmatprep.subr.bf16.mxu0 %v4416
    %7254 = vmatpush1.bf16.msra.mxu0 %v4415
    %7255 = vmatprep.subr.bf16.mxu0 %v4432
    %7256 = vmatpush1.bf16.msra.mxu0 %v4431
    %7257 = vmatprep.subr.bf16.mxu0 %v4448
    %7258 = vmatpush1.bf16.msra.mxu0 %v4447
    %7259 = vmatprep.mubr.bf16.mxu0 %v92
    %7260 = vmatmul.mubr.bf16.gmra.mrb[0].mxu0 %v91
    %v7261 = vpop.f32.mrb[0].mxu0
    %v7262 = vadd.f32 0.0, %v7261
    %v7263 = vpop.f32.mrb[0].mxu0
    %v7264 = vadd.f32 0.0, %v7263
    %v7265 = vpop.f32.mrb[0].mxu0
    %v7266 = vpop.f32.mrb[0].mxu0
    %7267 = vdwg.mxu0
    %7268 = vmatprep.subr.bf16.mxu0 %v4464
    %7269 = vmatpush1.bf16.msra.mxu0 %v4463
    %7270 = vmatprep.subr.bf16.mxu0 %v4480
    %7271 = vmatpush1.bf16.msra.mxu0 %v4479
    %7272 = vmatprep.subr.bf16.mxu0 %v4496
    %7273 = vmatpush1.bf16.msra.mxu0 %v4495
    %7274 = vmatprep.subr.bf16.mxu0 %v4512
    %7275 = vmatpush1.bf16.msra.mxu0 %v4511
    %7276 = vmatprep.subr.bf16.mxu0 %v4528
    %7277 = vmatpush1.bf16.msra.mxu0 %v4527
    %7278 = vmatprep.subr.bf16.mxu0 %v4544
    %7279 = vmatpush1.bf16.msra.mxu0 %v4543
    %7280 = vmatprep.subr.bf16.mxu0 %v4560
    %7281 = vmatpush1.bf16.msra.mxu0 %v4559
    %7282 = vmatprep.subr.bf16.mxu0 %v4576
    %7283 = vmatpush1.bf16.msra.mxu0 %v4575
    %7284 = vmatprep.subr.bf16.mxu0 %v4592
    %7285 = vmatpush1.bf16.msra.mxu0 %v4591
    %7286 = vmatprep.subr.bf16.mxu0 %v4608
    %7287 = vmatpush1.bf16.msra.mxu0 %v4607
    %7288 = vmatprep.subr.bf16.mxu0 %v4624
    %7289 = vmatpush1.bf16.msra.mxu0 %v4623
    %7290 = vmatprep.subr.bf16.mxu0 %v4640
    %7291 = vmatpush1.bf16.msra.mxu0 %v4639
    %7292 = vmatprep.subr.bf16.mxu0 %v4656
    %7293 = vmatpush1.bf16.msra.mxu0 %v4655
    %7294 = vmatprep.subr.bf16.mxu0 %v4672
    %7295 = vmatpush1.bf16.msra.mxu0 %v4671
    %7296 = vmatprep.subr.bf16.mxu0 %v4688
    %7297 = vmatpush1.bf16.msra.mxu0 %v4687
    %7298 = vmatprep.subr.bf16.mxu0 %v4704
    %7299 = vmatpush1.bf16.msra.mxu0 %v4703
    %7300 = vmatprep.mubr.bf16.mxu0 %v94
    %7301 = vmatmul.mubr.bf16.gmra.mrb[0].mxu0 %v93
    %v7302 = vpop.f32.mrb[0].mxu0
    %v7303 = vadd.f32 %v7262, %v7302
    %v7304 = vpop.f32.mrb[0].mxu0
    %v7305 = vadd.f32 %v7264, %v7304
    %v7306 = vpop.f32.mrb[0].mxu0
    %v7307 = vpop.f32.mrb[0].mxu0
    %7308 = vdwg.mxu0
    %7309 = vmatprep.subr.bf16.mxu0 %v4720
    %7310 = vmatpush1.bf16.msra.mxu0 %v4719
    %7311 = vmatprep.subr.bf16.mxu0 %v4736
    %7312 = vmatpush1.bf16.msra.mxu0 %v4735
    %7313 = vmatprep.subr.bf16.mxu0 %v4752
    %7314 = vmatpush1.bf16.msra.mxu0 %v4751
    %7315 = vmatprep.subr.bf16.mxu0 %v4768
    %7316 = vmatpush1.bf16.msra.mxu0 %v4767
    %7317 = vmatprep.subr.bf16.mxu0 %v4784
    %7318 = vmatpush1.bf16.msra.mxu0 %v4783
    %7319 = vmatprep.subr.bf16.mxu0 %v4800
    %7320 = vmatpush1.bf16.msra.mxu0 %v4799
    %7321 = vmatprep.subr.bf16.mxu0 %v4816
    %7322 = vmatpush1.bf16.msra.mxu0 %v4815
    %7323 = vmatprep.subr.bf16.mxu0 %v4832
    %7324 = vmatpush1.bf16.msra.mxu0 %v4831
    %7325 = vmatprep.subr.bf16.mxu0 %v4848
    %7326 = vmatpush1.bf16.msra.mxu0 %v4847
    %7327 = vmatprep.subr.bf16.mxu0 %v4864
    %7328 = vmatpush1.bf16.msra.mxu0 %v4863
    %7329 = vmatprep.subr.bf16.mxu0 %v4880
    %7330 = vmatpush1.bf16.msra.mxu0 %v4879
    %7331 = vmatprep.subr.bf16.mxu0 %v4896
    %7332 = vmatpush1.bf16.msra.mxu0 %v4895
    %7333 = vmatprep.subr.bf16.mxu0 %v4912
    %7334 = vmatpush1.bf16.msra.mxu0 %v4911
    %7335 = vmatprep.subr.bf16.mxu0 %v4928
    %7336 = vmatpush1.bf16.msra.mxu0 %v4927
    %7337 = vmatprep.subr.bf16.mxu0 %v4944
    %7338 = vmatpush1.bf16.msra.mxu0 %v4943
    %7339 = vmatprep.subr.bf16.mxu0 %v4960
    %7340 = vmatpush1.bf16.msra.mxu0 %v4959
    %7341 = vmatprep.mubr.bf16.mxu0 %v96
    %7342 = vmatmul.mubr.bf16.gmra.mrb[0].mxu0 %v95
    %v7343 = vpop.f32.mrb[0].mxu0
    %v7344 = vadd.f32 %v7303, %v7343
    %v7345 = vpop.f32.mrb[0].mxu0
    %v7346 = vadd.f32 %v7305, %v7345
    %v7347 = vpop.f32.mrb[0].mxu0
    %v7348 = vpop.f32.mrb[0].mxu0
    %7349 = vdwg.mxu0
    %7350 = vmatprep.subr.bf16.mxu0 %v4976
    %7351 = vmatpush1.bf16.msra.mxu0 %v4975
    %7352 = vmatprep.subr.bf16.mxu0 %v4992
    %7353 = vmatpush1.bf16.msra.mxu0 %v4991
    %7354 = vmatprep.subr.bf16.mxu0 %v5008
    %7355 = vmatpush1.bf16.msra.mxu0 %v5007
    %7356 = vmatprep.subr.bf16.mxu0 %v5024
    %7357 = vmatpush1.bf16.msra.mxu0 %v5023
    %7358 = vmatprep.subr.bf16.mxu0 %v5040
    %7359 = vmatpush1.bf16.msra.mxu0 %v5039
    %7360 = vmatprep.subr.bf16.mxu0 %v5056
    %7361 = vmatpush1.bf16.msra.mxu0 %v5055
    %7362 = vmatprep.subr.bf16.mxu0 %v5072
    %7363 = vmatpush1.bf16.msra.mxu0 %v5071
    %7364 = vmatprep.subr.bf16.mxu0 %v5088
    %7365 = vmatpush1.bf16.msra.mxu0 %v5087
    %7366 = vmatprep.subr.bf16.mxu0 %v5104
    %7367 = vmatpush1.bf16.msra.mxu0 %v5103
    %7368 = vmatprep.subr.bf16.mxu0 %v5120
    %7369 = vmatpush1.bf16.msra.mxu0 %v5119
    %7370 = vmatprep.subr.bf16.mxu0 %v5136
    %7371 = vmatpush1.bf16.msra.mxu0 %v5135
    %7372 = vmatprep.subr.bf16.mxu0 %v5152
    %7373 = vmatpush1.bf16.msra.mxu0 %v5151
    %7374 = vmatprep.subr.bf16.mxu0 %v5168
    %7375 = vmatpush1.bf16.msra.mxu0 %v5167
    %7376 = vmatprep.subr.bf16.mxu0 %v5184
    %7377 = vmatpush1.bf16.msra.mxu0 %v5183
    %7378 = vmatprep.subr.bf16.mxu0 %v5200
    %7379 = vmatpush1.bf16.msra.mxu0 %v5199
    %7380 = vmatprep.subr.bf16.mxu0 %v5216
    %7381 = vmatpush1.bf16.msra.mxu0 %v5215
    %7382 = vmatprep.mubr.bf16.mxu0 %v98
    %7383 = vmatmul.mubr.bf16.gmra.mrb[0].mxu0 %v97
    %v7384 = vpop.f32.mrb[0].mxu0
    %v7385 = vadd.f32 %v7344, %v7384
    %v7386 = vpop.f32.mrb[0].mxu0
    %v7387 = vadd.f32 %v7346, %v7386
    %v7388 = vpop.f32.mrb[0].mxu0
    %v7389 = vpop.f32.mrb[0].mxu0
    %7390 = vdwg.mxu0
    %7391 = vmatprep.subr.bf16.mxu0 %v4210
    %7392 = vmatpush1.bf16.msra.mxu0 %v4209
    %7393 = vmatprep.subr.bf16.mxu0 %v4226
    %7394 = vmatpush1.bf16.msra.mxu0 %v4225
    %7395 = vmatprep.subr.bf16.mxu0 %v4242
    %7396 = vmatpush1.bf16.msra.mxu0 %v4241
    %7397 = vmatprep.subr.bf16.mxu0 %v4258
    %7398 = vmatpush1.bf16.msra.mxu0 %v4257
    %7399 = vmatprep.subr.bf16.mxu0 %v4274
    %7400 = vmatpush1.bf16.msra.mxu0 %v4273
    %7401 = vmatprep.subr.bf16.mxu0 %v4290
    %7402 = vmatpush1.bf16.msra.mxu0 %v4289
    %7403 = vmatprep.subr.bf16.mxu0 %v4306
    %7404 = vmatpush1.bf16.msra.mxu0 %v4305
    %7405 = vmatprep.subr.bf16.mxu0 %v4322
    %7406 = vmatpush1.bf16.msra.mxu0 %v4321
    %7407 = vmatprep.subr.bf16.mxu0 %v4338
    %7408 = vmatpush1.bf16.msra.mxu0 %v4337
    %7409 = vmatprep.subr.bf16.mxu0 %v4354
    %7410 = vmatpush1.bf16.msra.mxu0 %v4353
    %7411 = vmatprep.subr.bf16.mxu0 %v4370
    %7412 = vmatpush1.bf16.msra.mxu0 %v4369
    %7413 = vmatprep.subr.bf16.mxu0 %v4386
    %7414 = vmatpush1.bf16.msra.mxu0 %v4385
    %7415 = vmatprep.subr.bf16.mxu0 %v4402
    %7416 = vmatpush1.bf16.msra.mxu0 %v4401
    %7417 = vmatprep.subr.bf16.mxu0 %v4418
    %7418 = vmatpush1.bf16.msra.mxu0 %v4417
    %7419 = vmatprep.subr.bf16.mxu0 %v4434
    %7420 = vmatpush1.bf16.msra.mxu0 %v4433
    %7421 = vmatprep.subr.bf16.mxu0 %v4450
    %7422 = vmatpush1.bf16.msra.mxu0 %v4449
    %7423 = vmatprep.mubr.bf16.mxu0 %v92
    %7424 = vmatmul.mubr.bf16.gmra.mrb[0].mxu0 %v91
    %v7425 = vpop.f32.mrb[0].mxu0
    %v7426 = vadd.f32 0.0, %v7425
    %v7427 = vpop.f32.mrb[0].mxu0
    %v7428 = vadd.f32 0.0, %v7427
    %v7429 = vpop.f32.mrb[0].mxu0
    %v7430 = vpop.f32.mrb[0].mxu0
    %7431 = vdwg.mxu0
    %7432 = vmatprep.subr.bf16.mxu0 %v4466
    %7433 = vmatpush1.bf16.msra.mxu0 %v4465
    %7434 = vmatprep.subr.bf16.mxu0 %v4482
    %7435 = vmatpush1.bf16.msra.mxu0 %v4481
    %7436 = vmatprep.subr.bf16.mxu0 %v4498
    %7437 = vmatpush1.bf16.msra.mxu0 %v4497
    %7438 = vmatprep.subr.bf16.mxu0 %v4514
    %7439 = vmatpush1.bf16.msra.mxu0 %v4513
    %7440 = vmatprep.subr.bf16.mxu0 %v4530
    %7441 = vmatpush1.bf16.msra.mxu0 %v4529
    %7442 = vmatprep.subr.bf16.mxu0 %v4546
    %7443 = vmatpush1.bf16.msra.mxu0 %v4545
    %7444 = vmatprep.subr.bf16.mxu0 %v4562
    %7445 = vmatpush1.bf16.msra.mxu0 %v4561
    %7446 = vmatprep.subr.bf16.mxu0 %v4578
    %7447 = vmatpush1.bf16.msra.mxu0 %v4577
    %7448 = vmatprep.subr.bf16.mxu0 %v4594
    %7449 = vmatpush1.bf16.msra.mxu0 %v4593
    %7450 = vmatprep.subr.bf16.mxu0 %v4610
    %7451 = vmatpush1.bf16.msra.mxu0 %v4609
    %7452 = vmatprep.subr.bf16.mxu0 %v4626
    %7453 = vmatpush1.bf16.msra.mxu0 %v4625
    %7454 = vmatprep.subr.bf16.mxu0 %v4642
    %7455 = vmatpush1.bf16.msra.mxu0 %v4641
    %7456 = vmatprep.subr.bf16.mxu0 %v4658
    %7457 = vmatpush1.bf16.msra.mxu0 %v4657
    %7458 = vmatprep.subr.bf16.mxu0 %v4674
    %7459 = vmatpush1.bf16.msra.mxu0 %v4673
    %7460 = vmatprep.subr.bf16.mxu0 %v4690
    %7461 = vmatpush1.bf16.msra.mxu0 %v4689
    %7462 = vmatprep.subr.bf16.mxu0 %v4706
    %7463 = vmatpush1.bf16.msra.mxu0 %v4705
    %7464 = vmatprep.mubr.bf16.mxu0 %v94
    %7465 = vmatmul.mubr.bf16.gmra.mrb[0].mxu0 %v93
    %v7466 = vpop.f32.mrb[0].mxu0
    %v7467 = vadd.f32 %v7426, %v7466
    %v7468 = vpop.f32.mrb[0].mxu0
    %v7469 = vadd.f32 %v7428, %v7468
    %v7470 = vpop.f32.mrb[0].mxu0
    %v7471 = vpop.f32.mrb[0].mxu0
    %7472 = vdwg.mxu0
    %7473 = vmatprep.subr.bf16.mxu0 %v4722
    %7474 = vmatpush1.bf16.msra.mxu0 %v4721
    %7475 = vmatprep.subr.bf16.mxu0 %v4738
    %7476 = vmatpush1.bf16.msra.mxu0 %v4737
    %7477 = vmatprep.subr.bf16.mxu0 %v4754
    %7478 = vmatpush1.bf16.msra.mxu0 %v4753
    %7479 = vmatprep.subr.bf16.mxu0 %v4770
    %7480 = vmatpush1.bf16.msra.mxu0 %v4769
    %7481 = vmatprep.subr.bf16.mxu0 %v4786
    %7482 = vmatpush1.bf16.msra.mxu0 %v4785
    %7483 = vmatprep.subr.bf16.mxu0 %v4802
    %7484 = vmatpush1.bf16.msra.mxu0 %v4801
    %7485 = vmatprep.subr.bf16.mxu0 %v4818
    %7486 = vmatpush1.bf16.msra.mxu0 %v4817
    %7487 = vmatprep.subr.bf16.mxu0 %v4834
    %7488 = vmatpush1.bf16.msra.mxu0 %v4833
    %7489 = vmatprep.subr.bf16.mxu0 %v4850
    %7490 = vmatpush1.bf16.msra.mxu0 %v4849
    %7491 = vmatprep.subr.bf16.mxu0 %v4866
    %7492 = vmatpush1.bf16.msra.mxu0 %v4865
    %7493 = vmatprep.subr.bf16.mxu0 %v4882
    %7494 = vmatpush1.bf16.msra.mxu0 %v4881
    %7495 = vmatprep.subr.bf16.mxu0 %v4898
    %7496 = vmatpush1.bf16.msra.mxu0 %v4897
    %7497 = vmatprep.subr.bf16.mxu0 %v4914
    %7498 = vmatpush1.bf16.msra.mxu0 %v4913
    %7499 = vmatprep.subr.bf16.mxu0 %v4930
    %7500 = vmatpush1.bf16.msra.mxu0 %v4929
    %7501 = vmatprep.subr.bf16.mxu0 %v4946
    %7502 = vmatpush1.bf16.msra.mxu0 %v4945
    %7503 = vmatprep.subr.bf16.mxu0 %v4962
    %7504 = vmatpush1.bf16.msra.mxu0 %v4961
    %7505 = vmatprep.mubr.bf16.mxu0 %v96
    %7506 = vmatmul.mubr.bf16.gmra.mrb[0].mxu0 %v95
    %v7507 = vpop.f32.mrb[0].mxu0
    %v7508 = vadd.f32 %v7467, %v7507
    %v7509 = vpop.f32.mrb[0].mxu0
    %v7510 = vadd.f32 %v7469, %v7509
    %v7511 = vpop.f32.mrb[0].mxu0
    %v7512 = vpop.f32.mrb[0].mxu0
    %7513 = vdwg.mxu0
    %7514 = vmatprep.subr.bf16.mxu0 %v4978
    %7515 = vmatpush1.bf16.msra.mxu0 %v4977
    %7516 = vmatprep.subr.bf16.mxu0 %v4994
    %7517 = vmatpush1.bf16.msra.mxu0 %v4993
    %7518 = vmatprep.subr.bf16.mxu0 %v5010
    %7519 = vmatpush1.bf16.msra.mxu0 %v5009
    %7520 = vmatprep.subr.bf16.mxu0 %v5026
    %7521 = vmatpush1.bf16.msra.mxu0 %v5025
    %7522 = vmatprep.subr.bf16.mxu0 %v5042
    %7523 = vmatpush1.bf16.msra.mxu0 %v5041
    %7524 = vmatprep.subr.bf16.mxu0 %v5058
    %7525 = vmatpush1.bf16.msra.mxu0 %v5057
    %7526 = vmatprep.subr.bf16.mxu0 %v5074
    %7527 = vmatpush1.bf16.msra.mxu0 %v5073
    %7528 = vmatprep.subr.bf16.mxu0 %v5090
    %7529 = vmatpush1.bf16.msra.mxu0 %v5089
    %7530 = vmatprep.subr.bf16.mxu0 %v5106
    %7531 = vmatpush1.bf16.msra.mxu0 %v5105
    %7532 = vmatprep.subr.bf16.mxu0 %v5122
    %7533 = vmatpush1.bf16.msra.mxu0 %v5121
    %7534 = vmatprep.subr.bf16.mxu0 %v5138
    %7535 = vmatpush1.bf16.msra.mxu0 %v5137
    %7536 = vmatprep.subr.bf16.mxu0 %v5154
    %7537 = vmatpush1.bf16.msra.mxu0 %v5153
    %7538 = vmatprep.subr.bf16.mxu0 %v5170
    %7539 = vmatpush1.bf16.msra.mxu0 %v5169
    %7540 = vmatprep.subr.bf16.mxu0 %v5186
    %7541 = vmatpush1.bf16.msra.mxu0 %v5185
    %7542 = vmatprep.subr.bf16.mxu0 %v5202
    %7543 = vmatpush1.bf16.msra.mxu0 %v5201
    %7544 = vmatprep.subr.bf16.mxu0 %v5218
    %7545 = vmatpush1.bf16.msra.mxu0 %v5217
    %7546 = vmatprep.mubr.bf16.mxu0 %v98
    %7547 = vmatmul.mubr.bf16.gmra.mrb[0].mxu0 %v97
    %v7548 = vpop.f32.mrb[0].mxu0
    %v7549 = vadd.f32 %v7508, %v7548
    %v7550 = vpop.f32.mrb[0].mxu0
    %v7551 = vadd.f32 %v7510, %v7550
    %v7552 = vpop.f32.mrb[0].mxu0
    %v7553 = vpop.f32.mrb[0].mxu0
    %7554 = vdwg.mxu0
    %v7555 = vmax.f32 %v6401, %v6729
    %v7556 = vmax.f32 %v6403, %v6731
    %v7557 = vmax.f32 %v6565, %v6893
    %v7558 = vmax.f32 %v6567, %v6895
    %v7559 = vmax.f32 %v7555, %v7057
    %v7560 = vmax.f32 %v7556, %v7059
    %v7561 = vmax.f32 %v7557, %v7221
    %v7562 = vmax.f32 %v7558, %v7223
    %v7563 = vmax.f32 %v7559, %v7385
    %v7564 = vmax.f32 %v7560, %v7387
    %v7565 = vmax.f32 %v7561, %v7549
    %v7566 = vmax.f32 %v7562, %v7551
    %v7567 = vld [vmem:[#allocation7] sm:$0xf]
    %v7569 = vlaneseq
    %v7570 = vshrl.u32 %v7569, 7
    %v7571 = vsub.s32 0, %v7570
    %v7572 = vrot.slane %v7567, %v7571
    %v7573 = vlaneseq
    %v7574 = vshrl.u32 %v7573, 7
    %v7575 = vsub.s32 1, %v7574
    %v7576 = vrot.slane %v7567, %v7575
    %v7577 = vlaneseq
    %v7578 = vshrl.u32 %v7577, 7
    %v7579 = vsub.s32 2, %v7578
    %v7580 = vrot.slane %v7567, %v7579
    %v7581 = vlaneseq
    %v7582 = vshrl.u32 %v7581, 7
    %v7583 = vsub.s32 3, %v7582
    %v7584 = vrot.slane %v7567, %v7583
    %v7589 = vadd.f32 %v7563, %v7572
    %v7590 = vadd.f32 %v7564, %v7576
    %v7591 = vadd.f32 %v7565, %v7580
    %v7592 = vadd.f32 %v7566, %v7584
    %v7593 = vmul.f32 %v7589, 0.01
    %v7594 = vmul.f32 %v7590, 0.01
    %v7595 = vmul.f32 %v7591, 0.01
    %v7596 = vmul.f32 %v7592, 0.01
    %v7597 = vmax.f32 %v7589, %v7593
    %v7598 = vmax.f32 %v7590, %v7594
    %v7599 = vmax.f32 %v7591, %v7595
    %v7600 = vmax.f32 %v7592, %v7596
    %v7601 = vpack.c.bf16 %v7597, %v7597
    %v7602 = vpack.c.bf16 %v7598, %v7598
    %v7603 = vpack.c.bf16 %v7599, %v7599
    %v7604 = vpack.c.bf16 %v7600, %v7600
    %v7605 = vld [vmem:[#allocation8] sm:$0xff]
    %v7606 = vld [vmem:[#allocation8 + $0x8] sm:$0xff]
    %v7607 = vld [vmem:[#allocation8 + $0x10] sm:$0xff]
    %v7608 = vld [vmem:[#allocation8 + $0x18] sm:$0xff]
    %v7609 = vld [vmem:[#allocation8 + $0x20] sm:$0xff]
    %v7610 = vld [vmem:[#allocation8 + $0x28] sm:$0xff]
    %v7611 = vld [vmem:[#allocation8 + $0x30] sm:$0xff]
    %v7612 = vld [vmem:[#allocation8 + $0x38] sm:$0xff]
    %v7613 = vld [vmem:[#allocation8 + $0x40] sm:$0xff]
    %v7614 = vld [vmem:[#allocation8 + $0x48] sm:$0xff]
    %v7615 = vld [vmem:[#allocation8 + $0x50] sm:$0xff]
    %v7616 = vld [vmem:[#allocation8 + $0x58] sm:$0xff]
    %v7617 = vld [vmem:[#allocation8 + $0x60] sm:$0xff]
    %v7618 = vld [vmem:[#allocation8 + $0x68] sm:$0xff]
    %v7619 = vld [vmem:[#allocation8 + $0x70] sm:$0xff]
    %v7620 = vld [vmem:[#allocation8 + $0x78] sm:$0xff]
    %v7621 = vld [vmem:[#allocation8 + $0x80] sm:$0xff]
    %v7622 = vld [vmem:[#allocation8 + $0x88] sm:$0xff]
    %v7623 = vld [vmem:[#allocation8 + $0x90] sm:$0xff]
    %v7624 = vld [vmem:[#allocation8 + $0x98] sm:$0xff]
    %v7625 = vld [vmem:[#allocation8 + $0xa0] sm:$0xff]
    %v7626 = vld [vmem:[#allocation8 + $0xa8] sm:$0xff]
    %v7627 = vld [vmem:[#allocation8 + $0xb0] sm:$0xff]
    %v7628 = vld [vmem:[#allocation8 + $0xb8] sm:$0xff]
    %v7629 = vld [vmem:[#allocation8 + $0xc0] sm:$0xff]
    %v7630 = vld [vmem:[#allocation8 + $0xc8] sm:$0xff]
    %v7631 = vld [vmem:[#allocation8 + $0xd0] sm:$0xff]
    %v7632 = vld [vmem:[#allocation8 + $0xd8] sm:$0xff]
    %v7633 = vld [vmem:[#allocation8 + $0xe0] sm:$0xff]
    %v7634 = vld [vmem:[#allocation8 + $0xe8] sm:$0xff]
    %v7635 = vld [vmem:[#allocation8 + $0xf0] sm:$0xff]
    %v7636 = vld [vmem:[#allocation8 + $0xf8] sm:$0xff]
    %v7637 = vld [vmem:[#allocation8 + $0x100] sm:$0xff]
    %v7638 = vld [vmem:[#allocation8 + $0x108] sm:$0xff]
    %v7639 = vld [vmem:[#allocation8 + $0x110] sm:$0xff]
    %v7640 = vld [vmem:[#allocation8 + $0x118] sm:$0xff]
    %v7641 = vld [vmem:[#allocation8 + $0x120] sm:$0xff]
    %v7642 = vld [vmem:[#allocation8 + $0x128] sm:$0xff]
    %v7643 = vld [vmem:[#allocation8 + $0x130] sm:$0xff]
    %v7644 = vld [vmem:[#allocation8 + $0x138] sm:$0xff]
    %v7645 = vld [vmem:[#allocation8 + $0x140] sm:$0xff]
    %v7646 = vld [vmem:[#allocation8 + $0x148] sm:$0xff]
    %v7647 = vld [vmem:[#allocation8 + $0x150] sm:$0xff]
    %v7648 = vld [vmem:[#allocation8 + $0x158] sm:$0xff]
    %v7649 = vld [vmem:[#allocation8 + $0x160] sm:$0xff]
    %v7650 = vld [vmem:[#allocation8 + $0x168] sm:$0xff]
    %v7651 = vld [vmem:[#allocation8 + $0x170] sm:$0xff]
    %v7652 = vld [vmem:[#allocation8 + $0x178] sm:$0xff]
    %v7653 = vld [vmem:[#allocation8 + $0x180] sm:$0xff]
    %v7654 = vld [vmem:[#allocation8 + $0x188] sm:$0xff]
    %v7655 = vld [vmem:[#allocation8 + $0x190] sm:$0xff]
    %v7656 = vld [vmem:[#allocation8 + $0x198] sm:$0xff]
    %v7657 = vld [vmem:[#allocation8 + $0x1a0] sm:$0xff]
    %v7658 = vld [vmem:[#allocation8 + $0x1a8] sm:$0xff]
    %v7659 = vld [vmem:[#allocation8 + $0x1b0] sm:$0xff]
    %v7660 = vld [vmem:[#allocation8 + $0x1b8] sm:$0xff]
    %v7661 = vld [vmem:[#allocation8 + $0x1c0] sm:$0xff]
    %v7662 = vld [vmem:[#allocation8 + $0x1c8] sm:$0xff]
    %v7663 = vld [vmem:[#allocation8 + $0x1d0] sm:$0xff]
    %v7664 = vld [vmem:[#allocation8 + $0x1d8] sm:$0xff]
    %v7665 = vld [vmem:[#allocation8 + $0x1e0] sm:$0xff]
    %v7666 = vld [vmem:[#allocation8 + $0x1e8] sm:$0xff]
    %v7667 = vld [vmem:[#allocation8 + $0x1f0] sm:$0xff]
    %v7668 = vld [vmem:[#allocation8 + $0x1f8] sm:$0xff]
    %v7669 = vld [vmem:[#allocation8 + $0x200] sm:$0xff]
    %v7670 = vld [vmem:[#allocation8 + $0x208] sm:$0xff]
    %v7671 = vld [vmem:[#allocation8 + $0x210] sm:$0xff]
    %v7672 = vld [vmem:[#allocation8 + $0x218] sm:$0xff]
    %v7673 = vld [vmem:[#allocation8 + $0x220] sm:$0xff]
    %v7674 = vld [vmem:[#allocation8 + $0x228] sm:$0xff]
    %v7675 = vld [vmem:[#allocation8 + $0x230] sm:$0xff]
    %v7676 = vld [vmem:[#allocation8 + $0x238] sm:$0xff]
    %v7677 = vld [vmem:[#allocation8 + $0x240] sm:$0xff]
    %v7678 = vld [vmem:[#allocation8 + $0x248] sm:$0xff]
    %v7679 = vld [vmem:[#allocation8 + $0x250] sm:$0xff]
    %v7680 = vld [vmem:[#allocation8 + $0x258] sm:$0xff]
    %v7681 = vld [vmem:[#allocation8 + $0x260] sm:$0xff]
    %v7682 = vld [vmem:[#allocation8 + $0x268] sm:$0xff]
    %v7683 = vld [vmem:[#allocation8 + $0x270] sm:$0xff]
    %v7684 = vld [vmem:[#allocation8 + $0x278] sm:$0xff]
    %v7685 = vld [vmem:[#allocation8 + $0x280] sm:$0xff]
    %v7686 = vld [vmem:[#allocation8 + $0x288] sm:$0xff]
    %v7687 = vld [vmem:[#allocation8 + $0x290] sm:$0xff]
    %v7688 = vld [vmem:[#allocation8 + $0x298] sm:$0xff]
    %v7689 = vld [vmem:[#allocation8 + $0x2a0] sm:$0xff]
    %v7690 = vld [vmem:[#allocation8 + $0x2a8] sm:$0xff]
    %v7691 = vld [vmem:[#allocation8 + $0x2b0] sm:$0xff]
    %v7692 = vld [vmem:[#allocation8 + $0x2b8] sm:$0xff]
    %v7693 = vld [vmem:[#allocation8 + $0x2c0] sm:$0xff]
    %v7694 = vld [vmem:[#allocation8 + $0x2c8] sm:$0xff]
    %v7695 = vld [vmem:[#allocation8 + $0x2d0] sm:$0xff]
    %v7696 = vld [vmem:[#allocation8 + $0x2d8] sm:$0xff]
    %v7697 = vld [vmem:[#allocation8 + $0x2e0] sm:$0xff]
    %v7698 = vld [vmem:[#allocation8 + $0x2e8] sm:$0xff]
    %v7699 = vld [vmem:[#allocation8 + $0x2f0] sm:$0xff]
    %v7700 = vld [vmem:[#allocation8 + $0x2f8] sm:$0xff]
    %v7701 = vld [vmem:[#allocation8 + $0x300] sm:$0xff]
    %v7702 = vld [vmem:[#allocation8 + $0x308] sm:$0xff]
    %v7703 = vld [vmem:[#allocation8 + $0x310] sm:$0xff]
    %v7704 = vld [vmem:[#allocation8 + $0x318] sm:$0xff]
    %v7705 = vld [vmem:[#allocation8 + $0x320] sm:$0xff]
    %v7706 = vld [vmem:[#allocation8 + $0x328] sm:$0xff]
    %v7707 = vld [vmem:[#allocation8 + $0x330] sm:$0xff]
    %v7708 = vld [vmem:[#allocation8 + $0x338] sm:$0xff]
    %v7709 = vld [vmem:[#allocation8 + $0x340] sm:$0xff]
    %v7710 = vld [vmem:[#allocation8 + $0x348] sm:$0xff]
    %v7711 = vld [vmem:[#allocation8 + $0x350] sm:$0xff]
    %v7712 = vld [vmem:[#allocation8 + $0x358] sm:$0xff]
    %v7713 = vld [vmem:[#allocation8 + $0x360] sm:$0xff]
    %v7714 = vld [vmem:[#allocation8 + $0x368] sm:$0xff]
    %v7715 = vld [vmem:[#allocation8 + $0x370] sm:$0xff]
    %v7716 = vld [vmem:[#allocation8 + $0x378] sm:$0xff]
    %v7717 = vld [vmem:[#allocation8 + $0x380] sm:$0xff]
    %v7718 = vld [vmem:[#allocation8 + $0x388] sm:$0xff]
    %v7719 = vld [vmem:[#allocation8 + $0x390] sm:$0xff]
    %v7720 = vld [vmem:[#allocation8 + $0x398] sm:$0xff]
    %v7721 = vld [vmem:[#allocation8 + $0x3a0] sm:$0xff]
    %v7722 = vld [vmem:[#allocation8 + $0x3a8] sm:$0xff]
    %v7723 = vld [vmem:[#allocation8 + $0x3b0] sm:$0xff]
    %v7724 = vld [vmem:[#allocation8 + $0x3b8] sm:$0xff]
    %v7725 = vld [vmem:[#allocation8 + $0x3c0] sm:$0xff]
    %v7726 = vld [vmem:[#allocation8 + $0x3c8] sm:$0xff]
    %v7727 = vld [vmem:[#allocation8 + $0x3d0] sm:$0xff]
    %v7728 = vld [vmem:[#allocation8 + $0x3d8] sm:$0xff]
    %v7729 = vld [vmem:[#allocation8 + $0x3e0] sm:$0xff]
    %v7730 = vld [vmem:[#allocation8 + $0x3e8] sm:$0xff]
    %v7731 = vld [vmem:[#allocation8 + $0x3f0] sm:$0xff]
    %v7732 = vld [vmem:[#allocation8 + $0x3f8] sm:$0xff]
    %v7861 = vunpack.c.l.b16 %v7605
    %v7862 = vunpack.c.h.b16 %v7605
    %v7863 = vunpack.c.l.b16 %v7606
    %v7864 = vunpack.c.h.b16 %v7606
    %v7865 = vunpack.c.l.b16 %v7607
    %v7866 = vunpack.c.h.b16 %v7607
    %v7867 = vunpack.c.l.b16 %v7608
    %v7868 = vunpack.c.h.b16 %v7608
    %v7869 = vunpack.c.l.b16 %v7609
    %v7870 = vunpack.c.h.b16 %v7609
    %v7871 = vunpack.c.l.b16 %v7610
    %v7872 = vunpack.c.h.b16 %v7610
    %v7873 = vunpack.c.l.b16 %v7611
    %v7874 = vunpack.c.h.b16 %v7611
    %v7875 = vunpack.c.l.b16 %v7612
    %v7876 = vunpack.c.h.b16 %v7612
    %v7877 = vunpack.c.l.b16 %v7613
    %v7878 = vunpack.c.h.b16 %v7613
    %v7879 = vunpack.c.l.b16 %v7614
    %v7880 = vunpack.c.h.b16 %v7614
    %v7881 = vunpack.c.l.b16 %v7615
    %v7882 = vunpack.c.h.b16 %v7615
    %v7883 = vunpack.c.l.b16 %v7616
    %v7884 = vunpack.c.h.b16 %v7616
    %v7885 = vunpack.c.l.b16 %v7617
    %v7886 = vunpack.c.h.b16 %v7617
    %v7887 = vunpack.c.l.b16 %v7618
    %v7888 = vunpack.c.h.b16 %v7618
    %v7889 = vunpack.c.l.b16 %v7619
    %v7890 = vunpack.c.h.b16 %v7619
    %v7891 = vunpack.c.l.b16 %v7620
    %v7892 = vunpack.c.h.b16 %v7620
    %v7893 = vunpack.c.l.b16 %v7621
    %v7894 = vunpack.c.h.b16 %v7621
    %v7895 = vunpack.c.l.b16 %v7622
    %v7896 = vunpack.c.h.b16 %v7622
    %v7897 = vunpack.c.l.b16 %v7623
    %v7898 = vunpack.c.h.b16 %v7623
    %v7899 = vunpack.c.l.b16 %v7624
    %v7900 = vunpack.c.h.b16 %v7624
    %v7901 = vunpack.c.l.b16 %v7625
    %v7902 = vunpack.c.h.b16 %v7625
    %v7903 = vunpack.c.l.b16 %v7626
    %v7904 = vunpack.c.h.b16 %v7626
    %v7905 = vunpack.c.l.b16 %v7627
    %v7906 = vunpack.c.h.b16 %v7627
    %v7907 = vunpack.c.l.b16 %v7628
    %v7908 = vunpack.c.h.b16 %v7628
    %v7909 = vunpack.c.l.b16 %v7629
    %v7910 = vunpack.c.h.b16 %v7629
    %v7911 = vunpack.c.l.b16 %v7630
    %v7912 = vunpack.c.h.b16 %v7630
    %v7913 = vunpack.c.l.b16 %v7631
    %v7914 = vunpack.c.h.b16 %v7631
    %v7915 = vunpack.c.l.b16 %v7632
    %v7916 = vunpack.c.h.b16 %v7632
    %v7917 = vunpack.c.l.b16 %v7633
    %v7918 = vunpack.c.h.b16 %v7633
    %v7919 = vunpack.c.l.b16 %v7634
    %v7920 = vunpack.c.h.b16 %v7634
    %v7921 = vunpack.c.l.b16 %v7635
    %v7922 = vunpack.c.h.b16 %v7635
    %v7923 = vunpack.c.l.b16 %v7636
    %v7924 = vunpack.c.h.b16 %v7636
    %v7925 = vunpack.c.l.b16 %v7637
    %v7926 = vunpack.c.h.b16 %v7637
    %v7927 = vunpack.c.l.b16 %v7638
    %v7928 = vunpack.c.h.b16 %v7638
    %v7929 = vunpack.c.l.b16 %v7639
    %v7930 = vunpack.c.h.b16 %v7639
    %v7931 = vunpack.c.l.b16 %v7640
    %v7932 = vunpack.c.h.b16 %v7640
    %v7933 = vunpack.c.l.b16 %v7641
    %v7934 = vunpack.c.h.b16 %v7641
    %v7935 = vunpack.c.l.b16 %v7642
    %v7936 = vunpack.c.h.b16 %v7642
    %v7937 = vunpack.c.l.b16 %v7643
    %v7938 = vunpack.c.h.b16 %v7643
    %v7939 = vunpack.c.l.b16 %v7644
    %v7940 = vunpack.c.h.b16 %v7644
    %v7941 = vunpack.c.l.b16 %v7645
    %v7942 = vunpack.c.h.b16 %v7645
    %v7943 = vunpack.c.l.b16 %v7646
    %v7944 = vunpack.c.h.b16 %v7646
    %v7945 = vunpack.c.l.b16 %v7647
    %v7946 = vunpack.c.h.b16 %v7647
    %v7947 = vunpack.c.l.b16 %v7648
    %v7948 = vunpack.c.h.b16 %v7648
    %v7949 = vunpack.c.l.b16 %v7649
    %v7950 = vunpack.c.h.b16 %v7649
    %v7951 = vunpack.c.l.b16 %v7650
    %v7952 = vunpack.c.h.b16 %v7650
    %v7953 = vunpack.c.l.b16 %v7651
    %v7954 = vunpack.c.h.b16 %v7651
    %v7955 = vunpack.c.l.b16 %v7652
    %v7956 = vunpack.c.h.b16 %v7652
    %v7957 = vunpack.c.l.b16 %v7653
    %v7958 = vunpack.c.h.b16 %v7653
    %v7959 = vunpack.c.l.b16 %v7654
    %v7960 = vunpack.c.h.b16 %v7654
    %v7961 = vunpack.c.l.b16 %v7655
    %v7962 = vunpack.c.h.b16 %v7655
    %v7963 = vunpack.c.l.b16 %v7656
    %v7964 = vunpack.c.h.b16 %v7656
    %v7965 = vunpack.c.l.b16 %v7657
    %v7966 = vunpack.c.h.b16 %v7657
    %v7967 = vunpack.c.l.b16 %v7658
    %v7968 = vunpack.c.h.b16 %v7658
    %v7969 = vunpack.c.l.b16 %v7659
    %v7970 = vunpack.c.h.b16 %v7659
    %v7971 = vunpack.c.l.b16 %v7660
    %v7972 = vunpack.c.h.b16 %v7660
    %v7973 = vunpack.c.l.b16 %v7661
    %v7974 = vunpack.c.h.b16 %v7661
    %v7975 = vunpack.c.l.b16 %v7662
    %v7976 = vunpack.c.h.b16 %v7662
    %v7977 = vunpack.c.l.b16 %v7663
    %v7978 = vunpack.c.h.b16 %v7663
    %v7979 = vunpack.c.l.b16 %v7664
    %v7980 = vunpack.c.h.b16 %v7664
    %v7981 = vunpack.c.l.b16 %v7665
    %v7982 = vunpack.c.h.b16 %v7665
    %v7983 = vunpack.c.l.b16 %v7666
    %v7984 = vunpack.c.h.b16 %v7666
    %v7985 = vunpack.c.l.b16 %v7667
    %v7986 = vunpack.c.h.b16 %v7667
    %v7987 = vunpack.c.l.b16 %v7668
    %v7988 = vunpack.c.h.b16 %v7668
    %v7989 = vunpack.c.l.b16 %v7669
    %v7990 = vunpack.c.h.b16 %v7669
    %v7991 = vunpack.c.l.b16 %v7670
    %v7992 = vunpack.c.h.b16 %v7670
    %v7993 = vunpack.c.l.b16 %v7671
    %v7994 = vunpack.c.h.b16 %v7671
    %v7995 = vunpack.c.l.b16 %v7672
    %v7996 = vunpack.c.h.b16 %v7672
    %v7997 = vunpack.c.l.b16 %v7673
    %v7998 = vunpack.c.h.b16 %v7673
    %v7999 = vunpack.c.l.b16 %v7674
    %v8000 = vunpack.c.h.b16 %v7674
    %v8001 = vunpack.c.l.b16 %v7675
    %v8002 = vunpack.c.h.b16 %v7675
    %v8003 = vunpack.c.l.b16 %v7676
    %v8004 = vunpack.c.h.b16 %v7676
    %v8005 = vunpack.c.l.b16 %v7677
    %v8006 = vunpack.c.h.b16 %v7677
    %v8007 = vunpack.c.l.b16 %v7678
    %v8008 = vunpack.c.h.b16 %v7678
    %v8009 = vunpack.c.l.b16 %v7679
    %v8010 = vunpack.c.h.b16 %v7679
    %v8011 = vunpack.c.l.b16 %v7680
    %v8012 = vunpack.c.h.b16 %v7680
    %v8013 = vunpack.c.l.b16 %v7681
    %v8014 = vunpack.c.h.b16 %v7681
    %v8015 = vunpack.c.l.b16 %v7682
    %v8016 = vunpack.c.h.b16 %v7682
    %v8017 = vunpack.c.l.b16 %v7683
    %v8018 = vunpack.c.h.b16 %v7683
    %v8019 = vunpack.c.l.b16 %v7684
    %v8020 = vunpack.c.h.b16 %v7684
    %v8021 = vunpack.c.l.b16 %v7685
    %v8022 = vunpack.c.h.b16 %v7685
    %v8023 = vunpack.c.l.b16 %v7686
    %v8024 = vunpack.c.h.b16 %v7686
    %v8025 = vunpack.c.l.b16 %v7687
    %v8026 = vunpack.c.h.b16 %v7687
    %v8027 = vunpack.c.l.b16 %v7688
    %v8028 = vunpack.c.h.b16 %v7688
    %v8029 = vunpack.c.l.b16 %v7689
    %v8030 = vunpack.c.h.b16 %v7689
    %v8031 = vunpack.c.l.b16 %v7690
    %v8032 = vunpack.c.h.b16 %v7690
    %v8033 = vunpack.c.l.b16 %v7691
    %v8034 = vunpack.c.h.b16 %v7691
    %v8035 = vunpack.c.l.b16 %v7692
    %v8036 = vunpack.c.h.b16 %v7692
    %v8037 = vunpack.c.l.b16 %v7693
    %v8038 = vunpack.c.h.b16 %v7693
    %v8039 = vunpack.c.l.b16 %v7694
    %v8040 = vunpack.c.h.b16 %v7694
    %v8041 = vunpack.c.l.b16 %v7695
    %v8042 = vunpack.c.h.b16 %v7695
    %v8043 = vunpack.c.l.b16 %v7696
    %v8044 = vunpack.c.h.b16 %v7696
    %v8045 = vunpack.c.l.b16 %v7697
    %v8046 = vunpack.c.h.b16 %v7697
    %v8047 = vunpack.c.l.b16 %v7698
    %v8048 = vunpack.c.h.b16 %v7698
    %v8049 = vunpack.c.l.b16 %v7699
    %v8050 = vunpack.c.h.b16 %v7699
    %v8051 = vunpack.c.l.b16 %v7700
    %v8052 = vunpack.c.h.b16 %v7700
    %v8053 = vunpack.c.l.b16 %v7701
    %v8054 = vunpack.c.h.b16 %v7701
    %v8055 = vunpack.c.l.b16 %v7702
    %v8056 = vunpack.c.h.b16 %v7702
    %v8057 = vunpack.c.l.b16 %v7703
    %v8058 = vunpack.c.h.b16 %v7703
    %v8059 = vunpack.c.l.b16 %v7704
    %v8060 = vunpack.c.h.b16 %v7704
    %v8061 = vunpack.c.l.b16 %v7705
    %v8062 = vunpack.c.h.b16 %v7705
    %v8063 = vunpack.c.l.b16 %v7706
    %v8064 = vunpack.c.h.b16 %v7706
    %v8065 = vunpack.c.l.b16 %v7707
    %v8066 = vunpack.c.h.b16 %v7707
    %v8067 = vunpack.c.l.b16 %v7708
    %v8068 = vunpack.c.h.b16 %v7708
    %v8069 = vunpack.c.l.b16 %v7709
    %v8070 = vunpack.c.h.b16 %v7709
    %v8071 = vunpack.c.l.b16 %v7710
    %v8072 = vunpack.c.h.b16 %v7710
    %v8073 = vunpack.c.l.b16 %v7711
    %v8074 = vunpack.c.h.b16 %v7711
    %v8075 = vunpack.c.l.b16 %v7712
    %v8076 = vunpack.c.h.b16 %v7712
    %v8077 = vunpack.c.l.b16 %v7713
    %v8078 = vunpack.c.h.b16 %v7713
    %v8079 = vunpack.c.l.b16 %v7714
    %v8080 = vunpack.c.h.b16 %v7714
    %v8081 = vunpack.c.l.b16 %v7715
    %v8082 = vunpack.c.h.b16 %v7715
    %v8083 = vunpack.c.l.b16 %v7716
    %v8084 = vunpack.c.h.b16 %v7716
    %v8085 = vunpack.c.l.b16 %v7717
    %v8086 = vunpack.c.h.b16 %v7717
    %v8087 = vunpack.c.l.b16 %v7718
    %v8088 = vunpack.c.h.b16 %v7718
    %v8089 = vunpack.c.l.b16 %v7719
    %v8090 = vunpack.c.h.b16 %v7719
    %v8091 = vunpack.c.l.b16 %v7720
    %v8092 = vunpack.c.h.b16 %v7720
    %v8093 = vunpack.c.l.b16 %v7721
    %v8094 = vunpack.c.h.b16 %v7721
    %v8095 = vunpack.c.l.b16 %v7722
    %v8096 = vunpack.c.h.b16 %v7722
    %v8097 = vunpack.c.l.b16 %v7723
    %v8098 = vunpack.c.h.b16 %v7723
    %v8099 = vunpack.c.l.b16 %v7724
    %v8100 = vunpack.c.h.b16 %v7724
    %v8101 = vunpack.c.l.b16 %v7725
    %v8102 = vunpack.c.h.b16 %v7725
    %v8103 = vunpack.c.l.b16 %v7726
    %v8104 = vunpack.c.h.b16 %v7726
    %v8105 = vunpack.c.l.b16 %v7727
    %v8106 = vunpack.c.h.b16 %v7727
    %v8107 = vunpack.c.l.b16 %v7728
    %v8108 = vunpack.c.h.b16 %v7728
    %v8109 = vunpack.c.l.b16 %v7729
    %v8110 = vunpack.c.h.b16 %v7729
    %v8111 = vunpack.c.l.b16 %v7730
    %v8112 = vunpack.c.h.b16 %v7730
    %v8113 = vunpack.c.l.b16 %v7731
    %v8114 = vunpack.c.h.b16 %v7731
    %v8115 = vunpack.c.l.b16 %v7732
    %v8116 = vunpack.c.h.b16 %v7732
    %v8117 = vpack.c.b16 %v7865, %v7861
    %v8118 = vpack.c.b16 %v7866, %v7862
    %v8119 = vpack.c.b16 %v7867, %v7863
    %v8120 = vpack.c.b16 %v7868, %v7864
    %v8121 = vpack.c.b16 %v7873, %v7869
    %v8122 = vpack.c.b16 %v7874, %v7870
    %v8123 = vpack.c.b16 %v7875, %v7871
    %v8124 = vpack.c.b16 %v7876, %v7872
    %v8125 = vpack.c.b16 %v7881, %v7877
    %v8126 = vpack.c.b16 %v7882, %v7878
    %v8127 = vpack.c.b16 %v7883, %v7879
    %v8128 = vpack.c.b16 %v7884, %v7880
    %v8129 = vpack.c.b16 %v7889, %v7885
    %v8130 = vpack.c.b16 %v7890, %v7886
    %v8131 = vpack.c.b16 %v7891, %v7887
    %v8132 = vpack.c.b16 %v7892, %v7888
    %v8133 = vpack.c.b16 %v7897, %v7893
    %v8134 = vpack.c.b16 %v7898, %v7894
    %v8135 = vpack.c.b16 %v7899, %v7895
    %v8136 = vpack.c.b16 %v7900, %v7896
    %v8137 = vpack.c.b16 %v7905, %v7901
    %v8138 = vpack.c.b16 %v7906, %v7902
    %v8139 = vpack.c.b16 %v7907, %v7903
    %v8140 = vpack.c.b16 %v7908, %v7904
    %v8141 = vpack.c.b16 %v7913, %v7909
    %v8142 = vpack.c.b16 %v7914, %v7910
    %v8143 = vpack.c.b16 %v7915, %v7911
    %v8144 = vpack.c.b16 %v7916, %v7912
    %v8145 = vpack.c.b16 %v7921, %v7917
    %v8146 = vpack.c.b16 %v7922, %v7918
    %v8147 = vpack.c.b16 %v7923, %v7919
    %v8148 = vpack.c.b16 %v7924, %v7920
    %v8149 = vpack.c.b16 %v7929, %v7925
    %v8150 = vpack.c.b16 %v7930, %v7926
    %v8151 = vpack.c.b16 %v7931, %v7927
    %v8152 = vpack.c.b16 %v7932, %v7928
    %v8153 = vpack.c.b16 %v7937, %v7933
    %v8154 = vpack.c.b16 %v7938, %v7934
    %v8155 = vpack.c.b16 %v7939, %v7935
    %v8156 = vpack.c.b16 %v7940, %v7936
    %v8157 = vpack.c.b16 %v7945, %v7941
    %v8158 = vpack.c.b16 %v7946, %v7942
    %v8159 = vpack.c.b16 %v7947, %v7943
    %v8160 = vpack.c.b16 %v7948, %v7944
    %v8161 = vpack.c.b16 %v7953, %v7949
    %v8162 = vpack.c.b16 %v7954, %v7950
    %v8163 = vpack.c.b16 %v7955, %v7951
    %v8164 = vpack.c.b16 %v7956, %v7952
    %v8165 = vpack.c.b16 %v7961, %v7957
    %v8166 = vpack.c.b16 %v7962, %v7958
    %v8167 = vpack.c.b16 %v7963, %v7959
    %v8168 = vpack.c.b16 %v7964, %v7960
    %v8169 = vpack.c.b16 %v7969, %v7965
    %v8170 = vpack.c.b16 %v7970, %v7966
    %v8171 = vpack.c.b16 %v7971, %v7967
    %v8172 = vpack.c.b16 %v7972, %v7968
    %v8173 = vpack.c.b16 %v7977, %v7973
    %v8174 = vpack.c.b16 %v7978, %v7974
    %v8175 = vpack.c.b16 %v7979, %v7975
    %v8176 = vpack.c.b16 %v7980, %v7976
    %v8177 = vpack.c.b16 %v7985, %v7981
    %v8178 = vpack.c.b16 %v7986, %v7982
    %v8179 = vpack.c.b16 %v7987, %v7983
    %v8180 = vpack.c.b16 %v7988, %v7984
    %v8181 = vpack.c.b16 %v7993, %v7989
    %v8182 = vpack.c.b16 %v7994, %v7990
    %v8183 = vpack.c.b16 %v7995, %v7991
    %v8184 = vpack.c.b16 %v7996, %v7992
    %v8185 = vpack.c.b16 %v8001, %v7997
    %v8186 = vpack.c.b16 %v8002, %v7998
    %v8187 = vpack.c.b16 %v8003, %v7999
    %v8188 = vpack.c.b16 %v8004, %v8000
    %v8189 = vpack.c.b16 %v8009, %v8005
    %v8190 = vpack.c.b16 %v8010, %v8006
    %v8191 = vpack.c.b16 %v8011, %v8007
    %v8192 = vpack.c.b16 %v8012, %v8008
    %v8193 = vpack.c.b16 %v8017, %v8013
    %v8194 = vpack.c.b16 %v8018, %v8014
    %v8195 = vpack.c.b16 %v8019, %v8015
    %v8196 = vpack.c.b16 %v8020, %v8016
    %v8197 = vpack.c.b16 %v8025, %v8021
    %v8198 = vpack.c.b16 %v8026, %v8022
    %v8199 = vpack.c.b16 %v8027, %v8023
    %v8200 = vpack.c.b16 %v8028, %v8024
    %v8201 = vpack.c.b16 %v8033, %v8029
    %v8202 = vpack.c.b16 %v8034, %v8030
    %v8203 = vpack.c.b16 %v8035, %v8031
    %v8204 = vpack.c.b16 %v8036, %v8032
    %v8205 = vpack.c.b16 %v8041, %v8037
    %v8206 = vpack.c.b16 %v8042, %v8038
    %v8207 = vpack.c.b16 %v8043, %v8039
    %v8208 = vpack.c.b16 %v8044, %v8040
    %v8209 = vpack.c.b16 %v8049, %v8045
    %v8210 = vpack.c.b16 %v8050, %v8046
    %v8211 = vpack.c.b16 %v8051, %v8047
    %v8212 = vpack.c.b16 %v8052, %v8048
    %v8213 = vpack.c.b16 %v8057, %v8053
    %v8214 = vpack.c.b16 %v8058, %v8054
    %v8215 = vpack.c.b16 %v8059, %v8055
    %v8216 = vpack.c.b16 %v8060, %v8056
    %v8217 = vpack.c.b16 %v8065, %v8061
    %v8218 = vpack.c.b16 %v8066, %v8062
    %v8219 = vpack.c.b16 %v8067, %v8063
    %v8220 = vpack.c.b16 %v8068, %v8064
    %v8221 = vpack.c.b16 %v8073, %v8069
    %v8222 = vpack.c.b16 %v8074, %v8070
    %v8223 = vpack.c.b16 %v8075, %v8071
    %v8224 = vpack.c.b16 %v8076, %v8072
    %v8225 = vpack.c.b16 %v8081, %v8077
    %v8226 = vpack.c.b16 %v8082, %v8078
    %v8227 = vpack.c.b16 %v8083, %v8079
    %v8228 = vpack.c.b16 %v8084, %v8080
    %v8229 = vpack.c.b16 %v8089, %v8085
    %v8230 = vpack.c.b16 %v8090, %v8086
    %v8231 = vpack.c.b16 %v8091, %v8087
    %v8232 = vpack.c.b16 %v8092, %v8088
    %v8233 = vpack.c.b16 %v8097, %v8093
    %v8234 = vpack.c.b16 %v8098, %v8094
    %v8235 = vpack.c.b16 %v8099, %v8095
    %v8236 = vpack.c.b16 %v8100, %v8096
    %v8237 = vpack.c.b16 %v8105, %v8101
    %v8238 = vpack.c.b16 %v8106, %v8102
    %v8239 = vpack.c.b16 %v8107, %v8103
    %v8240 = vpack.c.b16 %v8108, %v8104
    %v8241 = vpack.c.b16 %v8113, %v8109
    %v8242 = vpack.c.b16 %v8114, %v8110
    %v8243 = vpack.c.b16 %v8115, %v8111
    %v8244 = vpack.c.b16 %v8116, %v8112
    %8373 = vmatprep.subr.bf16.mxu0 %v8118
    %8374 = vmatpush1.bf16.msra.mxu0 %v8117
    %8375 = vmatprep.subr.bf16.mxu0 %v8122
    %8376 = vmatpush1.bf16.msra.mxu0 %v8121
    %8377 = vmatprep.subr.bf16.mxu0 %v8126
    %8378 = vmatpush1.bf16.msra.mxu0 %v8125
    %8379 = vmatprep.subr.bf16.mxu0 %v8130
    %8380 = vmatpush1.bf16.msra.mxu0 %v8129
    %8381 = vmatprep.subr.bf16.mxu0 %v8134
    %8382 = vmatpush1.bf16.msra.mxu0 %v8133
    %8383 = vmatprep.subr.bf16.mxu0 %v8138
    %8384 = vmatpush1.bf16.msra.mxu0 %v8137
    %8385 = vmatprep.subr.bf16.mxu0 %v8142
    %8386 = vmatpush1.bf16.msra.mxu0 %v8141
    %8387 = vmatprep.subr.bf16.mxu0 %v8146
    %8388 = vmatpush1.bf16.msra.mxu0 %v8145
    %8389 = vmatprep.subr.bf16.mxu0 %v8150
    %8390 = vmatpush1.bf16.msra.mxu0 %v8149
    %8391 = vmatprep.subr.bf16.mxu0 %v8154
    %8392 = vmatpush1.bf16.msra.mxu0 %v8153
    %8393 = vmatprep.subr.bf16.mxu0 %v8158
    %8394 = vmatpush1.bf16.msra.mxu0 %v8157
    %8395 = vmatprep.subr.bf16.mxu0 %v8162
    %8396 = vmatpush1.bf16.msra.mxu0 %v8161
    %8397 = vmatprep.subr.bf16.mxu0 %v8166
    %8398 = vmatpush1.bf16.msra.mxu0 %v8165
    %8399 = vmatprep.subr.bf16.mxu0 %v8170
    %8400 = vmatpush1.bf16.msra.mxu0 %v8169
    %8401 = vmatprep.subr.bf16.mxu0 %v8174
    %8402 = vmatpush1.bf16.msra.mxu0 %v8173
    %8403 = vmatprep.subr.bf16.mxu0 %v8178
    %8404 = vmatpush1.bf16.msra.mxu0 %v8177
    %8405 = vmatprep.mubr.bf16.mxu0 %v7602
    %8406 = vmatmul.mubr.bf16.gmra.mrb[0].mxu0 %v7601
    %v8407 = vpop.f32.mrb[0].mxu0
    %v8408 = vadd.f32 0.0, %v8407
    %v8409 = vpop.f32.mrb[0].mxu0
    %v8410 = vadd.f32 0.0, %v8409
    %v8411 = vpop.f32.mrb[0].mxu0
    %v8412 = vpop.f32.mrb[0].mxu0
    %8413 = vdwg.mxu0
    %8414 = vmatprep.subr.bf16.mxu0 %v8182
    %8415 = vmatpush1.bf16.msra.mxu0 %v8181
    %8416 = vmatprep.subr.bf16.mxu0 %v8186
    %8417 = vmatpush1.bf16.msra.mxu0 %v8185
    %8418 = vmatprep.subr.bf16.mxu0 %v8190
    %8419 = vmatpush1.bf16.msra.mxu0 %v8189
    %8420 = vmatprep.subr.bf16.mxu0 %v8194
    %8421 = vmatpush1.bf16.msra.mxu0 %v8193
    %8422 = vmatprep.subr.bf16.mxu0 %v8198
    %8423 = vmatpush1.bf16.msra.mxu0 %v8197
    %8424 = vmatprep.subr.bf16.mxu0 %v8202
    %8425 = vmatpush1.bf16.msra.mxu0 %v8201
    %8426 = vmatprep.subr.bf16.mxu0 %v8206
    %8427 = vmatpush1.bf16.msra.mxu0 %v8205
    %8428 = vmatprep.subr.bf16.mxu0 %v8210
    %8429 = vmatpush1.bf16.msra.mxu0 %v8209
    %8430 = vmatprep.subr.bf16.mxu0 %v8214
    %8431 = vmatpush1.bf16.msra.mxu0 %v8213
    %8432 = vmatprep.subr.bf16.mxu0 %v8218
    %8433 = vmatpush1.bf16.msra.mxu0 %v8217
    %8434 = vmatprep.subr.bf16.mxu0 %v8222
    %8435 = vmatpush1.bf16.msra.mxu0 %v8221
    %8436 = vmatprep.subr.bf16.mxu0 %v8226
    %8437 = vmatpush1.bf16.msra.mxu0 %v8225
    %8438 = vmatprep.subr.bf16.mxu0 %v8230
    %8439 = vmatpush1.bf16.msra.mxu0 %v8229
    %8440 = vmatprep.subr.bf16.mxu0 %v8234
    %8441 = vmatpush1.bf16.msra.mxu0 %v8233
    %8442 = vmatprep.subr.bf16.mxu0 %v8238
    %8443 = vmatpush1.bf16.msra.mxu0 %v8237
    %8444 = vmatprep.subr.bf16.mxu0 %v8242
    %8445 = vmatpush1.bf16.msra.mxu0 %v8241
    %8446 = vmatprep.mubr.bf16.mxu0 %v7604
    %8447 = vmatmul.mubr.bf16.gmra.mrb[0].mxu0 %v7603
    %v8448 = vpop.f32.mrb[0].mxu0
    %v8449 = vadd.f32 %v8408, %v8448
    %v8450 = vpop.f32.mrb[0].mxu0
    %v8451 = vadd.f32 %v8410, %v8450
    %v8452 = vpop.f32.mrb[0].mxu0
    %v8453 = vpop.f32.mrb[0].mxu0
    %8454 = vdwg.mxu0
    %8455 = vmatprep.subr.bf16.mxu0 %v8120
    %8456 = vmatpush1.bf16.msra.mxu0 %v8119
    %8457 = vmatprep.subr.bf16.mxu0 %v8124
    %8458 = vmatpush1.bf16.msra.mxu0 %v8123
    %8459 = vmatprep.subr.bf16.mxu0 %v8128
    %8460 = vmatpush1.bf16.msra.mxu0 %v8127
    %8461 = vmatprep.subr.bf16.mxu0 %v8132
    %8462 = vmatpush1.bf16.msra.mxu0 %v8131
    %8463 = vmatprep.subr.bf16.mxu0 %v8136
    %8464 = vmatpush1.bf16.msra.mxu0 %v8135
    %8465 = vmatprep.subr.bf16.mxu0 %v8140
    %8466 = vmatpush1.bf16.msra.mxu0 %v8139
    %8467 = vmatprep.subr.bf16.mxu0 %v8144
    %8468 = vmatpush1.bf16.msra.mxu0 %v8143
    %8469 = vmatprep.subr.bf16.mxu0 %v8148
    %8470 = vmatpush1.bf16.msra.mxu0 %v8147
    %8471 = vmatprep.subr.bf16.mxu0 %v8152
    %8472 = vmatpush1.bf16.msra.mxu0 %v8151
    %8473 = vmatprep.subr.bf16.mxu0 %v8156
    %8474 = vmatpush1.bf16.msra.mxu0 %v8155
    %8475 = vmatprep.subr.bf16.mxu0 %v8160
    %8476 = vmatpush1.bf16.msra.mxu0 %v8159
    %8477 = vmatprep.subr.bf16.mxu0 %v8164
    %8478 = vmatpush1.bf16.msra.mxu0 %v8163
    %8479 = vmatprep.subr.bf16.mxu0 %v8168
    %8480 = vmatpush1.bf16.msra.mxu0 %v8167
    %8481 = vmatprep.subr.bf16.mxu0 %v8172
    %8482 = vmatpush1.bf16.msra.mxu0 %v8171
    %8483 = vmatprep.subr.bf16.mxu0 %v8176
    %8484 = vmatpush1.bf16.msra.mxu0 %v8175
    %8485 = vmatprep.subr.bf16.mxu0 %v8180
    %8486 = vmatpush1.bf16.msra.mxu0 %v8179
    %8487 = vmatprep.mubr.bf16.mxu0 %v7602
    %8488 = vmatmul.mubr.bf16.gmra.mrb[0].mxu0 %v7601
    %v8489 = vpop.f32.mrb[0].mxu0
    %v8490 = vadd.f32 0.0, %v8489
    %v8491 = vpop.f32.mrb[0].mxu0
    %v8492 = vadd.f32 0.0, %v8491
    %v8493 = vpop.f32.mrb[0].mxu0
    %v8494 = vpop.f32.mrb[0].mxu0
    %8495 = vdwg.mxu0
    %8496 = vmatprep.subr.bf16.mxu0 %v8184
    %8497 = vmatpush1.bf16.msra.mxu0 %v8183
    %8498 = vmatprep.subr.bf16.mxu0 %v8188
    %8499 = vmatpush1.bf16.msra.mxu0 %v8187
    %8500 = vmatprep.subr.bf16.mxu0 %v8192
    %8501 = vmatpush1.bf16.msra.mxu0 %v8191
    %8502 = vmatprep.subr.bf16.mxu0 %v8196
    %8503 = vmatpush1.bf16.msra.mxu0 %v8195
    %8504 = vmatprep.subr.bf16.mxu0 %v8200
    %8505 = vmatpush1.bf16.msra.mxu0 %v8199
    %8506 = vmatprep.subr.bf16.mxu0 %v8204
    %8507 = vmatpush1.bf16.msra.mxu0 %v8203
    %8508 = vmatprep.subr.bf16.mxu0 %v8208
    %8509 = vmatpush1.bf16.msra.mxu0 %v8207
    %8510 = vmatprep.subr.bf16.mxu0 %v8212
    %8511 = vmatpush1.bf16.msra.mxu0 %v8211
    %8512 = vmatprep.subr.bf16.mxu0 %v8216
    %8513 = vmatpush1.bf16.msra.mxu0 %v8215
    %8514 = vmatprep.subr.bf16.mxu0 %v8220
    %8515 = vmatpush1.bf16.msra.mxu0 %v8219
    %8516 = vmatprep.subr.bf16.mxu0 %v8224
    %8517 = vmatpush1.bf16.msra.mxu0 %v8223
    %8518 = vmatprep.subr.bf16.mxu0 %v8228
    %8519 = vmatpush1.bf16.msra.mxu0 %v8227
    %8520 = vmatprep.subr.bf16.mxu0 %v8232
    %8521 = vmatpush1.bf16.msra.mxu0 %v8231
    %8522 = vmatprep.subr.bf16.mxu0 %v8236
    %8523 = vmatpush1.bf16.msra.mxu0 %v8235
    %8524 = vmatprep.subr.bf16.mxu0 %v8240
    %8525 = vmatpush1.bf16.msra.mxu0 %v8239
    %8526 = vmatprep.subr.bf16.mxu0 %v8244
    %8527 = vmatpush1.bf16.msra.mxu0 %v8243
    %8528 = vmatprep.mubr.bf16.mxu0 %v7604
    %8529 = vmatmul.mubr.bf16.gmra.mrb[0].mxu0 %v7603
    %v8530 = vpop.f32.mrb[0].mxu0
    %v8531 = vadd.f32 %v8490, %v8530
    %v8532 = vpop.f32.mrb[0].mxu0
    %v8533 = vadd.f32 %v8492, %v8532
    %v8534 = vpop.f32.mrb[0].mxu0
    %v8535 = vpop.f32.mrb[0].mxu0
    %8536 = vdwg.mxu0
    %v8537 = vmax.f32 %v8449, %v8451
    %v8538 = vmax.f32 %v8537, %v8531
    %v8539 = vmax.f32 %v8538, %v8533
    %v8540 = vld [vmem:[#allocation10] sm:$0x1]
    %v8542 = vlaneseq
    %v8543 = vshrl.u32 %v8542, 7
    %v8544 = vsub.s32 0, %v8543
    %v8545 = vrot.slane %v8540, %v8544
    %v8547 = vadd.f32 %v8539, %v8545
    %v8548 = vmul.f32 %v8547, 0.01
    %v8549 = vmax.f32 %v8547, %v8548
    %8550 = vst [vmem:[#allocation11] sm:$0xff] %v8549
    // Predicated region
    $region42: #{tpu_custom_call.1} parent=1 // pred_check
      _
    $region43: #{tpu_custom_call.1} parent=1 // pred_check_branch
      %8552 = sbr.rel (0) target = $region45
    $region44: #{tpu_custom_call.1} parent=1 // pred_region
      %s8554 = ssub.s32 128, 128
      %8555 = vsyncadd [#allocation4], %s8554
      %s8557 = sshll.u32 [#allocation11], 4
      %s8558 = int_to_ptr.vmem [resolvable:$true] %s8557
      %8560 = dma.vmem_to_hbm [thread:$0]  %s8558, 128, %s5, [#allocation4]
    $region45: #{tpu_custom_call.1} parent=1 // pred_fallthru
      _
    // Predicated region
    $region46: #{tpu_custom_call.1} parent=1 // pred_check
      _
    $region47: #{tpu_custom_call.1} parent=1 // pred_check_branch
      %8562 = sbr.rel (0) target = $region49
    $region48: #{tpu_custom_call.1} parent=1 // pred_region
      %8563 = dma.done [#allocation4], 128
    $region49: #{tpu_custom_call.1} parent=1 // pred_fallthru
      _
    %8564 = vsyncpa [#allocation3], 1
    %8565 = vsyncpa [#allocation6], 1
    %8566 = vsyncpa [#allocation9], 1
    %8567 = vsyncpa [#allocation4], 1

</llo_original>
